<compile_context>
chip_gen: v6e
topology: v6e:2x2x1
jax: 0.10.0
libtpu: 0.0.40
codegen_flags: <defaults>
</compile_context>

<pallas_src>
import functools

import numpy as np

import jax
import jax.numpy as jnp
from jax import lax
from jax.experimental import pallas as pl
from jax.experimental.pallas import tpu as pltpu


TILE_N = 32                        # examples per grid step (4 f32 sublane groups)
VMEM_TABLE_BYTES_LIMIT = 8 << 20   # tables go to VMEM when head+tail fit this budget


def _round_up(x, m):
    return ((x + m - 1) // m) * m


def _neg_logsigmoid(x):
    # -F.logsigmoid(x) == softplus(-x) == max(-x, 0) + log(1 + exp(-|x|))
    return jnp.maximum(-x, 0.0) + jnp.log(1.0 + jnp.exp(-jnp.abs(x)))


# ---------------------------------------------------------------------------
# Shared per-tile compute and finalize (used by both kernels)
# ---------------------------------------------------------------------------
def _tile_body(tile, n_act, hrows, trows, neg_row_fn, rel,
               posdot_scr, bias_scr, neg_acc, hsq_acc, tsq_acc,
               *, num_neg, embed_dim, tile_n):
    f32 = jnp.float32
    # `example` is zero on every lane >= embed_dim (head table and rel vector are
    # zero-padded there), so the fused bias column of the tail table contributes
    # nothing to the dot products below.
    example = hrows + rel                                               # (tile_n, dp)
    pos_dot = jnp.sum(trows * example, axis=1, keepdims=True)           # (tile_n, 1)
    bias_tile = trows[:, embed_dim:embed_dim + 1]                       # static lane slice

    neg_loss_row = jnp.zeros((tile_n, 1), f32)
    for k in range(num_neg):                                            # k-major: (tile_n, dp) tiles
        neg_dot = jnp.sum(neg_row_fn(k) * example, axis=1, keepdims=True)
        neg_loss_row = neg_loss_row + _neg_logsigmoid(-(neg_dot + bias_tile))

    row_id = tile * tile_n + lax.broadcasted_iota(jnp.int32, (tile_n, 1), 0)
    row_valid = row_id < n_act                                          # mask padded rows
    neg_tile_sum = jnp.sum(jnp.where(row_valid, neg_loss_row, 0.0))

    base = pl.multiple_of(tile * tile_n, tile_n)
    posdot_scr[pl.ds(base, tile_n), :] = pos_dot
    bias_scr[pl.ds(base, tile_n), :] = bias_tile

    # padded rows gather the all-zero padding row -> contribute 0 to the norms
    neg_acc[...] += jnp.full((1, 1), neg_tile_sum, f32)
    hsq_acc[...] += jnp.full((1, 1), jnp.sum(hrows * hrows), f32)
    tsq_acc[...] += jnp.full((1, 1),
                             jnp.sum(trows * trows) - jnp.sum(bias_tile * bias_tile), f32)


def _finalize(n_act, rel, posdot_scr, bias_scr, neg_acc, hsq_acc, tsq_acc, out_ref,
              *, n_pad, tile_n):
    f32 = jnp.float32
    n_f = n_act.astype(f32)
    bias_row = jnp.transpose(bias_scr[...])                              # (1, n_pad)
    col_valid = lax.broadcasted_iota(jnp.int32, (1, n_pad), 1) < n_act

    # Reproduce the reference broadcast quirk logits[i, j] = pos_dot[i] + bias[j],
    # striping the (n_pad, n_pad) block so it is never materialised at once (VMEM-safe
    # at large n_pad on v7x's 64 MiB VMEM as well as v5e/v6e).
    def stripe(s, acc):
        sbase = pl.multiple_of(s * tile_n, tile_n)
        pd = posdot_scr[pl.ds(sbase, tile_n), :]                         # (tile_n, 1)
        row_valid = (sbase + lax.broadcasted_iota(jnp.int32, (tile_n, 1), 0)) < n_act
        logits = pd + bias_row                                           # (tile_n, n_pad)
        valid = jnp.logical_and(row_valid, col_valid)
        return acc + jnp.full((1, 1),
                              jnp.sum(jnp.where(valid, _neg_logsigmoid(logits), 0.0)), f32)

    pos_sum = lax.fori_loop(0, n_pad // tile_n, stripe, jnp.zeros((1, 1), f32))

    # mean over the (n, n) block of (pos + broadcast(neg)) without materialising it:
    #   mean(pos + neg) = (sum(pos) + n * sum(neg)) / n^2
    loss_11 = (pos_sum + n_f * neg_acc[...]) / (n_f * n_f)
    l2_11 = (jnp.sqrt(hsq_acc[...]) + jnp.sqrt(tsq_acc[...])
             + jnp.full((1, 1), jnp.sqrt(jnp.sum(rel * rel)), f32))

    out_lane = lax.broadcasted_iota(jnp.int32, (1, 128), 1)
    out_ref[...] = (jnp.where(out_lane == 0, loss_11, 0.0)
                    + jnp.where(out_lane == 1, l2_11, 0.0))


# ---------------------------------------------------------------------------
# Kernel A: embedding tables resident in VMEM (small vocabularies)
# ---------------------------------------------------------------------------
def _transe_kernel_vmem(h_idx, t_idx, neg_idx, meta,               # scalar prefetch (SMEM)
                        head_ref, tail_ref, rel_ref,               # whole tables in VMEM
                        out_ref,                                   # (1, 128) VMEM output
                        hbuf, tbuf, nbuf,                          # gathered-row scratch
                        posdot_scr, bias_scr,
                        neg_acc, hsq_acc, tsq_acc,
                        *, num_neg, embed_dim, n_pad, tile_n):
    tile = pl.program_id(0)
    ntiles = pl.num_programs(0)
    n_act = meta[0]
    base = tile * tile_n

    @pl.when(tile == 0)
    def _():
        neg_acc[...] = jnp.zeros_like(neg_acc)
        hsq_acc[...] = jnp.zeros_like(hsq_acc)
        tsq_acc[...] = jnp.zeros_like(tsq_acc)

    # Row gather straight out of the VMEM-resident tables (no DMA descriptors / sems).
    for r in range(tile_n):
        hbuf[pl.ds(r, 1), :] = head_ref[pl.ds(h_idx[base + r], 1), :]
        tbuf[pl.ds(r, 1), :] = tail_ref[pl.ds(t_idx[base + r], 1), :]
        for k in range(num_neg):
            g = neg_idx[(base + r) * num_neg + k]
            nbuf[k, pl.ds(r, 1), :] = tail_ref[pl.ds(g, 1), :]

    rel = rel_ref[...]
    _tile_body(tile, n_act, hbuf[...], tbuf[...], lambda k: nbuf[k], rel,
               posdot_scr, bias_scr, neg_acc, hsq_acc, tsq_acc,
               num_neg=num_neg, embed_dim=embed_dim, tile_n=tile_n)

    @pl.when(tile == ntiles - 1)
    def _():
        _finalize(n_act, rel, posdot_scr, bias_scr, neg_acc, hsq_acc, tsq_acc, out_ref,
                  n_pad=n_pad, tile_n=tile_n)


# ---------------------------------------------------------------------------
# Kernel B: tables in HBM, manually double-buffered per-row gather DMAs
# ---------------------------------------------------------------------------
def _transe_kernel_hbm(h_idx, t_idx, neg_idx, meta,                # scalar prefetch (SMEM)
                       head_hbm, tail_hbm, rel_ref,                # HBM, HBM(+bias col), VMEM
                       out_ref,                                    # (1, 128) VMEM output
                       hbuf, tbuf, nbuf, sems,                     # double-buffered gathers
                       posdot_scr, bias_scr,
                       neg_acc, hsq_acc, tsq_acc,
                       *, num_neg, embed_dim, n_pad, tile_n):
    tile = pl.program_id(0)
    ntiles = pl.num_programs(0)
    slot = lax.rem(tile, 2)
    n_act = meta[0]

    def start_fetch(tile_idx, dst_slot):
        fbase = tile_idx * tile_n
        for r in range(tile_n):
            pltpu.make_async_copy(head_hbm.at[h_idx[fbase + r]], hbuf.at[dst_slot, r],
                                  sems.at[dst_slot, 0]).start()
            pltpu.make_async_copy(tail_hbm.at[t_idx[fbase + r]], tbuf.at[dst_slot, r],
                                  sems.at[dst_slot, 1]).start()
            for k in range(num_neg):
                g = neg_idx[(fbase + r) * num_neg + k]
                pltpu.make_async_copy(tail_hbm.at[g], nbuf.at[dst_slot, k, r],
                                      sems.at[dst_slot, 2]).start()

    def wait_fetch(dst_slot):
        # One wait per stream: descriptor sized like the whole slot buffer (DMA
        # semaphores count bytes, so N row-copies satisfy one slot-sized wait).
        pltpu.make_async_copy(hbuf.at[dst_slot], hbuf.at[dst_slot], sems.at[dst_slot, 0]).wait()
        pltpu.make_async_copy(tbuf.at[dst_slot], tbuf.at[dst_slot], sems.at[dst_slot, 1]).wait()
        pltpu.make_async_copy(nbuf.at[dst_slot], nbuf.at[dst_slot], sems.at[dst_slot, 2]).wait()

    @pl.when(tile == 0)
    def _():
        neg_acc[...] = jnp.zeros_like(neg_acc)
        hsq_acc[...] = jnp.zeros_like(hsq_acc)
        tsq_acc[...] = jnp.zeros_like(tsq_acc)
        start_fetch(0, 0)                                   # prime slot 0

    # Prefetch the NEXT tile BEFORE waiting on the current one (alternate slot,
    # separate semaphores) so next-tile HBM latency overlaps this tile's wait+compute,
    # and the SMEM index reads stay ahead of the .wait().
    @pl.when(tile + 1 < ntiles)
    def _():
        start_fetch(tile + 1, 1 - slot)

    wait_fetch(slot)

    rel = rel_ref[...]
    _tile_body(tile, n_act, hbuf[slot], tbuf[slot], lambda k: nbuf[slot, k], rel,
               posdot_scr, bias_scr, neg_acc, hsq_acc, tsq_acc,
               num_neg=num_neg, embed_dim=embed_dim, tile_n=tile_n)

    @pl.when(tile == ntiles - 1)
    def _():
        _finalize(n_act, rel, posdot_scr, bias_scr, neg_acc, hsq_acc, tsq_acc, out_ref,
                  n_pad=n_pad, tile_n=tile_n)


# ---------------------------------------------------------------------------
# Host wrapper: one fixed-shape pallas_call per relation group
# ---------------------------------------------------------------------------
def _grid_spec_vmem(num_tiles, head_rows, tail_rows, dp, n_pad, num_neg):
    return pltpu.PrefetchScalarGridSpec(
        num_scalar_prefetch=4,
        grid=(num_tiles,),
        in_specs=[
            pl.BlockSpec((head_rows, dp), lambda t, *_: (0, 0)),     # whole head table in VMEM
            pl.BlockSpec((tail_rows, dp), lambda t, *_: (0, 0)),     # whole fused tail(+bias) table
            pl.BlockSpec((1, dp), lambda t, *_: (0, 0)),             # relation vector
        ],
        out_specs=pl.BlockSpec((1, 128), lambda t, *_: (0, 0)),      # lane-dense scalar slab
        scratch_shapes=[
            pltpu.VMEM((TILE_N, dp), jnp.float32),                   # gathered head rows
            pltpu.VMEM((TILE_N, dp), jnp.float32),                   # gathered tail rows
            pltpu.VMEM((num_neg, TILE_N, dp), jnp.float32),          # gathered negatives (k-major)
            pltpu.VMEM((n_pad, 1), jnp.float32),                     # pos_dot per example
            pltpu.VMEM((n_pad, 1), jnp.float32),                     # bias per example
            pltpu.VMEM((1, 1), jnp.float32),                         # neg-loss accumulator
            pltpu.VMEM((1, 1), jnp.float32),                         # head sum-of-squares
            pltpu.VMEM((1, 1), jnp.float32),                         # tail sum-of-squares
        ],
    )


def _grid_spec_hbm(num_tiles, dp, n_pad, num_neg):
    return pltpu.PrefetchScalarGridSpec(
        num_scalar_prefetch=4,
        grid=(num_tiles,),
        in_specs=[
            pl.BlockSpec(memory_space=pl.ANY),                       # head table stays in HBM
            pl.BlockSpec(memory_space=pl.ANY),                       # fused tail(+bias) table in HBM
            pl.BlockSpec((1, dp), lambda t, *_: (0, 0)),             # relation vector -> VMEM
        ],
        out_specs=pl.BlockSpec((1, 128), lambda t, *_: (0, 0)),
        scratch_shapes=[
            pltpu.VMEM((2, TILE_N, dp), jnp.float32),                # head rows (double buffer)
            pltpu.VMEM((2, TILE_N, dp), jnp.float32),                # tail rows
            pltpu.VMEM((2, num_neg, TILE_N, dp), jnp.float32),       # negative rows (k-major)
            pltpu.SemaphoreType.DMA((2, 3)),                         # slot x {head, tail, neg}
            pltpu.VMEM((n_pad, 1), jnp.float32),                     # pos_dot per example
            pltpu.VMEM((n_pad, 1), jnp.float32),                     # bias per example
            pltpu.VMEM((1, 1), jnp.float32),
            pltpu.VMEM((1, 1), jnp.float32),
            pltpu.VMEM((1, 1), jnp.float32),
        ],
    )


@functools.partial(jax.jit, static_argnames=("num_neg", "embed_dim", "tables_in_vmem"))
def transe_neg_loss(h_idx, t_idx, neg_idx, n_act, head_tab_p, tail_tab_p, rel_vec_p,
                    *, num_neg, embed_dim, tables_in_vmem):
    """KnowledgeEmbedding.neg_loss for one relation group (padded to TILE_N rows)."""
    n_pad = int(h_idx.shape[0])
    assert n_pad % TILE_N == 0
    dp = int(head_tab_p.shape[1])
    num_tiles = n_pad // TILE_N

    if tables_in_vmem:
        kern = functools.partial(_transe_kernel_vmem, num_neg=num_neg, embed_dim=embed_dim,
                                 n_pad=n_pad, tile_n=TILE_N)
        grid_spec = _grid_spec_vmem(num_tiles, int(head_tab_p.shape[0]),
                                    int(tail_tab_p.shape[0]), dp, n_pad, num_neg)
    else:
        kern = functools.partial(_transe_kernel_hbm, num_neg=num_neg, embed_dim=embed_dim,
                                 n_pad=n_pad, tile_n=TILE_N)
        grid_spec = _grid_spec_hbm(num_tiles, dp, n_pad, num_neg)

    out = pl.pallas_call(
        kern,
        out_shape=jax.ShapeDtypeStruct((1, 128), jnp.float32),
        grid_spec=grid_spec,
        compiler_params=pltpu.CompilerParams(
            dimension_semantics=("arbitrary",),       # serial: scratch accumulators carry state
            vmem_limit_bytes=32 * 1024 * 1024,
        ),
    )(h_idx.astype(jnp.int32), t_idx.astype(jnp.int32), neg_idx.astype(jnp.int32),
      jnp.reshape(jnp.asarray(n_act, jnp.int32), (1,)),
      head_tab_p, tail_tab_p, rel_vec_p)

    return out[0, 0], out[0, 1]


# Pure-JAX reference of the same per-relation loss (for validation).
def _transe_neg_loss_reference(h_idx, t_idx, neg_idx, n_act, head_p, tail_p, rel_p,
                               *, num_neg, embed_dim):
    n = int(n_act)
    h = h_idx[:n]
    t = t_idx[:n]
    g = neg_idx[: n * num_neg]
    head_vec = head_p[h, :embed_dim]
    tail_vec = tail_p[t, :embed_dim]
    bias = tail_p[t, embed_dim]
    rel = rel_p[:, :embed_dim]
    example = head_vec + rel
    pos_logits = jnp.sum(tail_vec * example, axis=1, keepdims=True) + bias[None, :]  # (n, n) quirk
    pos_loss = -jax.nn.log_sigmoid(pos_logits)
    neg_vec = tail_p[g, :embed_dim].reshape(n, num_neg, embed_dim)
    neg_logits = jnp.einsum("nkd,nd->nk", neg_vec, example) + bias[:, None]
    neg_loss = jnp.sum(-jax.nn.log_sigmoid(-neg_logits), axis=1)                      # (n,)
    loss = jnp.mean(pos_loss + neg_loss[None, :])
    l2 = jnp.linalg.norm(head_vec) + jnp.linalg.norm(tail_vec) + jnp.linalg.norm(rel)
    return loss, l2


# ---------------------------------------------------------------------------
# Parameter setup (mirrors KnowledgeEmbedding.__init__ shapes / init)
# ---------------------------------------------------------------------------
def _fuse_and_pad_tables(head_tab, tail_tab, bias_tab, rel_vec, embed_dim):
    """Lane-pad tables to a multiple of 128, row-pad to a multiple of 8, and fuse the
    relation bias as column `embed_dim` of the tail table."""
    dp = _round_up(embed_dim + 1, 128)
    hr = _round_up(head_tab.shape[0], 8)
    tr = _round_up(tail_tab.shape[0], 8)
    head_p = jnp.zeros((hr, dp), jnp.float32).at[:head_tab.shape[0], :embed_dim].set(head_tab)
    tail_p = (jnp.zeros((tr, dp), jnp.float32)
              .at[:tail_tab.shape[0], :embed_dim].set(tail_tab)
              .at[:tail_tab.shape[0], embed_dim].set(bias_tab[:, 0]))
    rel_p = jnp.zeros((1, dp), jnp.float32).at[:, :embed_dim].set(rel_vec)
    return head_p, tail_p, rel_p


def make_params(key, *, embed_size, head_vocab_size, tail_vocab_size):
    initrange = 0.5 / embed_size
    k1, k2, k3 = jax.random.split(key, 3)

    def entity_embedding(k, vocab_size):
        w = jax.random.uniform(k, (vocab_size + 1, embed_size),
                               minval=-initrange, maxval=initrange, dtype=jnp.float32)
        return w.at[vocab_size].set(0.0)      # padding_idx row zeroed

    return {
        "user": entity_embedding(k1, head_vocab_size),                  # [Vh+1, D]
        "product": entity_embedding(k2, tail_vocab_size),               # [Vt+1, D]
        "purchase": jax.random.uniform(k3, (1, embed_size),
                                       minval=-initrange, maxval=initrange,
                                       dtype=jnp.float32),
        "purchase_bias": jnp.zeros((tail_vocab_size + 1, 1), jnp.float32),
    }


def build_relation_registry(params, *, embed_size, head_vocab_size, tail_vocab_size):
    head_p, tail_p, rel_p = _fuse_and_pad_tables(
        params["user"], params["product"], params["purchase_bias"], params["purchase"],
        embed_size)
    distrib = np.arange(1, tail_vocab_size + 1, dtype=np.float32)
    distrib = distrib / distrib.sum()
    return {
        0: {  # relation index 0 -> "purchase": user -> product
            "head_tab": head_p, "tail_tab": tail_p, "rel_vec": rel_p,
            "head_pad_row": head_vocab_size, "tail_pad_row": tail_vocab_size,
            "distribution": jnp.asarray(distrib),
        }
    }


def knowledge_embedding_forward(params, relation_registry, batch_triples, key,
                                *, num_neg_samples, l2_lambda, impl="pallas_auto"):
    """Mirrors KnowledgeEmbedding.forward / compute_loss.

    impl: "pallas_auto" | "pallas_vmem" | "pallas_hbm" | "reference"
    """
    triples = np.asarray(batch_triples)
    h_idxs, r_idxs, t_idxs = triples[:, 0], triples[:, 1], triples[:, 2]
    batch_size = triples.shape[0]
    embed_dim = int(params["purchase"].shape[1])
    # every relation group is padded to the same bucket -> a single compiled kernel shape
    n_bucket = max(TILE_N, _round_up(batch_size, TILE_N))

    total_loss = jnp.float32(0.0)
    reg_sum = jnp.float32(0.0)
    has_reg = False

    for rel_idx in np.unique(r_idxs):          # host-side loop over unique relations
        info = relation_registry.get(int(rel_idx))
        if info is None:
            continue
        mask = r_idxs == rel_idx
        cur_h = np.asarray(h_idxs[mask], np.int32)
        cur_t = np.asarray(t_idxs[mask], np.int32)
        n = int(cur_h.shape[0])
        if n <= 0:
            continue
        h_pad = np.full((n_bucket,), info["head_pad_row"], np.int32)
        h_pad[:n] = cur_h
        t_pad = np.full((n_bucket,), info["tail_pad_row"], np.int32)
        t_pad[:n] = cur_t

        key, sub = jax.random.split(key)
        # TODO(synk): torch.multinomial replaced by jax.random.categorical (different RNG stream).
        neg = jax.random.categorical(sub, jnp.log(info["distribution"]),
                                     shape=(n_bucket * num_neg_samples,)).astype(jnp.int32)

        args = (jnp.asarray(h_pad), jnp.asarray(t_pad), neg, jnp.asarray(n, jnp.int32),
                info["head_tab"], info["tail_tab"], info["rel_vec"])
        if impl == "reference":
            rel_loss, rel_l2 = _transe_neg_loss_reference(*args, num_neg=num_neg_samples,
                                                          embed_dim=embed_dim)
        else:
            table_bytes = (info["head_tab"].size + info["tail_tab"].size) * 4
            if impl == "pallas_vmem":
                in_vmem = True
            elif impl == "pallas_hbm":
                in_vmem = False
            else:
                in_vmem = table_bytes <= VMEM_TABLE_BYTES_LIMIT
            rel_loss, rel_l2 = transe_neg_loss(*args, num_neg=num_neg_samples,
                                               embed_dim=embed_dim, tables_in_vmem=in_vmem)
        total_loss = total_loss + rel_loss
        reg_sum = reg_sum + rel_l2
        has_reg = True

    if l2_lambda > 0 and has_reg:
        total_loss = total_loss + l2_lambda * reg_sum
    if batch_size > 0:
        total_loss = total_loss / batch_size
    return total_loss


if __name__ == "__main__":
    EMBED_SIZE = 32
    NUM_NEG = 4
    L2_LAMBDA = 1e-3
    HEAD_VOCAB = 20   # "user" vocab_size
    TAIL_VOCAB = 30   # "product" vocab_size
    BATCH = 8

    root = jax.random.PRNGKey(0)
    k_params, k_bias, k_h, k_t, k_neg = jax.random.split(root, 5)

    params = make_params(k_params, embed_size=EMBED_SIZE,
                         head_vocab_size=HEAD_VOCAB, tail_vocab_size=TAIL_VOCAB)
    # The reference init zeros the relation bias; perturb it here so the fused-bias
    # column is numerically exercised by the self-test (padding_idx row stays 0).
    bias = jax.random.normal(k_bias, (TAIL_VOCAB + 1, 1), jnp.float32) * 0.1
    params["purchase_bias"] = bias.at[TAIL_VOCAB].set(0.0)

    relation_registry = build_relation_registry(
        params, embed_size=EMBED_SIZE,
        head_vocab_size=HEAD_VOCAB, tail_vocab_size=TAIL_VOCAB)

    heads = jax.random.randint(k_h, (BATCH,), 0, HEAD_VOCAB, dtype=jnp.int32)
    tails = jax.random.randint(k_t, (BATCH,), 0, TAIL_VOCAB, dtype=jnp.int32)
    rels = jnp.zeros((BATCH,), jnp.int32)     # all triples use relation 0 ("purchase")
    batch_triples = jnp.stack([heads, rels, tails], axis=1)   # [B, 3]

    common = dict(num_neg_samples=NUM_NEG, l2_lambda=L2_LAMBDA)
    loss_vmem = jax.block_until_ready(knowledge_embedding_forward(
        params, relation_registry, batch_triples, k_neg, impl="pallas_vmem", **common))
    loss_hbm = jax.block_until_ready(knowledge_embedding_forward(
        params, relation_registry, batch_triples, k_neg, impl="pallas_hbm", **common))
    loss_ref = jax.block_until_ready(knowledge_embedding_forward(
        params, relation_registry, batch_triples, k_neg, impl="reference", **common))

    assert np.isfinite(np.asarray(loss_vmem)), "VMEM-path loss is not finite"
    assert np.isfinite(np.asarray(loss_hbm)), "HBM-path loss is not finite"
    np.testing.assert_allclose(np.asarray(loss_vmem), np.asarray(loss_ref), rtol=2e-3, atol=2e-4)
    np.testing.assert_allclose(np.asarray(loss_hbm), np.asarray(loss_ref), rtol=2e-3, atol=2e-4)
    print("KERNEL_OK")
</pallas_src>

<mosaic_0001>
module attributes {stable_mosaic.version = 11 : i64} {
  func.func @_transe_kernel_vmem(%arg0: i32, %arg1: memref<32xi32, #tpu.memory_space<smem>>, %arg2: memref<32xi32, #tpu.memory_space<smem>>, %arg3: memref<128xi32, #tpu.memory_space<smem>>, %arg4: memref<1xi32, #tpu.memory_space<smem>>, %arg5: memref<24x128xf32, #tpu.memory_space<vmem>>, %arg6: memref<32x128xf32, #tpu.memory_space<vmem>>, %arg7: memref<1x128xf32, #tpu.memory_space<vmem>>, %arg8: memref<1x128xf32, #tpu.memory_space<vmem>>, %arg9: memref<32x128xf32, #tpu.memory_space<vmem>>, %arg10: memref<32x128xf32, #tpu.memory_space<vmem>>, %arg11: memref<4x32x128xf32, #tpu.memory_space<vmem>>, %arg12: memref<32x1xf32, #tpu.memory_space<vmem>>, %arg13: memref<32x1xf32, #tpu.memory_space<vmem>>, %arg14: memref<1x1xf32, #tpu.memory_space<vmem>>, %arg15: memref<1x1xf32, #tpu.memory_space<vmem>>, %arg16: memref<1x1xf32, #tpu.memory_space<vmem>>) attributes {dimension_semantics = [#tpu.dimension_semantics<arbitrary>], iteration_bounds = array<i64: 1>, scalar_prefetch = 4 : i64, scratch_operands = 8 : i64, tpu.core_type = #tpu.core_type<tc>, window_params = [{pipeline_mode = #tpu.pipeline_mode<synchronous>, transform_indices = @transform_0, window_bounds = array<i64: 24, 128>}, {pipeline_mode = #tpu.pipeline_mode<synchronous>, transform_indices = @transform_1, window_bounds = array<i64: 32, 128>}, {pipeline_mode = #tpu.pipeline_mode<synchronous>, transform_indices = @transform_2, window_bounds = array<i64: 1, 128>}, {pipeline_mode = #tpu.pipeline_mode<synchronous>, transform_indices = @transform_3, window_bounds = array<i64: 1, 128>}]} {
    %c0 = arith.constant 0 : index
    %0 = memref.load %arg4[%c0] : memref<1xi32, #tpu.memory_space<smem>>
    %c32_i32 = arith.constant 32 : i32
    %1 = arith.muli %arg0, %c32_i32 : i32
    %c0_i32 = arith.constant 0 : i32
    %2 = arith.cmpi eq, %arg0, %c0_i32 : i32
    %3 = arith.extui %2 : i1 to i32
    %c0_i32_0 = arith.constant 0 : i32
    %4 = arith.cmpi ne, %3, %c0_i32_0 : i32
    scf.if %4 {
      %cst_1157 = arith.constant 0.000000e+00 : f32
      %1812 = vector.broadcast %cst_1157 : f32 to vector<1x1xf32>
      %c0_1158 = arith.constant 0 : index
      %c0_1159 = arith.constant 0 : index
      %1813 = vector.load %arg14[%c0_1158, %c0_1159] : memref<1x1xf32, #tpu.memory_space<vmem>>, vector<1x1xf32>
      tpu.vector_store %arg14[%c0_1158, %c0_1159], %1812 {strides = array<i32>} : memref<1x1xf32, #tpu.memory_space<vmem>>, vector<1x1xf32>,
      %cst_1160 = arith.constant 0.000000e+00 : f32
      %1814 = vector.broadcast %cst_1160 : f32 to vector<1x1xf32>
      %c0_1161 = arith.constant 0 : index
      %c0_1162 = arith.constant 0 : index
      %1815 = vector.load %arg15[%c0_1161, %c0_1162] : memref<1x1xf32, #tpu.memory_space<vmem>>, vector<1x1xf32>
      tpu.vector_store %arg15[%c0_1161, %c0_1162], %1814 {strides = array<i32>} : memref<1x1xf32, #tpu.memory_space<vmem>>, vector<1x1xf32>,
      %cst_1163 = arith.constant 0.000000e+00 : f32
      %1816 = vector.broadcast %cst_1163 : f32 to vector<1x1xf32>
      %c0_1164 = arith.constant 0 : index
      %c0_1165 = arith.constant 0 : index
      %1817 = vector.load %arg16[%c0_1164, %c0_1165] : memref<1x1xf32, #tpu.memory_space<vmem>>, vector<1x1xf32>
      tpu.vector_store %arg16[%c0_1164, %c0_1165], %1816 {strides = array<i32>} : memref<1x1xf32, #tpu.memory_space<vmem>>, vector<1x1xf32>,
    } else {
    }
    %c0_i32_1 = arith.constant 0 : i32
    %5 = arith.addi %1, %c0_i32_1 : i32
    %6 = arith.index_cast %5 : i32 to index
    %7 = memref.load %arg1[%6] : memref<32xi32, #tpu.memory_space<smem>>
    %8 = arith.index_cast %7 : i32 to index
    %c0_2 = arith.constant 0 : index
    %9 = vector.load %arg5[%8, %c0_2] : memref<24x128xf32, #tpu.memory_space<vmem>>, vector<1x128xf32>
    %c0_3 = arith.constant 0 : index
    %c0_4 = arith.constant 0 : index
    %10 = vector.load %arg9[%c0_3, %c0_4] : memref<32x128xf32, #tpu.memory_space<vmem>>, vector<1x128xf32>
    tpu.vector_store %arg9[%c0_3, %c0_4], %9 {strides = array<i32>} : memref<32x128xf32, #tpu.memory_space<vmem>>, vector<1x128xf32>,
    %c0_i32_5 = arith.constant 0 : i32
    %11 = arith.addi %1, %c0_i32_5 : i32
    %12 = arith.index_cast %11 : i32 to index
    %13 = memref.load %arg2[%12] : memref<32xi32, #tpu.memory_space<smem>>
    %14 = arith.index_cast %13 : i32 to index
    %c0_6 = arith.constant 0 : index
    %15 = vector.load %arg6[%14, %c0_6] : memref<32x128xf32, #tpu.memory_space<vmem>>, vector<1x128xf32>
    %c0_7 = arith.constant 0 : index
    %c0_8 = arith.constant 0 : index
    %16 = vector.load %arg10[%c0_7, %c0_8] : memref<32x128xf32, #tpu.memory_space<vmem>>, vector<1x128xf32>
    tpu.vector_store %arg10[%c0_7, %c0_8], %15 {strides = array<i32>} : memref<32x128xf32, #tpu.memory_space<vmem>>, vector<1x128xf32>,
    %c0_i32_9 = arith.constant 0 : i32
    %17 = arith.addi %1, %c0_i32_9 : i32
    %c4_i32 = arith.constant 4 : i32
    %18 = arith.muli %17, %c4_i32 : i32
    %c0_i32_10 = arith.constant 0 : i32
    %19 = arith.addi %18, %c0_i32_10 : i32
    %20 = arith.index_cast %19 : i32 to index
    %21 = memref.load %arg3[%20] : memref<128xi32, #tpu.memory_space<smem>>
    %22 = arith.index_cast %21 : i32 to index
    %c0_11 = arith.constant 0 : index
    %23 = vector.load %arg6[%22, %c0_11] : memref<32x128xf32, #tpu.memory_space<vmem>>, vector<1x128xf32>
    %c0_12 = arith.constant 0 : index
    %c0_13 = arith.constant 0 : index
    %c0_14 = arith.constant 0 : index
    %24 = vector.load %arg11[%c0_12, %c0_13, %c0_14] : memref<4x32x128xf32, #tpu.memory_space<vmem>>, vector<1x1x128xf32>
    %25 = vector.shape_cast %24 : vector<1x1x128xf32> to vector<1x128xf32>
    %26 = vector.shape_cast %23 : vector<1x128xf32> to vector<1x1x128xf32>
    tpu.vector_store %arg11[%c0_12, %c0_13, %c0_14], %26 {strides = array<i32>} : memref<4x32x128xf32, #tpu.memory_space<vmem>>, vector<1x1x128xf32>,
    %c0_i32_15 = arith.constant 0 : i32
    %27 = arith.addi %1, %c0_i32_15 : i32
    %c4_i32_16 = arith.constant 4 : i32
    %28 = arith.muli %27, %c4_i32_16 : i32
    %c1_i32 = arith.constant 1 : i32
    %29 = arith.addi %28, %c1_i32 : i32
    %30 = arith.index_cast %29 : i32 to index
    %31 = memref.load %arg3[%30] : memref<128xi32, #tpu.memory_space<smem>>
    %32 = arith.index_cast %31 : i32 to index
    %c0_17 = arith.constant 0 : index
    %33 = vector.load %arg6[%32, %c0_17] : memref<32x128xf32, #tpu.memory_space<vmem>>, vector<1x128xf32>
    %c1 = arith.constant 1 : index
    %c0_18 = arith.constant 0 : index
    %c0_19 = arith.constant 0 : index
    %34 = vector.load %arg11[%c1, %c0_18, %c0_19] : memref<4x32x128xf32, #tpu.memory_space<vmem>>, vector<1x1x128xf32>
    %35 = vector.shape_cast %34 : vector<1x1x128xf32> to vector<1x128xf32>
    %36 = vector.shape_cast %33 : vector<1x128xf32> to vector<1x1x128xf32>
    tpu.vector_store %arg11[%c1, %c0_18, %c0_19], %36 {strides = array<i32>} : memref<4x32x128xf32, #tpu.memory_space<vmem>>, vector<1x1x128xf32>,
    %c0_i32_20 = arith.constant 0 : i32
    %37 = arith.addi %1, %c0_i32_20 : i32
    %c4_i32_21 = arith.constant 4 : i32
    %38 = arith.muli %37, %c4_i32_21 : i32
    %c2_i32 = arith.constant 2 : i32
    %39 = arith.addi %38, %c2_i32 : i32
    %40 = arith.index_cast %39 : i32 to index
    %41 = memref.load %arg3[%40] : memref<128xi32, #tpu.memory_space<smem>>
    %42 = arith.index_cast %41 : i32 to index
    %c0_22 = arith.constant 0 : index
    %43 = vector.load %arg6[%42, %c0_22] : memref<32x128xf32, #tpu.memory_space<vmem>>, vector<1x128xf32>
    %c2 = arith.constant 2 : index
    %c0_23 = arith.constant 0 : index
    %c0_24 = arith.constant 0 : index
    %44 = vector.load %arg11[%c2, %c0_23, %c0_24] : memref<4x32x128xf32, #tpu.memory_space<vmem>>, vector<1x1x128xf32>
    %45 = vector.shape_cast %44 : vector<1x1x128xf32> to vector<1x128xf32>
    %46 = vector.shape_cast %43 : vector<1x128xf32> to vector<1x1x128xf32>
    tpu.vector_store %arg11[%c2, %c0_23, %c0_24], %46 {strides = array<i32>} : memref<4x32x128xf32, #tpu.memory_space<vmem>>, vector<1x1x128xf32>,
    %c0_i32_25 = arith.constant 0 : i32
    %47 = arith.addi %1, %c0_i32_25 : i32
    %c4_i32_26 = arith.constant 4 : i32
    %48 = arith.muli %47, %c4_i32_26 : i32
    %c3_i32 = arith.constant 3 : i32
    %49 = arith.addi %48, %c3_i32 : i32
    %50 = arith.index_cast %49 : i32 to index
    %51 = memref.load %arg3[%50] : memref<128xi32, #tpu.memory_space<smem>>
    %52 = arith.index_cast %51 : i32 to index
    %c0_27 = arith.constant 0 : index
    %53 = vector.load %arg6[%52, %c0_27] : memref<32x128xf32, #tpu.memory_space<vmem>>, vector<1x128xf32>
    %c3 = arith.constant 3 : index
    %c0_28 = arith.constant 0 : index
    %c0_29 = arith.constant 0 : index
    %54 = vector.load %arg11[%c3, %c0_28, %c0_29] : memref<4x32x128xf32, #tpu.memory_space<vmem>>, vector<1x1x128xf32>
    %55 = vector.shape_cast %54 : vector<1x1x128xf32> to vector<1x128xf32>
    %56 = vector.shape_cast %53 : vector<1x128xf32> to vector<1x1x128xf32>
    tpu.vector_store %arg11[%c3, %c0_28, %c0_29], %56 {strides = array<i32>} : memref<4x32x128xf32, #tpu.memory_space<vmem>>, vector<1x1x128xf32>,
    %c1_i32_30 = arith.constant 1 : i32
    %57 = arith.addi %1, %c1_i32_30 : i32
    %58 = arith.index_cast %57 : i32 to index
    %59 = memref.load %arg1[%58] : memref<32xi32, #tpu.memory_space<smem>>
    %60 = arith.index_cast %59 : i32 to index
    %c0_31 = arith.constant 0 : index
    %61 = vector.load %arg5[%60, %c0_31] : memref<24x128xf32, #tpu.memory_space<vmem>>, vector<1x128xf32>
    %c1_32 = arith.constant 1 : index
    %c0_33 = arith.constant 0 : index
    %62 = vector.load %arg9[%c1_32, %c0_33] : memref<32x128xf32, #tpu.memory_space<vmem>>, vector<1x128xf32>
    tpu.vector_store %arg9[%c1_32, %c0_33], %61 {strides = array<i32>} : memref<32x128xf32, #tpu.memory_space<vmem>>, vector<1x128xf32>,
    %c1_i32_34 = arith.constant 1 : i32
    %63 = arith.addi %1, %c1_i32_34 : i32
    %64 = arith.index_cast %63 : i32 to index
    %65 = memref.load %arg2[%64] : memref<32xi32, #tpu.memory_space<smem>>
    %66 = arith.index_cast %65 : i32 to index
    %c0_35 = arith.constant 0 : index
    %67 = vector.load %arg6[%66, %c0_35] : memref<32x128xf32, #tpu.memory_space<vmem>>, vector<1x128xf32>
    %c1_36 = arith.constant 1 : index
    %c0_37 = arith.constant 0 : index
    %68 = vector.load %arg10[%c1_36, %c0_37] : memref<32x128xf32, #tpu.memory_space<vmem>>, vector<1x128xf32>
    tpu.vector_store %arg10[%c1_36, %c0_37], %67 {strides = array<i32>} : memref<32x128xf32, #tpu.memory_space<vmem>>, vector<1x128xf32>,
    %c1_i32_38 = arith.constant 1 : i32
    %69 = arith.addi %1, %c1_i32_38 : i32
    %c4_i32_39 = arith.constant 4 : i32
    %70 = arith.muli %69, %c4_i32_39 : i32
    %c0_i32_40 = arith.constant 0 : i32
    %71 = arith.addi %70, %c0_i32_40 : i32
    %72 = arith.index_cast %71 : i32 to index
    %73 = memref.load %arg3[%72] : memref<128xi32, #tpu.memory_space<smem>>
    %74 = arith.index_cast %73 : i32 to index
    %c0_41 = arith.constant 0 : index
    %75 = vector.load %arg6[%74, %c0_41] : memref<32x128xf32, #tpu.memory_space<vmem>>, vector<1x128xf32>
    %c0_42 = arith.constant 0 : index
    %c1_43 = arith.constant 1 : index
    %c0_44 = arith.constant 0 : index
    %76 = vector.load %arg11[%c0_42, %c1_43, %c0_44] : memref<4x32x128xf32, #tpu.memory_space<vmem>>, vector<1x1x128xf32>
    %77 = vector.shape_cast %76 : vector<1x1x128xf32> to vector<1x128xf32>
    %78 = vector.shape_cast %75 : vector<1x128xf32> to vector<1x1x128xf32>
    tpu.vector_store %arg11[%c0_42, %c1_43, %c0_44], %78 {strides = array<i32>} : memref<4x32x128xf32, #tpu.memory_space<vmem>>, vector<1x1x128xf32>,
    %c1_i32_45 = arith.constant 1 : i32
    %79 = arith.addi %1, %c1_i32_45 : i32
    %c4_i32_46 = arith.constant 4 : i32
    %80 = arith.muli %79, %c4_i32_46 : i32
    %c1_i32_47 = arith.constant 1 : i32
    %81 = arith.addi %80, %c1_i32_47 : i32
    %82 = arith.index_cast %81 : i32 to index
    %83 = memref.load %arg3[%82] : memref<128xi32, #tpu.memory_space<smem>>
    %84 = arith.index_cast %83 : i32 to index
    %c0_48 = arith.constant 0 : index
    %85 = vector.load %arg6[%84, %c0_48] : memref<32x128xf32, #tpu.memory_space<vmem>>, vector<1x128xf32>
    %c1_49 = arith.constant 1 : index
    %c1_50 = arith.constant 1 : index
    %c0_51 = arith.constant 0 : index
    %86 = vector.load %arg11[%c1_49, %c1_50, %c0_51] : memref<4x32x128xf32, #tpu.memory_space<vmem>>, vector<1x1x128xf32>
    %87 = vector.shape_cast %86 : vector<1x1x128xf32> to vector<1x128xf32>
    %88 = vector.shape_cast %85 : vector<1x128xf32> to vector<1x1x128xf32>
    tpu.vector_store %arg11[%c1_49, %c1_50, %c0_51], %88 {strides = array<i32>} : memref<4x32x128xf32, #tpu.memory_space<vmem>>, vector<1x1x128xf32>,
    %c1_i32_52 = arith.constant 1 : i32
    %89 = arith.addi %1, %c1_i32_52 : i32
    %c4_i32_53 = arith.constant 4 : i32
    %90 = arith.muli %89, %c4_i32_53 : i32
    %c2_i32_54 = arith.constant 2 : i32
    %91 = arith.addi %90, %c2_i32_54 : i32
    %92 = arith.index_cast %91 : i32 to index
    %93 = memref.load %arg3[%92] : memref<128xi32, #tpu.memory_space<smem>>
    %94 = arith.index_cast %93 : i32 to index
    %c0_55 = arith.constant 0 : index
    %95 = vector.load %arg6[%94, %c0_55] : memref<32x128xf32, #tpu.memory_space<vmem>>, vector<1x128xf32>
    %c2_56 = arith.constant 2 : index
    %c1_57 = arith.constant 1 : index
    %c0_58 = arith.constant 0 : index
    %96 = vector.load %arg11[%c2_56, %c1_57, %c0_58] : memref<4x32x128xf32, #tpu.memory_space<vmem>>, vector<1x1x128xf32>
    %97 = vector.shape_cast %96 : vector<1x1x128xf32> to vector<1x128xf32>
    %98 = vector.shape_cast %95 : vector<1x128xf32> to vector<1x1x128xf32>
    tpu.vector_store %arg11[%c2_56, %c1_57, %c0_58], %98 {strides = array<i32>} : memref<4x32x128xf32, #tpu.memory_space<vmem>>, vector<1x1x128xf32>,
    %c1_i32_59 = arith.constant 1 : i32
    %99 = arith.addi %1, %c1_i32_59 : i32
    %c4_i32_60 = arith.constant 4 : i32
    %100 = arith.muli %99, %c4_i32_60 : i32
    %c3_i32_61 = arith.constant 3 : i32
    %101 = arith.addi %100, %c3_i32_61 : i32
    %102 = arith.index_cast %101 : i32 to index
    %103 = memref.load %arg3[%102] : memref<128xi32, #tpu.memory_space<smem>>
    %104 = arith.index_cast %103 : i32 to index
    %c0_62 = arith.constant 0 : index
    %105 = vector.load %arg6[%104, %c0_62] : memref<32x128xf32, #tpu.memory_space<vmem>>, vector<1x128xf32>
    %c3_63 = arith.constant 3 : index
    %c1_64 = arith.constant 1 : index
    %c0_65 = arith.constant 0 : index
    %106 = vector.load %arg11[%c3_63, %c1_64, %c0_65] : memref<4x32x128xf32, #tpu.memory_space<vmem>>, vector<1x1x128xf32>
    %107 = vector.shape_cast %106 : vector<1x1x128xf32> to vector<1x128xf32>
    %108 = vector.shape_cast %105 : vector<1x128xf32> to vector<1x1x128xf32>
    tpu.vector_store %arg11[%c3_63, %c1_64, %c0_65], %108 {strides = array<i32>} : memref<4x32x128xf32, #tpu.memory_space<vmem>>, vector<1x1x128xf32>,
    %c2_i32_66 = arith.constant 2 : i32
    %109 = arith.addi %1, %c2_i32_66 : i32
    %110 = arith.index_cast %109 : i32 to index
    %111 = memref.load %arg1[%110] : memref<32xi32, #tpu.memory_space<smem>>
    %112 = arith.index_cast %111 : i32 to index
    %c0_67 = arith.constant 0 : index
    %113 = vector.load %arg5[%112, %c0_67] : memref<24x128xf32, #tpu.memory_space<vmem>>, vector<1x128xf32>
    %c2_68 = arith.constant 2 : index
    %c0_69 = arith.constant 0 : index
    %114 = vector.load %arg9[%c2_68, %c0_69] : memref<32x128xf32, #tpu.memory_space<vmem>>, vector<1x128xf32>
    tpu.vector_store %arg9[%c2_68, %c0_69], %113 {strides = array<i32>} : memref<32x128xf32, #tpu.memory_space<vmem>>, vector<1x128xf32>,
    %c2_i32_70 = arith.constant 2 : i32
    %115 = arith.addi %1, %c2_i32_70 : i32
    %116 = arith.index_cast %115 : i32 to index
    %117 = memref.load %arg2[%116] : memref<32xi32, #tpu.memory_space<smem>>
    %118 = arith.index_cast %117 : i32 to index
    %c0_71 = arith.constant 0 : index
    %119 = vector.load %arg6[%118, %c0_71] : memref<32x128xf32, #tpu.memory_space<vmem>>, vector<1x128xf32>
    %c2_72 = arith.constant 2 : index
    %c0_73 = arith.constant 0 : index
    %120 = vector.load %arg10[%c2_72, %c0_73] : memref<32x128xf32, #tpu.memory_space<vmem>>, vector<1x128xf32>
    tpu.vector_store %arg10[%c2_72, %c0_73], %119 {strides = array<i32>} : memref<32x128xf32, #tpu.memory_space<vmem>>, vector<1x128xf32>,
    %c2_i32_74 = arith.constant 2 : i32
    %121 = arith.addi %1, %c2_i32_74 : i32
    %c4_i32_75 = arith.constant 4 : i32
    %122 = arith.muli %121, %c4_i32_75 : i32
    %c0_i32_76 = arith.constant 0 : i32
    %123 = arith.addi %122, %c0_i32_76 : i32
    %124 = arith.index_cast %123 : i32 to index
    %125 = memref.load %arg3[%124] : memref<128xi32, #tpu.memory_space<smem>>
    %126 = arith.index_cast %125 : i32 to index
    %c0_77 = arith.constant 0 : index
    %127 = vector.load %arg6[%126, %c0_77] : memref<32x128xf32, #tpu.memory_space<vmem>>, vector<1x128xf32>
    %c0_78 = arith.constant 0 : index
    %c2_79 = arith.constant 2 : index
    %c0_80 = arith.constant 0 : index
    %128 = vector.load %arg11[%c0_78, %c2_79, %c0_80] : memref<4x32x128xf32, #tpu.memory_space<vmem>>, vector<1x1x128xf32>
    %129 = vector.shape_cast %128 : vector<1x1x128xf32> to vector<1x128xf32>
    %130 = vector.shape_cast %127 : vector<1x128xf32> to vector<1x1x128xf32>
    tpu.vector_store %arg11[%c0_78, %c2_79, %c0_80], %130 {strides = array<i32>} : memref<4x32x128xf32, #tpu.memory_space<vmem>>, vector<1x1x128xf32>,
    %c2_i32_81 = arith.constant 2 : i32
    %131 = arith.addi %1, %c2_i32_81 : i32
    %c4_i32_82 = arith.constant 4 : i32
    %132 = arith.muli %131, %c4_i32_82 : i32
    %c1_i32_83 = arith.constant 1 : i32
    %133 = arith.addi %132, %c1_i32_83 : i32
    %134 = arith.index_cast %133 : i32 to index
    %135 = memref.load %arg3[%134] : memref<128xi32, #tpu.memory_space<smem>>
    %136 = arith.index_cast %135 : i32 to index
    %c0_84 = arith.constant 0 : index
    %137 = vector.load %arg6[%136, %c0_84] : memref<32x128xf32, #tpu.memory_space<vmem>>, vector<1x128xf32>
    %c1_85 = arith.constant 1 : index
    %c2_86 = arith.constant 2 : index
    %c0_87 = arith.constant 0 : index
    %138 = vector.load %arg11[%c1_85, %c2_86, %c0_87] : memref<4x32x128xf32, #tpu.memory_space<vmem>>, vector<1x1x128xf32>
    %139 = vector.shape_cast %138 : vector<1x1x128xf32> to vector<1x128xf32>
    %140 = vector.shape_cast %137 : vector<1x128xf32> to vector<1x1x128xf32>
    tpu.vector_store %arg11[%c1_85, %c2_86, %c0_87], %140 {strides = array<i32>} : memref<4x32x128xf32, #tpu.memory_space<vmem>>, vector<1x1x128xf32>,
    %c2_i32_88 = arith.constant 2 : i32
    %141 = arith.addi %1, %c2_i32_88 : i32
    %c4_i32_89 = arith.constant 4 : i32
    %142 = arith.muli %141, %c4_i32_89 : i32
    %c2_i32_90 = arith.constant 2 : i32
    %143 = arith.addi %142, %c2_i32_90 : i32
    %144 = arith.index_cast %143 : i32 to index
    %145 = memref.load %arg3[%144] : memref<128xi32, #tpu.memory_space<smem>>
    %146 = arith.index_cast %145 : i32 to index
    %c0_91 = arith.constant 0 : index
    %147 = vector.load %arg6[%146, %c0_91] : memref<32x128xf32, #tpu.memory_space<vmem>>, vector<1x128xf32>
    %c2_92 = arith.constant 2 : index
    %c2_93 = arith.constant 2 : index
    %c0_94 = arith.constant 0 : index
    %148 = vector.load %arg11[%c2_92, %c2_93, %c0_94] : memref<4x32x128xf32, #tpu.memory_space<vmem>>, vector<1x1x128xf32>
    %149 = vector.shape_cast %148 : vector<1x1x128xf32> to vector<1x128xf32>
    %150 = vector.shape_cast %147 : vector<1x128xf32> to vector<1x1x128xf32>
    tpu.vector_store %arg11[%c2_92, %c2_93, %c0_94], %150 {strides = array<i32>} : memref<4x32x128xf32, #tpu.memory_space<vmem>>, vector<1x1x128xf32>,
    %c2_i32_95 = arith.constant 2 : i32
    %151 = arith.addi %1, %c2_i32_95 : i32
    %c4_i32_96 = arith.constant 4 : i32
    %152 = arith.muli %151, %c4_i32_96 : i32
    %c3_i32_97 = arith.constant 3 : i32
    %153 = arith.addi %152, %c3_i32_97 : i32
    %154 = arith.index_cast %153 : i32 to index
    %155 = memref.load %arg3[%154] : memref<128xi32, #tpu.memory_space<smem>>
    %156 = arith.index_cast %155 : i32 to index
    %c0_98 = arith.constant 0 : index
    %157 = vector.load %arg6[%156, %c0_98] : memref<32x128xf32, #tpu.memory_space<vmem>>, vector<1x128xf32>
    %c3_99 = arith.constant 3 : index
    %c2_100 = arith.constant 2 : index
    %c0_101 = arith.constant 0 : index
    %158 = vector.load %arg11[%c3_99, %c2_100, %c0_101] : memref<4x32x128xf32, #tpu.memory_space<vmem>>, vector<1x1x128xf32>
    %159 = vector.shape_cast %158 : vector<1x1x128xf32> to vector<1x128xf32>
    %160 = vector.shape_cast %157 : vector<1x128xf32> to vector<1x1x128xf32>
    tpu.vector_store %arg11[%c3_99, %c2_100, %c0_101], %160 {strides = array<i32>} : memref<4x32x128xf32, #tpu.memory_space<vmem>>, vector<1x1x128xf32>,
    %c3_i32_102 = arith.constant 3 : i32
    %161 = arith.addi %1, %c3_i32_102 : i32
    %162 = arith.index_cast %161 : i32 to index
    %163 = memref.load %arg1[%162] : memref<32xi32, #tpu.memory_space<smem>>
    %164 = arith.index_cast %163 : i32 to index
    %c0_103 = arith.constant 0 : index
    %165 = vector.load %arg5[%164, %c0_103] : memref<24x128xf32, #tpu.memory_space<vmem>>, vector<1x128xf32>
    %c3_104 = arith.constant 3 : index
    %c0_105 = arith.constant 0 : index
    %166 = vector.load %arg9[%c3_104, %c0_105] : memref<32x128xf32, #tpu.memory_space<vmem>>, vector<1x128xf32>
    tpu.vector_store %arg9[%c3_104, %c0_105], %165 {strides = array<i32>} : memref<32x128xf32, #tpu.memory_space<vmem>>, vector<1x128xf32>,
    %c3_i32_106 = arith.constant 3 : i32
    %167 = arith.addi %1, %c3_i32_106 : i32
    %168 = arith.index_cast %167 : i32 to index
    %169 = memref.load %arg2[%168] : memref<32xi32, #tpu.memory_space<smem>>
    %170 = arith.index_cast %169 : i32 to index
    %c0_107 = arith.constant 0 : index
    %171 = vector.load %arg6[%170, %c0_107] : memref<32x128xf32, #tpu.memory_space<vmem>>, vector<1x128xf32>
    %c3_108 = arith.constant 3 : index
    %c0_109 = arith.constant 0 : index
    %172 = vector.load %arg10[%c3_108, %c0_109] : memref<32x128xf32, #tpu.memory_space<vmem>>, vector<1x128xf32>
    tpu.vector_store %arg10[%c3_108, %c0_109], %171 {strides = array<i32>} : memref<32x128xf32, #tpu.memory_space<vmem>>, vector<1x128xf32>,
    %c3_i32_110 = arith.constant 3 : i32
    %173 = arith.addi %1, %c3_i32_110 : i32
    %c4_i32_111 = arith.constant 4 : i32
    %174 = arith.muli %173, %c4_i32_111 : i32
    %c0_i32_112 = arith.constant 0 : i32
    %175 = arith.addi %174, %c0_i32_112 : i32
    %176 = arith.index_cast %175 : i32 to index
    %177 = memref.load %arg3[%176] : memref<128xi32, #tpu.memory_space<smem>>
    %178 = arith.index_cast %177 : i32 to index
    %c0_113 = arith.constant 0 : index
    %179 = vector.load %arg6[%178, %c0_113] : memref<32x128xf32, #tpu.memory_space<vmem>>, vector<1x128xf32>
    %c0_114 = arith.constant 0 : index
    %c3_115 = arith.constant 3 : index
    %c0_116 = arith.constant 0 : index
    %180 = vector.load %arg11[%c0_114, %c3_115, %c0_116] : memref<4x32x128xf32, #tpu.memory_space<vmem>>, vector<1x1x128xf32>
    %181 = vector.shape_cast %180 : vector<1x1x128xf32> to vector<1x128xf32>
    %182 = vector.shape_cast %179 : vector<1x128xf32> to vector<1x1x128xf32>
    tpu.vector_store %arg11[%c0_114, %c3_115, %c0_116], %182 {strides = array<i32>} : memref<4x32x128xf32, #tpu.memory_space<vmem>>, vector<1x1x128xf32>,
    %c3_i32_117 = arith.constant 3 : i32
    %183 = arith.addi %1, %c3_i32_117 : i32
    %c4_i32_118 = arith.constant 4 : i32
    %184 = arith.muli %183, %c4_i32_118 : i32
    %c1_i32_119 = arith.constant 1 : i32
    %185 = arith.addi %184, %c1_i32_119 : i32
    %186 = arith.index_cast %185 : i32 to index
    %187 = memref.load %arg3[%186] : memref<128xi32, #tpu.memory_space<smem>>
    %188 = arith.index_cast %187 : i32 to index
    %c0_120 = arith.constant 0 : index
    %189 = vector.load %arg6[%188, %c0_120] : memref<32x128xf32, #tpu.memory_space<vmem>>, vector<1x128xf32>
    %c1_121 = arith.constant 1 : index
    %c3_122 = arith.constant 3 : index
    %c0_123 = arith.constant 0 : index
    %190 = vector.load %arg11[%c1_121, %c3_122, %c0_123] : memref<4x32x128xf32, #tpu.memory_space<vmem>>, vector<1x1x128xf32>
    %191 = vector.shape_cast %190 : vector<1x1x128xf32> to vector<1x128xf32>
    %192 = vector.shape_cast %189 : vector<1x128xf32> to vector<1x1x128xf32>
    tpu.vector_store %arg11[%c1_121, %c3_122, %c0_123], %192 {strides = array<i32>} : memref<4x32x128xf32, #tpu.memory_space<vmem>>, vector<1x1x128xf32>,
    %c3_i32_124 = arith.constant 3 : i32
    %193 = arith.addi %1, %c3_i32_124 : i32
    %c4_i32_125 = arith.constant 4 : i32
    %194 = arith.muli %193, %c4_i32_125 : i32
    %c2_i32_126 = arith.constant 2 : i32
    %195 = arith.addi %194, %c2_i32_126 : i32
    %196 = arith.index_cast %195 : i32 to index
    %197 = memref.load %arg3[%196] : memref<128xi32, #tpu.memory_space<smem>>
    %198 = arith.index_cast %197 : i32 to index
    %c0_127 = arith.constant 0 : index
    %199 = vector.load %arg6[%198, %c0_127] : memref<32x128xf32, #tpu.memory_space<vmem>>, vector<1x128xf32>
    %c2_128 = arith.constant 2 : index
    %c3_129 = arith.constant 3 : index
    %c0_130 = arith.constant 0 : index
    %200 = vector.load %arg11[%c2_128, %c3_129, %c0_130] : memref<4x32x128xf32, #tpu.memory_space<vmem>>, vector<1x1x128xf32>
    %201 = vector.shape_cast %200 : vector<1x1x128xf32> to vector<1x128xf32>
    %202 = vector.shape_cast %199 : vector<1x128xf32> to vector<1x1x128xf32>
    tpu.vector_store %arg11[%c2_128, %c3_129, %c0_130], %202 {strides = array<i32>} : memref<4x32x128xf32, #tpu.memory_space<vmem>>, vector<1x1x128xf32>,
    %c3_i32_131 = arith.constant 3 : i32
    %203 = arith.addi %1, %c3_i32_131 : i32
    %c4_i32_132 = arith.constant 4 : i32
    %204 = arith.muli %203, %c4_i32_132 : i32
    %c3_i32_133 = arith.constant 3 : i32
    %205 = arith.addi %204, %c3_i32_133 : i32
    %206 = arith.index_cast %205 : i32 to index
    %207 = memref.load %arg3[%206] : memref<128xi32, #tpu.memory_space<smem>>
    %208 = arith.index_cast %207 : i32 to index
    %c0_134 = arith.constant 0 : index
    %209 = vector.load %arg6[%208, %c0_134] : memref<32x128xf32, #tpu.memory_space<vmem>>, vector<1x128xf32>
    %c3_135 = arith.constant 3 : index
    %c3_136 = arith.constant 3 : index
    %c0_137 = arith.constant 0 : index
    %210 = vector.load %arg11[%c3_135, %c3_136, %c0_137] : memref<4x32x128xf32, #tpu.memory_space<vmem>>, vector<1x1x128xf32>
    %211 = vector.shape_cast %210 : vector<1x1x128xf32> to vector<1x128xf32>
    %212 = vector.shape_cast %209 : vector<1x128xf32> to vector<1x1x128xf32>
    tpu.vector_store %arg11[%c3_135, %c3_136, %c0_137], %212 {strides = array<i32>} : memref<4x32x128xf32, #tpu.memory_space<vmem>>, vector<1x1x128xf32>,
    %c4_i32_138 = arith.constant 4 : i32
    %213 = arith.addi %1, %c4_i32_138 : i32
    %214 = arith.index_cast %213 : i32 to index
    %215 = memref.load %arg1[%214] : memref<32xi32, #tpu.memory_space<smem>>
    %216 = arith.index_cast %215 : i32 to index
    %c0_139 = arith.constant 0 : index
    %217 = vector.load %arg5[%216, %c0_139] : memref<24x128xf32, #tpu.memory_space<vmem>>, vector<1x128xf32>
    %c4 = arith.constant 4 : index
    %c0_140 = arith.constant 0 : index
    %218 = vector.load %arg9[%c4, %c0_140] : memref<32x128xf32, #tpu.memory_space<vmem>>, vector<1x128xf32>
    tpu.vector_store %arg9[%c4, %c0_140], %217 {strides = array<i32>} : memref<32x128xf32, #tpu.memory_space<vmem>>, vector<1x128xf32>,
    %c4_i32_141 = arith.constant 4 : i32
    %219 = arith.addi %1, %c4_i32_141 : i32
    %220 = arith.index_cast %219 : i32 to index
    %221 = memref.load %arg2[%220] : memref<32xi32, #tpu.memory_space<smem>>
    %222 = arith.index_cast %221 : i32 to index
    %c0_142 = arith.constant 0 : index
    %223 = vector.load %arg6[%222, %c0_142] : memref<32x128xf32, #tpu.memory_space<vmem>>, vector<1x128xf32>
    %c4_143 = arith.constant 4 : index
    %c0_144 = arith.constant 0 : index
    %224 = vector.load %arg10[%c4_143, %c0_144] : memref<32x128xf32, #tpu.memory_space<vmem>>, vector<1x128xf32>
    tpu.vector_store %arg10[%c4_143, %c0_144], %223 {strides = array<i32>} : memref<32x128xf32, #tpu.memory_space<vmem>>, vector<1x128xf32>,
    %c4_i32_145 = arith.constant 4 : i32
    %225 = arith.addi %1, %c4_i32_145 : i32
    %c4_i32_146 = arith.constant 4 : i32
    %226 = arith.muli %225, %c4_i32_146 : i32
    %c0_i32_147 = arith.constant 0 : i32
    %227 = arith.addi %226, %c0_i32_147 : i32
    %228 = arith.index_cast %227 : i32 to index
    %229 = memref.load %arg3[%228] : memref<128xi32, #tpu.memory_space<smem>>
    %230 = arith.index_cast %229 : i32 to index
    %c0_148 = arith.constant 0 : index
    %231 = vector.load %arg6[%230, %c0_148] : memref<32x128xf32, #tpu.memory_space<vmem>>, vector<1x128xf32>
    %c0_149 = arith.constant 0 : index
    %c4_150 = arith.constant 4 : index
    %c0_151 = arith.constant 0 : index
    %232 = vector.load %arg11[%c0_149, %c4_150, %c0_151] : memref<4x32x128xf32, #tpu.memory_space<vmem>>, vector<1x1x128xf32>
    %233 = vector.shape_cast %232 : vector<1x1x128xf32> to vector<1x128xf32>
    %234 = vector.shape_cast %231 : vector<1x128xf32> to vector<1x1x128xf32>
    tpu.vector_store %arg11[%c0_149, %c4_150, %c0_151], %234 {strides = array<i32>} : memref<4x32x128xf32, #tpu.memory_space<vmem>>, vector<1x1x128xf32>,
    %c4_i32_152 = arith.constant 4 : i32
    %235 = arith.addi %1, %c4_i32_152 : i32
    %c4_i32_153 = arith.constant 4 : i32
    %236 = arith.muli %235, %c4_i32_153 : i32
    %c1_i32_154 = arith.constant 1 : i32
    %237 = arith.addi %236, %c1_i32_154 : i32
    %238 = arith.index_cast %237 : i32 to index
    %239 = memref.load %arg3[%238] : memref<128xi32, #tpu.memory_space<smem>>
    %240 = arith.index_cast %239 : i32 to index
    %c0_155 = arith.constant 0 : index
    %241 = vector.load %arg6[%240, %c0_155] : memref<32x128xf32, #tpu.memory_space<vmem>>, vector<1x128xf32>
    %c1_156 = arith.constant 1 : index
    %c4_157 = arith.constant 4 : index
    %c0_158 = arith.constant 0 : index
    %242 = vector.load %arg11[%c1_156, %c4_157, %c0_158] : memref<4x32x128xf32, #tpu.memory_space<vmem>>, vector<1x1x128xf32>
    %243 = vector.shape_cast %242 : vector<1x1x128xf32> to vector<1x128xf32>
    %244 = vector.shape_cast %241 : vector<1x128xf32> to vector<1x1x128xf32>
    tpu.vector_store %arg11[%c1_156, %c4_157, %c0_158], %244 {strides = array<i32>} : memref<4x32x128xf32, #tpu.memory_space<vmem>>, vector<1x1x128xf32>,
    %c4_i32_159 = arith.constant 4 : i32
    %245 = arith.addi %1, %c4_i32_159 : i32
    %c4_i32_160 = arith.constant 4 : i32
    %246 = arith.muli %245, %c4_i32_160 : i32
    %c2_i32_161 = arith.constant 2 : i32
    %247 = arith.addi %246, %c2_i32_161 : i32
    %248 = arith.index_cast %247 : i32 to index
    %249 = memref.load %arg3[%248] : memref<128xi32, #tpu.memory_space<smem>>
    %250 = arith.index_cast %249 : i32 to index
    %c0_162 = arith.constant 0 : index
    %251 = vector.load %arg6[%250, %c0_162] : memref<32x128xf32, #tpu.memory_space<vmem>>, vector<1x128xf32>
    %c2_163 = arith.constant 2 : index
    %c4_164 = arith.constant 4 : index
    %c0_165 = arith.constant 0 : index
    %252 = vector.load %arg11[%c2_163, %c4_164, %c0_165] : memref<4x32x128xf32, #tpu.memory_space<vmem>>, vector<1x1x128xf32>
    %253 = vector.shape_cast %252 : vector<1x1x128xf32> to vector<1x128xf32>
    %254 = vector.shape_cast %251 : vector<1x128xf32> to vector<1x1x128xf32>
    tpu.vector_store %arg11[%c2_163, %c4_164, %c0_165], %254 {strides = array<i32>} : memref<4x32x128xf32, #tpu.memory_space<vmem>>, vector<1x1x128xf32>,
    %c4_i32_166 = arith.constant 4 : i32
    %255 = arith.addi %1, %c4_i32_166 : i32
    %c4_i32_167 = arith.constant 4 : i32
    %256 = arith.muli %255, %c4_i32_167 : i32
    %c3_i32_168 = arith.constant 3 : i32
    %257 = arith.addi %256, %c3_i32_168 : i32
    %258 = arith.index_cast %257 : i32 to index
    %259 = memref.load %arg3[%258] : memref<128xi32, #tpu.memory_space<smem>>
    %260 = arith.index_cast %259 : i32 to index
    %c0_169 = arith.constant 0 : index
    %261 = vector.load %arg6[%260, %c0_169] : memref<32x128xf32, #tpu.memory_space<vmem>>, vector<1x128xf32>
    %c3_170 = arith.constant 3 : index
    %c4_171 = arith.constant 4 : index
    %c0_172 = arith.constant 0 : index
    %262 = vector.load %arg11[%c3_170, %c4_171, %c0_172] : memref<4x32x128xf32, #tpu.memory_space<vmem>>, vector<1x1x128xf32>
    %263 = vector.shape_cast %262 : vector<1x1x128xf32> to vector<1x128xf32>
    %264 = vector.shape_cast %261 : vector<1x128xf32> to vector<1x1x128xf32>
    tpu.vector_store %arg11[%c3_170, %c4_171, %c0_172], %264 {strides = array<i32>} : memref<4x32x128xf32, #tpu.memory_space<vmem>>, vector<1x1x128xf32>,
    %c5_i32 = arith.constant 5 : i32
    %265 = arith.addi %1, %c5_i32 : i32
    %266 = arith.index_cast %265 : i32 to index
    %267 = memref.load %arg1[%266] : memref<32xi32, #tpu.memory_space<smem>>
    %268 = arith.index_cast %267 : i32 to index
    %c0_173 = arith.constant 0 : index
    %269 = vector.load %arg5[%268, %c0_173] : memref<24x128xf32, #tpu.memory_space<vmem>>, vector<1x128xf32>
    %c5 = arith.constant 5 : index
    %c0_174 = arith.constant 0 : index
    %270 = vector.load %arg9[%c5, %c0_174] : memref<32x128xf32, #tpu.memory_space<vmem>>, vector<1x128xf32>
    tpu.vector_store %arg9[%c5, %c0_174], %269 {strides = array<i32>} : memref<32x128xf32, #tpu.memory_space<vmem>>, vector<1x128xf32>,
    %c5_i32_175 = arith.constant 5 : i32
    %271 = arith.addi %1, %c5_i32_175 : i32
    %272 = arith.index_cast %271 : i32 to index
    %273 = memref.load %arg2[%272] : memref<32xi32, #tpu.memory_space<smem>>
    %274 = arith.index_cast %273 : i32 to index
    %c0_176 = arith.constant 0 : index
    %275 = vector.load %arg6[%274, %c0_176] : memref<32x128xf32, #tpu.memory_space<vmem>>, vector<1x128xf32>
    %c5_177 = arith.constant 5 : index
    %c0_178 = arith.constant 0 : index
    %276 = vector.load %arg10[%c5_177, %c0_178] : memref<32x128xf32, #tpu.memory_space<vmem>>, vector<1x128xf32>
    tpu.vector_store %arg10[%c5_177, %c0_178], %275 {strides = array<i32>} : memref<32x128xf32, #tpu.memory_space<vmem>>, vector<1x128xf32>,
    %c5_i32_179 = arith.constant 5 : i32
    %277 = arith.addi %1, %c5_i32_179 : i32
    %c4_i32_180 = arith.constant 4 : i32
    %278 = arith.muli %277, %c4_i32_180 : i32
    %c0_i32_181 = arith.constant 0 : i32
    %279 = arith.addi %278, %c0_i32_181 : i32
    %280 = arith.index_cast %279 : i32 to index
    %281 = memref.load %arg3[%280] : memref<128xi32, #tpu.memory_space<smem>>
    %282 = arith.index_cast %281 : i32 to index
    %c0_182 = arith.constant 0 : index
    %283 = vector.load %arg6[%282, %c0_182] : memref<32x128xf32, #tpu.memory_space<vmem>>, vector<1x128xf32>
    %c0_183 = arith.constant 0 : index
    %c5_184 = arith.constant 5 : index
    %c0_185 = arith.constant 0 : index
    %284 = vector.load %arg11[%c0_183, %c5_184, %c0_185] : memref<4x32x128xf32, #tpu.memory_space<vmem>>, vector<1x1x128xf32>
    %285 = vector.shape_cast %284 : vector<1x1x128xf32> to vector<1x128xf32>
    %286 = vector.shape_cast %283 : vector<1x128xf32> to vector<1x1x128xf32>
    tpu.vector_store %arg11[%c0_183, %c5_184, %c0_185], %286 {strides = array<i32>} : memref<4x32x128xf32, #tpu.memory_space<vmem>>, vector<1x1x128xf32>,
    %c5_i32_186 = arith.constant 5 : i32
    %287 = arith.addi %1, %c5_i32_186 : i32
    %c4_i32_187 = arith.constant 4 : i32
    %288 = arith.muli %287, %c4_i32_187 : i32
    %c1_i32_188 = arith.constant 1 : i32
    %289 = arith.addi %288, %c1_i32_188 : i32
    %290 = arith.index_cast %289 : i32 to index
    %291 = memref.load %arg3[%290] : memref<128xi32, #tpu.memory_space<smem>>
    %292 = arith.index_cast %291 : i32 to index
    %c0_189 = arith.constant 0 : index
    %293 = vector.load %arg6[%292, %c0_189] : memref<32x128xf32, #tpu.memory_space<vmem>>, vector<1x128xf32>
    %c1_190 = arith.constant 1 : index
    %c5_191 = arith.constant 5 : index
    %c0_192 = arith.constant 0 : index
    %294 = vector.load %arg11[%c1_190, %c5_191, %c0_192] : memref<4x32x128xf32, #tpu.memory_space<vmem>>, vector<1x1x128xf32>
    %295 = vector.shape_cast %294 : vector<1x1x128xf32> to vector<1x128xf32>
    %296 = vector.shape_cast %293 : vector<1x128xf32> to vector<1x1x128xf32>
    tpu.vector_store %arg11[%c1_190, %c5_191, %c0_192], %296 {strides = array<i32>} : memref<4x32x128xf32, #tpu.memory_space<vmem>>, vector<1x1x128xf32>,
    %c5_i32_193 = arith.constant 5 : i32
    %297 = arith.addi %1, %c5_i32_193 : i32
    %c4_i32_194 = arith.constant 4 : i32
    %298 = arith.muli %297, %c4_i32_194 : i32
    %c2_i32_195 = arith.constant 2 : i32
    %299 = arith.addi %298, %c2_i32_195 : i32
    %300 = arith.index_cast %299 : i32 to index
    %301 = memref.load %arg3[%300] : memref<128xi32, #tpu.memory_space<smem>>
    %302 = arith.index_cast %301 : i32 to index
    %c0_196 = arith.constant 0 : index
    %303 = vector.load %arg6[%302, %c0_196] : memref<32x128xf32, #tpu.memory_space<vmem>>, vector<1x128xf32>
    %c2_197 = arith.constant 2 : index
    %c5_198 = arith.constant 5 : index
    %c0_199 = arith.constant 0 : index
    %304 = vector.load %arg11[%c2_197, %c5_198, %c0_199] : memref<4x32x128xf32, #tpu.memory_space<vmem>>, vector<1x1x128xf32>
    %305 = vector.shape_cast %304 : vector<1x1x128xf32> to vector<1x128xf32>
    %306 = vector.shape_cast %303 : vector<1x128xf32> to vector<1x1x128xf32>
    tpu.vector_store %arg11[%c2_197, %c5_198, %c0_199], %306 {strides = array<i32>} : memref<4x32x128xf32, #tpu.memory_space<vmem>>, vector<1x1x128xf32>,
    %c5_i32_200 = arith.constant 5 : i32
    %307 = arith.addi %1, %c5_i32_200 : i32
    %c4_i32_201 = arith.constant 4 : i32
    %308 = arith.muli %307, %c4_i32_201 : i32
    %c3_i32_202 = arith.constant 3 : i32
    %309 = arith.addi %308, %c3_i32_202 : i32
    %310 = arith.index_cast %309 : i32 to index
    %311 = memref.load %arg3[%310] : memref<128xi32, #tpu.memory_space<smem>>
    %312 = arith.index_cast %311 : i32 to index
    %c0_203 = arith.constant 0 : index
    %313 = vector.load %arg6[%312, %c0_203] : memref<32x128xf32, #tpu.memory_space<vmem>>, vector<1x128xf32>
    %c3_204 = arith.constant 3 : index
    %c5_205 = arith.constant 5 : index
    %c0_206 = arith.constant 0 : index
    %314 = vector.load %arg11[%c3_204, %c5_205, %c0_206] : memref<4x32x128xf32, #tpu.memory_space<vmem>>, vector<1x1x128xf32>
    %315 = vector.shape_cast %314 : vector<1x1x128xf32> to vector<1x128xf32>
    %316 = vector.shape_cast %313 : vector<1x128xf32> to vector<1x1x128xf32>
    tpu.vector_store %arg11[%c3_204, %c5_205, %c0_206], %316 {strides = array<i32>} : memref<4x32x128xf32, #tpu.memory_space<vmem>>, vector<1x1x128xf32>,
    %c6_i32 = arith.constant 6 : i32
    %317 = arith.addi %1, %c6_i32 : i32
    %318 = arith.index_cast %317 : i32 to index
    %319 = memref.load %arg1[%318] : memref<32xi32, #tpu.memory_space<smem>>
    %320 = arith.index_cast %319 : i32 to index
    %c0_207 = arith.constant 0 : index
    %321 = vector.load %arg5[%320, %c0_207] : memref<24x128xf32, #tpu.memory_space<vmem>>, vector<1x128xf32>
    %c6 = arith.constant 6 : index
    %c0_208 = arith.constant 0 : index
    %322 = vector.load %arg9[%c6, %c0_208] : memref<32x128xf32, #tpu.memory_space<vmem>>, vector<1x128xf32>
    tpu.vector_store %arg9[%c6, %c0_208], %321 {strides = array<i32>} : memref<32x128xf32, #tpu.memory_space<vmem>>, vector<1x128xf32>,
    %c6_i32_209 = arith.constant 6 : i32
    %323 = arith.addi %1, %c6_i32_209 : i32
    %324 = arith.index_cast %323 : i32 to index
    %325 = memref.load %arg2[%324] : memref<32xi32, #tpu.memory_space<smem>>
    %326 = arith.index_cast %325 : i32 to index
    %c0_210 = arith.constant 0 : index
    %327 = vector.load %arg6[%326, %c0_210] : memref<32x128xf32, #tpu.memory_space<vmem>>, vector<1x128xf32>
    %c6_211 = arith.constant 6 : index
    %c0_212 = arith.constant 0 : index
    %328 = vector.load %arg10[%c6_211, %c0_212] : memref<32x128xf32, #tpu.memory_space<vmem>>, vector<1x128xf32>
    tpu.vector_store %arg10[%c6_211, %c0_212], %327 {strides = array<i32>} : memref<32x128xf32, #tpu.memory_space<vmem>>, vector<1x128xf32>,
    %c6_i32_213 = arith.constant 6 : i32
    %329 = arith.addi %1, %c6_i32_213 : i32
    %c4_i32_214 = arith.constant 4 : i32
    %330 = arith.muli %329, %c4_i32_214 : i32
    %c0_i32_215 = arith.constant 0 : i32
    %331 = arith.addi %330, %c0_i32_215 : i32
    %332 = arith.index_cast %331 : i32 to index
    %333 = memref.load %arg3[%332] : memref<128xi32, #tpu.memory_space<smem>>
    %334 = arith.index_cast %333 : i32 to index
    %c0_216 = arith.constant 0 : index
    %335 = vector.load %arg6[%334, %c0_216] : memref<32x128xf32, #tpu.memory_space<vmem>>, vector<1x128xf32>
    %c0_217 = arith.constant 0 : index
    %c6_218 = arith.constant 6 : index
    %c0_219 = arith.constant 0 : index
    %336 = vector.load %arg11[%c0_217, %c6_218, %c0_219] : memref<4x32x128xf32, #tpu.memory_space<vmem>>, vector<1x1x128xf32>
    %337 = vector.shape_cast %336 : vector<1x1x128xf32> to vector<1x128xf32>
    %338 = vector.shape_cast %335 : vector<1x128xf32> to vector<1x1x128xf32>
    tpu.vector_store %arg11[%c0_217, %c6_218, %c0_219], %338 {strides = array<i32>} : memref<4x32x128xf32, #tpu.memory_space<vmem>>, vector<1x1x128xf32>,
    %c6_i32_220 = arith.constant 6 : i32
    %339 = arith.addi %1, %c6_i32_220 : i32
    %c4_i32_221 = arith.constant 4 : i32
    %340 = arith.muli %339, %c4_i32_221 : i32
    %c1_i32_222 = arith.constant 1 : i32
    %341 = arith.addi %340, %c1_i32_222 : i32
    %342 = arith.index_cast %341 : i32 to index
    %343 = memref.load %arg3[%342] : memref<128xi32, #tpu.memory_space<smem>>
    %344 = arith.index_cast %343 : i32 to index
    %c0_223 = arith.constant 0 : index
    %345 = vector.load %arg6[%344, %c0_223] : memref<32x128xf32, #tpu.memory_space<vmem>>, vector<1x128xf32>
    %c1_224 = arith.constant 1 : index
    %c6_225 = arith.constant 6 : index
    %c0_226 = arith.constant 0 : index
    %346 = vector.load %arg11[%c1_224, %c6_225, %c0_226] : memref<4x32x128xf32, #tpu.memory_space<vmem>>, vector<1x1x128xf32>
    %347 = vector.shape_cast %346 : vector<1x1x128xf32> to vector<1x128xf32>
    %348 = vector.shape_cast %345 : vector<1x128xf32> to vector<1x1x128xf32>
    tpu.vector_store %arg11[%c1_224, %c6_225, %c0_226], %348 {strides = array<i32>} : memref<4x32x128xf32, #tpu.memory_space<vmem>>, vector<1x1x128xf32>,
    %c6_i32_227 = arith.constant 6 : i32
    %349 = arith.addi %1, %c6_i32_227 : i32
    %c4_i32_228 = arith.constant 4 : i32
    %350 = arith.muli %349, %c4_i32_228 : i32
    %c2_i32_229 = arith.constant 2 : i32
    %351 = arith.addi %350, %c2_i32_229 : i32
    %352 = arith.index_cast %351 : i32 to index
    %353 = memref.load %arg3[%352] : memref<128xi32, #tpu.memory_space<smem>>
    %354 = arith.index_cast %353 : i32 to index
    %c0_230 = arith.constant 0 : index
    %355 = vector.load %arg6[%354, %c0_230] : memref<32x128xf32, #tpu.memory_space<vmem>>, vector<1x128xf32>
    %c2_231 = arith.constant 2 : index
    %c6_232 = arith.constant 6 : index
    %c0_233 = arith.constant 0 : index
    %356 = vector.load %arg11[%c2_231, %c6_232, %c0_233] : memref<4x32x128xf32, #tpu.memory_space<vmem>>, vector<1x1x128xf32>
    %357 = vector.shape_cast %356 : vector<1x1x128xf32> to vector<1x128xf32>
    %358 = vector.shape_cast %355 : vector<1x128xf32> to vector<1x1x128xf32>
    tpu.vector_store %arg11[%c2_231, %c6_232, %c0_233], %358 {strides = array<i32>} : memref<4x32x128xf32, #tpu.memory_space<vmem>>, vector<1x1x128xf32>,
    %c6_i32_234 = arith.constant 6 : i32
    %359 = arith.addi %1, %c6_i32_234 : i32
    %c4_i32_235 = arith.constant 4 : i32
    %360 = arith.muli %359, %c4_i32_235 : i32
    %c3_i32_236 = arith.constant 3 : i32
    %361 = arith.addi %360, %c3_i32_236 : i32
    %362 = arith.index_cast %361 : i32 to index
    %363 = memref.load %arg3[%362] : memref<128xi32, #tpu.memory_space<smem>>
    %364 = arith.index_cast %363 : i32 to index
    %c0_237 = arith.constant 0 : index
    %365 = vector.load %arg6[%364, %c0_237] : memref<32x128xf32, #tpu.memory_space<vmem>>, vector<1x128xf32>
    %c3_238 = arith.constant 3 : index
    %c6_239 = arith.constant 6 : index
    %c0_240 = arith.constant 0 : index
    %366 = vector.load %arg11[%c3_238, %c6_239, %c0_240] : memref<4x32x128xf32, #tpu.memory_space<vmem>>, vector<1x1x128xf32>
    %367 = vector.shape_cast %366 : vector<1x1x128xf32> to vector<1x128xf32>
    %368 = vector.shape_cast %365 : vector<1x128xf32> to vector<1x1x128xf32>
    tpu.vector_store %arg11[%c3_238, %c6_239, %c0_240], %368 {strides = array<i32>} : memref<4x32x128xf32, #tpu.memory_space<vmem>>, vector<1x1x128xf32>,
    %c7_i32 = arith.constant 7 : i32
    %369 = arith.addi %1, %c7_i32 : i32
    %370 = arith.index_cast %369 : i32 to index
    %371 = memref.load %arg1[%370] : memref<32xi32, #tpu.memory_space<smem>>
    %372 = arith.index_cast %371 : i32 to index
    %c0_241 = arith.constant 0 : index
    %373 = vector.load %arg5[%372, %c0_241] : memref<24x128xf32, #tpu.memory_space<vmem>>, vector<1x128xf32>
    %c7 = arith.constant 7 : index
    %c0_242 = arith.constant 0 : index
    %374 = vector.load %arg9[%c7, %c0_242] : memref<32x128xf32, #tpu.memory_space<vmem>>, vector<1x128xf32>
    tpu.vector_store %arg9[%c7, %c0_242], %373 {strides = array<i32>} : memref<32x128xf32, #tpu.memory_space<vmem>>, vector<1x128xf32>,
    %c7_i32_243 = arith.constant 7 : i32
    %375 = arith.addi %1, %c7_i32_243 : i32
    %376 = arith.index_cast %375 : i32 to index
    %377 = memref.load %arg2[%376] : memref<32xi32, #tpu.memory_space<smem>>
    %378 = arith.index_cast %377 : i32 to index
    %c0_244 = arith.constant 0 : index
    %379 = vector.load %arg6[%378, %c0_244] : memref<32x128xf32, #tpu.memory_space<vmem>>, vector<1x128xf32>
    %c7_245 = arith.constant 7 : index
    %c0_246 = arith.constant 0 : index
    %380 = vector.load %arg10[%c7_245, %c0_246] : memref<32x128xf32, #tpu.memory_space<vmem>>, vector<1x128xf32>
    tpu.vector_store %arg10[%c7_245, %c0_246], %379 {strides = array<i32>} : memref<32x128xf32, #tpu.memory_space<vmem>>, vector<1x128xf32>,
    %c7_i32_247 = arith.constant 7 : i32
    %381 = arith.addi %1, %c7_i32_247 : i32
    %c4_i32_248 = arith.constant 4 : i32
    %382 = arith.muli %381, %c4_i32_248 : i32
    %c0_i32_249 = arith.constant 0 : i32
    %383 = arith.addi %382, %c0_i32_249 : i32
    %384 = arith.index_cast %383 : i32 to index
    %385 = memref.load %arg3[%384] : memref<128xi32, #tpu.memory_space<smem>>
    %386 = arith.index_cast %385 : i32 to index
    %c0_250 = arith.constant 0 : index
    %387 = vector.load %arg6[%386, %c0_250] : memref<32x128xf32, #tpu.memory_space<vmem>>, vector<1x128xf32>
    %c0_251 = arith.constant 0 : index
    %c7_252 = arith.constant 7 : index
    %c0_253 = arith.constant 0 : index
    %388 = vector.load %arg11[%c0_251, %c7_252, %c0_253] : memref<4x32x128xf32, #tpu.memory_space<vmem>>, vector<1x1x128xf32>
    %389 = vector.shape_cast %388 : vector<1x1x128xf32> to vector<1x128xf32>
    %390 = vector.shape_cast %387 : vector<1x128xf32> to vector<1x1x128xf32>
    tpu.vector_store %arg11[%c0_251, %c7_252, %c0_253], %390 {strides = array<i32>} : memref<4x32x128xf32, #tpu.memory_space<vmem>>, vector<1x1x128xf32>,
    %c7_i32_254 = arith.constant 7 : i32
    %391 = arith.addi %1, %c7_i32_254 : i32
    %c4_i32_255 = arith.constant 4 : i32
    %392 = arith.muli %391, %c4_i32_255 : i32
    %c1_i32_256 = arith.constant 1 : i32
    %393 = arith.addi %392, %c1_i32_256 : i32
    %394 = arith.index_cast %393 : i32 to index
    %395 = memref.load %arg3[%394] : memref<128xi32, #tpu.memory_space<smem>>
    %396 = arith.index_cast %395 : i32 to index
    %c0_257 = arith.constant 0 : index
    %397 = vector.load %arg6[%396, %c0_257] : memref<32x128xf32, #tpu.memory_space<vmem>>, vector<1x128xf32>
    %c1_258 = arith.constant 1 : index
    %c7_259 = arith.constant 7 : index
    %c0_260 = arith.constant 0 : index
    %398 = vector.load %arg11[%c1_258, %c7_259, %c0_260] : memref<4x32x128xf32, #tpu.memory_space<vmem>>, vector<1x1x128xf32>
    %399 = vector.shape_cast %398 : vector<1x1x128xf32> to vector<1x128xf32>
    %400 = vector.shape_cast %397 : vector<1x128xf32> to vector<1x1x128xf32>
    tpu.vector_store %arg11[%c1_258, %c7_259, %c0_260], %400 {strides = array<i32>} : memref<4x32x128xf32, #tpu.memory_space<vmem>>, vector<1x1x128xf32>,
    %c7_i32_261 = arith.constant 7 : i32
    %401 = arith.addi %1, %c7_i32_261 : i32
    %c4_i32_262 = arith.constant 4 : i32
    %402 = arith.muli %401, %c4_i32_262 : i32
    %c2_i32_263 = arith.constant 2 : i32
    %403 = arith.addi %402, %c2_i32_263 : i32
    %404 = arith.index_cast %403 : i32 to index
    %405 = memref.load %arg3[%404] : memref<128xi32, #tpu.memory_space<smem>>
    %406 = arith.index_cast %405 : i32 to index
    %c0_264 = arith.constant 0 : index
    %407 = vector.load %arg6[%406, %c0_264] : memref<32x128xf32, #tpu.memory_space<vmem>>, vector<1x128xf32>
    %c2_265 = arith.constant 2 : index
    %c7_266 = arith.constant 7 : index
    %c0_267 = arith.constant 0 : index
    %408 = vector.load %arg11[%c2_265, %c7_266, %c0_267] : memref<4x32x128xf32, #tpu.memory_space<vmem>>, vector<1x1x128xf32>
    %409 = vector.shape_cast %408 : vector<1x1x128xf32> to vector<1x128xf32>
    %410 = vector.shape_cast %407 : vector<1x128xf32> to vector<1x1x128xf32>
    tpu.vector_store %arg11[%c2_265, %c7_266, %c0_267], %410 {strides = array<i32>} : memref<4x32x128xf32, #tpu.memory_space<vmem>>, vector<1x1x128xf32>,
    %c7_i32_268 = arith.constant 7 : i32
    %411 = arith.addi %1, %c7_i32_268 : i32
    %c4_i32_269 = arith.constant 4 : i32
    %412 = arith.muli %411, %c4_i32_269 : i32
    %c3_i32_270 = arith.constant 3 : i32
    %413 = arith.addi %412, %c3_i32_270 : i32
    %414 = arith.index_cast %413 : i32 to index
    %415 = memref.load %arg3[%414] : memref<128xi32, #tpu.memory_space<smem>>
    %416 = arith.index_cast %415 : i32 to index
    %c0_271 = arith.constant 0 : index
    %417 = vector.load %arg6[%416, %c0_271] : memref<32x128xf32, #tpu.memory_space<vmem>>, vector<1x128xf32>
    %c3_272 = arith.constant 3 : index
    %c7_273 = arith.constant 7 : index
    %c0_274 = arith.constant 0 : index
    %418 = vector.load %arg11[%c3_272, %c7_273, %c0_274] : memref<4x32x128xf32, #tpu.memory_space<vmem>>, vector<1x1x128xf32>
    %419 = vector.shape_cast %418 : vector<1x1x128xf32> to vector<1x128xf32>
    %420 = vector.shape_cast %417 : vector<1x128xf32> to vector<1x1x128xf32>
    tpu.vector_store %arg11[%c3_272, %c7_273, %c0_274], %420 {strides = array<i32>} : memref<4x32x128xf32, #tpu.memory_space<vmem>>, vector<1x1x128xf32>,
    %c8_i32 = arith.constant 8 : i32
    %421 = arith.addi %1, %c8_i32 : i32
    %422 = arith.index_cast %421 : i32 to index
    %423 = memref.load %arg1[%422] : memref<32xi32, #tpu.memory_space<smem>>
    %424 = arith.index_cast %423 : i32 to index
    %c0_275 = arith.constant 0 : index
    %425 = vector.load %arg5[%424, %c0_275] : memref<24x128xf32, #tpu.memory_space<vmem>>, vector<1x128xf32>
    %c8 = arith.constant 8 : index
    %c0_276 = arith.constant 0 : index
    %426 = vector.load %arg9[%c8, %c0_276] : memref<32x128xf32, #tpu.memory_space<vmem>>, vector<1x128xf32>
    tpu.vector_store %arg9[%c8, %c0_276], %425 {strides = array<i32>} : memref<32x128xf32, #tpu.memory_space<vmem>>, vector<1x128xf32>,
    %c8_i32_277 = arith.constant 8 : i32
    %427 = arith.addi %1, %c8_i32_277 : i32
    %428 = arith.index_cast %427 : i32 to index
    %429 = memref.load %arg2[%428] : memref<32xi32, #tpu.memory_space<smem>>
    %430 = arith.index_cast %429 : i32 to index
    %c0_278 = arith.constant 0 : index
    %431 = vector.load %arg6[%430, %c0_278] : memref<32x128xf32, #tpu.memory_space<vmem>>, vector<1x128xf32>
    %c8_279 = arith.constant 8 : index
    %c0_280 = arith.constant 0 : index
    %432 = vector.load %arg10[%c8_279, %c0_280] : memref<32x128xf32, #tpu.memory_space<vmem>>, vector<1x128xf32>
    tpu.vector_store %arg10[%c8_279, %c0_280], %431 {strides = array<i32>} : memref<32x128xf32, #tpu.memory_space<vmem>>, vector<1x128xf32>,
    %c8_i32_281 = arith.constant 8 : i32
    %433 = arith.addi %1, %c8_i32_281 : i32
    %c4_i32_282 = arith.constant 4 : i32
    %434 = arith.muli %433, %c4_i32_282 : i32
    %c0_i32_283 = arith.constant 0 : i32
    %435 = arith.addi %434, %c0_i32_283 : i32
    %436 = arith.index_cast %435 : i32 to index
    %437 = memref.load %arg3[%436] : memref<128xi32, #tpu.memory_space<smem>>
    %438 = arith.index_cast %437 : i32 to index
    %c0_284 = arith.constant 0 : index
    %439 = vector.load %arg6[%438, %c0_284] : memref<32x128xf32, #tpu.memory_space<vmem>>, vector<1x128xf32>
    %c0_285 = arith.constant 0 : index
    %c8_286 = arith.constant 8 : index
    %c0_287 = arith.constant 0 : index
    %440 = vector.load %arg11[%c0_285, %c8_286, %c0_287] : memref<4x32x128xf32, #tpu.memory_space<vmem>>, vector<1x1x128xf32>
    %441 = vector.shape_cast %440 : vector<1x1x128xf32> to vector<1x128xf32>
    %442 = vector.shape_cast %439 : vector<1x128xf32> to vector<1x1x128xf32>
    tpu.vector_store %arg11[%c0_285, %c8_286, %c0_287], %442 {strides = array<i32>} : memref<4x32x128xf32, #tpu.memory_space<vmem>>, vector<1x1x128xf32>,
    %c8_i32_288 = arith.constant 8 : i32
    %443 = arith.addi %1, %c8_i32_288 : i32
    %c4_i32_289 = arith.constant 4 : i32
    %444 = arith.muli %443, %c4_i32_289 : i32
    %c1_i32_290 = arith.constant 1 : i32
    %445 = arith.addi %444, %c1_i32_290 : i32
    %446 = arith.index_cast %445 : i32 to index
    %447 = memref.load %arg3[%446] : memref<128xi32, #tpu.memory_space<smem>>
    %448 = arith.index_cast %447 : i32 to index
    %c0_291 = arith.constant 0 : index
    %449 = vector.load %arg6[%448, %c0_291] : memref<32x128xf32, #tpu.memory_space<vmem>>, vector<1x128xf32>
    %c1_292 = arith.constant 1 : index
    %c8_293 = arith.constant 8 : index
    %c0_294 = arith.constant 0 : index
    %450 = vector.load %arg11[%c1_292, %c8_293, %c0_294] : memref<4x32x128xf32, #tpu.memory_space<vmem>>, vector<1x1x128xf32>
    %451 = vector.shape_cast %450 : vector<1x1x128xf32> to vector<1x128xf32>
    %452 = vector.shape_cast %449 : vector<1x128xf32> to vector<1x1x128xf32>
    tpu.vector_store %arg11[%c1_292, %c8_293, %c0_294], %452 {strides = array<i32>} : memref<4x32x128xf32, #tpu.memory_space<vmem>>, vector<1x1x128xf32>,
    %c8_i32_295 = arith.constant 8 : i32
    %453 = arith.addi %1, %c8_i32_295 : i32
    %c4_i32_296 = arith.constant 4 : i32
    %454 = arith.muli %453, %c4_i32_296 : i32
    %c2_i32_297 = arith.constant 2 : i32
    %455 = arith.addi %454, %c2_i32_297 : i32
    %456 = arith.index_cast %455 : i32 to index
    %457 = memref.load %arg3[%456] : memref<128xi32, #tpu.memory_space<smem>>
    %458 = arith.index_cast %457 : i32 to index
    %c0_298 = arith.constant 0 : index
    %459 = vector.load %arg6[%458, %c0_298] : memref<32x128xf32, #tpu.memory_space<vmem>>, vector<1x128xf32>
    %c2_299 = arith.constant 2 : index
    %c8_300 = arith.constant 8 : index
    %c0_301 = arith.constant 0 : index
    %460 = vector.load %arg11[%c2_299, %c8_300, %c0_301] : memref<4x32x128xf32, #tpu.memory_space<vmem>>, vector<1x1x128xf32>
    %461 = vector.shape_cast %460 : vector<1x1x128xf32> to vector<1x128xf32>
    %462 = vector.shape_cast %459 : vector<1x128xf32> to vector<1x1x128xf32>
    tpu.vector_store %arg11[%c2_299, %c8_300, %c0_301], %462 {strides = array<i32>} : memref<4x32x128xf32, #tpu.memory_space<vmem>>, vector<1x1x128xf32>,
    %c8_i32_302 = arith.constant 8 : i32
    %463 = arith.addi %1, %c8_i32_302 : i32
    %c4_i32_303 = arith.constant 4 : i32
    %464 = arith.muli %463, %c4_i32_303 : i32
    %c3_i32_304 = arith.constant 3 : i32
    %465 = arith.addi %464, %c3_i32_304 : i32
    %466 = arith.index_cast %465 : i32 to index
    %467 = memref.load %arg3[%466] : memref<128xi32, #tpu.memory_space<smem>>
    %468 = arith.index_cast %467 : i32 to index
    %c0_305 = arith.constant 0 : index
    %469 = vector.load %arg6[%468, %c0_305] : memref<32x128xf32, #tpu.memory_space<vmem>>, vector<1x128xf32>
    %c3_306 = arith.constant 3 : index
    %c8_307 = arith.constant 8 : index
    %c0_308 = arith.constant 0 : index
    %470 = vector.load %arg11[%c3_306, %c8_307, %c0_308] : memref<4x32x128xf32, #tpu.memory_space<vmem>>, vector<1x1x128xf32>
    %471 = vector.shape_cast %470 : vector<1x1x128xf32> to vector<1x128xf32>
    %472 = vector.shape_cast %469 : vector<1x128xf32> to vector<1x1x128xf32>
    tpu.vector_store %arg11[%c3_306, %c8_307, %c0_308], %472 {strides = array<i32>} : memref<4x32x128xf32, #tpu.memory_space<vmem>>, vector<1x1x128xf32>,
    %c9_i32 = arith.constant 9 : i32
    %473 = arith.addi %1, %c9_i32 : i32
    %474 = arith.index_cast %473 : i32 to index
    %475 = memref.load %arg1[%474] : memref<32xi32, #tpu.memory_space<smem>>
    %476 = arith.index_cast %475 : i32 to index
    %c0_309 = arith.constant 0 : index
    %477 = vector.load %arg5[%476, %c0_309] : memref<24x128xf32, #tpu.memory_space<vmem>>, vector<1x128xf32>
    %c9 = arith.constant 9 : index
    %c0_310 = arith.constant 0 : index
    %478 = vector.load %arg9[%c9, %c0_310] : memref<32x128xf32, #tpu.memory_space<vmem>>, vector<1x128xf32>
    tpu.vector_store %arg9[%c9, %c0_310], %477 {strides = array<i32>} : memref<32x128xf32, #tpu.memory_space<vmem>>, vector<1x128xf32>,
    %c9_i32_311 = arith.constant 9 : i32
    %479 = arith.addi %1, %c9_i32_311 : i32
    %480 = arith.index_cast %479 : i32 to index
    %481 = memref.load %arg2[%480] : memref<32xi32, #tpu.memory_space<smem>>
    %482 = arith.index_cast %481 : i32 to index
    %c0_312 = arith.constant 0 : index
    %483 = vector.load %arg6[%482, %c0_312] : memref<32x128xf32, #tpu.memory_space<vmem>>, vector<1x128xf32>
    %c9_313 = arith.constant 9 : index
    %c0_314 = arith.constant 0 : index
    %484 = vector.load %arg10[%c9_313, %c0_314] : memref<32x128xf32, #tpu.memory_space<vmem>>, vector<1x128xf32>
    tpu.vector_store %arg10[%c9_313, %c0_314], %483 {strides = array<i32>} : memref<32x128xf32, #tpu.memory_space<vmem>>, vector<1x128xf32>,
    %c9_i32_315 = arith.constant 9 : i32
    %485 = arith.addi %1, %c9_i32_315 : i32
    %c4_i32_316 = arith.constant 4 : i32
    %486 = arith.muli %485, %c4_i32_316 : i32
    %c0_i32_317 = arith.constant 0 : i32
    %487 = arith.addi %486, %c0_i32_317 : i32
    %488 = arith.index_cast %487 : i32 to index
    %489 = memref.load %arg3[%488] : memref<128xi32, #tpu.memory_space<smem>>
    %490 = arith.index_cast %489 : i32 to index
    %c0_318 = arith.constant 0 : index
    %491 = vector.load %arg6[%490, %c0_318] : memref<32x128xf32, #tpu.memory_space<vmem>>, vector<1x128xf32>
    %c0_319 = arith.constant 0 : index
    %c9_320 = arith.constant 9 : index
    %c0_321 = arith.constant 0 : index
    %492 = vector.load %arg11[%c0_319, %c9_320, %c0_321] : memref<4x32x128xf32, #tpu.memory_space<vmem>>, vector<1x1x128xf32>
    %493 = vector.shape_cast %492 : vector<1x1x128xf32> to vector<1x128xf32>
    %494 = vector.shape_cast %491 : vector<1x128xf32> to vector<1x1x128xf32>
    tpu.vector_store %arg11[%c0_319, %c9_320, %c0_321], %494 {strides = array<i32>} : memref<4x32x128xf32, #tpu.memory_space<vmem>>, vector<1x1x128xf32>,
    %c9_i32_322 = arith.constant 9 : i32
    %495 = arith.addi %1, %c9_i32_322 : i32
    %c4_i32_323 = arith.constant 4 : i32
    %496 = arith.muli %495, %c4_i32_323 : i32
    %c1_i32_324 = arith.constant 1 : i32
    %497 = arith.addi %496, %c1_i32_324 : i32
    %498 = arith.index_cast %497 : i32 to index
    %499 = memref.load %arg3[%498] : memref<128xi32, #tpu.memory_space<smem>>
    %500 = arith.index_cast %499 : i32 to index
    %c0_325 = arith.constant 0 : index
    %501 = vector.load %arg6[%500, %c0_325] : memref<32x128xf32, #tpu.memory_space<vmem>>, vector<1x128xf32>
    %c1_326 = arith.constant 1 : index
    %c9_327 = arith.constant 9 : index
    %c0_328 = arith.constant 0 : index
    %502 = vector.load %arg11[%c1_326, %c9_327, %c0_328] : memref<4x32x128xf32, #tpu.memory_space<vmem>>, vector<1x1x128xf32>
    %503 = vector.shape_cast %502 : vector<1x1x128xf32> to vector<1x128xf32>
    %504 = vector.shape_cast %501 : vector<1x128xf32> to vector<1x1x128xf32>
    tpu.vector_store %arg11[%c1_326, %c9_327, %c0_328], %504 {strides = array<i32>} : memref<4x32x128xf32, #tpu.memory_space<vmem>>, vector<1x1x128xf32>,
    %c9_i32_329 = arith.constant 9 : i32
    %505 = arith.addi %1, %c9_i32_329 : i32
    %c4_i32_330 = arith.constant 4 : i32
    %506 = arith.muli %505, %c4_i32_330 : i32
    %c2_i32_331 = arith.constant 2 : i32
    %507 = arith.addi %506, %c2_i32_331 : i32
    %508 = arith.index_cast %507 : i32 to index
    %509 = memref.load %arg3[%508] : memref<128xi32, #tpu.memory_space<smem>>
    %510 = arith.index_cast %509 : i32 to index
    %c0_332 = arith.constant 0 : index
    %511 = vector.load %arg6[%510, %c0_332] : memref<32x128xf32, #tpu.memory_space<vmem>>, vector<1x128xf32>
    %c2_333 = arith.constant 2 : index
    %c9_334 = arith.constant 9 : index
    %c0_335 = arith.constant 0 : index
    %512 = vector.load %arg11[%c2_333, %c9_334, %c0_335] : memref<4x32x128xf32, #tpu.memory_space<vmem>>, vector<1x1x128xf32>
    %513 = vector.shape_cast %512 : vector<1x1x128xf32> to vector<1x128xf32>
    %514 = vector.shape_cast %511 : vector<1x128xf32> to vector<1x1x128xf32>
    tpu.vector_store %arg11[%c2_333, %c9_334, %c0_335], %514 {strides = array<i32>} : memref<4x32x128xf32, #tpu.memory_space<vmem>>, vector<1x1x128xf32>,
    %c9_i32_336 = arith.constant 9 : i32
    %515 = arith.addi %1, %c9_i32_336 : i32
    %c4_i32_337 = arith.constant 4 : i32
    %516 = arith.muli %515, %c4_i32_337 : i32
    %c3_i32_338 = arith.constant 3 : i32
    %517 = arith.addi %516, %c3_i32_338 : i32
    %518 = arith.index_cast %517 : i32 to index
    %519 = memref.load %arg3[%518] : memref<128xi32, #tpu.memory_space<smem>>
    %520 = arith.index_cast %519 : i32 to index
    %c0_339 = arith.constant 0 : index
    %521 = vector.load %arg6[%520, %c0_339] : memref<32x128xf32, #tpu.memory_space<vmem>>, vector<1x128xf32>
    %c3_340 = arith.constant 3 : index
    %c9_341 = arith.constant 9 : index
    %c0_342 = arith.constant 0 : index
    %522 = vector.load %arg11[%c3_340, %c9_341, %c0_342] : memref<4x32x128xf32, #tpu.memory_space<vmem>>, vector<1x1x128xf32>
    %523 = vector.shape_cast %522 : vector<1x1x128xf32> to vector<1x128xf32>
    %524 = vector.shape_cast %521 : vector<1x128xf32> to vector<1x1x128xf32>
    tpu.vector_store %arg11[%c3_340, %c9_341, %c0_342], %524 {strides = array<i32>} : memref<4x32x128xf32, #tpu.memory_space<vmem>>, vector<1x1x128xf32>,
    %c10_i32 = arith.constant 10 : i32
    %525 = arith.addi %1, %c10_i32 : i32
    %526 = arith.index_cast %525 : i32 to index
    %527 = memref.load %arg1[%526] : memref<32xi32, #tpu.memory_space<smem>>
    %528 = arith.index_cast %527 : i32 to index
    %c0_343 = arith.constant 0 : index
    %529 = vector.load %arg5[%528, %c0_343] : memref<24x128xf32, #tpu.memory_space<vmem>>, vector<1x128xf32>
    %c10 = arith.constant 10 : index
    %c0_344 = arith.constant 0 : index
    %530 = vector.load %arg9[%c10, %c0_344] : memref<32x128xf32, #tpu.memory_space<vmem>>, vector<1x128xf32>
    tpu.vector_store %arg9[%c10, %c0_344], %529 {strides = array<i32>} : memref<32x128xf32, #tpu.memory_space<vmem>>, vector<1x128xf32>,
    %c10_i32_345 = arith.constant 10 : i32
    %531 = arith.addi %1, %c10_i32_345 : i32
    %532 = arith.index_cast %531 : i32 to index
    %533 = memref.load %arg2[%532] : memref<32xi32, #tpu.memory_space<smem>>
    %534 = arith.index_cast %533 : i32 to index
    %c0_346 = arith.constant 0 : index
    %535 = vector.load %arg6[%534, %c0_346] : memref<32x128xf32, #tpu.memory_space<vmem>>, vector<1x128xf32>
    %c10_347 = arith.constant 10 : index
    %c0_348 = arith.constant 0 : index
    %536 = vector.load %arg10[%c10_347, %c0_348] : memref<32x128xf32, #tpu.memory_space<vmem>>, vector<1x128xf32>
    tpu.vector_store %arg10[%c10_347, %c0_348], %535 {strides = array<i32>} : memref<32x128xf32, #tpu.memory_space<vmem>>, vector<1x128xf32>,
    %c10_i32_349 = arith.constant 10 : i32
    %537 = arith.addi %1, %c10_i32_349 : i32
    %c4_i32_350 = arith.constant 4 : i32
    %538 = arith.muli %537, %c4_i32_350 : i32
    %c0_i32_351 = arith.constant 0 : i32
    %539 = arith.addi %538, %c0_i32_351 : i32
    %540 = arith.index_cast %539 : i32 to index
    %541 = memref.load %arg3[%540] : memref<128xi32, #tpu.memory_space<smem>>
    %542 = arith.index_cast %541 : i32 to index
    %c0_352 = arith.constant 0 : index
    %543 = vector.load %arg6[%542, %c0_352] : memref<32x128xf32, #tpu.memory_space<vmem>>, vector<1x128xf32>
    %c0_353 = arith.constant 0 : index
    %c10_354 = arith.constant 10 : index
    %c0_355 = arith.constant 0 : index
    %544 = vector.load %arg11[%c0_353, %c10_354, %c0_355] : memref<4x32x128xf32, #tpu.memory_space<vmem>>, vector<1x1x128xf32>
    %545 = vector.shape_cast %544 : vector<1x1x128xf32> to vector<1x128xf32>
    %546 = vector.shape_cast %543 : vector<1x128xf32> to vector<1x1x128xf32>
    tpu.vector_store %arg11[%c0_353, %c10_354, %c0_355], %546 {strides = array<i32>} : memref<4x32x128xf32, #tpu.memory_space<vmem>>, vector<1x1x128xf32>,
    %c10_i32_356 = arith.constant 10 : i32
    %547 = arith.addi %1, %c10_i32_356 : i32
    %c4_i32_357 = arith.constant 4 : i32
    %548 = arith.muli %547, %c4_i32_357 : i32
    %c1_i32_358 = arith.constant 1 : i32
    %549 = arith.addi %548, %c1_i32_358 : i32
    %550 = arith.index_cast %549 : i32 to index
    %551 = memref.load %arg3[%550] : memref<128xi32, #tpu.memory_space<smem>>
    %552 = arith.index_cast %551 : i32 to index
    %c0_359 = arith.constant 0 : index
    %553 = vector.load %arg6[%552, %c0_359] : memref<32x128xf32, #tpu.memory_space<vmem>>, vector<1x128xf32>
    %c1_360 = arith.constant 1 : index
    %c10_361 = arith.constant 10 : index
    %c0_362 = arith.constant 0 : index
    %554 = vector.load %arg11[%c1_360, %c10_361, %c0_362] : memref<4x32x128xf32, #tpu.memory_space<vmem>>, vector<1x1x128xf32>
    %555 = vector.shape_cast %554 : vector<1x1x128xf32> to vector<1x128xf32>
    %556 = vector.shape_cast %553 : vector<1x128xf32> to vector<1x1x128xf32>
    tpu.vector_store %arg11[%c1_360, %c10_361, %c0_362], %556 {strides = array<i32>} : memref<4x32x128xf32, #tpu.memory_space<vmem>>, vector<1x1x128xf32>,
    %c10_i32_363 = arith.constant 10 : i32
    %557 = arith.addi %1, %c10_i32_363 : i32
    %c4_i32_364 = arith.constant 4 : i32
    %558 = arith.muli %557, %c4_i32_364 : i32
    %c2_i32_365 = arith.constant 2 : i32
    %559 = arith.addi %558, %c2_i32_365 : i32
    %560 = arith.index_cast %559 : i32 to index
    %561 = memref.load %arg3[%560] : memref<128xi32, #tpu.memory_space<smem>>
    %562 = arith.index_cast %561 : i32 to index
    %c0_366 = arith.constant 0 : index
    %563 = vector.load %arg6[%562, %c0_366] : memref<32x128xf32, #tpu.memory_space<vmem>>, vector<1x128xf32>
    %c2_367 = arith.constant 2 : index
    %c10_368 = arith.constant 10 : index
    %c0_369 = arith.constant 0 : index
    %564 = vector.load %arg11[%c2_367, %c10_368, %c0_369] : memref<4x32x128xf32, #tpu.memory_space<vmem>>, vector<1x1x128xf32>
    %565 = vector.shape_cast %564 : vector<1x1x128xf32> to vector<1x128xf32>
    %566 = vector.shape_cast %563 : vector<1x128xf32> to vector<1x1x128xf32>
    tpu.vector_store %arg11[%c2_367, %c10_368, %c0_369], %566 {strides = array<i32>} : memref<4x32x128xf32, #tpu.memory_space<vmem>>, vector<1x1x128xf32>,
    %c10_i32_370 = arith.constant 10 : i32
    %567 = arith.addi %1, %c10_i32_370 : i32
    %c4_i32_371 = arith.constant 4 : i32
    %568 = arith.muli %567, %c4_i32_371 : i32
    %c3_i32_372 = arith.constant 3 : i32
    %569 = arith.addi %568, %c3_i32_372 : i32
    %570 = arith.index_cast %569 : i32 to index
    %571 = memref.load %arg3[%570] : memref<128xi32, #tpu.memory_space<smem>>
    %572 = arith.index_cast %571 : i32 to index
    %c0_373 = arith.constant 0 : index
    %573 = vector.load %arg6[%572, %c0_373] : memref<32x128xf32, #tpu.memory_space<vmem>>, vector<1x128xf32>
    %c3_374 = arith.constant 3 : index
    %c10_375 = arith.constant 10 : index
    %c0_376 = arith.constant 0 : index
    %574 = vector.load %arg11[%c3_374, %c10_375, %c0_376] : memref<4x32x128xf32, #tpu.memory_space<vmem>>, vector<1x1x128xf32>
    %575 = vector.shape_cast %574 : vector<1x1x128xf32> to vector<1x128xf32>
    %576 = vector.shape_cast %573 : vector<1x128xf32> to vector<1x1x128xf32>
    tpu.vector_store %arg11[%c3_374, %c10_375, %c0_376], %576 {strides = array<i32>} : memref<4x32x128xf32, #tpu.memory_space<vmem>>, vector<1x1x128xf32>,
    %c11_i32 = arith.constant 11 : i32
    %577 = arith.addi %1, %c11_i32 : i32
    %578 = arith.index_cast %577 : i32 to index
    %579 = memref.load %arg1[%578] : memref<32xi32, #tpu.memory_space<smem>>
    %580 = arith.index_cast %579 : i32 to index
    %c0_377 = arith.constant 0 : index
    %581 = vector.load %arg5[%580, %c0_377] : memref<24x128xf32, #tpu.memory_space<vmem>>, vector<1x128xf32>
    %c11 = arith.constant 11 : index
    %c0_378 = arith.constant 0 : index
    %582 = vector.load %arg9[%c11, %c0_378] : memref<32x128xf32, #tpu.memory_space<vmem>>, vector<1x128xf32>
    tpu.vector_store %arg9[%c11, %c0_378], %581 {strides = array<i32>} : memref<32x128xf32, #tpu.memory_space<vmem>>, vector<1x128xf32>,
    %c11_i32_379 = arith.constant 11 : i32
    %583 = arith.addi %1, %c11_i32_379 : i32
    %584 = arith.index_cast %583 : i32 to index
    %585 = memref.load %arg2[%584] : memref<32xi32, #tpu.memory_space<smem>>
    %586 = arith.index_cast %585 : i32 to index
    %c0_380 = arith.constant 0 : index
    %587 = vector.load %arg6[%586, %c0_380] : memref<32x128xf32, #tpu.memory_space<vmem>>, vector<1x128xf32>
    %c11_381 = arith.constant 11 : index
    %c0_382 = arith.constant 0 : index
    %588 = vector.load %arg10[%c11_381, %c0_382] : memref<32x128xf32, #tpu.memory_space<vmem>>, vector<1x128xf32>
    tpu.vector_store %arg10[%c11_381, %c0_382], %587 {strides = array<i32>} : memref<32x128xf32, #tpu.memory_space<vmem>>, vector<1x128xf32>,
    %c11_i32_383 = arith.constant 11 : i32
    %589 = arith.addi %1, %c11_i32_383 : i32
    %c4_i32_384 = arith.constant 4 : i32
    %590 = arith.muli %589, %c4_i32_384 : i32
    %c0_i32_385 = arith.constant 0 : i32
    %591 = arith.addi %590, %c0_i32_385 : i32
    %592 = arith.index_cast %591 : i32 to index
    %593 = memref.load %arg3[%592] : memref<128xi32, #tpu.memory_space<smem>>
    %594 = arith.index_cast %593 : i32 to index
    %c0_386 = arith.constant 0 : index
    %595 = vector.load %arg6[%594, %c0_386] : memref<32x128xf32, #tpu.memory_space<vmem>>, vector<1x128xf32>
    %c0_387 = arith.constant 0 : index
    %c11_388 = arith.constant 11 : index
    %c0_389 = arith.constant 0 : index
    %596 = vector.load %arg11[%c0_387, %c11_388, %c0_389] : memref<4x32x128xf32, #tpu.memory_space<vmem>>, vector<1x1x128xf32>
    %597 = vector.shape_cast %596 : vector<1x1x128xf32> to vector<1x128xf32>
    %598 = vector.shape_cast %595 : vector<1x128xf32> to vector<1x1x128xf32>
    tpu.vector_store %arg11[%c0_387, %c11_388, %c0_389], %598 {strides = array<i32>} : memref<4x32x128xf32, #tpu.memory_space<vmem>>, vector<1x1x128xf32>,
    %c11_i32_390 = arith.constant 11 : i32
    %599 = arith.addi %1, %c11_i32_390 : i32
    %c4_i32_391 = arith.constant 4 : i32
    %600 = arith.muli %599, %c4_i32_391 : i32
    %c1_i32_392 = arith.constant 1 : i32
    %601 = arith.addi %600, %c1_i32_392 : i32
    %602 = arith.index_cast %601 : i32 to index
    %603 = memref.load %arg3[%602] : memref<128xi32, #tpu.memory_space<smem>>
    %604 = arith.index_cast %603 : i32 to index
    %c0_393 = arith.constant 0 : index
    %605 = vector.load %arg6[%604, %c0_393] : memref<32x128xf32, #tpu.memory_space<vmem>>, vector<1x128xf32>
    %c1_394 = arith.constant 1 : index
    %c11_395 = arith.constant 11 : index
    %c0_396 = arith.constant 0 : index
    %606 = vector.load %arg11[%c1_394, %c11_395, %c0_396] : memref<4x32x128xf32, #tpu.memory_space<vmem>>, vector<1x1x128xf32>
    %607 = vector.shape_cast %606 : vector<1x1x128xf32> to vector<1x128xf32>
    %608 = vector.shape_cast %605 : vector<1x128xf32> to vector<1x1x128xf32>
    tpu.vector_store %arg11[%c1_394, %c11_395, %c0_396], %608 {strides = array<i32>} : memref<4x32x128xf32, #tpu.memory_space<vmem>>, vector<1x1x128xf32>,
    %c11_i32_397 = arith.constant 11 : i32
    %609 = arith.addi %1, %c11_i32_397 : i32
    %c4_i32_398 = arith.constant 4 : i32
    %610 = arith.muli %609, %c4_i32_398 : i32
    %c2_i32_399 = arith.constant 2 : i32
    %611 = arith.addi %610, %c2_i32_399 : i32
    %612 = arith.index_cast %611 : i32 to index
    %613 = memref.load %arg3[%612] : memref<128xi32, #tpu.memory_space<smem>>
    %614 = arith.index_cast %613 : i32 to index
    %c0_400 = arith.constant 0 : index
    %615 = vector.load %arg6[%614, %c0_400] : memref<32x128xf32, #tpu.memory_space<vmem>>, vector<1x128xf32>
    %c2_401 = arith.constant 2 : index
    %c11_402 = arith.constant 11 : index
    %c0_403 = arith.constant 0 : index
    %616 = vector.load %arg11[%c2_401, %c11_402, %c0_403] : memref<4x32x128xf32, #tpu.memory_space<vmem>>, vector<1x1x128xf32>
    %617 = vector.shape_cast %616 : vector<1x1x128xf32> to vector<1x128xf32>
    %618 = vector.shape_cast %615 : vector<1x128xf32> to vector<1x1x128xf32>
    tpu.vector_store %arg11[%c2_401, %c11_402, %c0_403], %618 {strides = array<i32>} : memref<4x32x128xf32, #tpu.memory_space<vmem>>, vector<1x1x128xf32>,
    %c11_i32_404 = arith.constant 11 : i32
    %619 = arith.addi %1, %c11_i32_404 : i32
    %c4_i32_405 = arith.constant 4 : i32
    %620 = arith.muli %619, %c4_i32_405 : i32
    %c3_i32_406 = arith.constant 3 : i32
    %621 = arith.addi %620, %c3_i32_406 : i32
    %622 = arith.index_cast %621 : i32 to index
    %623 = memref.load %arg3[%622] : memref<128xi32, #tpu.memory_space<smem>>
    %624 = arith.index_cast %623 : i32 to index
    %c0_407 = arith.constant 0 : index
    %625 = vector.load %arg6[%624, %c0_407] : memref<32x128xf32, #tpu.memory_space<vmem>>, vector<1x128xf32>
    %c3_408 = arith.constant 3 : index
    %c11_409 = arith.constant 11 : index
    %c0_410 = arith.constant 0 : index
    %626 = vector.load %arg11[%c3_408, %c11_409, %c0_410] : memref<4x32x128xf32, #tpu.memory_space<vmem>>, vector<1x1x128xf32>
    %627 = vector.shape_cast %626 : vector<1x1x128xf32> to vector<1x128xf32>
    %628 = vector.shape_cast %625 : vector<1x128xf32> to vector<1x1x128xf32>
    tpu.vector_store %arg11[%c3_408, %c11_409, %c0_410], %628 {strides = array<i32>} : memref<4x32x128xf32, #tpu.memory_space<vmem>>, vector<1x1x128xf32>,
    %c12_i32 = arith.constant 12 : i32
    %629 = arith.addi %1, %c12_i32 : i32
    %630 = arith.index_cast %629 : i32 to index
    %631 = memref.load %arg1[%630] : memref<32xi32, #tpu.memory_space<smem>>
    %632 = arith.index_cast %631 : i32 to index
    %c0_411 = arith.constant 0 : index
    %633 = vector.load %arg5[%632, %c0_411] : memref<24x128xf32, #tpu.memory_space<vmem>>, vector<1x128xf32>
    %c12 = arith.constant 12 : index
    %c0_412 = arith.constant 0 : index
    %634 = vector.load %arg9[%c12, %c0_412] : memref<32x128xf32, #tpu.memory_space<vmem>>, vector<1x128xf32>
    tpu.vector_store %arg9[%c12, %c0_412], %633 {strides = array<i32>} : memref<32x128xf32, #tpu.memory_space<vmem>>, vector<1x128xf32>,
    %c12_i32_413 = arith.constant 12 : i32
    %635 = arith.addi %1, %c12_i32_413 : i32
    %636 = arith.index_cast %635 : i32 to index
    %637 = memref.load %arg2[%636] : memref<32xi32, #tpu.memory_space<smem>>
    %638 = arith.index_cast %637 : i32 to index
    %c0_414 = arith.constant 0 : index
    %639 = vector.load %arg6[%638, %c0_414] : memref<32x128xf32, #tpu.memory_space<vmem>>, vector<1x128xf32>
    %c12_415 = arith.constant 12 : index
    %c0_416 = arith.constant 0 : index
    %640 = vector.load %arg10[%c12_415, %c0_416] : memref<32x128xf32, #tpu.memory_space<vmem>>, vector<1x128xf32>
    tpu.vector_store %arg10[%c12_415, %c0_416], %639 {strides = array<i32>} : memref<32x128xf32, #tpu.memory_space<vmem>>, vector<1x128xf32>,
    %c12_i32_417 = arith.constant 12 : i32
    %641 = arith.addi %1, %c12_i32_417 : i32
    %c4_i32_418 = arith.constant 4 : i32
    %642 = arith.muli %641, %c4_i32_418 : i32
    %c0_i32_419 = arith.constant 0 : i32
    %643 = arith.addi %642, %c0_i32_419 : i32
    %644 = arith.index_cast %643 : i32 to index
    %645 = memref.load %arg3[%644] : memref<128xi32, #tpu.memory_space<smem>>
    %646 = arith.index_cast %645 : i32 to index
    %c0_420 = arith.constant 0 : index
    %647 = vector.load %arg6[%646, %c0_420] : memref<32x128xf32, #tpu.memory_space<vmem>>, vector<1x128xf32>
    %c0_421 = arith.constant 0 : index
    %c12_422 = arith.constant 12 : index
    %c0_423 = arith.constant 0 : index
    %648 = vector.load %arg11[%c0_421, %c12_422, %c0_423] : memref<4x32x128xf32, #tpu.memory_space<vmem>>, vector<1x1x128xf32>
    %649 = vector.shape_cast %648 : vector<1x1x128xf32> to vector<1x128xf32>
    %650 = vector.shape_cast %647 : vector<1x128xf32> to vector<1x1x128xf32>
    tpu.vector_store %arg11[%c0_421, %c12_422, %c0_423], %650 {strides = array<i32>} : memref<4x32x128xf32, #tpu.memory_space<vmem>>, vector<1x1x128xf32>,
    %c12_i32_424 = arith.constant 12 : i32
    %651 = arith.addi %1, %c12_i32_424 : i32
    %c4_i32_425 = arith.constant 4 : i32
    %652 = arith.muli %651, %c4_i32_425 : i32
    %c1_i32_426 = arith.constant 1 : i32
    %653 = arith.addi %652, %c1_i32_426 : i32
    %654 = arith.index_cast %653 : i32 to index
    %655 = memref.load %arg3[%654] : memref<128xi32, #tpu.memory_space<smem>>
    %656 = arith.index_cast %655 : i32 to index
    %c0_427 = arith.constant 0 : index
    %657 = vector.load %arg6[%656, %c0_427] : memref<32x128xf32, #tpu.memory_space<vmem>>, vector<1x128xf32>
    %c1_428 = arith.constant 1 : index
    %c12_429 = arith.constant 12 : index
    %c0_430 = arith.constant 0 : index
    %658 = vector.load %arg11[%c1_428, %c12_429, %c0_430] : memref<4x32x128xf32, #tpu.memory_space<vmem>>, vector<1x1x128xf32>
    %659 = vector.shape_cast %658 : vector<1x1x128xf32> to vector<1x128xf32>
    %660 = vector.shape_cast %657 : vector<1x128xf32> to vector<1x1x128xf32>
    tpu.vector_store %arg11[%c1_428, %c12_429, %c0_430], %660 {strides = array<i32>} : memref<4x32x128xf32, #tpu.memory_space<vmem>>, vector<1x1x128xf32>,
    %c12_i32_431 = arith.constant 12 : i32
    %661 = arith.addi %1, %c12_i32_431 : i32
    %c4_i32_432 = arith.constant 4 : i32
    %662 = arith.muli %661, %c4_i32_432 : i32
    %c2_i32_433 = arith.constant 2 : i32
    %663 = arith.addi %662, %c2_i32_433 : i32
    %664 = arith.index_cast %663 : i32 to index
    %665 = memref.load %arg3[%664] : memref<128xi32, #tpu.memory_space<smem>>
    %666 = arith.index_cast %665 : i32 to index
    %c0_434 = arith.constant 0 : index
    %667 = vector.load %arg6[%666, %c0_434] : memref<32x128xf32, #tpu.memory_space<vmem>>, vector<1x128xf32>
    %c2_435 = arith.constant 2 : index
    %c12_436 = arith.constant 12 : index
    %c0_437 = arith.constant 0 : index
    %668 = vector.load %arg11[%c2_435, %c12_436, %c0_437] : memref<4x32x128xf32, #tpu.memory_space<vmem>>, vector<1x1x128xf32>
    %669 = vector.shape_cast %668 : vector<1x1x128xf32> to vector<1x128xf32>
    %670 = vector.shape_cast %667 : vector<1x128xf32> to vector<1x1x128xf32>
    tpu.vector_store %arg11[%c2_435, %c12_436, %c0_437], %670 {strides = array<i32>} : memref<4x32x128xf32, #tpu.memory_space<vmem>>, vector<1x1x128xf32>,
    %c12_i32_438 = arith.constant 12 : i32
    %671 = arith.addi %1, %c12_i32_438 : i32
    %c4_i32_439 = arith.constant 4 : i32
    %672 = arith.muli %671, %c4_i32_439 : i32
    %c3_i32_440 = arith.constant 3 : i32
    %673 = arith.addi %672, %c3_i32_440 : i32
    %674 = arith.index_cast %673 : i32 to index
    %675 = memref.load %arg3[%674] : memref<128xi32, #tpu.memory_space<smem>>
    %676 = arith.index_cast %675 : i32 to index
    %c0_441 = arith.constant 0 : index
    %677 = vector.load %arg6[%676, %c0_441] : memref<32x128xf32, #tpu.memory_space<vmem>>, vector<1x128xf32>
    %c3_442 = arith.constant 3 : index
    %c12_443 = arith.constant 12 : index
    %c0_444 = arith.constant 0 : index
    %678 = vector.load %arg11[%c3_442, %c12_443, %c0_444] : memref<4x32x128xf32, #tpu.memory_space<vmem>>, vector<1x1x128xf32>
    %679 = vector.shape_cast %678 : vector<1x1x128xf32> to vector<1x128xf32>
    %680 = vector.shape_cast %677 : vector<1x128xf32> to vector<1x1x128xf32>
    tpu.vector_store %arg11[%c3_442, %c12_443, %c0_444], %680 {strides = array<i32>} : memref<4x32x128xf32, #tpu.memory_space<vmem>>, vector<1x1x128xf32>,
    %c13_i32 = arith.constant 13 : i32
    %681 = arith.addi %1, %c13_i32 : i32
    %682 = arith.index_cast %681 : i32 to index
    %683 = memref.load %arg1[%682] : memref<32xi32, #tpu.memory_space<smem>>
    %684 = arith.index_cast %683 : i32 to index
    %c0_445 = arith.constant 0 : index
    %685 = vector.load %arg5[%684, %c0_445] : memref<24x128xf32, #tpu.memory_space<vmem>>, vector<1x128xf32>
    %c13 = arith.constant 13 : index
    %c0_446 = arith.constant 0 : index
    %686 = vector.load %arg9[%c13, %c0_446] : memref<32x128xf32, #tpu.memory_space<vmem>>, vector<1x128xf32>
    tpu.vector_store %arg9[%c13, %c0_446], %685 {strides = array<i32>} : memref<32x128xf32, #tpu.memory_space<vmem>>, vector<1x128xf32>,
    %c13_i32_447 = arith.constant 13 : i32
    %687 = arith.addi %1, %c13_i32_447 : i32
    %688 = arith.index_cast %687 : i32 to index
    %689 = memref.load %arg2[%688] : memref<32xi32, #tpu.memory_space<smem>>
    %690 = arith.index_cast %689 : i32 to index
    %c0_448 = arith.constant 0 : index
    %691 = vector.load %arg6[%690, %c0_448] : memref<32x128xf32, #tpu.memory_space<vmem>>, vector<1x128xf32>
    %c13_449 = arith.constant 13 : index
    %c0_450 = arith.constant 0 : index
    %692 = vector.load %arg10[%c13_449, %c0_450] : memref<32x128xf32, #tpu.memory_space<vmem>>, vector<1x128xf32>
    tpu.vector_store %arg10[%c13_449, %c0_450], %691 {strides = array<i32>} : memref<32x128xf32, #tpu.memory_space<vmem>>, vector<1x128xf32>,
    %c13_i32_451 = arith.constant 13 : i32
    %693 = arith.addi %1, %c13_i32_451 : i32
    %c4_i32_452 = arith.constant 4 : i32
    %694 = arith.muli %693, %c4_i32_452 : i32
    %c0_i32_453 = arith.constant 0 : i32
    %695 = arith.addi %694, %c0_i32_453 : i32
    %696 = arith.index_cast %695 : i32 to index
    %697 = memref.load %arg3[%696] : memref<128xi32, #tpu.memory_space<smem>>
    %698 = arith.index_cast %697 : i32 to index
    %c0_454 = arith.constant 0 : index
    %699 = vector.load %arg6[%698, %c0_454] : memref<32x128xf32, #tpu.memory_space<vmem>>, vector<1x128xf32>
    %c0_455 = arith.constant 0 : index
    %c13_456 = arith.constant 13 : index
    %c0_457 = arith.constant 0 : index
    %700 = vector.load %arg11[%c0_455, %c13_456, %c0_457] : memref<4x32x128xf32, #tpu.memory_space<vmem>>, vector<1x1x128xf32>
    %701 = vector.shape_cast %700 : vector<1x1x128xf32> to vector<1x128xf32>
    %702 = vector.shape_cast %699 : vector<1x128xf32> to vector<1x1x128xf32>
    tpu.vector_store %arg11[%c0_455, %c13_456, %c0_457], %702 {strides = array<i32>} : memref<4x32x128xf32, #tpu.memory_space<vmem>>, vector<1x1x128xf32>,
    %c13_i32_458 = arith.constant 13 : i32
    %703 = arith.addi %1, %c13_i32_458 : i32
    %c4_i32_459 = arith.constant 4 : i32
    %704 = arith.muli %703, %c4_i32_459 : i32
    %c1_i32_460 = arith.constant 1 : i32
    %705 = arith.addi %704, %c1_i32_460 : i32
    %706 = arith.index_cast %705 : i32 to index
    %707 = memref.load %arg3[%706] : memref<128xi32, #tpu.memory_space<smem>>
    %708 = arith.index_cast %707 : i32 to index
    %c0_461 = arith.constant 0 : index
    %709 = vector.load %arg6[%708, %c0_461] : memref<32x128xf32, #tpu.memory_space<vmem>>, vector<1x128xf32>
    %c1_462 = arith.constant 1 : index
    %c13_463 = arith.constant 13 : index
    %c0_464 = arith.constant 0 : index
    %710 = vector.load %arg11[%c1_462, %c13_463, %c0_464] : memref<4x32x128xf32, #tpu.memory_space<vmem>>, vector<1x1x128xf32>
    %711 = vector.shape_cast %710 : vector<1x1x128xf32> to vector<1x128xf32>
    %712 = vector.shape_cast %709 : vector<1x128xf32> to vector<1x1x128xf32>
    tpu.vector_store %arg11[%c1_462, %c13_463, %c0_464], %712 {strides = array<i32>} : memref<4x32x128xf32, #tpu.memory_space<vmem>>, vector<1x1x128xf32>,
    %c13_i32_465 = arith.constant 13 : i32
    %713 = arith.addi %1, %c13_i32_465 : i32
    %c4_i32_466 = arith.constant 4 : i32
    %714 = arith.muli %713, %c4_i32_466 : i32
    %c2_i32_467 = arith.constant 2 : i32
    %715 = arith.addi %714, %c2_i32_467 : i32
    %716 = arith.index_cast %715 : i32 to index
    %717 = memref.load %arg3[%716] : memref<128xi32, #tpu.memory_space<smem>>
    %718 = arith.index_cast %717 : i32 to index
    %c0_468 = arith.constant 0 : index
    %719 = vector.load %arg6[%718, %c0_468] : memref<32x128xf32, #tpu.memory_space<vmem>>, vector<1x128xf32>
    %c2_469 = arith.constant 2 : index
    %c13_470 = arith.constant 13 : index
    %c0_471 = arith.constant 0 : index
    %720 = vector.load %arg11[%c2_469, %c13_470, %c0_471] : memref<4x32x128xf32, #tpu.memory_space<vmem>>, vector<1x1x128xf32>
    %721 = vector.shape_cast %720 : vector<1x1x128xf32> to vector<1x128xf32>
    %722 = vector.shape_cast %719 : vector<1x128xf32> to vector<1x1x128xf32>
    tpu.vector_store %arg11[%c2_469, %c13_470, %c0_471], %722 {strides = array<i32>} : memref<4x32x128xf32, #tpu.memory_space<vmem>>, vector<1x1x128xf32>,
    %c13_i32_472 = arith.constant 13 : i32
    %723 = arith.addi %1, %c13_i32_472 : i32
    %c4_i32_473 = arith.constant 4 : i32
    %724 = arith.muli %723, %c4_i32_473 : i32
    %c3_i32_474 = arith.constant 3 : i32
    %725 = arith.addi %724, %c3_i32_474 : i32
    %726 = arith.index_cast %725 : i32 to index
    %727 = memref.load %arg3[%726] : memref<128xi32, #tpu.memory_space<smem>>
    %728 = arith.index_cast %727 : i32 to index
    %c0_475 = arith.constant 0 : index
    %729 = vector.load %arg6[%728, %c0_475] : memref<32x128xf32, #tpu.memory_space<vmem>>, vector<1x128xf32>
    %c3_476 = arith.constant 3 : index
    %c13_477 = arith.constant 13 : index
    %c0_478 = arith.constant 0 : index
    %730 = vector.load %arg11[%c3_476, %c13_477, %c0_478] : memref<4x32x128xf32, #tpu.memory_space<vmem>>, vector<1x1x128xf32>
    %731 = vector.shape_cast %730 : vector<1x1x128xf32> to vector<1x128xf32>
    %732 = vector.shape_cast %729 : vector<1x128xf32> to vector<1x1x128xf32>
    tpu.vector_store %arg11[%c3_476, %c13_477, %c0_478], %732 {strides = array<i32>} : memref<4x32x128xf32, #tpu.memory_space<vmem>>, vector<1x1x128xf32>,
    %c14_i32 = arith.constant 14 : i32
    %733 = arith.addi %1, %c14_i32 : i32
    %734 = arith.index_cast %733 : i32 to index
    %735 = memref.load %arg1[%734] : memref<32xi32, #tpu.memory_space<smem>>
    %736 = arith.index_cast %735 : i32 to index
    %c0_479 = arith.constant 0 : index
    %737 = vector.load %arg5[%736, %c0_479] : memref<24x128xf32, #tpu.memory_space<vmem>>, vector<1x128xf32>
    %c14 = arith.constant 14 : index
    %c0_480 = arith.constant 0 : index
    %738 = vector.load %arg9[%c14, %c0_480] : memref<32x128xf32, #tpu.memory_space<vmem>>, vector<1x128xf32>
    tpu.vector_store %arg9[%c14, %c0_480], %737 {strides = array<i32>} : memref<32x128xf32, #tpu.memory_space<vmem>>, vector<1x128xf32>,
    %c14_i32_481 = arith.constant 14 : i32
    %739 = arith.addi %1, %c14_i32_481 : i32
    %740 = arith.index_cast %739 : i32 to index
    %741 = memref.load %arg2[%740] : memref<32xi32, #tpu.memory_space<smem>>
    %742 = arith.index_cast %741 : i32 to index
    %c0_482 = arith.constant 0 : index
    %743 = vector.load %arg6[%742, %c0_482] : memref<32x128xf32, #tpu.memory_space<vmem>>, vector<1x128xf32>
    %c14_483 = arith.constant 14 : index
    %c0_484 = arith.constant 0 : index
    %744 = vector.load %arg10[%c14_483, %c0_484] : memref<32x128xf32, #tpu.memory_space<vmem>>, vector<1x128xf32>
    tpu.vector_store %arg10[%c14_483, %c0_484], %743 {strides = array<i32>} : memref<32x128xf32, #tpu.memory_space<vmem>>, vector<1x128xf32>,
    %c14_i32_485 = arith.constant 14 : i32
    %745 = arith.addi %1, %c14_i32_485 : i32
    %c4_i32_486 = arith.constant 4 : i32
    %746 = arith.muli %745, %c4_i32_486 : i32
    %c0_i32_487 = arith.constant 0 : i32
    %747 = arith.addi %746, %c0_i32_487 : i32
    %748 = arith.index_cast %747 : i32 to index
    %749 = memref.load %arg3[%748] : memref<128xi32, #tpu.memory_space<smem>>
    %750 = arith.index_cast %749 : i32 to index
    %c0_488 = arith.constant 0 : index
    %751 = vector.load %arg6[%750, %c0_488] : memref<32x128xf32, #tpu.memory_space<vmem>>, vector<1x128xf32>
    %c0_489 = arith.constant 0 : index
    %c14_490 = arith.constant 14 : index
    %c0_491 = arith.constant 0 : index
    %752 = vector.load %arg11[%c0_489, %c14_490, %c0_491] : memref<4x32x128xf32, #tpu.memory_space<vmem>>, vector<1x1x128xf32>
    %753 = vector.shape_cast %752 : vector<1x1x128xf32> to vector<1x128xf32>
    %754 = vector.shape_cast %751 : vector<1x128xf32> to vector<1x1x128xf32>
    tpu.vector_store %arg11[%c0_489, %c14_490, %c0_491], %754 {strides = array<i32>} : memref<4x32x128xf32, #tpu.memory_space<vmem>>, vector<1x1x128xf32>,
    %c14_i32_492 = arith.constant 14 : i32
    %755 = arith.addi %1, %c14_i32_492 : i32
    %c4_i32_493 = arith.constant 4 : i32
    %756 = arith.muli %755, %c4_i32_493 : i32
    %c1_i32_494 = arith.constant 1 : i32
    %757 = arith.addi %756, %c1_i32_494 : i32
    %758 = arith.index_cast %757 : i32 to index
    %759 = memref.load %arg3[%758] : memref<128xi32, #tpu.memory_space<smem>>
    %760 = arith.index_cast %759 : i32 to index
    %c0_495 = arith.constant 0 : index
    %761 = vector.load %arg6[%760, %c0_495] : memref<32x128xf32, #tpu.memory_space<vmem>>, vector<1x128xf32>
    %c1_496 = arith.constant 1 : index
    %c14_497 = arith.constant 14 : index
    %c0_498 = arith.constant 0 : index
    %762 = vector.load %arg11[%c1_496, %c14_497, %c0_498] : memref<4x32x128xf32, #tpu.memory_space<vmem>>, vector<1x1x128xf32>
    %763 = vector.shape_cast %762 : vector<1x1x128xf32> to vector<1x128xf32>
    %764 = vector.shape_cast %761 : vector<1x128xf32> to vector<1x1x128xf32>
    tpu.vector_store %arg11[%c1_496, %c14_497, %c0_498], %764 {strides = array<i32>} : memref<4x32x128xf32, #tpu.memory_space<vmem>>, vector<1x1x128xf32>,
    %c14_i32_499 = arith.constant 14 : i32
    %765 = arith.addi %1, %c14_i32_499 : i32
    %c4_i32_500 = arith.constant 4 : i32
    %766 = arith.muli %765, %c4_i32_500 : i32
    %c2_i32_501 = arith.constant 2 : i32
    %767 = arith.addi %766, %c2_i32_501 : i32
    %768 = arith.index_cast %767 : i32 to index
    %769 = memref.load %arg3[%768] : memref<128xi32, #tpu.memory_space<smem>>
    %770 = arith.index_cast %769 : i32 to index
    %c0_502 = arith.constant 0 : index
    %771 = vector.load %arg6[%770, %c0_502] : memref<32x128xf32, #tpu.memory_space<vmem>>, vector<1x128xf32>
    %c2_503 = arith.constant 2 : index
    %c14_504 = arith.constant 14 : index
    %c0_505 = arith.constant 0 : index
    %772 = vector.load %arg11[%c2_503, %c14_504, %c0_505] : memref<4x32x128xf32, #tpu.memory_space<vmem>>, vector<1x1x128xf32>
    %773 = vector.shape_cast %772 : vector<1x1x128xf32> to vector<1x128xf32>
    %774 = vector.shape_cast %771 : vector<1x128xf32> to vector<1x1x128xf32>
    tpu.vector_store %arg11[%c2_503, %c14_504, %c0_505], %774 {strides = array<i32>} : memref<4x32x128xf32, #tpu.memory_space<vmem>>, vector<1x1x128xf32>,
    %c14_i32_506 = arith.constant 14 : i32
    %775 = arith.addi %1, %c14_i32_506 : i32
    %c4_i32_507 = arith.constant 4 : i32
    %776 = arith.muli %775, %c4_i32_507 : i32
    %c3_i32_508 = arith.constant 3 : i32
    %777 = arith.addi %776, %c3_i32_508 : i32
    %778 = arith.index_cast %777 : i32 to index
    %779 = memref.load %arg3[%778] : memref<128xi32, #tpu.memory_space<smem>>
    %780 = arith.index_cast %779 : i32 to index
    %c0_509 = arith.constant 0 : index
    %781 = vector.load %arg6[%780, %c0_509] : memref<32x128xf32, #tpu.memory_space<vmem>>, vector<1x128xf32>
    %c3_510 = arith.constant 3 : index
    %c14_511 = arith.constant 14 : index
    %c0_512 = arith.constant 0 : index
    %782 = vector.load %arg11[%c3_510, %c14_511, %c0_512] : memref<4x32x128xf32, #tpu.memory_space<vmem>>, vector<1x1x128xf32>
    %783 = vector.shape_cast %782 : vector<1x1x128xf32> to vector<1x128xf32>
    %784 = vector.shape_cast %781 : vector<1x128xf32> to vector<1x1x128xf32>
    tpu.vector_store %arg11[%c3_510, %c14_511, %c0_512], %784 {strides = array<i32>} : memref<4x32x128xf32, #tpu.memory_space<vmem>>, vector<1x1x128xf32>,
    %c15_i32 = arith.constant 15 : i32
    %785 = arith.addi %1, %c15_i32 : i32
    %786 = arith.index_cast %785 : i32 to index
    %787 = memref.load %arg1[%786] : memref<32xi32, #tpu.memory_space<smem>>
    %788 = arith.index_cast %787 : i32 to index
    %c0_513 = arith.constant 0 : index
    %789 = vector.load %arg5[%788, %c0_513] : memref<24x128xf32, #tpu.memory_space<vmem>>, vector<1x128xf32>
    %c15 = arith.constant 15 : index
    %c0_514 = arith.constant 0 : index
    %790 = vector.load %arg9[%c15, %c0_514] : memref<32x128xf32, #tpu.memory_space<vmem>>, vector<1x128xf32>
    tpu.vector_store %arg9[%c15, %c0_514], %789 {strides = array<i32>} : memref<32x128xf32, #tpu.memory_space<vmem>>, vector<1x128xf32>,
    %c15_i32_515 = arith.constant 15 : i32
    %791 = arith.addi %1, %c15_i32_515 : i32
    %792 = arith.index_cast %791 : i32 to index
    %793 = memref.load %arg2[%792] : memref<32xi32, #tpu.memory_space<smem>>
    %794 = arith.index_cast %793 : i32 to index
    %c0_516 = arith.constant 0 : index
    %795 = vector.load %arg6[%794, %c0_516] : memref<32x128xf32, #tpu.memory_space<vmem>>, vector<1x128xf32>
    %c15_517 = arith.constant 15 : index
    %c0_518 = arith.constant 0 : index
    %796 = vector.load %arg10[%c15_517, %c0_518] : memref<32x128xf32, #tpu.memory_space<vmem>>, vector<1x128xf32>
    tpu.vector_store %arg10[%c15_517, %c0_518], %795 {strides = array<i32>} : memref<32x128xf32, #tpu.memory_space<vmem>>, vector<1x128xf32>,
    %c15_i32_519 = arith.constant 15 : i32
    %797 = arith.addi %1, %c15_i32_519 : i32
    %c4_i32_520 = arith.constant 4 : i32
    %798 = arith.muli %797, %c4_i32_520 : i32
    %c0_i32_521 = arith.constant 0 : i32
    %799 = arith.addi %798, %c0_i32_521 : i32
    %800 = arith.index_cast %799 : i32 to index
    %801 = memref.load %arg3[%800] : memref<128xi32, #tpu.memory_space<smem>>
    %802 = arith.index_cast %801 : i32 to index
    %c0_522 = arith.constant 0 : index
    %803 = vector.load %arg6[%802, %c0_522] : memref<32x128xf32, #tpu.memory_space<vmem>>, vector<1x128xf32>
    %c0_523 = arith.constant 0 : index
    %c15_524 = arith.constant 15 : index
    %c0_525 = arith.constant 0 : index
    %804 = vector.load %arg11[%c0_523, %c15_524, %c0_525] : memref<4x32x128xf32, #tpu.memory_space<vmem>>, vector<1x1x128xf32>
    %805 = vector.shape_cast %804 : vector<1x1x128xf32> to vector<1x128xf32>
    %806 = vector.shape_cast %803 : vector<1x128xf32> to vector<1x1x128xf32>
    tpu.vector_store %arg11[%c0_523, %c15_524, %c0_525], %806 {strides = array<i32>} : memref<4x32x128xf32, #tpu.memory_space<vmem>>, vector<1x1x128xf32>,
    %c15_i32_526 = arith.constant 15 : i32
    %807 = arith.addi %1, %c15_i32_526 : i32
    %c4_i32_527 = arith.constant 4 : i32
    %808 = arith.muli %807, %c4_i32_527 : i32
    %c1_i32_528 = arith.constant 1 : i32
    %809 = arith.addi %808, %c1_i32_528 : i32
    %810 = arith.index_cast %809 : i32 to index
    %811 = memref.load %arg3[%810] : memref<128xi32, #tpu.memory_space<smem>>
    %812 = arith.index_cast %811 : i32 to index
    %c0_529 = arith.constant 0 : index
    %813 = vector.load %arg6[%812, %c0_529] : memref<32x128xf32, #tpu.memory_space<vmem>>, vector<1x128xf32>
    %c1_530 = arith.constant 1 : index
    %c15_531 = arith.constant 15 : index
    %c0_532 = arith.constant 0 : index
    %814 = vector.load %arg11[%c1_530, %c15_531, %c0_532] : memref<4x32x128xf32, #tpu.memory_space<vmem>>, vector<1x1x128xf32>
    %815 = vector.shape_cast %814 : vector<1x1x128xf32> to vector<1x128xf32>
    %816 = vector.shape_cast %813 : vector<1x128xf32> to vector<1x1x128xf32>
    tpu.vector_store %arg11[%c1_530, %c15_531, %c0_532], %816 {strides = array<i32>} : memref<4x32x128xf32, #tpu.memory_space<vmem>>, vector<1x1x128xf32>,
    %c15_i32_533 = arith.constant 15 : i32
    %817 = arith.addi %1, %c15_i32_533 : i32
    %c4_i32_534 = arith.constant 4 : i32
    %818 = arith.muli %817, %c4_i32_534 : i32
    %c2_i32_535 = arith.constant 2 : i32
    %819 = arith.addi %818, %c2_i32_535 : i32
    %820 = arith.index_cast %819 : i32 to index
    %821 = memref.load %arg3[%820] : memref<128xi32, #tpu.memory_space<smem>>
    %822 = arith.index_cast %821 : i32 to index
    %c0_536 = arith.constant 0 : index
    %823 = vector.load %arg6[%822, %c0_536] : memref<32x128xf32, #tpu.memory_space<vmem>>, vector<1x128xf32>
    %c2_537 = arith.constant 2 : index
    %c15_538 = arith.constant 15 : index
    %c0_539 = arith.constant 0 : index
    %824 = vector.load %arg11[%c2_537, %c15_538, %c0_539] : memref<4x32x128xf32, #tpu.memory_space<vmem>>, vector<1x1x128xf32>
    %825 = vector.shape_cast %824 : vector<1x1x128xf32> to vector<1x128xf32>
    %826 = vector.shape_cast %823 : vector<1x128xf32> to vector<1x1x128xf32>
    tpu.vector_store %arg11[%c2_537, %c15_538, %c0_539], %826 {strides = array<i32>} : memref<4x32x128xf32, #tpu.memory_space<vmem>>, vector<1x1x128xf32>,
    %c15_i32_540 = arith.constant 15 : i32
    %827 = arith.addi %1, %c15_i32_540 : i32
    %c4_i32_541 = arith.constant 4 : i32
    %828 = arith.muli %827, %c4_i32_541 : i32
    %c3_i32_542 = arith.constant 3 : i32
    %829 = arith.addi %828, %c3_i32_542 : i32
    %830 = arith.index_cast %829 : i32 to index
    %831 = memref.load %arg3[%830] : memref<128xi32, #tpu.memory_space<smem>>
    %832 = arith.index_cast %831 : i32 to index
    %c0_543 = arith.constant 0 : index
    %833 = vector.load %arg6[%832, %c0_543] : memref<32x128xf32, #tpu.memory_space<vmem>>, vector<1x128xf32>
    %c3_544 = arith.constant 3 : index
    %c15_545 = arith.constant 15 : index
    %c0_546 = arith.constant 0 : index
    %834 = vector.load %arg11[%c3_544, %c15_545, %c0_546] : memref<4x32x128xf32, #tpu.memory_space<vmem>>, vector<1x1x128xf32>
    %835 = vector.shape_cast %834 : vector<1x1x128xf32> to vector<1x128xf32>
    %836 = vector.shape_cast %833 : vector<1x128xf32> to vector<1x1x128xf32>
    tpu.vector_store %arg11[%c3_544, %c15_545, %c0_546], %836 {strides = array<i32>} : memref<4x32x128xf32, #tpu.memory_space<vmem>>, vector<1x1x128xf32>,
    %c16_i32 = arith.constant 16 : i32
    %837 = arith.addi %1, %c16_i32 : i32
    %838 = arith.index_cast %837 : i32 to index
    %839 = memref.load %arg1[%838] : memref<32xi32, #tpu.memory_space<smem>>
    %840 = arith.index_cast %839 : i32 to index
    %c0_547 = arith.constant 0 : index
    %841 = vector.load %arg5[%840, %c0_547] : memref<24x128xf32, #tpu.memory_space<vmem>>, vector<1x128xf32>
    %c16 = arith.constant 16 : index
    %c0_548 = arith.constant 0 : index
    %842 = vector.load %arg9[%c16, %c0_548] : memref<32x128xf32, #tpu.memory_space<vmem>>, vector<1x128xf32>
    tpu.vector_store %arg9[%c16, %c0_548], %841 {strides = array<i32>} : memref<32x128xf32, #tpu.memory_space<vmem>>, vector<1x128xf32>,
    %c16_i32_549 = arith.constant 16 : i32
    %843 = arith.addi %1, %c16_i32_549 : i32
    %844 = arith.index_cast %843 : i32 to index
    %845 = memref.load %arg2[%844] : memref<32xi32, #tpu.memory_space<smem>>
    %846 = arith.index_cast %845 : i32 to index
    %c0_550 = arith.constant 0 : index
    %847 = vector.load %arg6[%846, %c0_550] : memref<32x128xf32, #tpu.memory_space<vmem>>, vector<1x128xf32>
    %c16_551 = arith.constant 16 : index
    %c0_552 = arith.constant 0 : index
    %848 = vector.load %arg10[%c16_551, %c0_552] : memref<32x128xf32, #tpu.memory_space<vmem>>, vector<1x128xf32>
    tpu.vector_store %arg10[%c16_551, %c0_552], %847 {strides = array<i32>} : memref<32x128xf32, #tpu.memory_space<vmem>>, vector<1x128xf32>,
    %c16_i32_553 = arith.constant 16 : i32
    %849 = arith.addi %1, %c16_i32_553 : i32
    %c4_i32_554 = arith.constant 4 : i32
    %850 = arith.muli %849, %c4_i32_554 : i32
    %c0_i32_555 = arith.constant 0 : i32
    %851 = arith.addi %850, %c0_i32_555 : i32
    %852 = arith.index_cast %851 : i32 to index
    %853 = memref.load %arg3[%852] : memref<128xi32, #tpu.memory_space<smem>>
    %854 = arith.index_cast %853 : i32 to index
    %c0_556 = arith.constant 0 : index
    %855 = vector.load %arg6[%854, %c0_556] : memref<32x128xf32, #tpu.memory_space<vmem>>, vector<1x128xf32>
    %c0_557 = arith.constant 0 : index
    %c16_558 = arith.constant 16 : index
    %c0_559 = arith.constant 0 : index
    %856 = vector.load %arg11[%c0_557, %c16_558, %c0_559] : memref<4x32x128xf32, #tpu.memory_space<vmem>>, vector<1x1x128xf32>
    %857 = vector.shape_cast %856 : vector<1x1x128xf32> to vector<1x128xf32>
    %858 = vector.shape_cast %855 : vector<1x128xf32> to vector<1x1x128xf32>
    tpu.vector_store %arg11[%c0_557, %c16_558, %c0_559], %858 {strides = array<i32>} : memref<4x32x128xf32, #tpu.memory_space<vmem>>, vector<1x1x128xf32>,
    %c16_i32_560 = arith.constant 16 : i32
    %859 = arith.addi %1, %c16_i32_560 : i32
    %c4_i32_561 = arith.constant 4 : i32
    %860 = arith.muli %859, %c4_i32_561 : i32
    %c1_i32_562 = arith.constant 1 : i32
    %861 = arith.addi %860, %c1_i32_562 : i32
    %862 = arith.index_cast %861 : i32 to index
    %863 = memref.load %arg3[%862] : memref<128xi32, #tpu.memory_space<smem>>
    %864 = arith.index_cast %863 : i32 to index
    %c0_563 = arith.constant 0 : index
    %865 = vector.load %arg6[%864, %c0_563] : memref<32x128xf32, #tpu.memory_space<vmem>>, vector<1x128xf32>
    %c1_564 = arith.constant 1 : index
    %c16_565 = arith.constant 16 : index
    %c0_566 = arith.constant 0 : index
    %866 = vector.load %arg11[%c1_564, %c16_565, %c0_566] : memref<4x32x128xf32, #tpu.memory_space<vmem>>, vector<1x1x128xf32>
    %867 = vector.shape_cast %866 : vector<1x1x128xf32> to vector<1x128xf32>
    %868 = vector.shape_cast %865 : vector<1x128xf32> to vector<1x1x128xf32>
    tpu.vector_store %arg11[%c1_564, %c16_565, %c0_566], %868 {strides = array<i32>} : memref<4x32x128xf32, #tpu.memory_space<vmem>>, vector<1x1x128xf32>,
    %c16_i32_567 = arith.constant 16 : i32
    %869 = arith.addi %1, %c16_i32_567 : i32
    %c4_i32_568 = arith.constant 4 : i32
    %870 = arith.muli %869, %c4_i32_568 : i32
    %c2_i32_569 = arith.constant 2 : i32
    %871 = arith.addi %870, %c2_i32_569 : i32
    %872 = arith.index_cast %871 : i32 to index
    %873 = memref.load %arg3[%872] : memref<128xi32, #tpu.memory_space<smem>>
    %874 = arith.index_cast %873 : i32 to index
    %c0_570 = arith.constant 0 : index
    %875 = vector.load %arg6[%874, %c0_570] : memref<32x128xf32, #tpu.memory_space<vmem>>, vector<1x128xf32>
    %c2_571 = arith.constant 2 : index
    %c16_572 = arith.constant 16 : index
    %c0_573 = arith.constant 0 : index
    %876 = vector.load %arg11[%c2_571, %c16_572, %c0_573] : memref<4x32x128xf32, #tpu.memory_space<vmem>>, vector<1x1x128xf32>
    %877 = vector.shape_cast %876 : vector<1x1x128xf32> to vector<1x128xf32>
    %878 = vector.shape_cast %875 : vector<1x128xf32> to vector<1x1x128xf32>
    tpu.vector_store %arg11[%c2_571, %c16_572, %c0_573], %878 {strides = array<i32>} : memref<4x32x128xf32, #tpu.memory_space<vmem>>, vector<1x1x128xf32>,
    %c16_i32_574 = arith.constant 16 : i32
    %879 = arith.addi %1, %c16_i32_574 : i32
    %c4_i32_575 = arith.constant 4 : i32
    %880 = arith.muli %879, %c4_i32_575 : i32
    %c3_i32_576 = arith.constant 3 : i32
    %881 = arith.addi %880, %c3_i32_576 : i32
    %882 = arith.index_cast %881 : i32 to index
    %883 = memref.load %arg3[%882] : memref<128xi32, #tpu.memory_space<smem>>
    %884 = arith.index_cast %883 : i32 to index
    %c0_577 = arith.constant 0 : index
    %885 = vector.load %arg6[%884, %c0_577] : memref<32x128xf32, #tpu.memory_space<vmem>>, vector<1x128xf32>
    %c3_578 = arith.constant 3 : index
    %c16_579 = arith.constant 16 : index
    %c0_580 = arith.constant 0 : index
    %886 = vector.load %arg11[%c3_578, %c16_579, %c0_580] : memref<4x32x128xf32, #tpu.memory_space<vmem>>, vector<1x1x128xf32>
    %887 = vector.shape_cast %886 : vector<1x1x128xf32> to vector<1x128xf32>
    %888 = vector.shape_cast %885 : vector<1x128xf32> to vector<1x1x128xf32>
    tpu.vector_store %arg11[%c3_578, %c16_579, %c0_580], %888 {strides = array<i32>} : memref<4x32x128xf32, #tpu.memory_space<vmem>>, vector<1x1x128xf32>,
    %c17_i32 = arith.constant 17 : i32
    %889 = arith.addi %1, %c17_i32 : i32
    %890 = arith.index_cast %889 : i32 to index
    %891 = memref.load %arg1[%890] : memref<32xi32, #tpu.memory_space<smem>>
    %892 = arith.index_cast %891 : i32 to index
    %c0_581 = arith.constant 0 : index
    %893 = vector.load %arg5[%892, %c0_581] : memref<24x128xf32, #tpu.memory_space<vmem>>, vector<1x128xf32>
    %c17 = arith.constant 17 : index
    %c0_582 = arith.constant 0 : index
    %894 = vector.load %arg9[%c17, %c0_582] : memref<32x128xf32, #tpu.memory_space<vmem>>, vector<1x128xf32>
    tpu.vector_store %arg9[%c17, %c0_582], %893 {strides = array<i32>} : memref<32x128xf32, #tpu.memory_space<vmem>>, vector<1x128xf32>,
    %c17_i32_583 = arith.constant 17 : i32
    %895 = arith.addi %1, %c17_i32_583 : i32
    %896 = arith.index_cast %895 : i32 to index
    %897 = memref.load %arg2[%896] : memref<32xi32, #tpu.memory_space<smem>>
    %898 = arith.index_cast %897 : i32 to index
    %c0_584 = arith.constant 0 : index
    %899 = vector.load %arg6[%898, %c0_584] : memref<32x128xf32, #tpu.memory_space<vmem>>, vector<1x128xf32>
    %c17_585 = arith.constant 17 : index
    %c0_586 = arith.constant 0 : index
    %900 = vector.load %arg10[%c17_585, %c0_586] : memref<32x128xf32, #tpu.memory_space<vmem>>, vector<1x128xf32>
    tpu.vector_store %arg10[%c17_585, %c0_586], %899 {strides = array<i32>} : memref<32x128xf32, #tpu.memory_space<vmem>>, vector<1x128xf32>,
    %c17_i32_587 = arith.constant 17 : i32
    %901 = arith.addi %1, %c17_i32_587 : i32
    %c4_i32_588 = arith.constant 4 : i32
    %902 = arith.muli %901, %c4_i32_588 : i32
    %c0_i32_589 = arith.constant 0 : i32
    %903 = arith.addi %902, %c0_i32_589 : i32
    %904 = arith.index_cast %903 : i32 to index
    %905 = memref.load %arg3[%904] : memref<128xi32, #tpu.memory_space<smem>>
    %906 = arith.index_cast %905 : i32 to index
    %c0_590 = arith.constant 0 : index
    %907 = vector.load %arg6[%906, %c0_590] : memref<32x128xf32, #tpu.memory_space<vmem>>, vector<1x128xf32>
    %c0_591 = arith.constant 0 : index
    %c17_592 = arith.constant 17 : index
    %c0_593 = arith.constant 0 : index
    %908 = vector.load %arg11[%c0_591, %c17_592, %c0_593] : memref<4x32x128xf32, #tpu.memory_space<vmem>>, vector<1x1x128xf32>
    %909 = vector.shape_cast %908 : vector<1x1x128xf32> to vector<1x128xf32>
    %910 = vector.shape_cast %907 : vector<1x128xf32> to vector<1x1x128xf32>
    tpu.vector_store %arg11[%c0_591, %c17_592, %c0_593], %910 {strides = array<i32>} : memref<4x32x128xf32, #tpu.memory_space<vmem>>, vector<1x1x128xf32>,
    %c17_i32_594 = arith.constant 17 : i32
    %911 = arith.addi %1, %c17_i32_594 : i32
    %c4_i32_595 = arith.constant 4 : i32
    %912 = arith.muli %911, %c4_i32_595 : i32
    %c1_i32_596 = arith.constant 1 : i32
    %913 = arith.addi %912, %c1_i32_596 : i32
    %914 = arith.index_cast %913 : i32 to index
    %915 = memref.load %arg3[%914] : memref<128xi32, #tpu.memory_space<smem>>
    %916 = arith.index_cast %915 : i32 to index
    %c0_597 = arith.constant 0 : index
    %917 = vector.load %arg6[%916, %c0_597] : memref<32x128xf32, #tpu.memory_space<vmem>>, vector<1x128xf32>
    %c1_598 = arith.constant 1 : index
    %c17_599 = arith.constant 17 : index
    %c0_600 = arith.constant 0 : index
    %918 = vector.load %arg11[%c1_598, %c17_599, %c0_600] : memref<4x32x128xf32, #tpu.memory_space<vmem>>, vector<1x1x128xf32>
    %919 = vector.shape_cast %918 : vector<1x1x128xf32> to vector<1x128xf32>
    %920 = vector.shape_cast %917 : vector<1x128xf32> to vector<1x1x128xf32>
    tpu.vector_store %arg11[%c1_598, %c17_599, %c0_600], %920 {strides = array<i32>} : memref<4x32x128xf32, #tpu.memory_space<vmem>>, vector<1x1x128xf32>,
    %c17_i32_601 = arith.constant 17 : i32
    %921 = arith.addi %1, %c17_i32_601 : i32
    %c4_i32_602 = arith.constant 4 : i32
    %922 = arith.muli %921, %c4_i32_602 : i32
    %c2_i32_603 = arith.constant 2 : i32
    %923 = arith.addi %922, %c2_i32_603 : i32
    %924 = arith.index_cast %923 : i32 to index
    %925 = memref.load %arg3[%924] : memref<128xi32, #tpu.memory_space<smem>>
    %926 = arith.index_cast %925 : i32 to index
    %c0_604 = arith.constant 0 : index
    %927 = vector.load %arg6[%926, %c0_604] : memref<32x128xf32, #tpu.memory_space<vmem>>, vector<1x128xf32>
    %c2_605 = arith.constant 2 : index
    %c17_606 = arith.constant 17 : index
    %c0_607 = arith.constant 0 : index
    %928 = vector.load %arg11[%c2_605, %c17_606, %c0_607] : memref<4x32x128xf32, #tpu.memory_space<vmem>>, vector<1x1x128xf32>
    %929 = vector.shape_cast %928 : vector<1x1x128xf32> to vector<1x128xf32>
    %930 = vector.shape_cast %927 : vector<1x128xf32> to vector<1x1x128xf32>
    tpu.vector_store %arg11[%c2_605, %c17_606, %c0_607], %930 {strides = array<i32>} : memref<4x32x128xf32, #tpu.memory_space<vmem>>, vector<1x1x128xf32>,
    %c17_i32_608 = arith.constant 17 : i32
    %931 = arith.addi %1, %c17_i32_608 : i32
    %c4_i32_609 = arith.constant 4 : i32
    %932 = arith.muli %931, %c4_i32_609 : i32
    %c3_i32_610 = arith.constant 3 : i32
    %933 = arith.addi %932, %c3_i32_610 : i32
    %934 = arith.index_cast %933 : i32 to index
    %935 = memref.load %arg3[%934] : memref<128xi32, #tpu.memory_space<smem>>
    %936 = arith.index_cast %935 : i32 to index
    %c0_611 = arith.constant 0 : index
    %937 = vector.load %arg6[%936, %c0_611] : memref<32x128xf32, #tpu.memory_space<vmem>>, vector<1x128xf32>
    %c3_612 = arith.constant 3 : index
    %c17_613 = arith.constant 17 : index
    %c0_614 = arith.constant 0 : index
    %938 = vector.load %arg11[%c3_612, %c17_613, %c0_614] : memref<4x32x128xf32, #tpu.memory_space<vmem>>, vector<1x1x128xf32>
    %939 = vector.shape_cast %938 : vector<1x1x128xf32> to vector<1x128xf32>
    %940 = vector.shape_cast %937 : vector<1x128xf32> to vector<1x1x128xf32>
    tpu.vector_store %arg11[%c3_612, %c17_613, %c0_614], %940 {strides = array<i32>} : memref<4x32x128xf32, #tpu.memory_space<vmem>>, vector<1x1x128xf32>,
    %c18_i32 = arith.constant 18 : i32
    %941 = arith.addi %1, %c18_i32 : i32
    %942 = arith.index_cast %941 : i32 to index
    %943 = memref.load %arg1[%942] : memref<32xi32, #tpu.memory_space<smem>>
    %944 = arith.index_cast %943 : i32 to index
    %c0_615 = arith.constant 0 : index
    %945 = vector.load %arg5[%944, %c0_615] : memref<24x128xf32, #tpu.memory_space<vmem>>, vector<1x128xf32>
    %c18 = arith.constant 18 : index
    %c0_616 = arith.constant 0 : index
    %946 = vector.load %arg9[%c18, %c0_616] : memref<32x128xf32, #tpu.memory_space<vmem>>, vector<1x128xf32>
    tpu.vector_store %arg9[%c18, %c0_616], %945 {strides = array<i32>} : memref<32x128xf32, #tpu.memory_space<vmem>>, vector<1x128xf32>,
    %c18_i32_617 = arith.constant 18 : i32
    %947 = arith.addi %1, %c18_i32_617 : i32
    %948 = arith.index_cast %947 : i32 to index
    %949 = memref.load %arg2[%948] : memref<32xi32, #tpu.memory_space<smem>>
    %950 = arith.index_cast %949 : i32 to index
    %c0_618 = arith.constant 0 : index
    %951 = vector.load %arg6[%950, %c0_618] : memref<32x128xf32, #tpu.memory_space<vmem>>, vector<1x128xf32>
    %c18_619 = arith.constant 18 : index
    %c0_620 = arith.constant 0 : index
    %952 = vector.load %arg10[%c18_619, %c0_620] : memref<32x128xf32, #tpu.memory_space<vmem>>, vector<1x128xf32>
    tpu.vector_store %arg10[%c18_619, %c0_620], %951 {strides = array<i32>} : memref<32x128xf32, #tpu.memory_space<vmem>>, vector<1x128xf32>,
    %c18_i32_621 = arith.constant 18 : i32
    %953 = arith.addi %1, %c18_i32_621 : i32
    %c4_i32_622 = arith.constant 4 : i32
    %954 = arith.muli %953, %c4_i32_622 : i32
    %c0_i32_623 = arith.constant 0 : i32
    %955 = arith.addi %954, %c0_i32_623 : i32
    %956 = arith.index_cast %955 : i32 to index
    %957 = memref.load %arg3[%956] : memref<128xi32, #tpu.memory_space<smem>>
    %958 = arith.index_cast %957 : i32 to index
    %c0_624 = arith.constant 0 : index
    %959 = vector.load %arg6[%958, %c0_624] : memref<32x128xf32, #tpu.memory_space<vmem>>, vector<1x128xf32>
    %c0_625 = arith.constant 0 : index
    %c18_626 = arith.constant 18 : index
    %c0_627 = arith.constant 0 : index
    %960 = vector.load %arg11[%c0_625, %c18_626, %c0_627] : memref<4x32x128xf32, #tpu.memory_space<vmem>>, vector<1x1x128xf32>
    %961 = vector.shape_cast %960 : vector<1x1x128xf32> to vector<1x128xf32>
    %962 = vector.shape_cast %959 : vector<1x128xf32> to vector<1x1x128xf32>
    tpu.vector_store %arg11[%c0_625, %c18_626, %c0_627], %962 {strides = array<i32>} : memref<4x32x128xf32, #tpu.memory_space<vmem>>, vector<1x1x128xf32>,
    %c18_i32_628 = arith.constant 18 : i32
    %963 = arith.addi %1, %c18_i32_628 : i32
    %c4_i32_629 = arith.constant 4 : i32
    %964 = arith.muli %963, %c4_i32_629 : i32
    %c1_i32_630 = arith.constant 1 : i32
    %965 = arith.addi %964, %c1_i32_630 : i32
    %966 = arith.index_cast %965 : i32 to index
    %967 = memref.load %arg3[%966] : memref<128xi32, #tpu.memory_space<smem>>
    %968 = arith.index_cast %967 : i32 to index
    %c0_631 = arith.constant 0 : index
    %969 = vector.load %arg6[%968, %c0_631] : memref<32x128xf32, #tpu.memory_space<vmem>>, vector<1x128xf32>
    %c1_632 = arith.constant 1 : index
    %c18_633 = arith.constant 18 : index
    %c0_634 = arith.constant 0 : index
    %970 = vector.load %arg11[%c1_632, %c18_633, %c0_634] : memref<4x32x128xf32, #tpu.memory_space<vmem>>, vector<1x1x128xf32>
    %971 = vector.shape_cast %970 : vector<1x1x128xf32> to vector<1x128xf32>
    %972 = vector.shape_cast %969 : vector<1x128xf32> to vector<1x1x128xf32>
    tpu.vector_store %arg11[%c1_632, %c18_633, %c0_634], %972 {strides = array<i32>} : memref<4x32x128xf32, #tpu.memory_space<vmem>>, vector<1x1x128xf32>,
    %c18_i32_635 = arith.constant 18 : i32
    %973 = arith.addi %1, %c18_i32_635 : i32
    %c4_i32_636 = arith.constant 4 : i32
    %974 = arith.muli %973, %c4_i32_636 : i32
    %c2_i32_637 = arith.constant 2 : i32
    %975 = arith.addi %974, %c2_i32_637 : i32
    %976 = arith.index_cast %975 : i32 to index
    %977 = memref.load %arg3[%976] : memref<128xi32, #tpu.memory_space<smem>>
    %978 = arith.index_cast %977 : i32 to index
    %c0_638 = arith.constant 0 : index
    %979 = vector.load %arg6[%978, %c0_638] : memref<32x128xf32, #tpu.memory_space<vmem>>, vector<1x128xf32>
    %c2_639 = arith.constant 2 : index
    %c18_640 = arith.constant 18 : index
    %c0_641 = arith.constant 0 : index
    %980 = vector.load %arg11[%c2_639, %c18_640, %c0_641] : memref<4x32x128xf32, #tpu.memory_space<vmem>>, vector<1x1x128xf32>
    %981 = vector.shape_cast %980 : vector<1x1x128xf32> to vector<1x128xf32>
    %982 = vector.shape_cast %979 : vector<1x128xf32> to vector<1x1x128xf32>
    tpu.vector_store %arg11[%c2_639, %c18_640, %c0_641], %982 {strides = array<i32>} : memref<4x32x128xf32, #tpu.memory_space<vmem>>, vector<1x1x128xf32>,
    %c18_i32_642 = arith.constant 18 : i32
    %983 = arith.addi %1, %c18_i32_642 : i32
    %c4_i32_643 = arith.constant 4 : i32
    %984 = arith.muli %983, %c4_i32_643 : i32
    %c3_i32_644 = arith.constant 3 : i32
    %985 = arith.addi %984, %c3_i32_644 : i32
    %986 = arith.index_cast %985 : i32 to index
    %987 = memref.load %arg3[%986] : memref<128xi32, #tpu.memory_space<smem>>
    %988 = arith.index_cast %987 : i32 to index
    %c0_645 = arith.constant 0 : index
    %989 = vector.load %arg6[%988, %c0_645] : memref<32x128xf32, #tpu.memory_space<vmem>>, vector<1x128xf32>
    %c3_646 = arith.constant 3 : index
    %c18_647 = arith.constant 18 : index
    %c0_648 = arith.constant 0 : index
    %990 = vector.load %arg11[%c3_646, %c18_647, %c0_648] : memref<4x32x128xf32, #tpu.memory_space<vmem>>, vector<1x1x128xf32>
    %991 = vector.shape_cast %990 : vector<1x1x128xf32> to vector<1x128xf32>
    %992 = vector.shape_cast %989 : vector<1x128xf32> to vector<1x1x128xf32>
    tpu.vector_store %arg11[%c3_646, %c18_647, %c0_648], %992 {strides = array<i32>} : memref<4x32x128xf32, #tpu.memory_space<vmem>>, vector<1x1x128xf32>,
    %c19_i32 = arith.constant 19 : i32
    %993 = arith.addi %1, %c19_i32 : i32
    %994 = arith.index_cast %993 : i32 to index
    %995 = memref.load %arg1[%994] : memref<32xi32, #tpu.memory_space<smem>>
    %996 = arith.index_cast %995 : i32 to index
    %c0_649 = arith.constant 0 : index
    %997 = vector.load %arg5[%996, %c0_649] : memref<24x128xf32, #tpu.memory_space<vmem>>, vector<1x128xf32>
    %c19 = arith.constant 19 : index
    %c0_650 = arith.constant 0 : index
    %998 = vector.load %arg9[%c19, %c0_650] : memref<32x128xf32, #tpu.memory_space<vmem>>, vector<1x128xf32>
    tpu.vector_store %arg9[%c19, %c0_650], %997 {strides = array<i32>} : memref<32x128xf32, #tpu.memory_space<vmem>>, vector<1x128xf32>,
    %c19_i32_651 = arith.constant 19 : i32
    %999 = arith.addi %1, %c19_i32_651 : i32
    %1000 = arith.index_cast %999 : i32 to index
    %1001 = memref.load %arg2[%1000] : memref<32xi32, #tpu.memory_space<smem>>
    %1002 = arith.index_cast %1001 : i32 to index
    %c0_652 = arith.constant 0 : index
    %1003 = vector.load %arg6[%1002, %c0_652] : memref<32x128xf32, #tpu.memory_space<vmem>>, vector<1x128xf32>
    %c19_653 = arith.constant 19 : index
    %c0_654 = arith.constant 0 : index
    %1004 = vector.load %arg10[%c19_653, %c0_654] : memref<32x128xf32, #tpu.memory_space<vmem>>, vector<1x128xf32>
    tpu.vector_store %arg10[%c19_653, %c0_654], %1003 {strides = array<i32>} : memref<32x128xf32, #tpu.memory_space<vmem>>, vector<1x128xf32>,
    %c19_i32_655 = arith.constant 19 : i32
    %1005 = arith.addi %1, %c19_i32_655 : i32
    %c4_i32_656 = arith.constant 4 : i32
    %1006 = arith.muli %1005, %c4_i32_656 : i32
    %c0_i32_657 = arith.constant 0 : i32
    %1007 = arith.addi %1006, %c0_i32_657 : i32
    %1008 = arith.index_cast %1007 : i32 to index
    %1009 = memref.load %arg3[%1008] : memref<128xi32, #tpu.memory_space<smem>>
    %1010 = arith.index_cast %1009 : i32 to index
    %c0_658 = arith.constant 0 : index
    %1011 = vector.load %arg6[%1010, %c0_658] : memref<32x128xf32, #tpu.memory_space<vmem>>, vector<1x128xf32>
    %c0_659 = arith.constant 0 : index
    %c19_660 = arith.constant 19 : index
    %c0_661 = arith.constant 0 : index
    %1012 = vector.load %arg11[%c0_659, %c19_660, %c0_661] : memref<4x32x128xf32, #tpu.memory_space<vmem>>, vector<1x1x128xf32>
    %1013 = vector.shape_cast %1012 : vector<1x1x128xf32> to vector<1x128xf32>
    %1014 = vector.shape_cast %1011 : vector<1x128xf32> to vector<1x1x128xf32>
    tpu.vector_store %arg11[%c0_659, %c19_660, %c0_661], %1014 {strides = array<i32>} : memref<4x32x128xf32, #tpu.memory_space<vmem>>, vector<1x1x128xf32>,
    %c19_i32_662 = arith.constant 19 : i32
    %1015 = arith.addi %1, %c19_i32_662 : i32
    %c4_i32_663 = arith.constant 4 : i32
    %1016 = arith.muli %1015, %c4_i32_663 : i32
    %c1_i32_664 = arith.constant 1 : i32
    %1017 = arith.addi %1016, %c1_i32_664 : i32
    %1018 = arith.index_cast %1017 : i32 to index
    %1019 = memref.load %arg3[%1018] : memref<128xi32, #tpu.memory_space<smem>>
    %1020 = arith.index_cast %1019 : i32 to index
    %c0_665 = arith.constant 0 : index
    %1021 = vector.load %arg6[%1020, %c0_665] : memref<32x128xf32, #tpu.memory_space<vmem>>, vector<1x128xf32>
    %c1_666 = arith.constant 1 : index
    %c19_667 = arith.constant 19 : index
    %c0_668 = arith.constant 0 : index
    %1022 = vector.load %arg11[%c1_666, %c19_667, %c0_668] : memref<4x32x128xf32, #tpu.memory_space<vmem>>, vector<1x1x128xf32>
    %1023 = vector.shape_cast %1022 : vector<1x1x128xf32> to vector<1x128xf32>
    %1024 = vector.shape_cast %1021 : vector<1x128xf32> to vector<1x1x128xf32>
    tpu.vector_store %arg11[%c1_666, %c19_667, %c0_668], %1024 {strides = array<i32>} : memref<4x32x128xf32, #tpu.memory_space<vmem>>, vector<1x1x128xf32>,
    %c19_i32_669 = arith.constant 19 : i32
    %1025 = arith.addi %1, %c19_i32_669 : i32
    %c4_i32_670 = arith.constant 4 : i32
    %1026 = arith.muli %1025, %c4_i32_670 : i32
    %c2_i32_671 = arith.constant 2 : i32
    %1027 = arith.addi %1026, %c2_i32_671 : i32
    %1028 = arith.index_cast %1027 : i32 to index
    %1029 = memref.load %arg3[%1028] : memref<128xi32, #tpu.memory_space<smem>>
    %1030 = arith.index_cast %1029 : i32 to index
    %c0_672 = arith.constant 0 : index
    %1031 = vector.load %arg6[%1030, %c0_672] : memref<32x128xf32, #tpu.memory_space<vmem>>, vector<1x128xf32>
    %c2_673 = arith.constant 2 : index
    %c19_674 = arith.constant 19 : index
    %c0_675 = arith.constant 0 : index
    %1032 = vector.load %arg11[%c2_673, %c19_674, %c0_675] : memref<4x32x128xf32, #tpu.memory_space<vmem>>, vector<1x1x128xf32>
    %1033 = vector.shape_cast %1032 : vector<1x1x128xf32> to vector<1x128xf32>
    %1034 = vector.shape_cast %1031 : vector<1x128xf32> to vector<1x1x128xf32>
    tpu.vector_store %arg11[%c2_673, %c19_674, %c0_675], %1034 {strides = array<i32>} : memref<4x32x128xf32, #tpu.memory_space<vmem>>, vector<1x1x128xf32>,
    %c19_i32_676 = arith.constant 19 : i32
    %1035 = arith.addi %1, %c19_i32_676 : i32
    %c4_i32_677 = arith.constant 4 : i32
    %1036 = arith.muli %1035, %c4_i32_677 : i32
    %c3_i32_678 = arith.constant 3 : i32
    %1037 = arith.addi %1036, %c3_i32_678 : i32
    %1038 = arith.index_cast %1037 : i32 to index
    %1039 = memref.load %arg3[%1038] : memref<128xi32, #tpu.memory_space<smem>>
    %1040 = arith.index_cast %1039 : i32 to index
    %c0_679 = arith.constant 0 : index
    %1041 = vector.load %arg6[%1040, %c0_679] : memref<32x128xf32, #tpu.memory_space<vmem>>, vector<1x128xf32>
    %c3_680 = arith.constant 3 : index
    %c19_681 = arith.constant 19 : index
    %c0_682 = arith.constant 0 : index
    %1042 = vector.load %arg11[%c3_680, %c19_681, %c0_682] : memref<4x32x128xf32, #tpu.memory_space<vmem>>, vector<1x1x128xf32>
    %1043 = vector.shape_cast %1042 : vector<1x1x128xf32> to vector<1x128xf32>
    %1044 = vector.shape_cast %1041 : vector<1x128xf32> to vector<1x1x128xf32>
    tpu.vector_store %arg11[%c3_680, %c19_681, %c0_682], %1044 {strides = array<i32>} : memref<4x32x128xf32, #tpu.memory_space<vmem>>, vector<1x1x128xf32>,
    %c20_i32 = arith.constant 20 : i32
    %1045 = arith.addi %1, %c20_i32 : i32
    %1046 = arith.index_cast %1045 : i32 to index
    %1047 = memref.load %arg1[%1046] : memref<32xi32, #tpu.memory_space<smem>>
    %1048 = arith.index_cast %1047 : i32 to index
    %c0_683 = arith.constant 0 : index
    %1049 = vector.load %arg5[%1048, %c0_683] : memref<24x128xf32, #tpu.memory_space<vmem>>, vector<1x128xf32>
    %c20 = arith.constant 20 : index
    %c0_684 = arith.constant 0 : index
    %1050 = vector.load %arg9[%c20, %c0_684] : memref<32x128xf32, #tpu.memory_space<vmem>>, vector<1x128xf32>
    tpu.vector_store %arg9[%c20, %c0_684], %1049 {strides = array<i32>} : memref<32x128xf32, #tpu.memory_space<vmem>>, vector<1x128xf32>,
    %c20_i32_685 = arith.constant 20 : i32
    %1051 = arith.addi %1, %c20_i32_685 : i32
    %1052 = arith.index_cast %1051 : i32 to index
    %1053 = memref.load %arg2[%1052] : memref<32xi32, #tpu.memory_space<smem>>
    %1054 = arith.index_cast %1053 : i32 to index
    %c0_686 = arith.constant 0 : index
    %1055 = vector.load %arg6[%1054, %c0_686] : memref<32x128xf32, #tpu.memory_space<vmem>>, vector<1x128xf32>
    %c20_687 = arith.constant 20 : index
    %c0_688 = arith.constant 0 : index
    %1056 = vector.load %arg10[%c20_687, %c0_688] : memref<32x128xf32, #tpu.memory_space<vmem>>, vector<1x128xf32>
    tpu.vector_store %arg10[%c20_687, %c0_688], %1055 {strides = array<i32>} : memref<32x128xf32, #tpu.memory_space<vmem>>, vector<1x128xf32>,
    %c20_i32_689 = arith.constant 20 : i32
    %1057 = arith.addi %1, %c20_i32_689 : i32
    %c4_i32_690 = arith.constant 4 : i32
    %1058 = arith.muli %1057, %c4_i32_690 : i32
    %c0_i32_691 = arith.constant 0 : i32
    %1059 = arith.addi %1058, %c0_i32_691 : i32
    %1060 = arith.index_cast %1059 : i32 to index
    %1061 = memref.load %arg3[%1060] : memref<128xi32, #tpu.memory_space<smem>>
    %1062 = arith.index_cast %1061 : i32 to index
    %c0_692 = arith.constant 0 : index
    %1063 = vector.load %arg6[%1062, %c0_692] : memref<32x128xf32, #tpu.memory_space<vmem>>, vector<1x128xf32>
    %c0_693 = arith.constant 0 : index
    %c20_694 = arith.constant 20 : index
    %c0_695 = arith.constant 0 : index
    %1064 = vector.load %arg11[%c0_693, %c20_694, %c0_695] : memref<4x32x128xf32, #tpu.memory_space<vmem>>, vector<1x1x128xf32>
    %1065 = vector.shape_cast %1064 : vector<1x1x128xf32> to vector<1x128xf32>
    %1066 = vector.shape_cast %1063 : vector<1x128xf32> to vector<1x1x128xf32>
    tpu.vector_store %arg11[%c0_693, %c20_694, %c0_695], %1066 {strides = array<i32>} : memref<4x32x128xf32, #tpu.memory_space<vmem>>, vector<1x1x128xf32>,
    %c20_i32_696 = arith.constant 20 : i32
    %1067 = arith.addi %1, %c20_i32_696 : i32
    %c4_i32_697 = arith.constant 4 : i32
    %1068 = arith.muli %1067, %c4_i32_697 : i32
    %c1_i32_698 = arith.constant 1 : i32
    %1069 = arith.addi %1068, %c1_i32_698 : i32
    %1070 = arith.index_cast %1069 : i32 to index
    %1071 = memref.load %arg3[%1070] : memref<128xi32, #tpu.memory_space<smem>>
    %1072 = arith.index_cast %1071 : i32 to index
    %c0_699 = arith.constant 0 : index
    %1073 = vector.load %arg6[%1072, %c0_699] : memref<32x128xf32, #tpu.memory_space<vmem>>, vector<1x128xf32>
    %c1_700 = arith.constant 1 : index
    %c20_701 = arith.constant 20 : index
    %c0_702 = arith.constant 0 : index
    %1074 = vector.load %arg11[%c1_700, %c20_701, %c0_702] : memref<4x32x128xf32, #tpu.memory_space<vmem>>, vector<1x1x128xf32>
    %1075 = vector.shape_cast %1074 : vector<1x1x128xf32> to vector<1x128xf32>
    %1076 = vector.shape_cast %1073 : vector<1x128xf32> to vector<1x1x128xf32>
    tpu.vector_store %arg11[%c1_700, %c20_701, %c0_702], %1076 {strides = array<i32>} : memref<4x32x128xf32, #tpu.memory_space<vmem>>, vector<1x1x128xf32>,
    %c20_i32_703 = arith.constant 20 : i32
    %1077 = arith.addi %1, %c20_i32_703 : i32
    %c4_i32_704 = arith.constant 4 : i32
    %1078 = arith.muli %1077, %c4_i32_704 : i32
    %c2_i32_705 = arith.constant 2 : i32
    %1079 = arith.addi %1078, %c2_i32_705 : i32
    %1080 = arith.index_cast %1079 : i32 to index
    %1081 = memref.load %arg3[%1080] : memref<128xi32, #tpu.memory_space<smem>>
    %1082 = arith.index_cast %1081 : i32 to index
    %c0_706 = arith.constant 0 : index
    %1083 = vector.load %arg6[%1082, %c0_706] : memref<32x128xf32, #tpu.memory_space<vmem>>, vector<1x128xf32>
    %c2_707 = arith.constant 2 : index
    %c20_708 = arith.constant 20 : index
    %c0_709 = arith.constant 0 : index
    %1084 = vector.load %arg11[%c2_707, %c20_708, %c0_709] : memref<4x32x128xf32, #tpu.memory_space<vmem>>, vector<1x1x128xf32>
    %1085 = vector.shape_cast %1084 : vector<1x1x128xf32> to vector<1x128xf32>
    %1086 = vector.shape_cast %1083 : vector<1x128xf32> to vector<1x1x128xf32>
    tpu.vector_store %arg11[%c2_707, %c20_708, %c0_709], %1086 {strides = array<i32>} : memref<4x32x128xf32, #tpu.memory_space<vmem>>, vector<1x1x128xf32>,
    %c20_i32_710 = arith.constant 20 : i32
    %1087 = arith.addi %1, %c20_i32_710 : i32
    %c4_i32_711 = arith.constant 4 : i32
    %1088 = arith.muli %1087, %c4_i32_711 : i32
    %c3_i32_712 = arith.constant 3 : i32
    %1089 = arith.addi %1088, %c3_i32_712 : i32
    %1090 = arith.index_cast %1089 : i32 to index
    %1091 = memref.load %arg3[%1090] : memref<128xi32, #tpu.memory_space<smem>>
    %1092 = arith.index_cast %1091 : i32 to index
    %c0_713 = arith.constant 0 : index
    %1093 = vector.load %arg6[%1092, %c0_713] : memref<32x128xf32, #tpu.memory_space<vmem>>, vector<1x128xf32>
    %c3_714 = arith.constant 3 : index
    %c20_715 = arith.constant 20 : index
    %c0_716 = arith.constant 0 : index
    %1094 = vector.load %arg11[%c3_714, %c20_715, %c0_716] : memref<4x32x128xf32, #tpu.memory_space<vmem>>, vector<1x1x128xf32>
    %1095 = vector.shape_cast %1094 : vector<1x1x128xf32> to vector<1x128xf32>
    %1096 = vector.shape_cast %1093 : vector<1x128xf32> to vector<1x1x128xf32>
    tpu.vector_store %arg11[%c3_714, %c20_715, %c0_716], %1096 {strides = array<i32>} : memref<4x32x128xf32, #tpu.memory_space<vmem>>, vector<1x1x128xf32>,
    %c21_i32 = arith.constant 21 : i32
    %1097 = arith.addi %1, %c21_i32 : i32
    %1098 = arith.index_cast %1097 : i32 to index
    %1099 = memref.load %arg1[%1098] : memref<32xi32, #tpu.memory_space<smem>>
    %1100 = arith.index_cast %1099 : i32 to index
    %c0_717 = arith.constant 0 : index
    %1101 = vector.load %arg5[%1100, %c0_717] : memref<24x128xf32, #tpu.memory_space<vmem>>, vector<1x128xf32>
    %c21 = arith.constant 21 : index
    %c0_718 = arith.constant 0 : index
    %1102 = vector.load %arg9[%c21, %c0_718] : memref<32x128xf32, #tpu.memory_space<vmem>>, vector<1x128xf32>
    tpu.vector_store %arg9[%c21, %c0_718], %1101 {strides = array<i32>} : memref<32x128xf32, #tpu.memory_space<vmem>>, vector<1x128xf32>,
    %c21_i32_719 = arith.constant 21 : i32
    %1103 = arith.addi %1, %c21_i32_719 : i32
    %1104 = arith.index_cast %1103 : i32 to index
    %1105 = memref.load %arg2[%1104] : memref<32xi32, #tpu.memory_space<smem>>
    %1106 = arith.index_cast %1105 : i32 to index
    %c0_720 = arith.constant 0 : index
    %1107 = vector.load %arg6[%1106, %c0_720] : memref<32x128xf32, #tpu.memory_space<vmem>>, vector<1x128xf32>
    %c21_721 = arith.constant 21 : index
    %c0_722 = arith.constant 0 : index
    %1108 = vector.load %arg10[%c21_721, %c0_722] : memref<32x128xf32, #tpu.memory_space<vmem>>, vector<1x128xf32>
    tpu.vector_store %arg10[%c21_721, %c0_722], %1107 {strides = array<i32>} : memref<32x128xf32, #tpu.memory_space<vmem>>, vector<1x128xf32>,
    %c21_i32_723 = arith.constant 21 : i32
    %1109 = arith.addi %1, %c21_i32_723 : i32
    %c4_i32_724 = arith.constant 4 : i32
    %1110 = arith.muli %1109, %c4_i32_724 : i32
    %c0_i32_725 = arith.constant 0 : i32
    %1111 = arith.addi %1110, %c0_i32_725 : i32
    %1112 = arith.index_cast %1111 : i32 to index
    %1113 = memref.load %arg3[%1112] : memref<128xi32, #tpu.memory_space<smem>>
    %1114 = arith.index_cast %1113 : i32 to index
    %c0_726 = arith.constant 0 : index
    %1115 = vector.load %arg6[%1114, %c0_726] : memref<32x128xf32, #tpu.memory_space<vmem>>, vector<1x128xf32>
    %c0_727 = arith.constant 0 : index
    %c21_728 = arith.constant 21 : index
    %c0_729 = arith.constant 0 : index
    %1116 = vector.load %arg11[%c0_727, %c21_728, %c0_729] : memref<4x32x128xf32, #tpu.memory_space<vmem>>, vector<1x1x128xf32>
    %1117 = vector.shape_cast %1116 : vector<1x1x128xf32> to vector<1x128xf32>
    %1118 = vector.shape_cast %1115 : vector<1x128xf32> to vector<1x1x128xf32>
    tpu.vector_store %arg11[%c0_727, %c21_728, %c0_729], %1118 {strides = array<i32>} : memref<4x32x128xf32, #tpu.memory_space<vmem>>, vector<1x1x128xf32>,
    %c21_i32_730 = arith.constant 21 : i32
    %1119 = arith.addi %1, %c21_i32_730 : i32
    %c4_i32_731 = arith.constant 4 : i32
    %1120 = arith.muli %1119, %c4_i32_731 : i32
    %c1_i32_732 = arith.constant 1 : i32
    %1121 = arith.addi %1120, %c1_i32_732 : i32
    %1122 = arith.index_cast %1121 : i32 to index
    %1123 = memref.load %arg3[%1122] : memref<128xi32, #tpu.memory_space<smem>>
    %1124 = arith.index_cast %1123 : i32 to index
    %c0_733 = arith.constant 0 : index
    %1125 = vector.load %arg6[%1124, %c0_733] : memref<32x128xf32, #tpu.memory_space<vmem>>, vector<1x128xf32>
    %c1_734 = arith.constant 1 : index
    %c21_735 = arith.constant 21 : index
    %c0_736 = arith.constant 0 : index
    %1126 = vector.load %arg11[%c1_734, %c21_735, %c0_736] : memref<4x32x128xf32, #tpu.memory_space<vmem>>, vector<1x1x128xf32>
    %1127 = vector.shape_cast %1126 : vector<1x1x128xf32> to vector<1x128xf32>
    %1128 = vector.shape_cast %1125 : vector<1x128xf32> to vector<1x1x128xf32>
    tpu.vector_store %arg11[%c1_734, %c21_735, %c0_736], %1128 {strides = array<i32>} : memref<4x32x128xf32, #tpu.memory_space<vmem>>, vector<1x1x128xf32>,
    %c21_i32_737 = arith.constant 21 : i32
    %1129 = arith.addi %1, %c21_i32_737 : i32
    %c4_i32_738 = arith.constant 4 : i32
    %1130 = arith.muli %1129, %c4_i32_738 : i32
    %c2_i32_739 = arith.constant 2 : i32
    %1131 = arith.addi %1130, %c2_i32_739 : i32
    %1132 = arith.index_cast %1131 : i32 to index
    %1133 = memref.load %arg3[%1132] : memref<128xi32, #tpu.memory_space<smem>>
    %1134 = arith.index_cast %1133 : i32 to index
    %c0_740 = arith.constant 0 : index
    %1135 = vector.load %arg6[%1134, %c0_740] : memref<32x128xf32, #tpu.memory_space<vmem>>, vector<1x128xf32>
    %c2_741 = arith.constant 2 : index
    %c21_742 = arith.constant 21 : index
    %c0_743 = arith.constant 0 : index
    %1136 = vector.load %arg11[%c2_741, %c21_742, %c0_743] : memref<4x32x128xf32, #tpu.memory_space<vmem>>, vector<1x1x128xf32>
    %1137 = vector.shape_cast %1136 : vector<1x1x128xf32> to vector<1x128xf32>
    %1138 = vector.shape_cast %1135 : vector<1x128xf32> to vector<1x1x128xf32>
    tpu.vector_store %arg11[%c2_741, %c21_742, %c0_743], %1138 {strides = array<i32>} : memref<4x32x128xf32, #tpu.memory_space<vmem>>, vector<1x1x128xf32>,
    %c21_i32_744 = arith.constant 21 : i32
    %1139 = arith.addi %1, %c21_i32_744 : i32
    %c4_i32_745 = arith.constant 4 : i32
    %1140 = arith.muli %1139, %c4_i32_745 : i32
    %c3_i32_746 = arith.constant 3 : i32
    %1141 = arith.addi %1140, %c3_i32_746 : i32
    %1142 = arith.index_cast %1141 : i32 to index
    %1143 = memref.load %arg3[%1142] : memref<128xi32, #tpu.memory_space<smem>>
    %1144 = arith.index_cast %1143 : i32 to index
    %c0_747 = arith.constant 0 : index
    %1145 = vector.load %arg6[%1144, %c0_747] : memref<32x128xf32, #tpu.memory_space<vmem>>, vector<1x128xf32>
    %c3_748 = arith.constant 3 : index
    %c21_749 = arith.constant 21 : index
    %c0_750 = arith.constant 0 : index
    %1146 = vector.load %arg11[%c3_748, %c21_749, %c0_750] : memref<4x32x128xf32, #tpu.memory_space<vmem>>, vector<1x1x128xf32>
    %1147 = vector.shape_cast %1146 : vector<1x1x128xf32> to vector<1x128xf32>
    %1148 = vector.shape_cast %1145 : vector<1x128xf32> to vector<1x1x128xf32>
    tpu.vector_store %arg11[%c3_748, %c21_749, %c0_750], %1148 {strides = array<i32>} : memref<4x32x128xf32, #tpu.memory_space<vmem>>, vector<1x1x128xf32>,
    %c22_i32 = arith.constant 22 : i32
    %1149 = arith.addi %1, %c22_i32 : i32
    %1150 = arith.index_cast %1149 : i32 to index
    %1151 = memref.load %arg1[%1150] : memref<32xi32, #tpu.memory_space<smem>>
    %1152 = arith.index_cast %1151 : i32 to index
    %c0_751 = arith.constant 0 : index
    %1153 = vector.load %arg5[%1152, %c0_751] : memref<24x128xf32, #tpu.memory_space<vmem>>, vector<1x128xf32>
    %c22 = arith.constant 22 : index
    %c0_752 = arith.constant 0 : index
    %1154 = vector.load %arg9[%c22, %c0_752] : memref<32x128xf32, #tpu.memory_space<vmem>>, vector<1x128xf32>
    tpu.vector_store %arg9[%c22, %c0_752], %1153 {strides = array<i32>} : memref<32x128xf32, #tpu.memory_space<vmem>>, vector<1x128xf32>,
    %c22_i32_753 = arith.constant 22 : i32
    %1155 = arith.addi %1, %c22_i32_753 : i32
    %1156 = arith.index_cast %1155 : i32 to index
    %1157 = memref.load %arg2[%1156] : memref<32xi32, #tpu.memory_space<smem>>
    %1158 = arith.index_cast %1157 : i32 to index
    %c0_754 = arith.constant 0 : index
    %1159 = vector.load %arg6[%1158, %c0_754] : memref<32x128xf32, #tpu.memory_space<vmem>>, vector<1x128xf32>
    %c22_755 = arith.constant 22 : index
    %c0_756 = arith.constant 0 : index
    %1160 = vector.load %arg10[%c22_755, %c0_756] : memref<32x128xf32, #tpu.memory_space<vmem>>, vector<1x128xf32>
    tpu.vector_store %arg10[%c22_755, %c0_756], %1159 {strides = array<i32>} : memref<32x128xf32, #tpu.memory_space<vmem>>, vector<1x128xf32>,
    %c22_i32_757 = arith.constant 22 : i32
    %1161 = arith.addi %1, %c22_i32_757 : i32
    %c4_i32_758 = arith.constant 4 : i32
    %1162 = arith.muli %1161, %c4_i32_758 : i32
    %c0_i32_759 = arith.constant 0 : i32
    %1163 = arith.addi %1162, %c0_i32_759 : i32
    %1164 = arith.index_cast %1163 : i32 to index
    %1165 = memref.load %arg3[%1164] : memref<128xi32, #tpu.memory_space<smem>>
    %1166 = arith.index_cast %1165 : i32 to index
    %c0_760 = arith.constant 0 : index
    %1167 = vector.load %arg6[%1166, %c0_760] : memref<32x128xf32, #tpu.memory_space<vmem>>, vector<1x128xf32>
    %c0_761 = arith.constant 0 : index
    %c22_762 = arith.constant 22 : index
    %c0_763 = arith.constant 0 : index
    %1168 = vector.load %arg11[%c0_761, %c22_762, %c0_763] : memref<4x32x128xf32, #tpu.memory_space<vmem>>, vector<1x1x128xf32>
    %1169 = vector.shape_cast %1168 : vector<1x1x128xf32> to vector<1x128xf32>
    %1170 = vector.shape_cast %1167 : vector<1x128xf32> to vector<1x1x128xf32>
    tpu.vector_store %arg11[%c0_761, %c22_762, %c0_763], %1170 {strides = array<i32>} : memref<4x32x128xf32, #tpu.memory_space<vmem>>, vector<1x1x128xf32>,
    %c22_i32_764 = arith.constant 22 : i32
    %1171 = arith.addi %1, %c22_i32_764 : i32
    %c4_i32_765 = arith.constant 4 : i32
    %1172 = arith.muli %1171, %c4_i32_765 : i32
    %c1_i32_766 = arith.constant 1 : i32
    %1173 = arith.addi %1172, %c1_i32_766 : i32
    %1174 = arith.index_cast %1173 : i32 to index
    %1175 = memref.load %arg3[%1174] : memref<128xi32, #tpu.memory_space<smem>>
    %1176 = arith.index_cast %1175 : i32 to index
    %c0_767 = arith.constant 0 : index
    %1177 = vector.load %arg6[%1176, %c0_767] : memref<32x128xf32, #tpu.memory_space<vmem>>, vector<1x128xf32>
    %c1_768 = arith.constant 1 : index
    %c22_769 = arith.constant 22 : index
    %c0_770 = arith.constant 0 : index
    %1178 = vector.load %arg11[%c1_768, %c22_769, %c0_770] : memref<4x32x128xf32, #tpu.memory_space<vmem>>, vector<1x1x128xf32>
    %1179 = vector.shape_cast %1178 : vector<1x1x128xf32> to vector<1x128xf32>
    %1180 = vector.shape_cast %1177 : vector<1x128xf32> to vector<1x1x128xf32>
    tpu.vector_store %arg11[%c1_768, %c22_769, %c0_770], %1180 {strides = array<i32>} : memref<4x32x128xf32, #tpu.memory_space<vmem>>, vector<1x1x128xf32>,
    %c22_i32_771 = arith.constant 22 : i32
    %1181 = arith.addi %1, %c22_i32_771 : i32
    %c4_i32_772 = arith.constant 4 : i32
    %1182 = arith.muli %1181, %c4_i32_772 : i32
    %c2_i32_773 = arith.constant 2 : i32
    %1183 = arith.addi %1182, %c2_i32_773 : i32
    %1184 = arith.index_cast %1183 : i32 to index
    %1185 = memref.load %arg3[%1184] : memref<128xi32, #tpu.memory_space<smem>>
    %1186 = arith.index_cast %1185 : i32 to index
    %c0_774 = arith.constant 0 : index
    %1187 = vector.load %arg6[%1186, %c0_774] : memref<32x128xf32, #tpu.memory_space<vmem>>, vector<1x128xf32>
    %c2_775 = arith.constant 2 : index
    %c22_776 = arith.constant 22 : index
    %c0_777 = arith.constant 0 : index
    %1188 = vector.load %arg11[%c2_775, %c22_776, %c0_777] : memref<4x32x128xf32, #tpu.memory_space<vmem>>, vector<1x1x128xf32>
    %1189 = vector.shape_cast %1188 : vector<1x1x128xf32> to vector<1x128xf32>
    %1190 = vector.shape_cast %1187 : vector<1x128xf32> to vector<1x1x128xf32>
    tpu.vector_store %arg11[%c2_775, %c22_776, %c0_777], %1190 {strides = array<i32>} : memref<4x32x128xf32, #tpu.memory_space<vmem>>, vector<1x1x128xf32>,
    %c22_i32_778 = arith.constant 22 : i32
    %1191 = arith.addi %1, %c22_i32_778 : i32
    %c4_i32_779 = arith.constant 4 : i32
    %1192 = arith.muli %1191, %c4_i32_779 : i32
    %c3_i32_780 = arith.constant 3 : i32
    %1193 = arith.addi %1192, %c3_i32_780 : i32
    %1194 = arith.index_cast %1193 : i32 to index
    %1195 = memref.load %arg3[%1194] : memref<128xi32, #tpu.memory_space<smem>>
    %1196 = arith.index_cast %1195 : i32 to index
    %c0_781 = arith.constant 0 : index
    %1197 = vector.load %arg6[%1196, %c0_781] : memref<32x128xf32, #tpu.memory_space<vmem>>, vector<1x128xf32>
    %c3_782 = arith.constant 3 : index
    %c22_783 = arith.constant 22 : index
    %c0_784 = arith.constant 0 : index
    %1198 = vector.load %arg11[%c3_782, %c22_783, %c0_784] : memref<4x32x128xf32, #tpu.memory_space<vmem>>, vector<1x1x128xf32>
    %1199 = vector.shape_cast %1198 : vector<1x1x128xf32> to vector<1x128xf32>
    %1200 = vector.shape_cast %1197 : vector<1x128xf32> to vector<1x1x128xf32>
    tpu.vector_store %arg11[%c3_782, %c22_783, %c0_784], %1200 {strides = array<i32>} : memref<4x32x128xf32, #tpu.memory_space<vmem>>, vector<1x1x128xf32>,
    %c23_i32 = arith.constant 23 : i32
    %1201 = arith.addi %1, %c23_i32 : i32
    %1202 = arith.index_cast %1201 : i32 to index
    %1203 = memref.load %arg1[%1202] : memref<32xi32, #tpu.memory_space<smem>>
    %1204 = arith.index_cast %1203 : i32 to index
    %c0_785 = arith.constant 0 : index
    %1205 = vector.load %arg5[%1204, %c0_785] : memref<24x128xf32, #tpu.memory_space<vmem>>, vector<1x128xf32>
    %c23 = arith.constant 23 : index
    %c0_786 = arith.constant 0 : index
    %1206 = vector.load %arg9[%c23, %c0_786] : memref<32x128xf32, #tpu.memory_space<vmem>>, vector<1x128xf32>
    tpu.vector_store %arg9[%c23, %c0_786], %1205 {strides = array<i32>} : memref<32x128xf32, #tpu.memory_space<vmem>>, vector<1x128xf32>,
    %c23_i32_787 = arith.constant 23 : i32
    %1207 = arith.addi %1, %c23_i32_787 : i32
    %1208 = arith.index_cast %1207 : i32 to index
    %1209 = memref.load %arg2[%1208] : memref<32xi32, #tpu.memory_space<smem>>
    %1210 = arith.index_cast %1209 : i32 to index
    %c0_788 = arith.constant 0 : index
    %1211 = vector.load %arg6[%1210, %c0_788] : memref<32x128xf32, #tpu.memory_space<vmem>>, vector<1x128xf32>
    %c23_789 = arith.constant 23 : index
    %c0_790 = arith.constant 0 : index
    %1212 = vector.load %arg10[%c23_789, %c0_790] : memref<32x128xf32, #tpu.memory_space<vmem>>, vector<1x128xf32>
    tpu.vector_store %arg10[%c23_789, %c0_790], %1211 {strides = array<i32>} : memref<32x128xf32, #tpu.memory_space<vmem>>, vector<1x128xf32>,
    %c23_i32_791 = arith.constant 23 : i32
    %1213 = arith.addi %1, %c23_i32_791 : i32
    %c4_i32_792 = arith.constant 4 : i32
    %1214 = arith.muli %1213, %c4_i32_792 : i32
    %c0_i32_793 = arith.constant 0 : i32
    %1215 = arith.addi %1214, %c0_i32_793 : i32
    %1216 = arith.index_cast %1215 : i32 to index
    %1217 = memref.load %arg3[%1216] : memref<128xi32, #tpu.memory_space<smem>>
    %1218 = arith.index_cast %1217 : i32 to index
    %c0_794 = arith.constant 0 : index
    %1219 = vector.load %arg6[%1218, %c0_794] : memref<32x128xf32, #tpu.memory_space<vmem>>, vector<1x128xf32>
    %c0_795 = arith.constant 0 : index
    %c23_796 = arith.constant 23 : index
    %c0_797 = arith.constant 0 : index
    %1220 = vector.load %arg11[%c0_795, %c23_796, %c0_797] : memref<4x32x128xf32, #tpu.memory_space<vmem>>, vector<1x1x128xf32>
    %1221 = vector.shape_cast %1220 : vector<1x1x128xf32> to vector<1x128xf32>
    %1222 = vector.shape_cast %1219 : vector<1x128xf32> to vector<1x1x128xf32>
    tpu.vector_store %arg11[%c0_795, %c23_796, %c0_797], %1222 {strides = array<i32>} : memref<4x32x128xf32, #tpu.memory_space<vmem>>, vector<1x1x128xf32>,
    %c23_i32_798 = arith.constant 23 : i32
    %1223 = arith.addi %1, %c23_i32_798 : i32
    %c4_i32_799 = arith.constant 4 : i32
    %1224 = arith.muli %1223, %c4_i32_799 : i32
    %c1_i32_800 = arith.constant 1 : i32
    %1225 = arith.addi %1224, %c1_i32_800 : i32
    %1226 = arith.index_cast %1225 : i32 to index
    %1227 = memref.load %arg3[%1226] : memref<128xi32, #tpu.memory_space<smem>>
    %1228 = arith.index_cast %1227 : i32 to index
    %c0_801 = arith.constant 0 : index
    %1229 = vector.load %arg6[%1228, %c0_801] : memref<32x128xf32, #tpu.memory_space<vmem>>, vector<1x128xf32>
    %c1_802 = arith.constant 1 : index
    %c23_803 = arith.constant 23 : index
    %c0_804 = arith.constant 0 : index
    %1230 = vector.load %arg11[%c1_802, %c23_803, %c0_804] : memref<4x32x128xf32, #tpu.memory_space<vmem>>, vector<1x1x128xf32>
    %1231 = vector.shape_cast %1230 : vector<1x1x128xf32> to vector<1x128xf32>
    %1232 = vector.shape_cast %1229 : vector<1x128xf32> to vector<1x1x128xf32>
    tpu.vector_store %arg11[%c1_802, %c23_803, %c0_804], %1232 {strides = array<i32>} : memref<4x32x128xf32, #tpu.memory_space<vmem>>, vector<1x1x128xf32>,
    %c23_i32_805 = arith.constant 23 : i32
    %1233 = arith.addi %1, %c23_i32_805 : i32
    %c4_i32_806 = arith.constant 4 : i32
    %1234 = arith.muli %1233, %c4_i32_806 : i32
    %c2_i32_807 = arith.constant 2 : i32
    %1235 = arith.addi %1234, %c2_i32_807 : i32
    %1236 = arith.index_cast %1235 : i32 to index
    %1237 = memref.load %arg3[%1236] : memref<128xi32, #tpu.memory_space<smem>>
    %1238 = arith.index_cast %1237 : i32 to index
    %c0_808 = arith.constant 0 : index
    %1239 = vector.load %arg6[%1238, %c0_808] : memref<32x128xf32, #tpu.memory_space<vmem>>, vector<1x128xf32>
    %c2_809 = arith.constant 2 : index
    %c23_810 = arith.constant 23 : index
    %c0_811 = arith.constant 0 : index
    %1240 = vector.load %arg11[%c2_809, %c23_810, %c0_811] : memref<4x32x128xf32, #tpu.memory_space<vmem>>, vector<1x1x128xf32>
    %1241 = vector.shape_cast %1240 : vector<1x1x128xf32> to vector<1x128xf32>
    %1242 = vector.shape_cast %1239 : vector<1x128xf32> to vector<1x1x128xf32>
    tpu.vector_store %arg11[%c2_809, %c23_810, %c0_811], %1242 {strides = array<i32>} : memref<4x32x128xf32, #tpu.memory_space<vmem>>, vector<1x1x128xf32>,
    %c23_i32_812 = arith.constant 23 : i32
    %1243 = arith.addi %1, %c23_i32_812 : i32
    %c4_i32_813 = arith.constant 4 : i32
    %1244 = arith.muli %1243, %c4_i32_813 : i32
    %c3_i32_814 = arith.constant 3 : i32
    %1245 = arith.addi %1244, %c3_i32_814 : i32
    %1246 = arith.index_cast %1245 : i32 to index
    %1247 = memref.load %arg3[%1246] : memref<128xi32, #tpu.memory_space<smem>>
    %1248 = arith.index_cast %1247 : i32 to index
    %c0_815 = arith.constant 0 : index
    %1249 = vector.load %arg6[%1248, %c0_815] : memref<32x128xf32, #tpu.memory_space<vmem>>, vector<1x128xf32>
    %c3_816 = arith.constant 3 : index
    %c23_817 = arith.constant 23 : index
    %c0_818 = arith.constant 0 : index
    %1250 = vector.load %arg11[%c3_816, %c23_817, %c0_818] : memref<4x32x128xf32, #tpu.memory_space<vmem>>, vector<1x1x128xf32>
    %1251 = vector.shape_cast %1250 : vector<1x1x128xf32> to vector<1x128xf32>
    %1252 = vector.shape_cast %1249 : vector<1x128xf32> to vector<1x1x128xf32>
    tpu.vector_store %arg11[%c3_816, %c23_817, %c0_818], %1252 {strides = array<i32>} : memref<4x32x128xf32, #tpu.memory_space<vmem>>, vector<1x1x128xf32>,
    %c24_i32 = arith.constant 24 : i32
    %1253 = arith.addi %1, %c24_i32 : i32
    %1254 = arith.index_cast %1253 : i32 to index
    %1255 = memref.load %arg1[%1254] : memref<32xi32, #tpu.memory_space<smem>>
    %1256 = arith.index_cast %1255 : i32 to index
    %c0_819 = arith.constant 0 : index
    %1257 = vector.load %arg5[%1256, %c0_819] : memref<24x128xf32, #tpu.memory_space<vmem>>, vector<1x128xf32>
    %c24 = arith.constant 24 : index
    %c0_820 = arith.constant 0 : index
    %1258 = vector.load %arg9[%c24, %c0_820] : memref<32x128xf32, #tpu.memory_space<vmem>>, vector<1x128xf32>
    tpu.vector_store %arg9[%c24, %c0_820], %1257 {strides = array<i32>} : memref<32x128xf32, #tpu.memory_space<vmem>>, vector<1x128xf32>,
    %c24_i32_821 = arith.constant 24 : i32
    %1259 = arith.addi %1, %c24_i32_821 : i32
    %1260 = arith.index_cast %1259 : i32 to index
    %1261 = memref.load %arg2[%1260] : memref<32xi32, #tpu.memory_space<smem>>
    %1262 = arith.index_cast %1261 : i32 to index
    %c0_822 = arith.constant 0 : index
    %1263 = vector.load %arg6[%1262, %c0_822] : memref<32x128xf32, #tpu.memory_space<vmem>>, vector<1x128xf32>
    %c24_823 = arith.constant 24 : index
    %c0_824 = arith.constant 0 : index
    %1264 = vector.load %arg10[%c24_823, %c0_824] : memref<32x128xf32, #tpu.memory_space<vmem>>, vector<1x128xf32>
    tpu.vector_store %arg10[%c24_823, %c0_824], %1263 {strides = array<i32>} : memref<32x128xf32, #tpu.memory_space<vmem>>, vector<1x128xf32>,
    %c24_i32_825 = arith.constant 24 : i32
    %1265 = arith.addi %1, %c24_i32_825 : i32
    %c4_i32_826 = arith.constant 4 : i32
    %1266 = arith.muli %1265, %c4_i32_826 : i32
    %c0_i32_827 = arith.constant 0 : i32
    %1267 = arith.addi %1266, %c0_i32_827 : i32
    %1268 = arith.index_cast %1267 : i32 to index
    %1269 = memref.load %arg3[%1268] : memref<128xi32, #tpu.memory_space<smem>>
    %1270 = arith.index_cast %1269 : i32 to index
    %c0_828 = arith.constant 0 : index
    %1271 = vector.load %arg6[%1270, %c0_828] : memref<32x128xf32, #tpu.memory_space<vmem>>, vector<1x128xf32>
    %c0_829 = arith.constant 0 : index
    %c24_830 = arith.constant 24 : index
    %c0_831 = arith.constant 0 : index
    %1272 = vector.load %arg11[%c0_829, %c24_830, %c0_831] : memref<4x32x128xf32, #tpu.memory_space<vmem>>, vector<1x1x128xf32>
    %1273 = vector.shape_cast %1272 : vector<1x1x128xf32> to vector<1x128xf32>
    %1274 = vector.shape_cast %1271 : vector<1x128xf32> to vector<1x1x128xf32>
    tpu.vector_store %arg11[%c0_829, %c24_830, %c0_831], %1274 {strides = array<i32>} : memref<4x32x128xf32, #tpu.memory_space<vmem>>, vector<1x1x128xf32>,
    %c24_i32_832 = arith.constant 24 : i32
    %1275 = arith.addi %1, %c24_i32_832 : i32
    %c4_i32_833 = arith.constant 4 : i32
    %1276 = arith.muli %1275, %c4_i32_833 : i32
    %c1_i32_834 = arith.constant 1 : i32
    %1277 = arith.addi %1276, %c1_i32_834 : i32
    %1278 = arith.index_cast %1277 : i32 to index
    %1279 = memref.load %arg3[%1278] : memref<128xi32, #tpu.memory_space<smem>>
    %1280 = arith.index_cast %1279 : i32 to index
    %c0_835 = arith.constant 0 : index
    %1281 = vector.load %arg6[%1280, %c0_835] : memref<32x128xf32, #tpu.memory_space<vmem>>, vector<1x128xf32>
    %c1_836 = arith.constant 1 : index
    %c24_837 = arith.constant 24 : index
    %c0_838 = arith.constant 0 : index
    %1282 = vector.load %arg11[%c1_836, %c24_837, %c0_838] : memref<4x32x128xf32, #tpu.memory_space<vmem>>, vector<1x1x128xf32>
    %1283 = vector.shape_cast %1282 : vector<1x1x128xf32> to vector<1x128xf32>
    %1284 = vector.shape_cast %1281 : vector<1x128xf32> to vector<1x1x128xf32>
    tpu.vector_store %arg11[%c1_836, %c24_837, %c0_838], %1284 {strides = array<i32>} : memref<4x32x128xf32, #tpu.memory_space<vmem>>, vector<1x1x128xf32>,
    %c24_i32_839 = arith.constant 24 : i32
    %1285 = arith.addi %1, %c24_i32_839 : i32
    %c4_i32_840 = arith.constant 4 : i32
    %1286 = arith.muli %1285, %c4_i32_840 : i32
    %c2_i32_841 = arith.constant 2 : i32
    %1287 = arith.addi %1286, %c2_i32_841 : i32
    %1288 = arith.index_cast %1287 : i32 to index
    %1289 = memref.load %arg3[%1288] : memref<128xi32, #tpu.memory_space<smem>>
    %1290 = arith.index_cast %1289 : i32 to index
    %c0_842 = arith.constant 0 : index
    %1291 = vector.load %arg6[%1290, %c0_842] : memref<32x128xf32, #tpu.memory_space<vmem>>, vector<1x128xf32>
    %c2_843 = arith.constant 2 : index
    %c24_844 = arith.constant 24 : index
    %c0_845 = arith.constant 0 : index
    %1292 = vector.load %arg11[%c2_843, %c24_844, %c0_845] : memref<4x32x128xf32, #tpu.memory_space<vmem>>, vector<1x1x128xf32>
    %1293 = vector.shape_cast %1292 : vector<1x1x128xf32> to vector<1x128xf32>
    %1294 = vector.shape_cast %1291 : vector<1x128xf32> to vector<1x1x128xf32>
    tpu.vector_store %arg11[%c2_843, %c24_844, %c0_845], %1294 {strides = array<i32>} : memref<4x32x128xf32, #tpu.memory_space<vmem>>, vector<1x1x128xf32>,
    %c24_i32_846 = arith.constant 24 : i32
    %1295 = arith.addi %1, %c24_i32_846 : i32
    %c4_i32_847 = arith.constant 4 : i32
    %1296 = arith.muli %1295, %c4_i32_847 : i32
    %c3_i32_848 = arith.constant 3 : i32
    %1297 = arith.addi %1296, %c3_i32_848 : i32
    %1298 = arith.index_cast %1297 : i32 to index
    %1299 = memref.load %arg3[%1298] : memref<128xi32, #tpu.memory_space<smem>>
    %1300 = arith.index_cast %1299 : i32 to index
    %c0_849 = arith.constant 0 : index
    %1301 = vector.load %arg6[%1300, %c0_849] : memref<32x128xf32, #tpu.memory_space<vmem>>, vector<1x128xf32>
    %c3_850 = arith.constant 3 : index
    %c24_851 = arith.constant 24 : index
    %c0_852 = arith.constant 0 : index
    %1302 = vector.load %arg11[%c3_850, %c24_851, %c0_852] : memref<4x32x128xf32, #tpu.memory_space<vmem>>, vector<1x1x128xf32>
    %1303 = vector.shape_cast %1302 : vector<1x1x128xf32> to vector<1x128xf32>
    %1304 = vector.shape_cast %1301 : vector<1x128xf32> to vector<1x1x128xf32>
    tpu.vector_store %arg11[%c3_850, %c24_851, %c0_852], %1304 {strides = array<i32>} : memref<4x32x128xf32, #tpu.memory_space<vmem>>, vector<1x1x128xf32>,
    %c25_i32 = arith.constant 25 : i32
    %1305 = arith.addi %1, %c25_i32 : i32
    %1306 = arith.index_cast %1305 : i32 to index
    %1307 = memref.load %arg1[%1306] : memref<32xi32, #tpu.memory_space<smem>>
    %1308 = arith.index_cast %1307 : i32 to index
    %c0_853 = arith.constant 0 : index
    %1309 = vector.load %arg5[%1308, %c0_853] : memref<24x128xf32, #tpu.memory_space<vmem>>, vector<1x128xf32>
    %c25 = arith.constant 25 : index
    %c0_854 = arith.constant 0 : index
    %1310 = vector.load %arg9[%c25, %c0_854] : memref<32x128xf32, #tpu.memory_space<vmem>>, vector<1x128xf32>
    tpu.vector_store %arg9[%c25, %c0_854], %1309 {strides = array<i32>} : memref<32x128xf32, #tpu.memory_space<vmem>>, vector<1x128xf32>,
    %c25_i32_855 = arith.constant 25 : i32
    %1311 = arith.addi %1, %c25_i32_855 : i32
    %1312 = arith.index_cast %1311 : i32 to index
    %1313 = memref.load %arg2[%1312] : memref<32xi32, #tpu.memory_space<smem>>
    %1314 = arith.index_cast %1313 : i32 to index
    %c0_856 = arith.constant 0 : index
    %1315 = vector.load %arg6[%1314, %c0_856] : memref<32x128xf32, #tpu.memory_space<vmem>>, vector<1x128xf32>
    %c25_857 = arith.constant 25 : index
    %c0_858 = arith.constant 0 : index
    %1316 = vector.load %arg10[%c25_857, %c0_858] : memref<32x128xf32, #tpu.memory_space<vmem>>, vector<1x128xf32>
    tpu.vector_store %arg10[%c25_857, %c0_858], %1315 {strides = array<i32>} : memref<32x128xf32, #tpu.memory_space<vmem>>, vector<1x128xf32>,
    %c25_i32_859 = arith.constant 25 : i32
    %1317 = arith.addi %1, %c25_i32_859 : i32
    %c4_i32_860 = arith.constant 4 : i32
    %1318 = arith.muli %1317, %c4_i32_860 : i32
    %c0_i32_861 = arith.constant 0 : i32
    %1319 = arith.addi %1318, %c0_i32_861 : i32
    %1320 = arith.index_cast %1319 : i32 to index
    %1321 = memref.load %arg3[%1320] : memref<128xi32, #tpu.memory_space<smem>>
    %1322 = arith.index_cast %1321 : i32 to index
    %c0_862 = arith.constant 0 : index
    %1323 = vector.load %arg6[%1322, %c0_862] : memref<32x128xf32, #tpu.memory_space<vmem>>, vector<1x128xf32>
    %c0_863 = arith.constant 0 : index
    %c25_864 = arith.constant 25 : index
    %c0_865 = arith.constant 0 : index
    %1324 = vector.load %arg11[%c0_863, %c25_864, %c0_865] : memref<4x32x128xf32, #tpu.memory_space<vmem>>, vector<1x1x128xf32>
    %1325 = vector.shape_cast %1324 : vector<1x1x128xf32> to vector<1x128xf32>
    %1326 = vector.shape_cast %1323 : vector<1x128xf32> to vector<1x1x128xf32>
    tpu.vector_store %arg11[%c0_863, %c25_864, %c0_865], %1326 {strides = array<i32>} : memref<4x32x128xf32, #tpu.memory_space<vmem>>, vector<1x1x128xf32>,
    %c25_i32_866 = arith.constant 25 : i32
    %1327 = arith.addi %1, %c25_i32_866 : i32
    %c4_i32_867 = arith.constant 4 : i32
    %1328 = arith.muli %1327, %c4_i32_867 : i32
    %c1_i32_868 = arith.constant 1 : i32
    %1329 = arith.addi %1328, %c1_i32_868 : i32
    %1330 = arith.index_cast %1329 : i32 to index
    %1331 = memref.load %arg3[%1330] : memref<128xi32, #tpu.memory_space<smem>>
    %1332 = arith.index_cast %1331 : i32 to index
    %c0_869 = arith.constant 0 : index
    %1333 = vector.load %arg6[%1332, %c0_869] : memref<32x128xf32, #tpu.memory_space<vmem>>, vector<1x128xf32>
    %c1_870 = arith.constant 1 : index
    %c25_871 = arith.constant 25 : index
    %c0_872 = arith.constant 0 : index
    %1334 = vector.load %arg11[%c1_870, %c25_871, %c0_872] : memref<4x32x128xf32, #tpu.memory_space<vmem>>, vector<1x1x128xf32>
    %1335 = vector.shape_cast %1334 : vector<1x1x128xf32> to vector<1x128xf32>
    %1336 = vector.shape_cast %1333 : vector<1x128xf32> to vector<1x1x128xf32>
    tpu.vector_store %arg11[%c1_870, %c25_871, %c0_872], %1336 {strides = array<i32>} : memref<4x32x128xf32, #tpu.memory_space<vmem>>, vector<1x1x128xf32>,
    %c25_i32_873 = arith.constant 25 : i32
    %1337 = arith.addi %1, %c25_i32_873 : i32
    %c4_i32_874 = arith.constant 4 : i32
    %1338 = arith.muli %1337, %c4_i32_874 : i32
    %c2_i32_875 = arith.constant 2 : i32
    %1339 = arith.addi %1338, %c2_i32_875 : i32
    %1340 = arith.index_cast %1339 : i32 to index
    %1341 = memref.load %arg3[%1340] : memref<128xi32, #tpu.memory_space<smem>>
    %1342 = arith.index_cast %1341 : i32 to index
    %c0_876 = arith.constant 0 : index
    %1343 = vector.load %arg6[%1342, %c0_876] : memref<32x128xf32, #tpu.memory_space<vmem>>, vector<1x128xf32>
    %c2_877 = arith.constant 2 : index
    %c25_878 = arith.constant 25 : index
    %c0_879 = arith.constant 0 : index
    %1344 = vector.load %arg11[%c2_877, %c25_878, %c0_879] : memref<4x32x128xf32, #tpu.memory_space<vmem>>, vector<1x1x128xf32>
    %1345 = vector.shape_cast %1344 : vector<1x1x128xf32> to vector<1x128xf32>
    %1346 = vector.shape_cast %1343 : vector<1x128xf32> to vector<1x1x128xf32>
    tpu.vector_store %arg11[%c2_877, %c25_878, %c0_879], %1346 {strides = array<i32>} : memref<4x32x128xf32, #tpu.memory_space<vmem>>, vector<1x1x128xf32>,
    %c25_i32_880 = arith.constant 25 : i32
    %1347 = arith.addi %1, %c25_i32_880 : i32
    %c4_i32_881 = arith.constant 4 : i32
    %1348 = arith.muli %1347, %c4_i32_881 : i32
    %c3_i32_882 = arith.constant 3 : i32
    %1349 = arith.addi %1348, %c3_i32_882 : i32
    %1350 = arith.index_cast %1349 : i32 to index
    %1351 = memref.load %arg3[%1350] : memref<128xi32, #tpu.memory_space<smem>>
    %1352 = arith.index_cast %1351 : i32 to index
    %c0_883 = arith.constant 0 : index
    %1353 = vector.load %arg6[%1352, %c0_883] : memref<32x128xf32, #tpu.memory_space<vmem>>, vector<1x128xf32>
    %c3_884 = arith.constant 3 : index
    %c25_885 = arith.constant 25 : index
    %c0_886 = arith.constant 0 : index
    %1354 = vector.load %arg11[%c3_884, %c25_885, %c0_886] : memref<4x32x128xf32, #tpu.memory_space<vmem>>, vector<1x1x128xf32>
    %1355 = vector.shape_cast %1354 : vector<1x1x128xf32> to vector<1x128xf32>
    %1356 = vector.shape_cast %1353 : vector<1x128xf32> to vector<1x1x128xf32>
    tpu.vector_store %arg11[%c3_884, %c25_885, %c0_886], %1356 {strides = array<i32>} : memref<4x32x128xf32, #tpu.memory_space<vmem>>, vector<1x1x128xf32>,
    %c26_i32 = arith.constant 26 : i32
    %1357 = arith.addi %1, %c26_i32 : i32
    %1358 = arith.index_cast %1357 : i32 to index
    %1359 = memref.load %arg1[%1358] : memref<32xi32, #tpu.memory_space<smem>>
    %1360 = arith.index_cast %1359 : i32 to index
    %c0_887 = arith.constant 0 : index
    %1361 = vector.load %arg5[%1360, %c0_887] : memref<24x128xf32, #tpu.memory_space<vmem>>, vector<1x128xf32>
    %c26 = arith.constant 26 : index
    %c0_888 = arith.constant 0 : index
    %1362 = vector.load %arg9[%c26, %c0_888] : memref<32x128xf32, #tpu.memory_space<vmem>>, vector<1x128xf32>
    tpu.vector_store %arg9[%c26, %c0_888], %1361 {strides = array<i32>} : memref<32x128xf32, #tpu.memory_space<vmem>>, vector<1x128xf32>,
    %c26_i32_889 = arith.constant 26 : i32
    %1363 = arith.addi %1, %c26_i32_889 : i32
    %1364 = arith.index_cast %1363 : i32 to index
    %1365 = memref.load %arg2[%1364] : memref<32xi32, #tpu.memory_space<smem>>
    %1366 = arith.index_cast %1365 : i32 to index
    %c0_890 = arith.constant 0 : index
    %1367 = vector.load %arg6[%1366, %c0_890] : memref<32x128xf32, #tpu.memory_space<vmem>>, vector<1x128xf32>
    %c26_891 = arith.constant 26 : index
    %c0_892 = arith.constant 0 : index
    %1368 = vector.load %arg10[%c26_891, %c0_892] : memref<32x128xf32, #tpu.memory_space<vmem>>, vector<1x128xf32>
    tpu.vector_store %arg10[%c26_891, %c0_892], %1367 {strides = array<i32>} : memref<32x128xf32, #tpu.memory_space<vmem>>, vector<1x128xf32>,
    %c26_i32_893 = arith.constant 26 : i32
    %1369 = arith.addi %1, %c26_i32_893 : i32
    %c4_i32_894 = arith.constant 4 : i32
    %1370 = arith.muli %1369, %c4_i32_894 : i32
    %c0_i32_895 = arith.constant 0 : i32
    %1371 = arith.addi %1370, %c0_i32_895 : i32
    %1372 = arith.index_cast %1371 : i32 to index
    %1373 = memref.load %arg3[%1372] : memref<128xi32, #tpu.memory_space<smem>>
    %1374 = arith.index_cast %1373 : i32 to index
    %c0_896 = arith.constant 0 : index
    %1375 = vector.load %arg6[%1374, %c0_896] : memref<32x128xf32, #tpu.memory_space<vmem>>, vector<1x128xf32>
    %c0_897 = arith.constant 0 : index
    %c26_898 = arith.constant 26 : index
    %c0_899 = arith.constant 0 : index
    %1376 = vector.load %arg11[%c0_897, %c26_898, %c0_899] : memref<4x32x128xf32, #tpu.memory_space<vmem>>, vector<1x1x128xf32>
    %1377 = vector.shape_cast %1376 : vector<1x1x128xf32> to vector<1x128xf32>
    %1378 = vector.shape_cast %1375 : vector<1x128xf32> to vector<1x1x128xf32>
    tpu.vector_store %arg11[%c0_897, %c26_898, %c0_899], %1378 {strides = array<i32>} : memref<4x32x128xf32, #tpu.memory_space<vmem>>, vector<1x1x128xf32>,
    %c26_i32_900 = arith.constant 26 : i32
    %1379 = arith.addi %1, %c26_i32_900 : i32
    %c4_i32_901 = arith.constant 4 : i32
    %1380 = arith.muli %1379, %c4_i32_901 : i32
    %c1_i32_902 = arith.constant 1 : i32
    %1381 = arith.addi %1380, %c1_i32_902 : i32
    %1382 = arith.index_cast %1381 : i32 to index
    %1383 = memref.load %arg3[%1382] : memref<128xi32, #tpu.memory_space<smem>>
    %1384 = arith.index_cast %1383 : i32 to index
    %c0_903 = arith.constant 0 : index
    %1385 = vector.load %arg6[%1384, %c0_903] : memref<32x128xf32, #tpu.memory_space<vmem>>, vector<1x128xf32>
    %c1_904 = arith.constant 1 : index
    %c26_905 = arith.constant 26 : index
    %c0_906 = arith.constant 0 : index
    %1386 = vector.load %arg11[%c1_904, %c26_905, %c0_906] : memref<4x32x128xf32, #tpu.memory_space<vmem>>, vector<1x1x128xf32>
    %1387 = vector.shape_cast %1386 : vector<1x1x128xf32> to vector<1x128xf32>
    %1388 = vector.shape_cast %1385 : vector<1x128xf32> to vector<1x1x128xf32>
    tpu.vector_store %arg11[%c1_904, %c26_905, %c0_906], %1388 {strides = array<i32>} : memref<4x32x128xf32, #tpu.memory_space<vmem>>, vector<1x1x128xf32>,
    %c26_i32_907 = arith.constant 26 : i32
    %1389 = arith.addi %1, %c26_i32_907 : i32
    %c4_i32_908 = arith.constant 4 : i32
    %1390 = arith.muli %1389, %c4_i32_908 : i32
    %c2_i32_909 = arith.constant 2 : i32
    %1391 = arith.addi %1390, %c2_i32_909 : i32
    %1392 = arith.index_cast %1391 : i32 to index
    %1393 = memref.load %arg3[%1392] : memref<128xi32, #tpu.memory_space<smem>>
    %1394 = arith.index_cast %1393 : i32 to index
    %c0_910 = arith.constant 0 : index
    %1395 = vector.load %arg6[%1394, %c0_910] : memref<32x128xf32, #tpu.memory_space<vmem>>, vector<1x128xf32>
    %c2_911 = arith.constant 2 : index
    %c26_912 = arith.constant 26 : index
    %c0_913 = arith.constant 0 : index
    %1396 = vector.load %arg11[%c2_911, %c26_912, %c0_913] : memref<4x32x128xf32, #tpu.memory_space<vmem>>, vector<1x1x128xf32>
    %1397 = vector.shape_cast %1396 : vector<1x1x128xf32> to vector<1x128xf32>
    %1398 = vector.shape_cast %1395 : vector<1x128xf32> to vector<1x1x128xf32>
    tpu.vector_store %arg11[%c2_911, %c26_912, %c0_913], %1398 {strides = array<i32>} : memref<4x32x128xf32, #tpu.memory_space<vmem>>, vector<1x1x128xf32>,
    %c26_i32_914 = arith.constant 26 : i32
    %1399 = arith.addi %1, %c26_i32_914 : i32
    %c4_i32_915 = arith.constant 4 : i32
    %1400 = arith.muli %1399, %c4_i32_915 : i32
    %c3_i32_916 = arith.constant 3 : i32
    %1401 = arith.addi %1400, %c3_i32_916 : i32
    %1402 = arith.index_cast %1401 : i32 to index
    %1403 = memref.load %arg3[%1402] : memref<128xi32, #tpu.memory_space<smem>>
    %1404 = arith.index_cast %1403 : i32 to index
    %c0_917 = arith.constant 0 : index
    %1405 = vector.load %arg6[%1404, %c0_917] : memref<32x128xf32, #tpu.memory_space<vmem>>, vector<1x128xf32>
    %c3_918 = arith.constant 3 : index
    %c26_919 = arith.constant 26 : index
    %c0_920 = arith.constant 0 : index
    %1406 = vector.load %arg11[%c3_918, %c26_919, %c0_920] : memref<4x32x128xf32, #tpu.memory_space<vmem>>, vector<1x1x128xf32>
    %1407 = vector.shape_cast %1406 : vector<1x1x128xf32> to vector<1x128xf32>
    %1408 = vector.shape_cast %1405 : vector<1x128xf32> to vector<1x1x128xf32>
    tpu.vector_store %arg11[%c3_918, %c26_919, %c0_920], %1408 {strides = array<i32>} : memref<4x32x128xf32, #tpu.memory_space<vmem>>, vector<1x1x128xf32>,
    %c27_i32 = arith.constant 27 : i32
    %1409 = arith.addi %1, %c27_i32 : i32
    %1410 = arith.index_cast %1409 : i32 to index
    %1411 = memref.load %arg1[%1410] : memref<32xi32, #tpu.memory_space<smem>>
    %1412 = arith.index_cast %1411 : i32 to index
    %c0_921 = arith.constant 0 : index
    %1413 = vector.load %arg5[%1412, %c0_921] : memref<24x128xf32, #tpu.memory_space<vmem>>, vector<1x128xf32>
    %c27 = arith.constant 27 : index
    %c0_922 = arith.constant 0 : index
    %1414 = vector.load %arg9[%c27, %c0_922] : memref<32x128xf32, #tpu.memory_space<vmem>>, vector<1x128xf32>
    tpu.vector_store %arg9[%c27, %c0_922], %1413 {strides = array<i32>} : memref<32x128xf32, #tpu.memory_space<vmem>>, vector<1x128xf32>,
    %c27_i32_923 = arith.constant 27 : i32
    %1415 = arith.addi %1, %c27_i32_923 : i32
    %1416 = arith.index_cast %1415 : i32 to index
    %1417 = memref.load %arg2[%1416] : memref<32xi32, #tpu.memory_space<smem>>
    %1418 = arith.index_cast %1417 : i32 to index
    %c0_924 = arith.constant 0 : index
    %1419 = vector.load %arg6[%1418, %c0_924] : memref<32x128xf32, #tpu.memory_space<vmem>>, vector<1x128xf32>
    %c27_925 = arith.constant 27 : index
    %c0_926 = arith.constant 0 : index
    %1420 = vector.load %arg10[%c27_925, %c0_926] : memref<32x128xf32, #tpu.memory_space<vmem>>, vector<1x128xf32>
    tpu.vector_store %arg10[%c27_925, %c0_926], %1419 {strides = array<i32>} : memref<32x128xf32, #tpu.memory_space<vmem>>, vector<1x128xf32>,
    %c27_i32_927 = arith.constant 27 : i32
    %1421 = arith.addi %1, %c27_i32_927 : i32
    %c4_i32_928 = arith.constant 4 : i32
    %1422 = arith.muli %1421, %c4_i32_928 : i32
    %c0_i32_929 = arith.constant 0 : i32
    %1423 = arith.addi %1422, %c0_i32_929 : i32
    %1424 = arith.index_cast %1423 : i32 to index
    %1425 = memref.load %arg3[%1424] : memref<128xi32, #tpu.memory_space<smem>>
    %1426 = arith.index_cast %1425 : i32 to index
    %c0_930 = arith.constant 0 : index
    %1427 = vector.load %arg6[%1426, %c0_930] : memref<32x128xf32, #tpu.memory_space<vmem>>, vector<1x128xf32>
    %c0_931 = arith.constant 0 : index
    %c27_932 = arith.constant 27 : index
    %c0_933 = arith.constant 0 : index
    %1428 = vector.load %arg11[%c0_931, %c27_932, %c0_933] : memref<4x32x128xf32, #tpu.memory_space<vmem>>, vector<1x1x128xf32>
    %1429 = vector.shape_cast %1428 : vector<1x1x128xf32> to vector<1x128xf32>
    %1430 = vector.shape_cast %1427 : vector<1x128xf32> to vector<1x1x128xf32>
    tpu.vector_store %arg11[%c0_931, %c27_932, %c0_933], %1430 {strides = array<i32>} : memref<4x32x128xf32, #tpu.memory_space<vmem>>, vector<1x1x128xf32>,
    %c27_i32_934 = arith.constant 27 : i32
    %1431 = arith.addi %1, %c27_i32_934 : i32
    %c4_i32_935 = arith.constant 4 : i32
    %1432 = arith.muli %1431, %c4_i32_935 : i32
    %c1_i32_936 = arith.constant 1 : i32
    %1433 = arith.addi %1432, %c1_i32_936 : i32
    %1434 = arith.index_cast %1433 : i32 to index
    %1435 = memref.load %arg3[%1434] : memref<128xi32, #tpu.memory_space<smem>>
    %1436 = arith.index_cast %1435 : i32 to index
    %c0_937 = arith.constant 0 : index
    %1437 = vector.load %arg6[%1436, %c0_937] : memref<32x128xf32, #tpu.memory_space<vmem>>, vector<1x128xf32>
    %c1_938 = arith.constant 1 : index
    %c27_939 = arith.constant 27 : index
    %c0_940 = arith.constant 0 : index
    %1438 = vector.load %arg11[%c1_938, %c27_939, %c0_940] : memref<4x32x128xf32, #tpu.memory_space<vmem>>, vector<1x1x128xf32>
    %1439 = vector.shape_cast %1438 : vector<1x1x128xf32> to vector<1x128xf32>
    %1440 = vector.shape_cast %1437 : vector<1x128xf32> to vector<1x1x128xf32>
    tpu.vector_store %arg11[%c1_938, %c27_939, %c0_940], %1440 {strides = array<i32>} : memref<4x32x128xf32, #tpu.memory_space<vmem>>, vector<1x1x128xf32>,
    %c27_i32_941 = arith.constant 27 : i32
    %1441 = arith.addi %1, %c27_i32_941 : i32
    %c4_i32_942 = arith.constant 4 : i32
    %1442 = arith.muli %1441, %c4_i32_942 : i32
    %c2_i32_943 = arith.constant 2 : i32
    %1443 = arith.addi %1442, %c2_i32_943 : i32
    %1444 = arith.index_cast %1443 : i32 to index
    %1445 = memref.load %arg3[%1444] : memref<128xi32, #tpu.memory_space<smem>>
    %1446 = arith.index_cast %1445 : i32 to index
    %c0_944 = arith.constant 0 : index
    %1447 = vector.load %arg6[%1446, %c0_944] : memref<32x128xf32, #tpu.memory_space<vmem>>, vector<1x128xf32>
    %c2_945 = arith.constant 2 : index
    %c27_946 = arith.constant 27 : index
    %c0_947 = arith.constant 0 : index
    %1448 = vector.load %arg11[%c2_945, %c27_946, %c0_947] : memref<4x32x128xf32, #tpu.memory_space<vmem>>, vector<1x1x128xf32>
    %1449 = vector.shape_cast %1448 : vector<1x1x128xf32> to vector<1x128xf32>
    %1450 = vector.shape_cast %1447 : vector<1x128xf32> to vector<1x1x128xf32>
    tpu.vector_store %arg11[%c2_945, %c27_946, %c0_947], %1450 {strides = array<i32>} : memref<4x32x128xf32, #tpu.memory_space<vmem>>, vector<1x1x128xf32>,
    %c27_i32_948 = arith.constant 27 : i32
    %1451 = arith.addi %1, %c27_i32_948 : i32
    %c4_i32_949 = arith.constant 4 : i32
    %1452 = arith.muli %1451, %c4_i32_949 : i32
    %c3_i32_950 = arith.constant 3 : i32
    %1453 = arith.addi %1452, %c3_i32_950 : i32
    %1454 = arith.index_cast %1453 : i32 to index
    %1455 = memref.load %arg3[%1454] : memref<128xi32, #tpu.memory_space<smem>>
    %1456 = arith.index_cast %1455 : i32 to index
    %c0_951 = arith.constant 0 : index
    %1457 = vector.load %arg6[%1456, %c0_951] : memref<32x128xf32, #tpu.memory_space<vmem>>, vector<1x128xf32>
    %c3_952 = arith.constant 3 : index
    %c27_953 = arith.constant 27 : index
    %c0_954 = arith.constant 0 : index
    %1458 = vector.load %arg11[%c3_952, %c27_953, %c0_954] : memref<4x32x128xf32, #tpu.memory_space<vmem>>, vector<1x1x128xf32>
    %1459 = vector.shape_cast %1458 : vector<1x1x128xf32> to vector<1x128xf32>
    %1460 = vector.shape_cast %1457 : vector<1x128xf32> to vector<1x1x128xf32>
    tpu.vector_store %arg11[%c3_952, %c27_953, %c0_954], %1460 {strides = array<i32>} : memref<4x32x128xf32, #tpu.memory_space<vmem>>, vector<1x1x128xf32>,
    %c28_i32 = arith.constant 28 : i32
    %1461 = arith.addi %1, %c28_i32 : i32
    %1462 = arith.index_cast %1461 : i32 to index
    %1463 = memref.load %arg1[%1462] : memref<32xi32, #tpu.memory_space<smem>>
    %1464 = arith.index_cast %1463 : i32 to index
    %c0_955 = arith.constant 0 : index
    %1465 = vector.load %arg5[%1464, %c0_955] : memref<24x128xf32, #tpu.memory_space<vmem>>, vector<1x128xf32>
    %c28 = arith.constant 28 : index
    %c0_956 = arith.constant 0 : index
    %1466 = vector.load %arg9[%c28, %c0_956] : memref<32x128xf32, #tpu.memory_space<vmem>>, vector<1x128xf32>
    tpu.vector_store %arg9[%c28, %c0_956], %1465 {strides = array<i32>} : memref<32x128xf32, #tpu.memory_space<vmem>>, vector<1x128xf32>,
    %c28_i32_957 = arith.constant 28 : i32
    %1467 = arith.addi %1, %c28_i32_957 : i32
    %1468 = arith.index_cast %1467 : i32 to index
    %1469 = memref.load %arg2[%1468] : memref<32xi32, #tpu.memory_space<smem>>
    %1470 = arith.index_cast %1469 : i32 to index
    %c0_958 = arith.constant 0 : index
    %1471 = vector.load %arg6[%1470, %c0_958] : memref<32x128xf32, #tpu.memory_space<vmem>>, vector<1x128xf32>
    %c28_959 = arith.constant 28 : index
    %c0_960 = arith.constant 0 : index
    %1472 = vector.load %arg10[%c28_959, %c0_960] : memref<32x128xf32, #tpu.memory_space<vmem>>, vector<1x128xf32>
    tpu.vector_store %arg10[%c28_959, %c0_960], %1471 {strides = array<i32>} : memref<32x128xf32, #tpu.memory_space<vmem>>, vector<1x128xf32>,
    %c28_i32_961 = arith.constant 28 : i32
    %1473 = arith.addi %1, %c28_i32_961 : i32
    %c4_i32_962 = arith.constant 4 : i32
    %1474 = arith.muli %1473, %c4_i32_962 : i32
    %c0_i32_963 = arith.constant 0 : i32
    %1475 = arith.addi %1474, %c0_i32_963 : i32
    %1476 = arith.index_cast %1475 : i32 to index
    %1477 = memref.load %arg3[%1476] : memref<128xi32, #tpu.memory_space<smem>>
    %1478 = arith.index_cast %1477 : i32 to index
    %c0_964 = arith.constant 0 : index
    %1479 = vector.load %arg6[%1478, %c0_964] : memref<32x128xf32, #tpu.memory_space<vmem>>, vector<1x128xf32>
    %c0_965 = arith.constant 0 : index
    %c28_966 = arith.constant 28 : index
    %c0_967 = arith.constant 0 : index
    %1480 = vector.load %arg11[%c0_965, %c28_966, %c0_967] : memref<4x32x128xf32, #tpu.memory_space<vmem>>, vector<1x1x128xf32>
    %1481 = vector.shape_cast %1480 : vector<1x1x128xf32> to vector<1x128xf32>
    %1482 = vector.shape_cast %1479 : vector<1x128xf32> to vector<1x1x128xf32>
    tpu.vector_store %arg11[%c0_965, %c28_966, %c0_967], %1482 {strides = array<i32>} : memref<4x32x128xf32, #tpu.memory_space<vmem>>, vector<1x1x128xf32>,
    %c28_i32_968 = arith.constant 28 : i32
    %1483 = arith.addi %1, %c28_i32_968 : i32
    %c4_i32_969 = arith.constant 4 : i32
    %1484 = arith.muli %1483, %c4_i32_969 : i32
    %c1_i32_970 = arith.constant 1 : i32
    %1485 = arith.addi %1484, %c1_i32_970 : i32
    %1486 = arith.index_cast %1485 : i32 to index
    %1487 = memref.load %arg3[%1486] : memref<128xi32, #tpu.memory_space<smem>>
    %1488 = arith.index_cast %1487 : i32 to index
    %c0_971 = arith.constant 0 : index
    %1489 = vector.load %arg6[%1488, %c0_971] : memref<32x128xf32, #tpu.memory_space<vmem>>, vector<1x128xf32>
    %c1_972 = arith.constant 1 : index
    %c28_973 = arith.constant 28 : index
    %c0_974 = arith.constant 0 : index
    %1490 = vector.load %arg11[%c1_972, %c28_973, %c0_974] : memref<4x32x128xf32, #tpu.memory_space<vmem>>, vector<1x1x128xf32>
    %1491 = vector.shape_cast %1490 : vector<1x1x128xf32> to vector<1x128xf32>
    %1492 = vector.shape_cast %1489 : vector<1x128xf32> to vector<1x1x128xf32>
    tpu.vector_store %arg11[%c1_972, %c28_973, %c0_974], %1492 {strides = array<i32>} : memref<4x32x128xf32, #tpu.memory_space<vmem>>, vector<1x1x128xf32>,
    %c28_i32_975 = arith.constant 28 : i32
    %1493 = arith.addi %1, %c28_i32_975 : i32
    %c4_i32_976 = arith.constant 4 : i32
    %1494 = arith.muli %1493, %c4_i32_976 : i32
    %c2_i32_977 = arith.constant 2 : i32
    %1495 = arith.addi %1494, %c2_i32_977 : i32
    %1496 = arith.index_cast %1495 : i32 to index
    %1497 = memref.load %arg3[%1496] : memref<128xi32, #tpu.memory_space<smem>>
    %1498 = arith.index_cast %1497 : i32 to index
    %c0_978 = arith.constant 0 : index
    %1499 = vector.load %arg6[%1498, %c0_978] : memref<32x128xf32, #tpu.memory_space<vmem>>, vector<1x128xf32>
    %c2_979 = arith.constant 2 : index
    %c28_980 = arith.constant 28 : index
    %c0_981 = arith.constant 0 : index
    %1500 = vector.load %arg11[%c2_979, %c28_980, %c0_981] : memref<4x32x128xf32, #tpu.memory_space<vmem>>, vector<1x1x128xf32>
    %1501 = vector.shape_cast %1500 : vector<1x1x128xf32> to vector<1x128xf32>
    %1502 = vector.shape_cast %1499 : vector<1x128xf32> to vector<1x1x128xf32>
    tpu.vector_store %arg11[%c2_979, %c28_980, %c0_981], %1502 {strides = array<i32>} : memref<4x32x128xf32, #tpu.memory_space<vmem>>, vector<1x1x128xf32>,
    %c28_i32_982 = arith.constant 28 : i32
    %1503 = arith.addi %1, %c28_i32_982 : i32
    %c4_i32_983 = arith.constant 4 : i32
    %1504 = arith.muli %1503, %c4_i32_983 : i32
    %c3_i32_984 = arith.constant 3 : i32
    %1505 = arith.addi %1504, %c3_i32_984 : i32
    %1506 = arith.index_cast %1505 : i32 to index
    %1507 = memref.load %arg3[%1506] : memref<128xi32, #tpu.memory_space<smem>>
    %1508 = arith.index_cast %1507 : i32 to index
    %c0_985 = arith.constant 0 : index
    %1509 = vector.load %arg6[%1508, %c0_985] : memref<32x128xf32, #tpu.memory_space<vmem>>, vector<1x128xf32>
    %c3_986 = arith.constant 3 : index
    %c28_987 = arith.constant 28 : index
    %c0_988 = arith.constant 0 : index
    %1510 = vector.load %arg11[%c3_986, %c28_987, %c0_988] : memref<4x32x128xf32, #tpu.memory_space<vmem>>, vector<1x1x128xf32>
    %1511 = vector.shape_cast %1510 : vector<1x1x128xf32> to vector<1x128xf32>
    %1512 = vector.shape_cast %1509 : vector<1x128xf32> to vector<1x1x128xf32>
    tpu.vector_store %arg11[%c3_986, %c28_987, %c0_988], %1512 {strides = array<i32>} : memref<4x32x128xf32, #tpu.memory_space<vmem>>, vector<1x1x128xf32>,
    %c29_i32 = arith.constant 29 : i32
    %1513 = arith.addi %1, %c29_i32 : i32
    %1514 = arith.index_cast %1513 : i32 to index
    %1515 = memref.load %arg1[%1514] : memref<32xi32, #tpu.memory_space<smem>>
    %1516 = arith.index_cast %1515 : i32 to index
    %c0_989 = arith.constant 0 : index
    %1517 = vector.load %arg5[%1516, %c0_989] : memref<24x128xf32, #tpu.memory_space<vmem>>, vector<1x128xf32>
    %c29 = arith.constant 29 : index
    %c0_990 = arith.constant 0 : index
    %1518 = vector.load %arg9[%c29, %c0_990] : memref<32x128xf32, #tpu.memory_space<vmem>>, vector<1x128xf32>
    tpu.vector_store %arg9[%c29, %c0_990], %1517 {strides = array<i32>} : memref<32x128xf32, #tpu.memory_space<vmem>>, vector<1x128xf32>,
    %c29_i32_991 = arith.constant 29 : i32
    %1519 = arith.addi %1, %c29_i32_991 : i32
    %1520 = arith.index_cast %1519 : i32 to index
    %1521 = memref.load %arg2[%1520] : memref<32xi32, #tpu.memory_space<smem>>
    %1522 = arith.index_cast %1521 : i32 to index
    %c0_992 = arith.constant 0 : index
    %1523 = vector.load %arg6[%1522, %c0_992] : memref<32x128xf32, #tpu.memory_space<vmem>>, vector<1x128xf32>
    %c29_993 = arith.constant 29 : index
    %c0_994 = arith.constant 0 : index
    %1524 = vector.load %arg10[%c29_993, %c0_994] : memref<32x128xf32, #tpu.memory_space<vmem>>, vector<1x128xf32>
    tpu.vector_store %arg10[%c29_993, %c0_994], %1523 {strides = array<i32>} : memref<32x128xf32, #tpu.memory_space<vmem>>, vector<1x128xf32>,
    %c29_i32_995 = arith.constant 29 : i32
    %1525 = arith.addi %1, %c29_i32_995 : i32
    %c4_i32_996 = arith.constant 4 : i32
    %1526 = arith.muli %1525, %c4_i32_996 : i32
    %c0_i32_997 = arith.constant 0 : i32
    %1527 = arith.addi %1526, %c0_i32_997 : i32
    %1528 = arith.index_cast %1527 : i32 to index
    %1529 = memref.load %arg3[%1528] : memref<128xi32, #tpu.memory_space<smem>>
    %1530 = arith.index_cast %1529 : i32 to index
    %c0_998 = arith.constant 0 : index
    %1531 = vector.load %arg6[%1530, %c0_998] : memref<32x128xf32, #tpu.memory_space<vmem>>, vector<1x128xf32>
    %c0_999 = arith.constant 0 : index
    %c29_1000 = arith.constant 29 : index
    %c0_1001 = arith.constant 0 : index
    %1532 = vector.load %arg11[%c0_999, %c29_1000, %c0_1001] : memref<4x32x128xf32, #tpu.memory_space<vmem>>, vector<1x1x128xf32>
    %1533 = vector.shape_cast %1532 : vector<1x1x128xf32> to vector<1x128xf32>
    %1534 = vector.shape_cast %1531 : vector<1x128xf32> to vector<1x1x128xf32>
    tpu.vector_store %arg11[%c0_999, %c29_1000, %c0_1001], %1534 {strides = array<i32>} : memref<4x32x128xf32, #tpu.memory_space<vmem>>, vector<1x1x128xf32>,
    %c29_i32_1002 = arith.constant 29 : i32
    %1535 = arith.addi %1, %c29_i32_1002 : i32
    %c4_i32_1003 = arith.constant 4 : i32
    %1536 = arith.muli %1535, %c4_i32_1003 : i32
    %c1_i32_1004 = arith.constant 1 : i32
    %1537 = arith.addi %1536, %c1_i32_1004 : i32
    %1538 = arith.index_cast %1537 : i32 to index
    %1539 = memref.load %arg3[%1538] : memref<128xi32, #tpu.memory_space<smem>>
    %1540 = arith.index_cast %1539 : i32 to index
    %c0_1005 = arith.constant 0 : index
    %1541 = vector.load %arg6[%1540, %c0_1005] : memref<32x128xf32, #tpu.memory_space<vmem>>, vector<1x128xf32>
    %c1_1006 = arith.constant 1 : index
    %c29_1007 = arith.constant 29 : index
    %c0_1008 = arith.constant 0 : index
    %1542 = vector.load %arg11[%c1_1006, %c29_1007, %c0_1008] : memref<4x32x128xf32, #tpu.memory_space<vmem>>, vector<1x1x128xf32>
    %1543 = vector.shape_cast %1542 : vector<1x1x128xf32> to vector<1x128xf32>
    %1544 = vector.shape_cast %1541 : vector<1x128xf32> to vector<1x1x128xf32>
    tpu.vector_store %arg11[%c1_1006, %c29_1007, %c0_1008], %1544 {strides = array<i32>} : memref<4x32x128xf32, #tpu.memory_space<vmem>>, vector<1x1x128xf32>,
    %c29_i32_1009 = arith.constant 29 : i32
    %1545 = arith.addi %1, %c29_i32_1009 : i32
    %c4_i32_1010 = arith.constant 4 : i32
    %1546 = arith.muli %1545, %c4_i32_1010 : i32
    %c2_i32_1011 = arith.constant 2 : i32
    %1547 = arith.addi %1546, %c2_i32_1011 : i32
    %1548 = arith.index_cast %1547 : i32 to index
    %1549 = memref.load %arg3[%1548] : memref<128xi32, #tpu.memory_space<smem>>
    %1550 = arith.index_cast %1549 : i32 to index
    %c0_1012 = arith.constant 0 : index
    %1551 = vector.load %arg6[%1550, %c0_1012] : memref<32x128xf32, #tpu.memory_space<vmem>>, vector<1x128xf32>
    %c2_1013 = arith.constant 2 : index
    %c29_1014 = arith.constant 29 : index
    %c0_1015 = arith.constant 0 : index
    %1552 = vector.load %arg11[%c2_1013, %c29_1014, %c0_1015] : memref<4x32x128xf32, #tpu.memory_space<vmem>>, vector<1x1x128xf32>
    %1553 = vector.shape_cast %1552 : vector<1x1x128xf32> to vector<1x128xf32>
    %1554 = vector.shape_cast %1551 : vector<1x128xf32> to vector<1x1x128xf32>
    tpu.vector_store %arg11[%c2_1013, %c29_1014, %c0_1015], %1554 {strides = array<i32>} : memref<4x32x128xf32, #tpu.memory_space<vmem>>, vector<1x1x128xf32>,
    %c29_i32_1016 = arith.constant 29 : i32
    %1555 = arith.addi %1, %c29_i32_1016 : i32
    %c4_i32_1017 = arith.constant 4 : i32
    %1556 = arith.muli %1555, %c4_i32_1017 : i32
    %c3_i32_1018 = arith.constant 3 : i32
    %1557 = arith.addi %1556, %c3_i32_1018 : i32
    %1558 = arith.index_cast %1557 : i32 to index
    %1559 = memref.load %arg3[%1558] : memref<128xi32, #tpu.memory_space<smem>>
    %1560 = arith.index_cast %1559 : i32 to index
    %c0_1019 = arith.constant 0 : index
    %1561 = vector.load %arg6[%1560, %c0_1019] : memref<32x128xf32, #tpu.memory_space<vmem>>, vector<1x128xf32>
    %c3_1020 = arith.constant 3 : index
    %c29_1021 = arith.constant 29 : index
    %c0_1022 = arith.constant 0 : index
    %1562 = vector.load %arg11[%c3_1020, %c29_1021, %c0_1022] : memref<4x32x128xf32, #tpu.memory_space<vmem>>, vector<1x1x128xf32>
    %1563 = vector.shape_cast %1562 : vector<1x1x128xf32> to vector<1x128xf32>
    %1564 = vector.shape_cast %1561 : vector<1x128xf32> to vector<1x1x128xf32>
    tpu.vector_store %arg11[%c3_1020, %c29_1021, %c0_1022], %1564 {strides = array<i32>} : memref<4x32x128xf32, #tpu.memory_space<vmem>>, vector<1x1x128xf32>,
    %c30_i32 = arith.constant 30 : i32
    %1565 = arith.addi %1, %c30_i32 : i32
    %1566 = arith.index_cast %1565 : i32 to index
    %1567 = memref.load %arg1[%1566] : memref<32xi32, #tpu.memory_space<smem>>
    %1568 = arith.index_cast %1567 : i32 to index
    %c0_1023 = arith.constant 0 : index
    %1569 = vector.load %arg5[%1568, %c0_1023] : memref<24x128xf32, #tpu.memory_space<vmem>>, vector<1x128xf32>
    %c30 = arith.constant 30 : index
    %c0_1024 = arith.constant 0 : index
    %1570 = vector.load %arg9[%c30, %c0_1024] : memref<32x128xf32, #tpu.memory_space<vmem>>, vector<1x128xf32>
    tpu.vector_store %arg9[%c30, %c0_1024], %1569 {strides = array<i32>} : memref<32x128xf32, #tpu.memory_space<vmem>>, vector<1x128xf32>,
    %c30_i32_1025 = arith.constant 30 : i32
    %1571 = arith.addi %1, %c30_i32_1025 : i32
    %1572 = arith.index_cast %1571 : i32 to index
    %1573 = memref.load %arg2[%1572] : memref<32xi32, #tpu.memory_space<smem>>
    %1574 = arith.index_cast %1573 : i32 to index
    %c0_1026 = arith.constant 0 : index
    %1575 = vector.load %arg6[%1574, %c0_1026] : memref<32x128xf32, #tpu.memory_space<vmem>>, vector<1x128xf32>
    %c30_1027 = arith.constant 30 : index
    %c0_1028 = arith.constant 0 : index
    %1576 = vector.load %arg10[%c30_1027, %c0_1028] : memref<32x128xf32, #tpu.memory_space<vmem>>, vector<1x128xf32>
    tpu.vector_store %arg10[%c30_1027, %c0_1028], %1575 {strides = array<i32>} : memref<32x128xf32, #tpu.memory_space<vmem>>, vector<1x128xf32>,
    %c30_i32_1029 = arith.constant 30 : i32
    %1577 = arith.addi %1, %c30_i32_1029 : i32
    %c4_i32_1030 = arith.constant 4 : i32
    %1578 = arith.muli %1577, %c4_i32_1030 : i32
    %c0_i32_1031 = arith.constant 0 : i32
    %1579 = arith.addi %1578, %c0_i32_1031 : i32
    %1580 = arith.index_cast %1579 : i32 to index
    %1581 = memref.load %arg3[%1580] : memref<128xi32, #tpu.memory_space<smem>>
    %1582 = arith.index_cast %1581 : i32 to index
    %c0_1032 = arith.constant 0 : index
    %1583 = vector.load %arg6[%1582, %c0_1032] : memref<32x128xf32, #tpu.memory_space<vmem>>, vector<1x128xf32>
    %c0_1033 = arith.constant 0 : index
    %c30_1034 = arith.constant 30 : index
    %c0_1035 = arith.constant 0 : index
    %1584 = vector.load %arg11[%c0_1033, %c30_1034, %c0_1035] : memref<4x32x128xf32, #tpu.memory_space<vmem>>, vector<1x1x128xf32>
    %1585 = vector.shape_cast %1584 : vector<1x1x128xf32> to vector<1x128xf32>
    %1586 = vector.shape_cast %1583 : vector<1x128xf32> to vector<1x1x128xf32>
    tpu.vector_store %arg11[%c0_1033, %c30_1034, %c0_1035], %1586 {strides = array<i32>} : memref<4x32x128xf32, #tpu.memory_space<vmem>>, vector<1x1x128xf32>,
    %c30_i32_1036 = arith.constant 30 : i32
    %1587 = arith.addi %1, %c30_i32_1036 : i32
    %c4_i32_1037 = arith.constant 4 : i32
    %1588 = arith.muli %1587, %c4_i32_1037 : i32
    %c1_i32_1038 = arith.constant 1 : i32
    %1589 = arith.addi %1588, %c1_i32_1038 : i32
    %1590 = arith.index_cast %1589 : i32 to index
    %1591 = memref.load %arg3[%1590] : memref<128xi32, #tpu.memory_space<smem>>
    %1592 = arith.index_cast %1591 : i32 to index
    %c0_1039 = arith.constant 0 : index
    %1593 = vector.load %arg6[%1592, %c0_1039] : memref<32x128xf32, #tpu.memory_space<vmem>>, vector<1x128xf32>
    %c1_1040 = arith.constant 1 : index
    %c30_1041 = arith.constant 30 : index
    %c0_1042 = arith.constant 0 : index
    %1594 = vector.load %arg11[%c1_1040, %c30_1041, %c0_1042] : memref<4x32x128xf32, #tpu.memory_space<vmem>>, vector<1x1x128xf32>
    %1595 = vector.shape_cast %1594 : vector<1x1x128xf32> to vector<1x128xf32>
    %1596 = vector.shape_cast %1593 : vector<1x128xf32> to vector<1x1x128xf32>
    tpu.vector_store %arg11[%c1_1040, %c30_1041, %c0_1042], %1596 {strides = array<i32>} : memref<4x32x128xf32, #tpu.memory_space<vmem>>, vector<1x1x128xf32>,
    %c30_i32_1043 = arith.constant 30 : i32
    %1597 = arith.addi %1, %c30_i32_1043 : i32
    %c4_i32_1044 = arith.constant 4 : i32
    %1598 = arith.muli %1597, %c4_i32_1044 : i32
    %c2_i32_1045 = arith.constant 2 : i32
    %1599 = arith.addi %1598, %c2_i32_1045 : i32
    %1600 = arith.index_cast %1599 : i32 to index
    %1601 = memref.load %arg3[%1600] : memref<128xi32, #tpu.memory_space<smem>>
    %1602 = arith.index_cast %1601 : i32 to index
    %c0_1046 = arith.constant 0 : index
    %1603 = vector.load %arg6[%1602, %c0_1046] : memref<32x128xf32, #tpu.memory_space<vmem>>, vector<1x128xf32>
    %c2_1047 = arith.constant 2 : index
    %c30_1048 = arith.constant 30 : index
    %c0_1049 = arith.constant 0 : index
    %1604 = vector.load %arg11[%c2_1047, %c30_1048, %c0_1049] : memref<4x32x128xf32, #tpu.memory_space<vmem>>, vector<1x1x128xf32>
    %1605 = vector.shape_cast %1604 : vector<1x1x128xf32> to vector<1x128xf32>
    %1606 = vector.shape_cast %1603 : vector<1x128xf32> to vector<1x1x128xf32>
    tpu.vector_store %arg11[%c2_1047, %c30_1048, %c0_1049], %1606 {strides = array<i32>} : memref<4x32x128xf32, #tpu.memory_space<vmem>>, vector<1x1x128xf32>,
    %c30_i32_1050 = arith.constant 30 : i32
    %1607 = arith.addi %1, %c30_i32_1050 : i32
    %c4_i32_1051 = arith.constant 4 : i32
    %1608 = arith.muli %1607, %c4_i32_1051 : i32
    %c3_i32_1052 = arith.constant 3 : i32
    %1609 = arith.addi %1608, %c3_i32_1052 : i32
    %1610 = arith.index_cast %1609 : i32 to index
    %1611 = memref.load %arg3[%1610] : memref<128xi32, #tpu.memory_space<smem>>
    %1612 = arith.index_cast %1611 : i32 to index
    %c0_1053 = arith.constant 0 : index
    %1613 = vector.load %arg6[%1612, %c0_1053] : memref<32x128xf32, #tpu.memory_space<vmem>>, vector<1x128xf32>
    %c3_1054 = arith.constant 3 : index
    %c30_1055 = arith.constant 30 : index
    %c0_1056 = arith.constant 0 : index
    %1614 = vector.load %arg11[%c3_1054, %c30_1055, %c0_1056] : memref<4x32x128xf32, #tpu.memory_space<vmem>>, vector<1x1x128xf32>
    %1615 = vector.shape_cast %1614 : vector<1x1x128xf32> to vector<1x128xf32>
    %1616 = vector.shape_cast %1613 : vector<1x128xf32> to vector<1x1x128xf32>
    tpu.vector_store %arg11[%c3_1054, %c30_1055, %c0_1056], %1616 {strides = array<i32>} : memref<4x32x128xf32, #tpu.memory_space<vmem>>, vector<1x1x128xf32>,
    %c31_i32 = arith.constant 31 : i32
    %1617 = arith.addi %1, %c31_i32 : i32
    %1618 = arith.index_cast %1617 : i32 to index
    %1619 = memref.load %arg1[%1618] : memref<32xi32, #tpu.memory_space<smem>>
    %1620 = arith.index_cast %1619 : i32 to index
    %c0_1057 = arith.constant 0 : index
    %1621 = vector.load %arg5[%1620, %c0_1057] : memref<24x128xf32, #tpu.memory_space<vmem>>, vector<1x128xf32>
    %c31 = arith.constant 31 : index
    %c0_1058 = arith.constant 0 : index
    %1622 = vector.load %arg9[%c31, %c0_1058] : memref<32x128xf32, #tpu.memory_space<vmem>>, vector<1x128xf32>
    tpu.vector_store %arg9[%c31, %c0_1058], %1621 {strides = array<i32>} : memref<32x128xf32, #tpu.memory_space<vmem>>, vector<1x128xf32>,
    %c31_i32_1059 = arith.constant 31 : i32
    %1623 = arith.addi %1, %c31_i32_1059 : i32
    %1624 = arith.index_cast %1623 : i32 to index
    %1625 = memref.load %arg2[%1624] : memref<32xi32, #tpu.memory_space<smem>>
    %1626 = arith.index_cast %1625 : i32 to index
    %c0_1060 = arith.constant 0 : index
    %1627 = vector.load %arg6[%1626, %c0_1060] : memref<32x128xf32, #tpu.memory_space<vmem>>, vector<1x128xf32>
    %c31_1061 = arith.constant 31 : index
    %c0_1062 = arith.constant 0 : index
    %1628 = vector.load %arg10[%c31_1061, %c0_1062] : memref<32x128xf32, #tpu.memory_space<vmem>>, vector<1x128xf32>
    tpu.vector_store %arg10[%c31_1061, %c0_1062], %1627 {strides = array<i32>} : memref<32x128xf32, #tpu.memory_space<vmem>>, vector<1x128xf32>,
    %c31_i32_1063 = arith.constant 31 : i32
    %1629 = arith.addi %1, %c31_i32_1063 : i32
    %c4_i32_1064 = arith.constant 4 : i32
    %1630 = arith.muli %1629, %c4_i32_1064 : i32
    %c0_i32_1065 = arith.constant 0 : i32
    %1631 = arith.addi %1630, %c0_i32_1065 : i32
    %1632 = arith.index_cast %1631 : i32 to index
    %1633 = memref.load %arg3[%1632] : memref<128xi32, #tpu.memory_space<smem>>
    %1634 = arith.index_cast %1633 : i32 to index
    %c0_1066 = arith.constant 0 : index
    %1635 = vector.load %arg6[%1634, %c0_1066] : memref<32x128xf32, #tpu.memory_space<vmem>>, vector<1x128xf32>
    %c0_1067 = arith.constant 0 : index
    %c31_1068 = arith.constant 31 : index
    %c0_1069 = arith.constant 0 : index
    %1636 = vector.load %arg11[%c0_1067, %c31_1068, %c0_1069] : memref<4x32x128xf32, #tpu.memory_space<vmem>>, vector<1x1x128xf32>
    %1637 = vector.shape_cast %1636 : vector<1x1x128xf32> to vector<1x128xf32>
    %1638 = vector.shape_cast %1635 : vector<1x128xf32> to vector<1x1x128xf32>
    tpu.vector_store %arg11[%c0_1067, %c31_1068, %c0_1069], %1638 {strides = array<i32>} : memref<4x32x128xf32, #tpu.memory_space<vmem>>, vector<1x1x128xf32>,
    %c31_i32_1070 = arith.constant 31 : i32
    %1639 = arith.addi %1, %c31_i32_1070 : i32
    %c4_i32_1071 = arith.constant 4 : i32
    %1640 = arith.muli %1639, %c4_i32_1071 : i32
    %c1_i32_1072 = arith.constant 1 : i32
    %1641 = arith.addi %1640, %c1_i32_1072 : i32
    %1642 = arith.index_cast %1641 : i32 to index
    %1643 = memref.load %arg3[%1642] : memref<128xi32, #tpu.memory_space<smem>>
    %1644 = arith.index_cast %1643 : i32 to index
    %c0_1073 = arith.constant 0 : index
    %1645 = vector.load %arg6[%1644, %c0_1073] : memref<32x128xf32, #tpu.memory_space<vmem>>, vector<1x128xf32>
    %c1_1074 = arith.constant 1 : index
    %c31_1075 = arith.constant 31 : index
    %c0_1076 = arith.constant 0 : index
    %1646 = vector.load %arg11[%c1_1074, %c31_1075, %c0_1076] : memref<4x32x128xf32, #tpu.memory_space<vmem>>, vector<1x1x128xf32>
    %1647 = vector.shape_cast %1646 : vector<1x1x128xf32> to vector<1x128xf32>
    %1648 = vector.shape_cast %1645 : vector<1x128xf32> to vector<1x1x128xf32>
    tpu.vector_store %arg11[%c1_1074, %c31_1075, %c0_1076], %1648 {strides = array<i32>} : memref<4x32x128xf32, #tpu.memory_space<vmem>>, vector<1x1x128xf32>,
    %c31_i32_1077 = arith.constant 31 : i32
    %1649 = arith.addi %1, %c31_i32_1077 : i32
    %c4_i32_1078 = arith.constant 4 : i32
    %1650 = arith.muli %1649, %c4_i32_1078 : i32
    %c2_i32_1079 = arith.constant 2 : i32
    %1651 = arith.addi %1650, %c2_i32_1079 : i32
    %1652 = arith.index_cast %1651 : i32 to index
    %1653 = memref.load %arg3[%1652] : memref<128xi32, #tpu.memory_space<smem>>
    %1654 = arith.index_cast %1653 : i32 to index
    %c0_1080 = arith.constant 0 : index
    %1655 = vector.load %arg6[%1654, %c0_1080] : memref<32x128xf32, #tpu.memory_space<vmem>>, vector<1x128xf32>
    %c2_1081 = arith.constant 2 : index
    %c31_1082 = arith.constant 31 : index
    %c0_1083 = arith.constant 0 : index
    %1656 = vector.load %arg11[%c2_1081, %c31_1082, %c0_1083] : memref<4x32x128xf32, #tpu.memory_space<vmem>>, vector<1x1x128xf32>
    %1657 = vector.shape_cast %1656 : vector<1x1x128xf32> to vector<1x128xf32>
    %1658 = vector.shape_cast %1655 : vector<1x128xf32> to vector<1x1x128xf32>
    tpu.vector_store %arg11[%c2_1081, %c31_1082, %c0_1083], %1658 {strides = array<i32>} : memref<4x32x128xf32, #tpu.memory_space<vmem>>, vector<1x1x128xf32>,
    %c31_i32_1084 = arith.constant 31 : i32
    %1659 = arith.addi %1, %c31_i32_1084 : i32
    %c4_i32_1085 = arith.constant 4 : i32
    %1660 = arith.muli %1659, %c4_i32_1085 : i32
    %c3_i32_1086 = arith.constant 3 : i32
    %1661 = arith.addi %1660, %c3_i32_1086 : i32
    %1662 = arith.index_cast %1661 : i32 to index
    %1663 = memref.load %arg3[%1662] : memref<128xi32, #tpu.memory_space<smem>>
    %1664 = arith.index_cast %1663 : i32 to index
    %c0_1087 = arith.constant 0 : index
    %1665 = vector.load %arg6[%1664, %c0_1087] : memref<32x128xf32, #tpu.memory_space<vmem>>, vector<1x128xf32>
    %c3_1088 = arith.constant 3 : index
    %c31_1089 = arith.constant 31 : index
    %c0_1090 = arith.constant 0 : index
    %1666 = vector.load %arg11[%c3_1088, %c31_1089, %c0_1090] : memref<4x32x128xf32, #tpu.memory_space<vmem>>, vector<1x1x128xf32>
    %1667 = vector.shape_cast %1666 : vector<1x1x128xf32> to vector<1x128xf32>
    %1668 = vector.shape_cast %1665 : vector<1x128xf32> to vector<1x1x128xf32>
    tpu.vector_store %arg11[%c3_1088, %c31_1089, %c0_1090], %1668 {strides = array<i32>} : memref<4x32x128xf32, #tpu.memory_space<vmem>>, vector<1x1x128xf32>,
    %c0_1091 = arith.constant 0 : index
    %c0_1092 = arith.constant 0 : index
    %1669 = vector.load %arg7[%c0_1091, %c0_1092] : memref<1x128xf32, #tpu.memory_space<vmem>>, vector<1x128xf32>
    %c0_1093 = arith.constant 0 : index
    %c0_1094 = arith.constant 0 : index
    %1670 = vector.load %arg9[%c0_1093, %c0_1094] : memref<32x128xf32, #tpu.memory_space<vmem>>, vector<32x128xf32>
    %c0_1095 = arith.constant 0 : index
    %c0_1096 = arith.constant 0 : index
    %1671 = vector.load %arg10[%c0_1095, %c0_1096] : memref<32x128xf32, #tpu.memory_space<vmem>>, vector<32x128xf32>
    %1672 = vector.broadcast %1669 : vector<1x128xf32> to vector<32x128xf32>
    %1673 = arith.addf %1670, %1672 : vector<32x128xf32>
    %1674 = arith.mulf %1671, %1673 : vector<32x128xf32>
    %cst = arith.constant dense<0.000000e+00> : vector<32xf32>
    %1675 = vector.multi_reduction <add>, %1674, %cst [1] : vector<32x128xf32> to vector<32xf32>
    %1676 = vector.shape_cast %1675 : vector<32xf32> to vector<32x1xf32>
    %1677 = vector.extract_strided_slice %1671 {offsets = [0, 32], sizes = [32, 1], strides = [1, 1]} : vector<32x128xf32> to vector<32x1xf32>
    %cst_1097 = arith.constant 0.000000e+00 : f32
    %1678 = vector.broadcast %cst_1097 : f32 to vector<32x1xf32>
    %c0_1098 = arith.constant 0 : index
    %c0_1099 = arith.constant 0 : index
    %c0_1100 = arith.constant 0 : index
    %1679 = vector.load %arg11[%c0_1098, %c0_1099, %c0_1100] : memref<4x32x128xf32, #tpu.memory_space<vmem>>, vector<1x32x128xf32>
    %1680 = vector.shape_cast %1679 : vector<1x32x128xf32> to vector<32x128xf32>
    %1681 = arith.mulf %1680, %1673 : vector<32x128xf32>
    %cst_1101 = arith.constant dense<0.000000e+00> : vector<32xf32>
    %1682 = vector.multi_reduction <add>, %1681, %cst_1101 [1] : vector<32x128xf32> to vector<32xf32>
    %1683 = vector.shape_cast %1682 : vector<32xf32> to vector<32x1xf32>
    %1684 = arith.addf %1683, %1677 : vector<32x1xf32>
    %cst_1102 = arith.constant 0.000000e+00 : f32
    %1685 = vector.broadcast %cst_1102 : f32 to vector<32x1xf32>
    %1686 = arith.subf %1685, %1684 : vector<32x1xf32>
    %cst_1103 = arith.constant 0.000000e+00 : f32
    %1687 = vector.broadcast %cst_1103 : f32 to vector<32x1xf32>
    %1688 = arith.subf %1687, %1686 : vector<32x1xf32>
    %cst_1104 = arith.constant 0.000000e+00 : f32
    %1689 = vector.broadcast %cst_1104 : f32 to vector<32x1xf32>
    %1690 = arith.maximumf %1688, %1689 : vector<32x1xf32>
    %1691 = math.absf %1686 : vector<32x1xf32>
    %cst_1105 = arith.constant 0.000000e+00 : f32
    %1692 = vector.broadcast %cst_1105 : f32 to vector<32x1xf32>
    %1693 = arith.subf %1692, %1691 : vector<32x1xf32>
    %1694 = math.exp %1693 : vector<32x1xf32>
    %cst_1106 = arith.constant 1.000000e+00 : f32
    %1695 = vector.broadcast %cst_1106 : f32 to vector<32x1xf32>
    %1696 = arith.addf %1695, %1694 : vector<32x1xf32>
    %1697 = math.log %1696 : vector<32x1xf32>
    %1698 = arith.addf %1690, %1697 : vector<32x1xf32>
    %1699 = arith.addf %1678, %1698 : vector<32x1xf32>
    %c1_1107 = arith.constant 1 : index
    %c0_1108 = arith.constant 0 : index
    %c0_1109 = arith.constant 0 : index
    %1700 = vector.load %arg11[%c1_1107, %c0_1108, %c0_1109] : memref<4x32x128xf32, #tpu.memory_space<vmem>>, vector<1x32x128xf32>
    %1701 = vector.shape_cast %1700 : vector<1x32x128xf32> to vector<32x128xf32>
    %1702 = arith.mulf %1701, %1673 : vector<32x128xf32>
    %cst_1110 = arith.constant dense<0.000000e+00> : vector<32xf32>
    %1703 = vector.multi_reduction <add>, %1702, %cst_1110 [1] : vector<32x128xf32> to vector<32xf32>
    %1704 = vector.shape_cast %1703 : vector<32xf32> to vector<32x1xf32>
    %1705 = arith.addf %1704, %1677 : vector<32x1xf32>
    %cst_1111 = arith.constant 0.000000e+00 : f32
    %1706 = vector.broadcast %cst_1111 : f32 to vector<32x1xf32>
    %1707 = arith.subf %1706, %1705 : vector<32x1xf32>
    %cst_1112 = arith.constant 0.000000e+00 : f32
    %1708 = vector.broadcast %cst_1112 : f32 to vector<32x1xf32>
    %1709 = arith.subf %1708, %1707 : vector<32x1xf32>
    %cst_1113 = arith.constant 0.000000e+00 : f32
    %1710 = vector.broadcast %cst_1113 : f32 to vector<32x1xf32>
    %1711 = arith.maximumf %1709, %1710 : vector<32x1xf32>
    %1712 = math.absf %1707 : vector<32x1xf32>
    %cst_1114 = arith.constant 0.000000e+00 : f32
    %1713 = vector.broadcast %cst_1114 : f32 to vector<32x1xf32>
    %1714 = arith.subf %1713, %1712 : vector<32x1xf32>
    %1715 = math.exp %1714 : vector<32x1xf32>
    %cst_1115 = arith.constant 1.000000e+00 : f32
    %1716 = vector.broadcast %cst_1115 : f32 to vector<32x1xf32>
    %1717 = arith.addf %1716, %1715 : vector<32x1xf32>
    %1718 = math.log %1717 : vector<32x1xf32>
    %1719 = arith.addf %1711, %1718 : vector<32x1xf32>
    %1720 = arith.addf %1699, %1719 : vector<32x1xf32>
    %c2_1116 = arith.constant 2 : index
    %c0_1117 = arith.constant 0 : index
    %c0_1118 = arith.constant 0 : index
    %1721 = vector.load %arg11[%c2_1116, %c0_1117, %c0_1118] : memref<4x32x128xf32, #tpu.memory_space<vmem>>, vector<1x32x128xf32>
    %1722 = vector.shape_cast %1721 : vector<1x32x128xf32> to vector<32x128xf32>
    %1723 = arith.mulf %1722, %1673 : vector<32x128xf32>
    %cst_1119 = arith.constant dense<0.000000e+00> : vector<32xf32>
    %1724 = vector.multi_reduction <add>, %1723, %cst_1119 [1] : vector<32x128xf32> to vector<32xf32>
    %1725 = vector.shape_cast %1724 : vector<32xf32> to vector<32x1xf32>
    %1726 = arith.addf %1725, %1677 : vector<32x1xf32>
    %cst_1120 = arith.constant 0.000000e+00 : f32
    %1727 = vector.broadcast %cst_1120 : f32 to vector<32x1xf32>
    %1728 = arith.subf %1727, %1726 : vector<32x1xf32>
    %cst_1121 = arith.constant 0.000000e+00 : f32
    %1729 = vector.broadcast %cst_1121 : f32 to vector<32x1xf32>
    %1730 = arith.subf %1729, %1728 : vector<32x1xf32>
    %cst_1122 = arith.constant 0.000000e+00 : f32
    %1731 = vector.broadcast %cst_1122 : f32 to vector<32x1xf32>
    %1732 = arith.maximumf %1730, %1731 : vector<32x1xf32>
    %1733 = math.absf %1728 : vector<32x1xf32>
    %cst_1123 = arith.constant 0.000000e+00 : f32
    %1734 = vector.broadcast %cst_1123 : f32 to vector<32x1xf32>
    %1735 = arith.subf %1734, %1733 : vector<32x1xf32>
    %1736 = math.exp %1735 : vector<32x1xf32>
    %cst_1124 = arith.constant 1.000000e+00 : f32
    %1737 = vector.broadcast %cst_1124 : f32 to vector<32x1xf32>
    %1738 = arith.addf %1737, %1736 : vector<32x1xf32>
    %1739 = math.log %1738 : vector<32x1xf32>
    %1740 = arith.addf %1732, %1739 : vector<32x1xf32>
    %1741 = arith.addf %1720, %1740 : vector<32x1xf32>
    %c3_1125 = arith.constant 3 : index
    %c0_1126 = arith.constant 0 : index
    %c0_1127 = arith.constant 0 : index
    %1742 = vector.load %arg11[%c3_1125, %c0_1126, %c0_1127] : memref<4x32x128xf32, #tpu.memory_space<vmem>>, vector<1x32x128xf32>
    %1743 = vector.shape_cast %1742 : vector<1x32x128xf32> to vector<32x128xf32>
    %1744 = arith.mulf %1743, %1673 : vector<32x128xf32>
    %cst_1128 = arith.constant dense<0.000000e+00> : vector<32xf32>
    %1745 = vector.multi_reduction <add>, %1744, %cst_1128 [1] : vector<32x128xf32> to vector<32xf32>
    %1746 = vector.shape_cast %1745 : vector<32xf32> to vector<32x1xf32>
    %1747 = arith.addf %1746, %1677 : vector<32x1xf32>
    %cst_1129 = arith.constant 0.000000e+00 : f32
    %1748 = vector.broadcast %cst_1129 : f32 to vector<32x1xf32>
    %1749 = arith.subf %1748, %1747 : vector<32x1xf32>
    %cst_1130 = arith.constant 0.000000e+00 : f32
    %1750 = vector.broadcast %cst_1130 : f32 to vector<32x1xf32>
    %1751 = arith.subf %1750, %1749 : vector<32x1xf32>
    %cst_1131 = arith.constant 0.000000e+00 : f32
    %1752 = vector.broadcast %cst_1131 : f32 to vector<32x1xf32>
    %1753 = arith.maximumf %1751, %1752 : vector<32x1xf32>
    %1754 = math.absf %1749 : vector<32x1xf32>
    %cst_1132 = arith.constant 0.000000e+00 : f32
    %1755 = vector.broadcast %cst_1132 : f32 to vector<32x1xf32>
    %1756 = arith.subf %1755, %1754 : vector<32x1xf32>
    %1757 = math.exp %1756 : vector<32x1xf32>
    %cst_1133 = arith.constant 1.000000e+00 : f32
    %1758 = vector.broadcast %cst_1133 : f32 to vector<32x1xf32>
    %1759 = arith.addf %1758, %1757 : vector<32x1xf32>
    %1760 = math.log %1759 : vector<32x1xf32>
    %1761 = arith.addf %1753, %1760 : vector<32x1xf32>
    %1762 = arith.addf %1741, %1761 : vector<32x1xf32>
    %c32_i32_1134 = arith.constant 32 : i32
    %1763 = arith.muli %arg0, %c32_i32_1134 : i32
    %1764 = tpu.iota {dimensions = array<i32: 0>} : vector<32x1xi32>
    %1765 = vector.broadcast %1763 : i32 to vector<32x1xi32>
    %1766 = arith.addi %1765, %1764 : vector<32x1xi32>
    %1767 = vector.broadcast %0 : i32 to vector<32x1xi32>
    %1768 = arith.cmpi slt, %1766, %1767 : vector<32x1xi32>
    %cst_1135 = arith.constant 0.000000e+00 : f32
    %1769 = vector.broadcast %cst_1135 : f32 to vector<32x1xf32>
    %1770 = arith.select %1768, %1762, %1769 : vector<32x1xi1>, vector<32x1xf32>
    %1771 = vector.shape_cast %1770 : vector<32x1xf32> to vector<1x32x1xf32>
    %cst_1136 = arith.constant dense<0.000000e+00> : vector<1xf32>
    %1772 = vector.multi_reduction <add>, %1771, %cst_1136 [1, 2] : vector<1x32x1xf32> to vector<1xf32>
    %1773 = vector.shape_cast %1772 : vector<1xf32> to vector<1x1x1xf32>
    %1774 = vector.extract %1773[0, 0, 0] : f32 from vector<1x1x1xf32>
    %c32_i32_1137 = arith.constant 32 : i32
    %1775 = arith.muli %arg0, %c32_i32_1137 : i32
    %1776 = tpu.assume_multiple %1775, 32 : i32
    %1777 = arith.index_cast %1776 : i32 to index
    %c0_1138 = arith.constant 0 : index
    %1778 = vector.load %arg12[%1777, %c0_1138] : memref<32x1xf32, #tpu.memory_space<vmem>>, vector<32x1xf32>
    tpu.vector_store %arg12[%1777, %c0_1138], %1676 {strides = array<i32>} : memref<32x1xf32, #tpu.memory_space<vmem>>, vector<32x1xf32>,
    %1779 = arith.index_cast %1776 : i32 to index
    %c0_1139 = arith.constant 0 : index
    %1780 = vector.load %arg13[%1779, %c0_1139] : memref<32x1xf32, #tpu.memory_space<vmem>>, vector<32x1xf32>
    tpu.vector_store %arg13[%1779, %c0_1139], %1677 {strides = array<i32>} : memref<32x1xf32, #tpu.memory_space<vmem>>, vector<32x1xf32>,
    %c0_1140 = arith.constant 0 : index
    %c0_1141 = arith.constant 0 : index
    %1781 = vector.load %arg14[%c0_1140, %c0_1141] : memref<1x1xf32, #tpu.memory_space<vmem>>, vector<1x1xf32>
    %1782 = vector.broadcast %1774 : f32 to vector<1x1xf32>
    %1783 = arith.addf %1781, %1782 : vector<1x1xf32>
    %c0_1142 = arith.constant 0 : index
    %c0_1143 = arith.constant 0 : index
    %1784 = vector.load %arg14[%c0_1142, %c0_1143] : memref<1x1xf32, #tpu.memory_space<vmem>>, vector<1x1xf32>
    tpu.vector_store %arg14[%c0_1142, %c0_1143], %1783 {strides = array<i32>} : memref<1x1xf32, #tpu.memory_space<vmem>>, vector<1x1xf32>,
    %c0_1144 = arith.constant 0 : index
    %c0_1145 = arith.constant 0 : index
    %1785 = vector.load %arg15[%c0_1144, %c0_1145] : memref<1x1xf32, #tpu.memory_space<vmem>>, vector<1x1xf32>
    %1786 = arith.mulf %1670, %1670 : vector<32x128xf32>
    %1787 = vector.shape_cast %1786 : vector<32x128xf32> to vector<1x32x128xf32>
    %cst_1146 = arith.constant dense<0.000000e+00> : vector<1xf32>
    %1788 = vector.multi_reduction <add>, %1787, %cst_1146 [1, 2] : vector<1x32x128xf32> to vector<1xf32>
    %1789 = vector.shape_cast %1788 : vector<1xf32> to vector<1x1x1xf32>
    %1790 = vector.extract %1789[0, 0, 0] : f32 from vector<1x1x1xf32>
    %1791 = vector.broadcast %1790 : f32 to vector<1x1xf32>
    %1792 = arith.addf %1785, %1791 : vector<1x1xf32>
    %c0_1147 = arith.constant 0 : index
    %c0_1148 = arith.constant 0 : index
    %1793 = vector.load %arg15[%c0_1147, %c0_1148] : memref<1x1xf32, #tpu.memory_space<vmem>>, vector<1x1xf32>
    tpu.vector_store %arg15[%c0_1147, %c0_1148], %1792 {strides = array<i32>} : memref<1x1xf32, #tpu.memory_space<vmem>>, vector<1x1xf32>,
    %c0_1149 = arith.constant 0 : index
    %c0_1150 = arith.constant 0 : index
    %1794 = vector.load %arg16[%c0_1149, %c0_1150] : memref<1x1xf32, #tpu.memory_space<vmem>>, vector<1x1xf32>
    %1795 = arith.mulf %1671, %1671 : vector<32x128xf32>
    %1796 = vector.shape_cast %1795 : vector<32x128xf32> to vector<1x32x128xf32>
    %cst_1151 = arith.constant dense<0.000000e+00> : vector<1xf32>
    %1797 = vector.multi_reduction <add>, %1796, %cst_1151 [1, 2] : vector<1x32x128xf32> to vector<1xf32>
    %1798 = vector.shape_cast %1797 : vector<1xf32> to vector<1x1x1xf32>
    %1799 = vector.extract %1798[0, 0, 0] : f32 from vector<1x1x1xf32>
    %1800 = arith.mulf %1677, %1677 : vector<32x1xf32>
    %1801 = vector.shape_cast %1800 : vector<32x1xf32> to vector<1x32x1xf32>
    %cst_1152 = arith.constant dense<0.000000e+00> : vector<1xf32>
    %1802 = vector.multi_reduction <add>, %1801, %cst_1152 [1, 2] : vector<1x32x1xf32> to vector<1xf32>
    %1803 = vector.shape_cast %1802 : vector<1xf32> to vector<1x1x1xf32>
    %1804 = vector.extract %1803[0, 0, 0] : f32 from vector<1x1x1xf32>
    %1805 = arith.subf %1799, %1804 : f32
    %1806 = vector.broadcast %1805 : f32 to vector<1x1xf32>
    %1807 = arith.addf %1794, %1806 : vector<1x1xf32>
    %c0_1153 = arith.constant 0 : index
    %c0_1154 = arith.constant 0 : index
    %1808 = vector.load %arg16[%c0_1153, %c0_1154] : memref<1x1xf32, #tpu.memory_space<vmem>>, vector<1x1xf32>
    tpu.vector_store %arg16[%c0_1153, %c0_1154], %1807 {strides = array<i32>} : memref<1x1xf32, #tpu.memory_space<vmem>>, vector<1x1xf32>,
    %c0_i32_1155 = arith.constant 0 : i32
    %1809 = arith.cmpi eq, %arg0, %c0_i32_1155 : i32
    %1810 = arith.extui %1809 : i1 to i32
    %c0_i32_1156 = arith.constant 0 : i32
    %1811 = arith.cmpi ne, %1810, %c0_i32_1156 : i32
    scf.if %1811 {
      %1812 = arith.sitofp %0 : i32 to f32
      %c0_1157 = arith.constant 0 : index
      %c0_1158 = arith.constant 0 : index
      %1813 = vector.load %arg13[%c0_1157, %c0_1158] : memref<32x1xf32, #tpu.memory_space<vmem>>, vector<32x1xf32>
      %1814 = tpu.transpose %1813, [1, 0] : vector<32x1xf32> -> vector<1x32xf32>
      %1815 = tpu.iota {dimensions = array<i32: 1>} : vector<1x32xi32>
      %1816 = vector.broadcast %0 : i32 to vector<1x32xi32>
      %1817 = arith.cmpi slt, %1815, %1816 : vector<1x32xi32>
      %cst_1159 = arith.constant 0.000000e+00 : f32
      %1818 = vector.broadcast %cst_1159 : f32 to vector<1x1xf32>
      %c0_i32_1160 = arith.constant 0 : i32
      %c32_i32_1161 = arith.constant 32 : i32
      %1819 = arith.muli %c0_i32_1160, %c32_i32_1161 : i32
      %1820 = tpu.assume_multiple %1819, 32 : i32
      %1821 = arith.index_cast %1820 : i32 to index
      %c0_1162 = arith.constant 0 : index
      %1822 = vector.load %arg12[%1821, %c0_1162] : memref<32x1xf32, #tpu.memory_space<vmem>>, vector<32x1xf32>
      %1823 = tpu.iota {dimensions = array<i32: 0>} : vector<32x1xi32>
      %1824 = vector.broadcast %1820 : i32 to vector<32x1xi32>
      %1825 = arith.addi %1824, %1823 : vector<32x1xi32>
      %1826 = vector.broadcast %0 : i32 to vector<32x1xi32>
      %1827 = arith.cmpi slt, %1825, %1826 : vector<32x1xi32>
      %1828 = vector.broadcast %1822 : vector<32x1xf32> to vector<32x32xf32>
      %1829 = vector.broadcast %1814 : vector<1x32xf32> to vector<32x32xf32>
      %1830 = arith.addf %1828, %1829 : vector<32x32xf32>
      %1831 = vector.broadcast %1827 : vector<32x1xi1> to vector<32x32xi1>
      %1832 = vector.broadcast %1817 : vector<1x32xi1> to vector<32x32xi1>
      %1833 = arith.andi %1831, %1832 : vector<32x32xi1>
      %cst_1163 = arith.constant 0.000000e+00 : f32
      %1834 = vector.broadcast %cst_1163 : f32 to vector<32x32xf32>
      %1835 = arith.subf %1834, %1830 : vector<32x32xf32>
      %cst_1164 = arith.constant 0.000000e+00 : f32
      %1836 = vector.broadcast %cst_1164 : f32 to vector<32x32xf32>
      %1837 = arith.maximumf %1835, %1836 : vector<32x32xf32>
      %1838 = math.absf %1830 : vector<32x32xf32>
      %cst_1165 = arith.constant 0.000000e+00 : f32
      %1839 = vector.broadcast %cst_1165 : f32 to vector<32x32xf32>
      %1840 = arith.subf %1839, %1838 : vector<32x32xf32>
      %1841 = math.exp %1840 : vector<32x32xf32>
      %cst_1166 = arith.constant 1.000000e+00 : f32
      %1842 = vector.broadcast %cst_1166 : f32 to vector<32x32xf32>
      %1843 = arith.addf %1842, %1841 : vector<32x32xf32>
      %1844 = math.log %1843 : vector<32x32xf32>
      %1845 = arith.addf %1837, %1844 : vector<32x32xf32>
      %cst_1167 = arith.constant 0.000000e+00 : f32
      %1846 = vector.broadcast %cst_1167 : f32 to vector<32x32xf32>
      %1847 = arith.select %1833, %1845, %1846 : vector<32x32xi1>, vector<32x32xf32>
      %1848 = vector.shape_cast %1847 : vector<32x32xf32> to vector<1x32x32xf32>
      %cst_1168 = arith.constant dense<0.000000e+00> : vector<1xf32>
      %1849 = vector.multi_reduction <add>, %1848, %cst_1168 [1, 2] : vector<1x32x32xf32> to vector<1xf32>
      %1850 = vector.shape_cast %1849 : vector<1xf32> to vector<1x1x1xf32>
      %1851 = vector.extract %1850[0, 0, 0] : f32 from vector<1x1x1xf32>
      %1852 = vector.broadcast %1851 : f32 to vector<1x1xf32>
      %1853 = arith.addf %1818, %1852 : vector<1x1xf32>
      %c1_i32_1169 = arith.constant 1 : i32
      %c0_1170 = arith.constant 0 : index
      %c0_1171 = arith.constant 0 : index
      %1854 = vector.load %arg14[%c0_1170, %c0_1171] : memref<1x1xf32, #tpu.memory_space<vmem>>, vector<1x1xf32>
      %1855 = vector.broadcast %1812 : f32 to vector<1x1xf32>
      %1856 = arith.mulf %1855, %1854 : vector<1x1xf32>
      %1857 = arith.addf %1853, %1856 : vector<1x1xf32>
      %1858 = arith.mulf %1812, %1812 : f32
      %1859 = vector.broadcast %1858 : f32 to vector<1x1xf32>
      %1860 = arith.divf %1857, %1859 : vector<1x1xf32>
      %c0_1172 = arith.constant 0 : index
      %c0_1173 = arith.constant 0 : index
      %1861 = vector.load %arg15[%c0_1172, %c0_1173] : memref<1x1xf32, #tpu.memory_space<vmem>>, vector<1x1xf32>
      %1862 = math.sqrt %1861 : vector<1x1xf32>
      %c0_1174 = arith.constant 0 : index
      %c0_1175 = arith.constant 0 : index
      %1863 = vector.load %arg16[%c0_1174, %c0_1175] : memref<1x1xf32, #tpu.memory_space<vmem>>, vector<1x1xf32>
      %1864 = math.sqrt %1863 : vector<1x1xf32>
      %1865 = arith.addf %1862, %1864 : vector<1x1xf32>
      %1866 = arith.mulf %1669, %1669 : vector<1x128xf32>
      %1867 = vector.shape_cast %1866 : vector<1x128xf32> to vector<1x1x128xf32>
      %cst_1176 = arith.constant dense<0.000000e+00> : vector<1xf32>
      %1868 = vector.multi_reduction <add>, %1867, %cst_1176 [1, 2] : vector<1x1x128xf32> to vector<1xf32>
      %1869 = vector.shape_cast %1868 : vector<1xf32> to vector<1x1x1xf32>
      %1870 = vector.extract %1869[0, 0, 0] : f32 from vector<1x1x1xf32>
      %1871 = math.sqrt %1870 : f32
      %1872 = vector.broadcast %1871 : f32 to vector<1x1xf32>
      %1873 = arith.addf %1865, %1872 : vector<1x1xf32>
      %1874 = tpu.iota {dimensions = array<i32: 1>} : vector<1x128xi32>
      %c0_i32_1177 = arith.constant 0 : i32
      %1875 = vector.broadcast %c0_i32_1177 : i32 to vector<1x128xi32>
      %1876 = arith.cmpi eq, %1874, %1875 : vector<1x128xi32>
      %cst_1178 = arith.constant 0.000000e+00 : f32
      %1877 = vector.shape_cast %1860 : vector<1x1xf32> to vector<1x1xf32>
      %1878 = vector.broadcast %1877 : vector<1x1xf32> to vector<1x128xf32>
      %1879 = vector.broadcast %cst_1178 : f32 to vector<1x128xf32>
      %1880 = arith.select %1876, %1878, %1879 : vector<1x128xi1>, vector<1x128xf32>
      %c1_i32_1179 = arith.constant 1 : i32
      %1881 = vector.broadcast %c1_i32_1179 : i32 to vector<1x128xi32>
      %1882 = arith.cmpi eq, %1874, %1881 : vector<1x128xi32>
      %cst_1180 = arith.constant 0.000000e+00 : f32
      %1883 = vector.shape_cast %1873 : vector<1x1xf32> to vector<1x1xf32>
      %1884 = vector.broadcast %1883 : vector<1x1xf32> to vector<1x128xf32>
      %1885 = vector.broadcast %cst_1180 : f32 to vector<1x128xf32>
      %1886 = arith.select %1882, %1884, %1885 : vector<1x128xi1>, vector<1x128xf32>
      %1887 = arith.addf %1880, %1886 : vector<1x128xf32>
      %c0_1181 = arith.constant 0 : index
      %c0_1182 = arith.constant 0 : index
      %1888 = vector.load %arg8[%c0_1181, %c0_1182] : memref<1x128xf32, #tpu.memory_space<vmem>>, vector<1x128xf32>
      tpu.vector_store %arg8[%c0_1181, %c0_1182], %1887 {strides = array<i32>} : memref<1x128xf32, #tpu.memory_space<vmem>>, vector<1x128xf32>,
    } else {
    }
    return
  }
  func.func @transform_0(%arg0: i32, %arg1: memref<32xi32, #tpu.memory_space<smem>>, %arg2: memref<32xi32, #tpu.memory_space<smem>>, %arg3: memref<128xi32, #tpu.memory_space<smem>>, %arg4: memref<1xi32, #tpu.memory_space<smem>>) -> (i32, i32) {
    %c0_i32 = arith.constant 0 : i32
    %c0_i32_0 = arith.constant 0 : i32
    %c0_i32_1 = arith.constant 0 : i32
    return %c0_i32, %c0_i32_0 : i32, i32
  }
  func.func @transform_1(%arg0: i32, %arg1: memref<32xi32, #tpu.memory_space<smem>>, %arg2: memref<32xi32, #tpu.memory_space<smem>>, %arg3: memref<128xi32, #tpu.memory_space<smem>>, %arg4: memref<1xi32, #tpu.memory_space<smem>>) -> (i32, i32) {
    %c0_i32 = arith.constant 0 : i32
    %c0_i32_0 = arith.constant 0 : i32
    %c0_i32_1 = arith.constant 0 : i32
    return %c0_i32, %c0_i32_0 : i32, i32
  }
  func.func @transform_2(%arg0: i32, %arg1: memref<32xi32, #tpu.memory_space<smem>>, %arg2: memref<32xi32, #tpu.memory_space<smem>>, %arg3: memref<128xi32, #tpu.memory_space<smem>>, %arg4: memref<1xi32, #tpu.memory_space<smem>>) -> (i32, i32) {
    %c0_i32 = arith.constant 0 : i32
    %c0_i32_0 = arith.constant 0 : i32
    %c0_i32_1 = arith.constant 0 : i32
    return %c0_i32, %c0_i32_0 : i32, i32
  }
  func.func @transform_3(%arg0: i32, %arg1: memref<32xi32, #tpu.memory_space<smem>>, %arg2: memref<32xi32, #tpu.memory_space<smem>>, %arg3: memref<128xi32, #tpu.memory_space<smem>>, %arg4: memref<1xi32, #tpu.memory_space<smem>>) -> (i32, i32) {
    %c0_i32 = arith.constant 0 : i32
    %c0_i32_0 = arith.constant 0 : i32
    %c0_i32_1 = arith.constant 0 : i32
    return %c0_i32, %c0_i32_0 : i32, i32
  }
}

</mosaic_0001>

<llo_original>
// kernel: transe_neg_loss.1
$region0: #{transe_neg_loss.1}
  #allocation0 [shape = 'u32[]', space=smem, size = 0x4, offset = 0x4, fixed_abs, tag = 'smem constant byte address 0x4 - core index']
  #allocation1 [shape = 'u32[144,128]{1,0:T(1,128)}', space=vmem, size = 0x12000, scoped, tag = 'internal scratch']
  #allocation2 [shape = 'f32[32,128]{1,0:T(8,128)}', space=vmem, size = 0x4000, scoped, tag = 'scratch operand']
  #allocation3 [shape = 'f32[32,128]{1,0:T(8,128)}', space=vmem, size = 0x4000, scoped, tag = 'scratch operand']
  #allocation4 [shape = 'f32[4,32,128]{2,1,0:T(8,128)}', space=vmem, size = 0x10000, scoped, tag = 'scratch operand']
  #allocation5 [shape = 'f32[32,1]{1,0:T(8,128)}', space=vmem, size = 0x4000, scoped, tag = 'scratch operand']
  #allocation6 [shape = 'f32[32,1]{1,0:T(8,128)}', space=vmem, size = 0x4000, scoped, tag = 'scratch operand']
  #allocation7 [shape = 'f32[1,1]{1,0:T(1,128)}', space=vmem, size = 0x200, scoped, tag = 'scratch operand']
  #allocation8 [shape = 'f32[1,1]{1,0:T(1,128)}', space=vmem, size = 0x200, scoped, tag = 'scratch operand']
  #allocation9 [shape = 'f32[1,1]{1,0:T(1,128)}', space=vmem, size = 0x200, scoped, tag = 'scratch operand']
  #allocation10 [shape = 's32[1]{0}', space=sflag, size = 0x4, scoped, tag = 'scoped memory for transe_neg_loss.1']
  #allocation11 [shape = 'u8[512]{0}', space=smem, size = 0x200, scoped, tag = 'prefetched SMEM operand 0']
  #allocation12 [shape = 'u8[512]{0}', space=smem, size = 0x200, scoped, tag = 'prefetched SMEM operand 1']
  #allocation13 [shape = 'u8[512]{0}', space=smem, size = 0x200, scoped, tag = 'prefetched SMEM operand 2']
  #allocation14 [shape = 's32[1]{0:T(128)S(6)}', space=smem, size = 0x200, scoped, tag = 'prefetched SMEM operand 3']
  %s0 = inlined_call_operand.vmem [shape: s32[32], index: 0, kind: input, shape index: {}]
  %s1 = inlined_call_operand.vmem [shape: s32[32], index: 1, kind: input, shape index: {}]
  %s2 = inlined_call_operand.vmem [shape: s32[128], index: 2, kind: input, shape index: {}]
  %s3 = inlined_call_operand.<no memory space> [shape: s32[1], index: 3, kind: input, shape index: {}]
  %s4 = inlined_call_operand.hbm [shape: f32[24,128], index: 4, kind: input, shape index: {}]
  %s5 = inlined_call_operand.hbm [shape: f32[32,128], index: 5, kind: input, shape index: {}]
  %s6 = inlined_call_operand.vmem [shape: f32[1,128], index: 6, kind: input, shape index: {}]
  %s7 = inlined_call_operand.vmem [shape: f32[1,128], index: 7, kind: output, shape index: {}]
  %s8 = sld [smem:[#allocation0]]
  $region38: #{transe_neg_loss.1} parent=0
    _
  %s10 = ssub.s32 1, %s8
  %s11 = scalar_select 0, %s10, %s8
  %s12 = sshll.u32 %s0, 4
  %s13 = int_to_ptr.vmem [resolvable:$true] %s12
  %15 = dma.vmem_to_smem %s13, 16, [#allocation11], [#allocation10]
  %s16 = sshll.u32 %s1, 4
  %s17 = int_to_ptr.vmem [resolvable:$true] %s16
  %19 = dma.vmem_to_smem %s17, 16, [#allocation12], [#allocation10]
  %s20 = sshll.u32 %s2, 4
  %s21 = int_to_ptr.vmem [resolvable:$true] %s20
  %23 = dma.vmem_to_smem %s21, 16, [#allocation13], [#allocation10]
  %24 = sst [smem:[#allocation14]] %s3
  %25 = dma.done [#allocation10], 48
  %26 = sfence
  $region1: #{transe_neg_loss.1} parent=0
    #allocation15 [shape = 'u8[12288]{0}', space=vmem, size = 0x3000, scoped, tag = 'input window, operand 4, single buffered']
    #allocation16 [shape = 's32[1]{0}', space=sflag, size = 0x4, scoped, tag = 'scoped memory for transe_neg_loss.1']
    #allocation17 [shape = 'u8[16384]{0}', space=vmem, size = 0x4000, scoped, tag = 'input window, operand 5, single buffered']
    #allocation18 [shape = 's32[1]{0}', space=sflag, size = 0x4, scoped, tag = 'scoped memory for transe_neg_loss.1']
    %27 = vsyncpa [#allocation16], 0
    %28 = vsyncpa [#allocation18], 0
    // Predicated region
    $region2: #{transe_neg_loss.1} parent=1 // pred_check
      _
    $region3: #{transe_neg_loss.1} parent=1 // pred_check_branch
      %30 = sbr.rel (0) target = $region5
    $region4: #{transe_neg_loss.1} parent=1 // pred_region
      %s32 = ssub.s32 384, 384
      %33 = vsyncadd [#allocation16], %s32
      %s34 = sshll.u32 [#allocation15], 4
      %s35 = int_to_ptr.vmem [resolvable:$true] %s34
      %40 = dma.hbm_to_vmem [thread:$0]  %s4, 384, %s35, [#allocation16], 128, 128, 8
    $region5: #{transe_neg_loss.1} parent=1 // pred_fallthru
      _
    // Predicated region
    $region6: #{transe_neg_loss.1} parent=1 // pred_check
      _
    $region7: #{transe_neg_loss.1} parent=1 // pred_check_branch
      %42 = sbr.rel (0) target = $region9
    $region8: #{transe_neg_loss.1} parent=1 // pred_region
      %s44 = ssub.s32 512, 512
      %45 = vsyncadd [#allocation18], %s44
      %s46 = sshll.u32 [#allocation17], 4
      %s47 = int_to_ptr.vmem [resolvable:$true] %s46
      %52 = dma.hbm_to_vmem [thread:$0]  %s5, 512, %s47, [#allocation18], 128, 128, 8
    $region9: #{transe_neg_loss.1} parent=1 // pred_fallthru
      _
    // Predicated region
    $region10: #{transe_neg_loss.1} parent=1 // pred_check
      _
    $region11: #{transe_neg_loss.1} parent=1 // pred_check_branch
      %54 = sbr.rel (0) target = $region13
    $region12: #{transe_neg_loss.1} parent=1 // pred_region
      _
    $region13: #{transe_neg_loss.1} parent=1 // pred_fallthru
      _
    // Predicated region
    $region14: #{transe_neg_loss.1} parent=1 // pred_check
      _
    $region15: #{transe_neg_loss.1} parent=1 // pred_check_branch
      %56 = sbr.rel (0) target = $region17
    $region16: #{transe_neg_loss.1} parent=1 // pred_region
      %57 = dma.done [#allocation16], 384
    $region17: #{transe_neg_loss.1} parent=1 // pred_fallthru
      _
    // Predicated region
    $region18: #{transe_neg_loss.1} parent=1 // pred_check
      _
    $region19: #{transe_neg_loss.1} parent=1 // pred_check_branch
      %59 = sbr.rel (0) target = $region21
    $region20: #{transe_neg_loss.1} parent=1 // pred_region
      %60 = dma.done [#allocation18], 512
    $region21: #{transe_neg_loss.1} parent=1 // pred_fallthru
      _
    %s61 = sld [smem:[#allocation14]]
    %s62 = smul.u32 0, 32
    %p63 = scmp.eq.s32.totalorder 0, 0
    // Predicated region
    $region22: #{transe_neg_loss.1} parent=1 // pred_check
      %p64 = pneg %p63
    $region23: #{transe_neg_loss.1} parent=1 // pred_check_branch
      %66 = sbr.rel (%p64) target = $region25
    $region24: #{transe_neg_loss.1} parent=1 // pred_region
      %vm67 = vcmask 0
      %68 = vst.msk [vmem:[#allocation7] sm:$0x1] %vm67, 0.0
      %69 = vst.msk [vmem:[#allocation8] sm:$0x1] %vm67, 0.0
      %70 = vst.msk [vmem:[#allocation9] sm:$0x1] %vm67, 0.0
    $region25: #{transe_neg_loss.1} parent=1 // pred_fallthru
      _
    %s71 = sld [smem:[#allocation11 + %s62]]
    %s72 = scalar_lea.vmem [#allocation15], %s71
    %v73 = vld [vmem:[%s72] sm:$0x1]
    %74 = vst [vmem:[#allocation2] sm:$0x1] %v73
    %s75 = sld [smem:[#allocation12 + %s62]]
    %s76 = scalar_lea.vmem [#allocation17], %s75
    %v77 = vld [vmem:[%s76] sm:$0x1]
    %78 = vst [vmem:[#allocation3] sm:$0x1] %v77
    %s79 = smul.u32 0, 128
    %s80 = sld [smem:[#allocation13 + %s79]]
    %s81 = scalar_lea.vmem [#allocation17], %s80
    %v82 = vld [vmem:[%s81] sm:$0x1]
    %83 = vst [vmem:[#allocation4] sm:$0x1] %v82
    %s84 = sadd.s32 %s79, 1
    %s85 = sld [smem:[#allocation13 + %s84]]
    %s86 = scalar_lea.vmem [#allocation17], %s85
    %v87 = vld [vmem:[%s86] sm:$0x1]
    %s88 = scalar_lea.vmem [#allocation4], 32
    %89 = vst [vmem:[%s88] sm:$0x1] %v87
    %s90 = sadd.s32 %s79, 2
    %s91 = sld [smem:[#allocation13 + %s90]]
    %s92 = scalar_lea.vmem [#allocation17], %s91
    %v93 = vld [vmem:[%s92] sm:$0x1]
    %s94 = scalar_lea.vmem [#allocation4], 64
    %95 = vst [vmem:[%s94] sm:$0x1] %v93
    %s96 = sadd.s32 %s79, 3
    %s97 = sld [smem:[#allocation13 + %s96]]
    %s98 = scalar_lea.vmem [#allocation17], %s97
    %v99 = vld [vmem:[%s98] sm:$0x1]
    %s100 = scalar_lea.vmem [#allocation4], 96
    %101 = vst [vmem:[%s100] sm:$0x1] %v99
    %s102 = sadd.s32 %s62, 1
    %s103 = sld [smem:[#allocation11 + %s102]]
    %s104 = scalar_lea.vmem [#allocation15], %s103
    %v105 = vld [vmem:[%s104] sm:$0x1]
    %106 = vst [vmem:[#allocation2 + $0x1] sm:$0x1] %v105
    %s107 = sld [smem:[#allocation12 + %s102]]
    %s108 = scalar_lea.vmem [#allocation17], %s107
    %v109 = vld [vmem:[%s108] sm:$0x1]
    %110 = vst [vmem:[#allocation3 + $0x1] sm:$0x1] %v109
    %s111 = smul.u32 %s102, 4
    %s112 = sld [smem:[#allocation13 + %s111]]
    %s113 = scalar_lea.vmem [#allocation17], %s112
    %v114 = vld [vmem:[%s113] sm:$0x1]
    %115 = vst [vmem:[#allocation4 + $0x1] sm:$0x1] %v114
    %s116 = sadd.s32 %s111, 1
    %s117 = sld [smem:[#allocation13 + %s116]]
    %s118 = scalar_lea.vmem [#allocation17], %s117
    %v119 = vld [vmem:[%s118] sm:$0x1]
    %120 = vst [vmem:[%s88 + $0x1] sm:$0x1] %v119
    %s121 = sadd.s32 %s111, 2
    %s122 = sld [smem:[#allocation13 + %s121]]
    %s123 = scalar_lea.vmem [#allocation17], %s122
    %v124 = vld [vmem:[%s123] sm:$0x1]
    %125 = vst [vmem:[%s94 + $0x1] sm:$0x1] %v124
    %s126 = sadd.s32 %s111, 3
    %s127 = sld [smem:[#allocation13 + %s126]]
    %s128 = scalar_lea.vmem [#allocation17], %s127
    %v129 = vld [vmem:[%s128] sm:$0x1]
    %130 = vst [vmem:[%s100 + $0x1] sm:$0x1] %v129
    %s131 = sadd.s32 %s62, 2
    %s132 = sld [smem:[#allocation11 + %s131]]
    %s133 = scalar_lea.vmem [#allocation15], %s132
    %v134 = vld [vmem:[%s133] sm:$0x1]
    %135 = vst [vmem:[#allocation2 + $0x2] sm:$0x1] %v134
    %s136 = sld [smem:[#allocation12 + %s131]]
    %s137 = scalar_lea.vmem [#allocation17], %s136
    %v138 = vld [vmem:[%s137] sm:$0x1]
    %139 = vst [vmem:[#allocation3 + $0x2] sm:$0x1] %v138
    %s140 = smul.u32 %s131, 4
    %s141 = sld [smem:[#allocation13 + %s140]]
    %s142 = scalar_lea.vmem [#allocation17], %s141
    %v143 = vld [vmem:[%s142] sm:$0x1]
    %144 = vst [vmem:[#allocation4 + $0x2] sm:$0x1] %v143
    %s145 = sadd.s32 %s140, 1
    %s146 = sld [smem:[#allocation13 + %s145]]
    %s147 = scalar_lea.vmem [#allocation17], %s146
    %v148 = vld [vmem:[%s147] sm:$0x1]
    %149 = vst [vmem:[%s88 + $0x2] sm:$0x1] %v148
    %s150 = sadd.s32 %s140, 2
    %s151 = sld [smem:[#allocation13 + %s150]]
    %s152 = scalar_lea.vmem [#allocation17], %s151
    %v153 = vld [vmem:[%s152] sm:$0x1]
    %154 = vst [vmem:[%s94 + $0x2] sm:$0x1] %v153
    %s155 = sadd.s32 %s140, 3
    %s156 = sld [smem:[#allocation13 + %s155]]
    %s157 = scalar_lea.vmem [#allocation17], %s156
    %v158 = vld [vmem:[%s157] sm:$0x1]
    %159 = vst [vmem:[%s100 + $0x2] sm:$0x1] %v158
    %s160 = sadd.s32 %s62, 3
    %s161 = sld [smem:[#allocation11 + %s160]]
    %s162 = scalar_lea.vmem [#allocation15], %s161
    %v163 = vld [vmem:[%s162] sm:$0x1]
    %164 = vst [vmem:[#allocation2 + $0x3] sm:$0x1] %v163
    %s165 = sld [smem:[#allocation12 + %s160]]
    %s166 = scalar_lea.vmem [#allocation17], %s165
    %v167 = vld [vmem:[%s166] sm:$0x1]
    %168 = vst [vmem:[#allocation3 + $0x3] sm:$0x1] %v167
    %s169 = smul.u32 %s160, 4
    %s170 = sld [smem:[#allocation13 + %s169]]
    %s171 = scalar_lea.vmem [#allocation17], %s170
    %v172 = vld [vmem:[%s171] sm:$0x1]
    %173 = vst [vmem:[#allocation4 + $0x3] sm:$0x1] %v172
    %s174 = sadd.s32 %s169, 1
    %s175 = sld [smem:[#allocation13 + %s174]]
    %s176 = scalar_lea.vmem [#allocation17], %s175
    %v177 = vld [vmem:[%s176] sm:$0x1]
    %178 = vst [vmem:[%s88 + $0x3] sm:$0x1] %v177
    %s179 = sadd.s32 %s169, 2
    %s180 = sld [smem:[#allocation13 + %s179]]
    %s181 = scalar_lea.vmem [#allocation17], %s180
    %v182 = vld [vmem:[%s181] sm:$0x1]
    %183 = vst [vmem:[%s94 + $0x3] sm:$0x1] %v182
    %s184 = sadd.s32 %s169, 3
    %s185 = sld [smem:[#allocation13 + %s184]]
    %s186 = scalar_lea.vmem [#allocation17], %s185
    %v187 = vld [vmem:[%s186] sm:$0x1]
    %188 = vst [vmem:[%s100 + $0x3] sm:$0x1] %v187
    %s189 = sadd.s32 %s62, 4
    %s190 = sld [smem:[#allocation11 + %s189]]
    %s191 = scalar_lea.vmem [#allocation15], %s190
    %v192 = vld [vmem:[%s191] sm:$0x1]
    %193 = vst [vmem:[#allocation2 + $0x4] sm:$0x1] %v192
    %s194 = sld [smem:[#allocation12 + %s189]]
    %s195 = scalar_lea.vmem [#allocation17], %s194
    %v196 = vld [vmem:[%s195] sm:$0x1]
    %197 = vst [vmem:[#allocation3 + $0x4] sm:$0x1] %v196
    %s198 = smul.u32 %s189, 4
    %s199 = sld [smem:[#allocation13 + %s198]]
    %s200 = scalar_lea.vmem [#allocation17], %s199
    %v201 = vld [vmem:[%s200] sm:$0x1]
    %202 = vst [vmem:[#allocation4 + $0x4] sm:$0x1] %v201
    %s203 = sadd.s32 %s198, 1
    %s204 = sld [smem:[#allocation13 + %s203]]
    %s205 = scalar_lea.vmem [#allocation17], %s204
    %v206 = vld [vmem:[%s205] sm:$0x1]
    %207 = vst [vmem:[%s88 + $0x4] sm:$0x1] %v206
    %s208 = sadd.s32 %s198, 2
    %s209 = sld [smem:[#allocation13 + %s208]]
    %s210 = scalar_lea.vmem [#allocation17], %s209
    %v211 = vld [vmem:[%s210] sm:$0x1]
    %212 = vst [vmem:[%s94 + $0x4] sm:$0x1] %v211
    %s213 = sadd.s32 %s198, 3
    %s214 = sld [smem:[#allocation13 + %s213]]
    %s215 = scalar_lea.vmem [#allocation17], %s214
    %v216 = vld [vmem:[%s215] sm:$0x1]
    %217 = vst [vmem:[%s100 + $0x4] sm:$0x1] %v216
    %s218 = sadd.s32 %s62, 5
    %s219 = sld [smem:[#allocation11 + %s218]]
    %s220 = scalar_lea.vmem [#allocation15], %s219
    %v221 = vld [vmem:[%s220] sm:$0x1]
    %222 = vst [vmem:[#allocation2 + $0x5] sm:$0x1] %v221
    %s223 = sld [smem:[#allocation12 + %s218]]
    %s224 = scalar_lea.vmem [#allocation17], %s223
    %v225 = vld [vmem:[%s224] sm:$0x1]
    %226 = vst [vmem:[#allocation3 + $0x5] sm:$0x1] %v225
    %s227 = smul.u32 %s218, 4
    %s228 = sld [smem:[#allocation13 + %s227]]
    %s229 = scalar_lea.vmem [#allocation17], %s228
    %v230 = vld [vmem:[%s229] sm:$0x1]
    %231 = vst [vmem:[#allocation4 + $0x5] sm:$0x1] %v230
    %s232 = sadd.s32 %s227, 1
    %s233 = sld [smem:[#allocation13 + %s232]]
    %s234 = scalar_lea.vmem [#allocation17], %s233
    %v235 = vld [vmem:[%s234] sm:$0x1]
    %236 = vst [vmem:[%s88 + $0x5] sm:$0x1] %v235
    %s237 = sadd.s32 %s227, 2
    %s238 = sld [smem:[#allocation13 + %s237]]
    %s239 = scalar_lea.vmem [#allocation17], %s238
    %v240 = vld [vmem:[%s239] sm:$0x1]
    %241 = vst [vmem:[%s94 + $0x5] sm:$0x1] %v240
    %s242 = sadd.s32 %s227, 3
    %s243 = sld [smem:[#allocation13 + %s242]]
    %s244 = scalar_lea.vmem [#allocation17], %s243
    %v245 = vld [vmem:[%s244] sm:$0x1]
    %246 = vst [vmem:[%s100 + $0x5] sm:$0x1] %v245
    %s247 = sadd.s32 %s62, 6
    %s248 = sld [smem:[#allocation11 + %s247]]
    %s249 = scalar_lea.vmem [#allocation15], %s248
    %v250 = vld [vmem:[%s249] sm:$0x1]
    %251 = vst [vmem:[#allocation2 + $0x6] sm:$0x1] %v250
    %s252 = sld [smem:[#allocation12 + %s247]]
    %s253 = scalar_lea.vmem [#allocation17], %s252
    %v254 = vld [vmem:[%s253] sm:$0x1]
    %255 = vst [vmem:[#allocation3 + $0x6] sm:$0x1] %v254
    %s256 = smul.u32 %s247, 4
    %s257 = sld [smem:[#allocation13 + %s256]]
    %s258 = scalar_lea.vmem [#allocation17], %s257
    %v259 = vld [vmem:[%s258] sm:$0x1]
    %260 = vst [vmem:[#allocation4 + $0x6] sm:$0x1] %v259
    %s261 = sadd.s32 %s256, 1
    %s262 = sld [smem:[#allocation13 + %s261]]
    %s263 = scalar_lea.vmem [#allocation17], %s262
    %v264 = vld [vmem:[%s263] sm:$0x1]
    %265 = vst [vmem:[%s88 + $0x6] sm:$0x1] %v264
    %s266 = sadd.s32 %s256, 2
    %s267 = sld [smem:[#allocation13 + %s266]]
    %s268 = scalar_lea.vmem [#allocation17], %s267
    %v269 = vld [vmem:[%s268] sm:$0x1]
    %270 = vst [vmem:[%s94 + $0x6] sm:$0x1] %v269
    %s271 = sadd.s32 %s256, 3
    %s272 = sld [smem:[#allocation13 + %s271]]
    %s273 = scalar_lea.vmem [#allocation17], %s272
    %v274 = vld [vmem:[%s273] sm:$0x1]
    %275 = vst [vmem:[%s100 + $0x6] sm:$0x1] %v274
    %s276 = sadd.s32 %s62, 7
    %s277 = sld [smem:[#allocation11 + %s276]]
    %s278 = scalar_lea.vmem [#allocation15], %s277
    %v279 = vld [vmem:[%s278] sm:$0x1]
    %280 = vst [vmem:[#allocation2 + $0x7] sm:$0x1] %v279
    %s281 = sld [smem:[#allocation12 + %s276]]
    %s282 = scalar_lea.vmem [#allocation17], %s281
    %v283 = vld [vmem:[%s282] sm:$0x1]
    %284 = vst [vmem:[#allocation3 + $0x7] sm:$0x1] %v283
    %s285 = smul.u32 %s276, 4
    %s286 = sld [smem:[#allocation13 + %s285]]
    %s287 = scalar_lea.vmem [#allocation17], %s286
    %v288 = vld [vmem:[%s287] sm:$0x1]
    %289 = vst [vmem:[#allocation4 + $0x7] sm:$0x1] %v288
    %s290 = sadd.s32 %s285, 1
    %s291 = sld [smem:[#allocation13 + %s290]]
    %s292 = scalar_lea.vmem [#allocation17], %s291
    %v293 = vld [vmem:[%s292] sm:$0x1]
    %294 = vst [vmem:[%s88 + $0x7] sm:$0x1] %v293
    %s295 = sadd.s32 %s285, 2
    %s296 = sld [smem:[#allocation13 + %s295]]
    %s297 = scalar_lea.vmem [#allocation17], %s296
    %v298 = vld [vmem:[%s297] sm:$0x1]
    %299 = vst [vmem:[%s94 + $0x7] sm:$0x1] %v298
    %s300 = sadd.s32 %s285, 3
    %s301 = sld [smem:[#allocation13 + %s300]]
    %s302 = scalar_lea.vmem [#allocation17], %s301
    %v303 = vld [vmem:[%s302] sm:$0x1]
    %304 = vst [vmem:[%s100 + $0x7] sm:$0x1] %v303
    %s305 = sadd.s32 %s62, 8
    %s306 = sld [smem:[#allocation11 + %s305]]
    %s307 = scalar_lea.vmem [#allocation15], %s306
    %v308 = vld [vmem:[%s307] sm:$0x1]
    %309 = vst [vmem:[#allocation2 + $0x8] sm:$0x1] %v308
    %s310 = sld [smem:[#allocation12 + %s305]]
    %s311 = scalar_lea.vmem [#allocation17], %s310
    %v312 = vld [vmem:[%s311] sm:$0x1]
    %313 = vst [vmem:[#allocation3 + $0x8] sm:$0x1] %v312
    %s314 = smul.u32 %s305, 4
    %s315 = sld [smem:[#allocation13 + %s314]]
    %s316 = scalar_lea.vmem [#allocation17], %s315
    %v317 = vld [vmem:[%s316] sm:$0x1]
    %318 = vst [vmem:[#allocation4 + $0x8] sm:$0x1] %v317
    %s319 = sadd.s32 %s314, 1
    %s320 = sld [smem:[#allocation13 + %s319]]
    %s321 = scalar_lea.vmem [#allocation17], %s320
    %v322 = vld [vmem:[%s321] sm:$0x1]
    %323 = vst [vmem:[%s88 + $0x8] sm:$0x1] %v322
    %s324 = sadd.s32 %s314, 2
    %s325 = sld [smem:[#allocation13 + %s324]]
    %s326 = scalar_lea.vmem [#allocation17], %s325
    %v327 = vld [vmem:[%s326] sm:$0x1]
    %328 = vst [vmem:[%s94 + $0x8] sm:$0x1] %v327
    %s329 = sadd.s32 %s314, 3
    %s330 = sld [smem:[#allocation13 + %s329]]
    %s331 = scalar_lea.vmem [#allocation17], %s330
    %v332 = vld [vmem:[%s331] sm:$0x1]
    %333 = vst [vmem:[%s100 + $0x8] sm:$0x1] %v332
    %s334 = sadd.s32 %s62, 9
    %s335 = sld [smem:[#allocation11 + %s334]]
    %s336 = scalar_lea.vmem [#allocation15], %s335
    %v337 = vld [vmem:[%s336] sm:$0x1]
    %338 = vst [vmem:[#allocation2 + $0x9] sm:$0x1] %v337
    %s339 = sld [smem:[#allocation12 + %s334]]
    %s340 = scalar_lea.vmem [#allocation17], %s339
    %v341 = vld [vmem:[%s340] sm:$0x1]
    %342 = vst [vmem:[#allocation3 + $0x9] sm:$0x1] %v341
    %s343 = smul.u32 %s334, 4
    %s344 = sld [smem:[#allocation13 + %s343]]
    %s345 = scalar_lea.vmem [#allocation17], %s344
    %v346 = vld [vmem:[%s345] sm:$0x1]
    %347 = vst [vmem:[#allocation4 + $0x9] sm:$0x1] %v346
    %s348 = sadd.s32 %s343, 1
    %s349 = sld [smem:[#allocation13 + %s348]]
    %s350 = scalar_lea.vmem [#allocation17], %s349
    %v351 = vld [vmem:[%s350] sm:$0x1]
    %352 = vst [vmem:[%s88 + $0x9] sm:$0x1] %v351
    %s353 = sadd.s32 %s343, 2
    %s354 = sld [smem:[#allocation13 + %s353]]
    %s355 = scalar_lea.vmem [#allocation17], %s354
    %v356 = vld [vmem:[%s355] sm:$0x1]
    %357 = vst [vmem:[%s94 + $0x9] sm:$0x1] %v356
    %s358 = sadd.s32 %s343, 3
    %s359 = sld [smem:[#allocation13 + %s358]]
    %s360 = scalar_lea.vmem [#allocation17], %s359
    %v361 = vld [vmem:[%s360] sm:$0x1]
    %362 = vst [vmem:[%s100 + $0x9] sm:$0x1] %v361
    %s363 = sadd.s32 %s62, 10
    %s364 = sld [smem:[#allocation11 + %s363]]
    %s365 = scalar_lea.vmem [#allocation15], %s364
    %v366 = vld [vmem:[%s365] sm:$0x1]
    %367 = vst [vmem:[#allocation2 + $0xa] sm:$0x1] %v366
    %s368 = sld [smem:[#allocation12 + %s363]]
    %s369 = scalar_lea.vmem [#allocation17], %s368
    %v370 = vld [vmem:[%s369] sm:$0x1]
    %371 = vst [vmem:[#allocation3 + $0xa] sm:$0x1] %v370
    %s372 = smul.u32 %s363, 4
    %s373 = sld [smem:[#allocation13 + %s372]]
    %s374 = scalar_lea.vmem [#allocation17], %s373
    %v375 = vld [vmem:[%s374] sm:$0x1]
    %376 = vst [vmem:[#allocation4 + $0xa] sm:$0x1] %v375
    %s377 = sadd.s32 %s372, 1
    %s378 = sld [smem:[#allocation13 + %s377]]
    %s379 = scalar_lea.vmem [#allocation17], %s378
    %v380 = vld [vmem:[%s379] sm:$0x1]
    %381 = vst [vmem:[%s88 + $0xa] sm:$0x1] %v380
    %s382 = sadd.s32 %s372, 2
    %s383 = sld [smem:[#allocation13 + %s382]]
    %s384 = scalar_lea.vmem [#allocation17], %s383
    %v385 = vld [vmem:[%s384] sm:$0x1]
    %386 = vst [vmem:[%s94 + $0xa] sm:$0x1] %v385
    %s387 = sadd.s32 %s372, 3
    %s388 = sld [smem:[#allocation13 + %s387]]
    %s389 = scalar_lea.vmem [#allocation17], %s388
    %v390 = vld [vmem:[%s389] sm:$0x1]
    %391 = vst [vmem:[%s100 + $0xa] sm:$0x1] %v390
    %s392 = sadd.s32 %s62, 11
    %s393 = sld [smem:[#allocation11 + %s392]]
    %s394 = scalar_lea.vmem [#allocation15], %s393
    %v395 = vld [vmem:[%s394] sm:$0x1]
    %396 = vst [vmem:[#allocation2 + $0xb] sm:$0x1] %v395
    %s397 = sld [smem:[#allocation12 + %s392]]
    %s398 = scalar_lea.vmem [#allocation17], %s397
    %v399 = vld [vmem:[%s398] sm:$0x1]
    %400 = vst [vmem:[#allocation3 + $0xb] sm:$0x1] %v399
    %s401 = smul.u32 %s392, 4
    %s402 = sld [smem:[#allocation13 + %s401]]
    %s403 = scalar_lea.vmem [#allocation17], %s402
    %v404 = vld [vmem:[%s403] sm:$0x1]
    %405 = vst [vmem:[#allocation4 + $0xb] sm:$0x1] %v404
    %s406 = sadd.s32 %s401, 1
    %s407 = sld [smem:[#allocation13 + %s406]]
    %s408 = scalar_lea.vmem [#allocation17], %s407
    %v409 = vld [vmem:[%s408] sm:$0x1]
    %410 = vst [vmem:[%s88 + $0xb] sm:$0x1] %v409
    %s411 = sadd.s32 %s401, 2
    %s412 = sld [smem:[#allocation13 + %s411]]
    %s413 = scalar_lea.vmem [#allocation17], %s412
    %v414 = vld [vmem:[%s413] sm:$0x1]
    %415 = vst [vmem:[%s94 + $0xb] sm:$0x1] %v414
    %s416 = sadd.s32 %s401, 3
    %s417 = sld [smem:[#allocation13 + %s416]]
    %s418 = scalar_lea.vmem [#allocation17], %s417
    %v419 = vld [vmem:[%s418] sm:$0x1]
    %420 = vst [vmem:[%s100 + $0xb] sm:$0x1] %v419
    %s421 = sadd.s32 %s62, 12
    %s422 = sld [smem:[#allocation11 + %s421]]
    %s423 = scalar_lea.vmem [#allocation15], %s422
    %v424 = vld [vmem:[%s423] sm:$0x1]
    %425 = vst [vmem:[#allocation2 + $0xc] sm:$0x1] %v424
    %s426 = sld [smem:[#allocation12 + %s421]]
    %s427 = scalar_lea.vmem [#allocation17], %s426
    %v428 = vld [vmem:[%s427] sm:$0x1]
    %429 = vst [vmem:[#allocation3 + $0xc] sm:$0x1] %v428
    %s430 = smul.u32 %s421, 4
    %s431 = sld [smem:[#allocation13 + %s430]]
    %s432 = scalar_lea.vmem [#allocation17], %s431
    %v433 = vld [vmem:[%s432] sm:$0x1]
    %434 = vst [vmem:[#allocation4 + $0xc] sm:$0x1] %v433
    %s435 = sadd.s32 %s430, 1
    %s436 = sld [smem:[#allocation13 + %s435]]
    %s437 = scalar_lea.vmem [#allocation17], %s436
    %v438 = vld [vmem:[%s437] sm:$0x1]
    %439 = vst [vmem:[%s88 + $0xc] sm:$0x1] %v438
    %s440 = sadd.s32 %s430, 2
    %s441 = sld [smem:[#allocation13 + %s440]]
    %s442 = scalar_lea.vmem [#allocation17], %s441
    %v443 = vld [vmem:[%s442] sm:$0x1]
    %444 = vst [vmem:[%s94 + $0xc] sm:$0x1] %v443
    %s445 = sadd.s32 %s430, 3
    %s446 = sld [smem:[#allocation13 + %s445]]
    %s447 = scalar_lea.vmem [#allocation17], %s446
    %v448 = vld [vmem:[%s447] sm:$0x1]
    %449 = vst [vmem:[%s100 + $0xc] sm:$0x1] %v448
    %s450 = sadd.s32 %s62, 13
    %s451 = sld [smem:[#allocation11 + %s450]]
    %s452 = scalar_lea.vmem [#allocation15], %s451
    %v453 = vld [vmem:[%s452] sm:$0x1]
    %454 = vst [vmem:[#allocation2 + $0xd] sm:$0x1] %v453
    %s455 = sld [smem:[#allocation12 + %s450]]
    %s456 = scalar_lea.vmem [#allocation17], %s455
    %v457 = vld [vmem:[%s456] sm:$0x1]
    %458 = vst [vmem:[#allocation3 + $0xd] sm:$0x1] %v457
    %s459 = smul.u32 %s450, 4
    %s460 = sld [smem:[#allocation13 + %s459]]
    %s461 = scalar_lea.vmem [#allocation17], %s460
    %v462 = vld [vmem:[%s461] sm:$0x1]
    %463 = vst [vmem:[#allocation4 + $0xd] sm:$0x1] %v462
    %s464 = sadd.s32 %s459, 1
    %s465 = sld [smem:[#allocation13 + %s464]]
    %s466 = scalar_lea.vmem [#allocation17], %s465
    %v467 = vld [vmem:[%s466] sm:$0x1]
    %468 = vst [vmem:[%s88 + $0xd] sm:$0x1] %v467
    %s469 = sadd.s32 %s459, 2
    %s470 = sld [smem:[#allocation13 + %s469]]
    %s471 = scalar_lea.vmem [#allocation17], %s470
    %v472 = vld [vmem:[%s471] sm:$0x1]
    %473 = vst [vmem:[%s94 + $0xd] sm:$0x1] %v472
    %s474 = sadd.s32 %s459, 3
    %s475 = sld [smem:[#allocation13 + %s474]]
    %s476 = scalar_lea.vmem [#allocation17], %s475
    %v477 = vld [vmem:[%s476] sm:$0x1]
    %478 = vst [vmem:[%s100 + $0xd] sm:$0x1] %v477
    %s479 = sadd.s32 %s62, 14
    %s480 = sld [smem:[#allocation11 + %s479]]
    %s481 = scalar_lea.vmem [#allocation15], %s480
    %v482 = vld [vmem:[%s481] sm:$0x1]
    %483 = vst [vmem:[#allocation2 + $0xe] sm:$0x1] %v482
    %s484 = sld [smem:[#allocation12 + %s479]]
    %s485 = scalar_lea.vmem [#allocation17], %s484
    %v486 = vld [vmem:[%s485] sm:$0x1]
    %487 = vst [vmem:[#allocation3 + $0xe] sm:$0x1] %v486
    %s488 = smul.u32 %s479, 4
    %s489 = sld [smem:[#allocation13 + %s488]]
    %s490 = scalar_lea.vmem [#allocation17], %s489
    %v491 = vld [vmem:[%s490] sm:$0x1]
    %492 = vst [vmem:[#allocation4 + $0xe] sm:$0x1] %v491
    %s493 = sadd.s32 %s488, 1
    %s494 = sld [smem:[#allocation13 + %s493]]
    %s495 = scalar_lea.vmem [#allocation17], %s494
    %v496 = vld [vmem:[%s495] sm:$0x1]
    %497 = vst [vmem:[%s88 + $0xe] sm:$0x1] %v496
    %s498 = sadd.s32 %s488, 2
    %s499 = sld [smem:[#allocation13 + %s498]]
    %s500 = scalar_lea.vmem [#allocation17], %s499
    %v501 = vld [vmem:[%s500] sm:$0x1]
    %502 = vst [vmem:[%s94 + $0xe] sm:$0x1] %v501
    %s503 = sadd.s32 %s488, 3
    %s504 = sld [smem:[#allocation13 + %s503]]
    %s505 = scalar_lea.vmem [#allocation17], %s504
    %v506 = vld [vmem:[%s505] sm:$0x1]
    %507 = vst [vmem:[%s100 + $0xe] sm:$0x1] %v506
    %s508 = sadd.s32 %s62, 15
    %s509 = sld [smem:[#allocation11 + %s508]]
    %s510 = scalar_lea.vmem [#allocation15], %s509
    %v511 = vld [vmem:[%s510] sm:$0x1]
    %512 = vst [vmem:[#allocation2 + $0xf] sm:$0x1] %v511
    %s513 = sld [smem:[#allocation12 + %s508]]
    %s514 = scalar_lea.vmem [#allocation17], %s513
    %v515 = vld [vmem:[%s514] sm:$0x1]
    %516 = vst [vmem:[#allocation3 + $0xf] sm:$0x1] %v515
    %s517 = smul.u32 %s508, 4
    %s518 = sld [smem:[#allocation13 + %s517]]
    %s519 = scalar_lea.vmem [#allocation17], %s518
    %v520 = vld [vmem:[%s519] sm:$0x1]
    %521 = vst [vmem:[#allocation4 + $0xf] sm:$0x1] %v520
    %s522 = sadd.s32 %s517, 1
    %s523 = sld [smem:[#allocation13 + %s522]]
    %s524 = scalar_lea.vmem [#allocation17], %s523
    %v525 = vld [vmem:[%s524] sm:$0x1]
    %526 = vst [vmem:[%s88 + $0xf] sm:$0x1] %v525
    %s527 = sadd.s32 %s517, 2
    %s528 = sld [smem:[#allocation13 + %s527]]
    %s529 = scalar_lea.vmem [#allocation17], %s528
    %v530 = vld [vmem:[%s529] sm:$0x1]
    %531 = vst [vmem:[%s94 + $0xf] sm:$0x1] %v530
    %s532 = sadd.s32 %s517, 3
    %s533 = sld [smem:[#allocation13 + %s532]]
    %s534 = scalar_lea.vmem [#allocation17], %s533
    %v535 = vld [vmem:[%s534] sm:$0x1]
    %536 = vst [vmem:[%s100 + $0xf] sm:$0x1] %v535
    %s537 = sadd.s32 %s62, 16
    %s538 = sld [smem:[#allocation11 + %s537]]
    %s539 = scalar_lea.vmem [#allocation15], %s538
    %v540 = vld [vmem:[%s539] sm:$0x1]
    %541 = vst [vmem:[#allocation2 + $0x10] sm:$0x1] %v540
    %s542 = sld [smem:[#allocation12 + %s537]]
    %s543 = scalar_lea.vmem [#allocation17], %s542
    %v544 = vld [vmem:[%s543] sm:$0x1]
    %545 = vst [vmem:[#allocation3 + $0x10] sm:$0x1] %v544
    %s546 = smul.u32 %s537, 4
    %s547 = sld [smem:[#allocation13 + %s546]]
    %s548 = scalar_lea.vmem [#allocation17], %s547
    %v549 = vld [vmem:[%s548] sm:$0x1]
    %550 = vst [vmem:[#allocation4 + $0x10] sm:$0x1] %v549
    %s551 = sadd.s32 %s546, 1
    %s552 = sld [smem:[#allocation13 + %s551]]
    %s553 = scalar_lea.vmem [#allocation17], %s552
    %v554 = vld [vmem:[%s553] sm:$0x1]
    %555 = vst [vmem:[%s88 + $0x10] sm:$0x1] %v554
    %s556 = sadd.s32 %s546, 2
    %s557 = sld [smem:[#allocation13 + %s556]]
    %s558 = scalar_lea.vmem [#allocation17], %s557
    %v559 = vld [vmem:[%s558] sm:$0x1]
    %560 = vst [vmem:[%s94 + $0x10] sm:$0x1] %v559
    %s561 = sadd.s32 %s546, 3
    %s562 = sld [smem:[#allocation13 + %s561]]
    %s563 = scalar_lea.vmem [#allocation17], %s562
    %v564 = vld [vmem:[%s563] sm:$0x1]
    %565 = vst [vmem:[%s100 + $0x10] sm:$0x1] %v564
    %s566 = sadd.s32 %s62, 17
    %s567 = sld [smem:[#allocation11 + %s566]]
    %s568 = scalar_lea.vmem [#allocation15], %s567
    %v569 = vld [vmem:[%s568] sm:$0x1]
    %570 = vst [vmem:[#allocation2 + $0x11] sm:$0x1] %v569
    %s571 = sld [smem:[#allocation12 + %s566]]
    %s572 = scalar_lea.vmem [#allocation17], %s571
    %v573 = vld [vmem:[%s572] sm:$0x1]
    %574 = vst [vmem:[#allocation3 + $0x11] sm:$0x1] %v573
    %s575 = smul.u32 %s566, 4
    %s576 = sld [smem:[#allocation13 + %s575]]
    %s577 = scalar_lea.vmem [#allocation17], %s576
    %v578 = vld [vmem:[%s577] sm:$0x1]
    %579 = vst [vmem:[#allocation4 + $0x11] sm:$0x1] %v578
    %s580 = sadd.s32 %s575, 1
    %s581 = sld [smem:[#allocation13 + %s580]]
    %s582 = scalar_lea.vmem [#allocation17], %s581
    %v583 = vld [vmem:[%s582] sm:$0x1]
    %584 = vst [vmem:[%s88 + $0x11] sm:$0x1] %v583
    %s585 = sadd.s32 %s575, 2
    %s586 = sld [smem:[#allocation13 + %s585]]
    %s587 = scalar_lea.vmem [#allocation17], %s586
    %v588 = vld [vmem:[%s587] sm:$0x1]
    %589 = vst [vmem:[%s94 + $0x11] sm:$0x1] %v588
    %s590 = sadd.s32 %s575, 3
    %s591 = sld [smem:[#allocation13 + %s590]]
    %s592 = scalar_lea.vmem [#allocation17], %s591
    %v593 = vld [vmem:[%s592] sm:$0x1]
    %594 = vst [vmem:[%s100 + $0x11] sm:$0x1] %v593
    %s595 = sadd.s32 %s62, 18
    %s596 = sld [smem:[#allocation11 + %s595]]
    %s597 = scalar_lea.vmem [#allocation15], %s596
    %v598 = vld [vmem:[%s597] sm:$0x1]
    %599 = vst [vmem:[#allocation2 + $0x12] sm:$0x1] %v598
    %s600 = sld [smem:[#allocation12 + %s595]]
    %s601 = scalar_lea.vmem [#allocation17], %s600
    %v602 = vld [vmem:[%s601] sm:$0x1]
    %603 = vst [vmem:[#allocation3 + $0x12] sm:$0x1] %v602
    %s604 = smul.u32 %s595, 4
    %s605 = sld [smem:[#allocation13 + %s604]]
    %s606 = scalar_lea.vmem [#allocation17], %s605
    %v607 = vld [vmem:[%s606] sm:$0x1]
    %608 = vst [vmem:[#allocation4 + $0x12] sm:$0x1] %v607
    %s609 = sadd.s32 %s604, 1
    %s610 = sld [smem:[#allocation13 + %s609]]
    %s611 = scalar_lea.vmem [#allocation17], %s610
    %v612 = vld [vmem:[%s611] sm:$0x1]
    %613 = vst [vmem:[%s88 + $0x12] sm:$0x1] %v612
    %s614 = sadd.s32 %s604, 2
    %s615 = sld [smem:[#allocation13 + %s614]]
    %s616 = scalar_lea.vmem [#allocation17], %s615
    %v617 = vld [vmem:[%s616] sm:$0x1]
    %618 = vst [vmem:[%s94 + $0x12] sm:$0x1] %v617
    %s619 = sadd.s32 %s604, 3
    %s620 = sld [smem:[#allocation13 + %s619]]
    %s621 = scalar_lea.vmem [#allocation17], %s620
    %v622 = vld [vmem:[%s621] sm:$0x1]
    %623 = vst [vmem:[%s100 + $0x12] sm:$0x1] %v622
    %s624 = sadd.s32 %s62, 19
    %s625 = sld [smem:[#allocation11 + %s624]]
    %s626 = scalar_lea.vmem [#allocation15], %s625
    %v627 = vld [vmem:[%s626] sm:$0x1]
    %628 = vst [vmem:[#allocation2 + $0x13] sm:$0x1] %v627
    %s629 = sld [smem:[#allocation12 + %s624]]
    %s630 = scalar_lea.vmem [#allocation17], %s629
    %v631 = vld [vmem:[%s630] sm:$0x1]
    %632 = vst [vmem:[#allocation3 + $0x13] sm:$0x1] %v631
    %s633 = smul.u32 %s624, 4
    %s634 = sld [smem:[#allocation13 + %s633]]
    %s635 = scalar_lea.vmem [#allocation17], %s634
    %v636 = vld [vmem:[%s635] sm:$0x1]
    %637 = vst [vmem:[#allocation4 + $0x13] sm:$0x1] %v636
    %s638 = sadd.s32 %s633, 1
    %s639 = sld [smem:[#allocation13 + %s638]]
    %s640 = scalar_lea.vmem [#allocation17], %s639
    %v641 = vld [vmem:[%s640] sm:$0x1]
    %642 = vst [vmem:[%s88 + $0x13] sm:$0x1] %v641
    %s643 = sadd.s32 %s633, 2
    %s644 = sld [smem:[#allocation13 + %s643]]
    %s645 = scalar_lea.vmem [#allocation17], %s644
    %v646 = vld [vmem:[%s645] sm:$0x1]
    %647 = vst [vmem:[%s94 + $0x13] sm:$0x1] %v646
    %s648 = sadd.s32 %s633, 3
    %s649 = sld [smem:[#allocation13 + %s648]]
    %s650 = scalar_lea.vmem [#allocation17], %s649
    %v651 = vld [vmem:[%s650] sm:$0x1]
    %652 = vst [vmem:[%s100 + $0x13] sm:$0x1] %v651
    %s653 = sadd.s32 %s62, 20
    %s654 = sld [smem:[#allocation11 + %s653]]
    %s655 = scalar_lea.vmem [#allocation15], %s654
    %v656 = vld [vmem:[%s655] sm:$0x1]
    %657 = vst [vmem:[#allocation2 + $0x14] sm:$0x1] %v656
    %s658 = sld [smem:[#allocation12 + %s653]]
    %s659 = scalar_lea.vmem [#allocation17], %s658
    %v660 = vld [vmem:[%s659] sm:$0x1]
    %661 = vst [vmem:[#allocation3 + $0x14] sm:$0x1] %v660
    %s662 = smul.u32 %s653, 4
    %s663 = sld [smem:[#allocation13 + %s662]]
    %s664 = scalar_lea.vmem [#allocation17], %s663
    %v665 = vld [vmem:[%s664] sm:$0x1]
    %666 = vst [vmem:[#allocation4 + $0x14] sm:$0x1] %v665
    %s667 = sadd.s32 %s662, 1
    %s668 = sld [smem:[#allocation13 + %s667]]
    %s669 = scalar_lea.vmem [#allocation17], %s668
    %v670 = vld [vmem:[%s669] sm:$0x1]
    %671 = vst [vmem:[%s88 + $0x14] sm:$0x1] %v670
    %s672 = sadd.s32 %s662, 2
    %s673 = sld [smem:[#allocation13 + %s672]]
    %s674 = scalar_lea.vmem [#allocation17], %s673
    %v675 = vld [vmem:[%s674] sm:$0x1]
    %676 = vst [vmem:[%s94 + $0x14] sm:$0x1] %v675
    %s677 = sadd.s32 %s662, 3
    %s678 = sld [smem:[#allocation13 + %s677]]
    %s679 = scalar_lea.vmem [#allocation17], %s678
    %v680 = vld [vmem:[%s679] sm:$0x1]
    %681 = vst [vmem:[%s100 + $0x14] sm:$0x1] %v680
    %s682 = sadd.s32 %s62, 21
    %s683 = sld [smem:[#allocation11 + %s682]]
    %s684 = scalar_lea.vmem [#allocation15], %s683
    %v685 = vld [vmem:[%s684] sm:$0x1]
    %686 = vst [vmem:[#allocation2 + $0x15] sm:$0x1] %v685
    %s687 = sld [smem:[#allocation12 + %s682]]
    %s688 = scalar_lea.vmem [#allocation17], %s687
    %v689 = vld [vmem:[%s688] sm:$0x1]
    %690 = vst [vmem:[#allocation3 + $0x15] sm:$0x1] %v689
    %s691 = smul.u32 %s682, 4
    %s692 = sld [smem:[#allocation13 + %s691]]
    %s693 = scalar_lea.vmem [#allocation17], %s692
    %v694 = vld [vmem:[%s693] sm:$0x1]
    %695 = vst [vmem:[#allocation4 + $0x15] sm:$0x1] %v694
    %s696 = sadd.s32 %s691, 1
    %s697 = sld [smem:[#allocation13 + %s696]]
    %s698 = scalar_lea.vmem [#allocation17], %s697
    %v699 = vld [vmem:[%s698] sm:$0x1]
    %700 = vst [vmem:[%s88 + $0x15] sm:$0x1] %v699
    %s701 = sadd.s32 %s691, 2
    %s702 = sld [smem:[#allocation13 + %s701]]
    %s703 = scalar_lea.vmem [#allocation17], %s702
    %v704 = vld [vmem:[%s703] sm:$0x1]
    %705 = vst [vmem:[%s94 + $0x15] sm:$0x1] %v704
    %s706 = sadd.s32 %s691, 3
    %s707 = sld [smem:[#allocation13 + %s706]]
    %s708 = scalar_lea.vmem [#allocation17], %s707
    %v709 = vld [vmem:[%s708] sm:$0x1]
    %710 = vst [vmem:[%s100 + $0x15] sm:$0x1] %v709
    %s711 = sadd.s32 %s62, 22
    %s712 = sld [smem:[#allocation11 + %s711]]
    %s713 = scalar_lea.vmem [#allocation15], %s712
    %v714 = vld [vmem:[%s713] sm:$0x1]
    %715 = vst [vmem:[#allocation2 + $0x16] sm:$0x1] %v714
    %s716 = sld [smem:[#allocation12 + %s711]]
    %s717 = scalar_lea.vmem [#allocation17], %s716
    %v718 = vld [vmem:[%s717] sm:$0x1]
    %719 = vst [vmem:[#allocation3 + $0x16] sm:$0x1] %v718
    %s720 = smul.u32 %s711, 4
    %s721 = sld [smem:[#allocation13 + %s720]]
    %s722 = scalar_lea.vmem [#allocation17], %s721
    %v723 = vld [vmem:[%s722] sm:$0x1]
    %724 = vst [vmem:[#allocation4 + $0x16] sm:$0x1] %v723
    %s725 = sadd.s32 %s720, 1
    %s726 = sld [smem:[#allocation13 + %s725]]
    %s727 = scalar_lea.vmem [#allocation17], %s726
    %v728 = vld [vmem:[%s727] sm:$0x1]
    %729 = vst [vmem:[%s88 + $0x16] sm:$0x1] %v728
    %s730 = sadd.s32 %s720, 2
    %s731 = sld [smem:[#allocation13 + %s730]]
    %s732 = scalar_lea.vmem [#allocation17], %s731
    %v733 = vld [vmem:[%s732] sm:$0x1]
    %734 = vst [vmem:[%s94 + $0x16] sm:$0x1] %v733
    %s735 = sadd.s32 %s720, 3
    %s736 = sld [smem:[#allocation13 + %s735]]
    %s737 = scalar_lea.vmem [#allocation17], %s736
    %v738 = vld [vmem:[%s737] sm:$0x1]
    %739 = vst [vmem:[%s100 + $0x16] sm:$0x1] %v738
    %s740 = sadd.s32 %s62, 23
    %s741 = sld [smem:[#allocation11 + %s740]]
    %s742 = scalar_lea.vmem [#allocation15], %s741
    %v743 = vld [vmem:[%s742] sm:$0x1]
    %744 = vst [vmem:[#allocation2 + $0x17] sm:$0x1] %v743
    %s745 = sld [smem:[#allocation12 + %s740]]
    %s746 = scalar_lea.vmem [#allocation17], %s745
    %v747 = vld [vmem:[%s746] sm:$0x1]
    %748 = vst [vmem:[#allocation3 + $0x17] sm:$0x1] %v747
    %s749 = smul.u32 %s740, 4
    %s750 = sld [smem:[#allocation13 + %s749]]
    %s751 = scalar_lea.vmem [#allocation17], %s750
    %v752 = vld [vmem:[%s751] sm:$0x1]
    %753 = vst [vmem:[#allocation4 + $0x17] sm:$0x1] %v752
    %s754 = sadd.s32 %s749, 1
    %s755 = sld [smem:[#allocation13 + %s754]]
    %s756 = scalar_lea.vmem [#allocation17], %s755
    %v757 = vld [vmem:[%s756] sm:$0x1]
    %758 = vst [vmem:[%s88 + $0x17] sm:$0x1] %v757
    %s759 = sadd.s32 %s749, 2
    %s760 = sld [smem:[#allocation13 + %s759]]
    %s761 = scalar_lea.vmem [#allocation17], %s760
    %v762 = vld [vmem:[%s761] sm:$0x1]
    %763 = vst [vmem:[%s94 + $0x17] sm:$0x1] %v762
    %s764 = sadd.s32 %s749, 3
    %s765 = sld [smem:[#allocation13 + %s764]]
    %s766 = scalar_lea.vmem [#allocation17], %s765
    %v767 = vld [vmem:[%s766] sm:$0x1]
    %768 = vst [vmem:[%s100 + $0x17] sm:$0x1] %v767
    %s769 = sadd.s32 %s62, 24
    %s770 = sld [smem:[#allocation11 + %s769]]
    %s771 = scalar_lea.vmem [#allocation15], %s770
    %v772 = vld [vmem:[%s771] sm:$0x1]
    %773 = vst [vmem:[#allocation2 + $0x18] sm:$0x1] %v772
    %s774 = sld [smem:[#allocation12 + %s769]]
    %s775 = scalar_lea.vmem [#allocation17], %s774
    %v776 = vld [vmem:[%s775] sm:$0x1]
    %777 = vst [vmem:[#allocation3 + $0x18] sm:$0x1] %v776
    %s778 = smul.u32 %s769, 4
    %s779 = sld [smem:[#allocation13 + %s778]]
    %s780 = scalar_lea.vmem [#allocation17], %s779
    %v781 = vld [vmem:[%s780] sm:$0x1]
    %782 = vst [vmem:[#allocation4 + $0x18] sm:$0x1] %v781
    %s783 = sadd.s32 %s778, 1
    %s784 = sld [smem:[#allocation13 + %s783]]
    %s785 = scalar_lea.vmem [#allocation17], %s784
    %v786 = vld [vmem:[%s785] sm:$0x1]
    %787 = vst [vmem:[%s88 + $0x18] sm:$0x1] %v786
    %s788 = sadd.s32 %s778, 2
    %s789 = sld [smem:[#allocation13 + %s788]]
    %s790 = scalar_lea.vmem [#allocation17], %s789
    %v791 = vld [vmem:[%s790] sm:$0x1]
    %792 = vst [vmem:[%s94 + $0x18] sm:$0x1] %v791
    %s793 = sadd.s32 %s778, 3
    %s794 = sld [smem:[#allocation13 + %s793]]
    %s795 = scalar_lea.vmem [#allocation17], %s794
    %v796 = vld [vmem:[%s795] sm:$0x1]
    %797 = vst [vmem:[%s100 + $0x18] sm:$0x1] %v796
    %s798 = sadd.s32 %s62, 25
    %s799 = sld [smem:[#allocation11 + %s798]]
    %s800 = scalar_lea.vmem [#allocation15], %s799
    %v801 = vld [vmem:[%s800] sm:$0x1]
    %802 = vst [vmem:[#allocation2 + $0x19] sm:$0x1] %v801
    %s803 = sld [smem:[#allocation12 + %s798]]
    %s804 = scalar_lea.vmem [#allocation17], %s803
    %v805 = vld [vmem:[%s804] sm:$0x1]
    %806 = vst [vmem:[#allocation3 + $0x19] sm:$0x1] %v805
    %s807 = smul.u32 %s798, 4
    %s808 = sld [smem:[#allocation13 + %s807]]
    %s809 = scalar_lea.vmem [#allocation17], %s808
    %v810 = vld [vmem:[%s809] sm:$0x1]
    %811 = vst [vmem:[#allocation4 + $0x19] sm:$0x1] %v810
    %s812 = sadd.s32 %s807, 1
    %s813 = sld [smem:[#allocation13 + %s812]]
    %s814 = scalar_lea.vmem [#allocation17], %s813
    %v815 = vld [vmem:[%s814] sm:$0x1]
    %816 = vst [vmem:[%s88 + $0x19] sm:$0x1] %v815
    %s817 = sadd.s32 %s807, 2
    %s818 = sld [smem:[#allocation13 + %s817]]
    %s819 = scalar_lea.vmem [#allocation17], %s818
    %v820 = vld [vmem:[%s819] sm:$0x1]
    %821 = vst [vmem:[%s94 + $0x19] sm:$0x1] %v820
    %s822 = sadd.s32 %s807, 3
    %s823 = sld [smem:[#allocation13 + %s822]]
    %s824 = scalar_lea.vmem [#allocation17], %s823
    %v825 = vld [vmem:[%s824] sm:$0x1]
    %826 = vst [vmem:[%s100 + $0x19] sm:$0x1] %v825
    %s827 = sadd.s32 %s62, 26
    %s828 = sld [smem:[#allocation11 + %s827]]
    %s829 = scalar_lea.vmem [#allocation15], %s828
    %v830 = vld [vmem:[%s829] sm:$0x1]
    %831 = vst [vmem:[#allocation2 + $0x1a] sm:$0x1] %v830
    %s832 = sld [smem:[#allocation12 + %s827]]
    %s833 = scalar_lea.vmem [#allocation17], %s832
    %v834 = vld [vmem:[%s833] sm:$0x1]
    %835 = vst [vmem:[#allocation3 + $0x1a] sm:$0x1] %v834
    %s836 = smul.u32 %s827, 4
    %s837 = sld [smem:[#allocation13 + %s836]]
    %s838 = scalar_lea.vmem [#allocation17], %s837
    %v839 = vld [vmem:[%s838] sm:$0x1]
    %840 = vst [vmem:[#allocation4 + $0x1a] sm:$0x1] %v839
    %s841 = sadd.s32 %s836, 1
    %s842 = sld [smem:[#allocation13 + %s841]]
    %s843 = scalar_lea.vmem [#allocation17], %s842
    %v844 = vld [vmem:[%s843] sm:$0x1]
    %845 = vst [vmem:[%s88 + $0x1a] sm:$0x1] %v844
    %s846 = sadd.s32 %s836, 2
    %s847 = sld [smem:[#allocation13 + %s846]]
    %s848 = scalar_lea.vmem [#allocation17], %s847
    %v849 = vld [vmem:[%s848] sm:$0x1]
    %850 = vst [vmem:[%s94 + $0x1a] sm:$0x1] %v849
    %s851 = sadd.s32 %s836, 3
    %s852 = sld [smem:[#allocation13 + %s851]]
    %s853 = scalar_lea.vmem [#allocation17], %s852
    %v854 = vld [vmem:[%s853] sm:$0x1]
    %855 = vst [vmem:[%s100 + $0x1a] sm:$0x1] %v854
    %s856 = sadd.s32 %s62, 27
    %s857 = sld [smem:[#allocation11 + %s856]]
    %s858 = scalar_lea.vmem [#allocation15], %s857
    %v859 = vld [vmem:[%s858] sm:$0x1]
    %860 = vst [vmem:[#allocation2 + $0x1b] sm:$0x1] %v859
    %s861 = sld [smem:[#allocation12 + %s856]]
    %s862 = scalar_lea.vmem [#allocation17], %s861
    %v863 = vld [vmem:[%s862] sm:$0x1]
    %864 = vst [vmem:[#allocation3 + $0x1b] sm:$0x1] %v863
    %s865 = smul.u32 %s856, 4
    %s866 = sld [smem:[#allocation13 + %s865]]
    %s867 = scalar_lea.vmem [#allocation17], %s866
    %v868 = vld [vmem:[%s867] sm:$0x1]
    %869 = vst [vmem:[#allocation4 + $0x1b] sm:$0x1] %v868
    %s870 = sadd.s32 %s865, 1
    %s871 = sld [smem:[#allocation13 + %s870]]
    %s872 = scalar_lea.vmem [#allocation17], %s871
    %v873 = vld [vmem:[%s872] sm:$0x1]
    %874 = vst [vmem:[%s88 + $0x1b] sm:$0x1] %v873
    %s875 = sadd.s32 %s865, 2
    %s876 = sld [smem:[#allocation13 + %s875]]
    %s877 = scalar_lea.vmem [#allocation17], %s876
    %v878 = vld [vmem:[%s877] sm:$0x1]
    %879 = vst [vmem:[%s94 + $0x1b] sm:$0x1] %v878
    %s880 = sadd.s32 %s865, 3
    %s881 = sld [smem:[#allocation13 + %s880]]
    %s882 = scalar_lea.vmem [#allocation17], %s881
    %v883 = vld [vmem:[%s882] sm:$0x1]
    %884 = vst [vmem:[%s100 + $0x1b] sm:$0x1] %v883
    %s885 = sadd.s32 %s62, 28
    %s886 = sld [smem:[#allocation11 + %s885]]
    %s887 = scalar_lea.vmem [#allocation15], %s886
    %v888 = vld [vmem:[%s887] sm:$0x1]
    %889 = vst [vmem:[#allocation2 + $0x1c] sm:$0x1] %v888
    %s890 = sld [smem:[#allocation12 + %s885]]
    %s891 = scalar_lea.vmem [#allocation17], %s890
    %v892 = vld [vmem:[%s891] sm:$0x1]
    %893 = vst [vmem:[#allocation3 + $0x1c] sm:$0x1] %v892
    %s894 = smul.u32 %s885, 4
    %s895 = sld [smem:[#allocation13 + %s894]]
    %s896 = scalar_lea.vmem [#allocation17], %s895
    %v897 = vld [vmem:[%s896] sm:$0x1]
    %898 = vst [vmem:[#allocation4 + $0x1c] sm:$0x1] %v897
    %s899 = sadd.s32 %s894, 1
    %s900 = sld [smem:[#allocation13 + %s899]]
    %s901 = scalar_lea.vmem [#allocation17], %s900
    %v902 = vld [vmem:[%s901] sm:$0x1]
    %903 = vst [vmem:[%s88 + $0x1c] sm:$0x1] %v902
    %s904 = sadd.s32 %s894, 2
    %s905 = sld [smem:[#allocation13 + %s904]]
    %s906 = scalar_lea.vmem [#allocation17], %s905
    %v907 = vld [vmem:[%s906] sm:$0x1]
    %908 = vst [vmem:[%s94 + $0x1c] sm:$0x1] %v907
    %s909 = sadd.s32 %s894, 3
    %s910 = sld [smem:[#allocation13 + %s909]]
    %s911 = scalar_lea.vmem [#allocation17], %s910
    %v912 = vld [vmem:[%s911] sm:$0x1]
    %913 = vst [vmem:[%s100 + $0x1c] sm:$0x1] %v912
    %s914 = sadd.s32 %s62, 29
    %s915 = sld [smem:[#allocation11 + %s914]]
    %s916 = scalar_lea.vmem [#allocation15], %s915
    %v917 = vld [vmem:[%s916] sm:$0x1]
    %918 = vst [vmem:[#allocation2 + $0x1d] sm:$0x1] %v917
    %s919 = sld [smem:[#allocation12 + %s914]]
    %s920 = scalar_lea.vmem [#allocation17], %s919
    %v921 = vld [vmem:[%s920] sm:$0x1]
    %922 = vst [vmem:[#allocation3 + $0x1d] sm:$0x1] %v921
    %s923 = smul.u32 %s914, 4
    %s924 = sld [smem:[#allocation13 + %s923]]
    %s925 = scalar_lea.vmem [#allocation17], %s924
    %v926 = vld [vmem:[%s925] sm:$0x1]
    %927 = vst [vmem:[#allocation4 + $0x1d] sm:$0x1] %v926
    %s928 = sadd.s32 %s923, 1
    %s929 = sld [smem:[#allocation13 + %s928]]
    %s930 = scalar_lea.vmem [#allocation17], %s929
    %v931 = vld [vmem:[%s930] sm:$0x1]
    %932 = vst [vmem:[%s88 + $0x1d] sm:$0x1] %v931
    %s933 = sadd.s32 %s923, 2
    %s934 = sld [smem:[#allocation13 + %s933]]
    %s935 = scalar_lea.vmem [#allocation17], %s934
    %v936 = vld [vmem:[%s935] sm:$0x1]
    %937 = vst [vmem:[%s94 + $0x1d] sm:$0x1] %v936
    %s938 = sadd.s32 %s923, 3
    %s939 = sld [smem:[#allocation13 + %s938]]
    %s940 = scalar_lea.vmem [#allocation17], %s939
    %v941 = vld [vmem:[%s940] sm:$0x1]
    %942 = vst [vmem:[%s100 + $0x1d] sm:$0x1] %v941
    %s943 = sadd.s32 %s62, 30
    %s944 = sld [smem:[#allocation11 + %s943]]
    %s945 = scalar_lea.vmem [#allocation15], %s944
    %v946 = vld [vmem:[%s945] sm:$0x1]
    %947 = vst [vmem:[#allocation2 + $0x1e] sm:$0x1] %v946
    %s948 = sld [smem:[#allocation12 + %s943]]
    %s949 = scalar_lea.vmem [#allocation17], %s948
    %v950 = vld [vmem:[%s949] sm:$0x1]
    %951 = vst [vmem:[#allocation3 + $0x1e] sm:$0x1] %v950
    %s952 = smul.u32 %s943, 4
    %s953 = sld [smem:[#allocation13 + %s952]]
    %s954 = scalar_lea.vmem [#allocation17], %s953
    %v955 = vld [vmem:[%s954] sm:$0x1]
    %956 = vst [vmem:[#allocation4 + $0x1e] sm:$0x1] %v955
    %s957 = sadd.s32 %s952, 1
    %s958 = sld [smem:[#allocation13 + %s957]]
    %s959 = scalar_lea.vmem [#allocation17], %s958
    %v960 = vld [vmem:[%s959] sm:$0x1]
    %961 = vst [vmem:[%s88 + $0x1e] sm:$0x1] %v960
    %s962 = sadd.s32 %s952, 2
    %s963 = sld [smem:[#allocation13 + %s962]]
    %s964 = scalar_lea.vmem [#allocation17], %s963
    %v965 = vld [vmem:[%s964] sm:$0x1]
    %966 = vst [vmem:[%s94 + $0x1e] sm:$0x1] %v965
    %s967 = sadd.s32 %s952, 3
    %s968 = sld [smem:[#allocation13 + %s967]]
    %s969 = scalar_lea.vmem [#allocation17], %s968
    %v970 = vld [vmem:[%s969] sm:$0x1]
    %971 = vst [vmem:[%s100 + $0x1e] sm:$0x1] %v970
    %s972 = sadd.s32 %s62, 31
    %s973 = sld [smem:[#allocation11 + %s972]]
    %s974 = scalar_lea.vmem [#allocation15], %s973
    %v975 = vld [vmem:[%s974] sm:$0x1]
    %976 = vst [vmem:[#allocation2 + $0x1f] sm:$0x1] %v975
    %s977 = sld [smem:[#allocation12 + %s972]]
    %s978 = scalar_lea.vmem [#allocation17], %s977
    %v979 = vld [vmem:[%s978] sm:$0x1]
    %980 = vst [vmem:[#allocation3 + $0x1f] sm:$0x1] %v979
    %s981 = smul.u32 %s972, 4
    %s982 = sld [smem:[#allocation13 + %s981]]
    %s983 = scalar_lea.vmem [#allocation17], %s982
    %v984 = vld [vmem:[%s983] sm:$0x1]
    %985 = vst [vmem:[#allocation4 + $0x1f] sm:$0x1] %v984
    %s986 = sadd.s32 %s981, 1
    %s987 = sld [smem:[#allocation13 + %s986]]
    %s988 = scalar_lea.vmem [#allocation17], %s987
    %v989 = vld [vmem:[%s988] sm:$0x1]
    %990 = vst [vmem:[%s88 + $0x1f] sm:$0x1] %v989
    %s991 = sadd.s32 %s981, 2
    %s992 = sld [smem:[#allocation13 + %s991]]
    %s993 = scalar_lea.vmem [#allocation17], %s992
    %v994 = vld [vmem:[%s993] sm:$0x1]
    %995 = vst [vmem:[%s94 + $0x1f] sm:$0x1] %v994
    %s996 = sadd.s32 %s981, 3
    %s997 = sld [smem:[#allocation13 + %s996]]
    %s998 = scalar_lea.vmem [#allocation17], %s997
    %v999 = vld [vmem:[%s998] sm:$0x1]
    %1000 = vst [vmem:[%s100 + $0x1f] sm:$0x1] %v999
    %v1001 = vld [vmem:[%s6] sm:$0x1]
    %v1002 = vld [vmem:[#allocation2] sm:$0xff]
    %v1003 = vld [vmem:[#allocation2 + $0x8] sm:$0xff]
    %v1004 = vld [vmem:[#allocation2 + $0x10] sm:$0xff]
    %v1005 = vld [vmem:[#allocation2 + $0x18] sm:$0xff]
    %v1006 = vld [vmem:[#allocation3] sm:$0xff]
    %v1007 = vld [vmem:[#allocation3 + $0x8] sm:$0xff]
    %v1008 = vld [vmem:[#allocation3 + $0x10] sm:$0xff]
    %v1009 = vld [vmem:[#allocation3 + $0x18] sm:$0xff]
    %v1011 = vlaneseq
    %v1012 = vshrl.u32 %v1011, 7
    %v1013 = vsub.s32 0, %v1012
    %v1014 = vrot.slane %v1001, %v1013
    %v1016 = vadd.f32 %v1002, %v1014
    %v1017 = vadd.f32 %v1003, %v1014
    %v1018 = vadd.f32 %v1004, %v1014
    %v1019 = vadd.f32 %v1005, %v1014
    %v1020 = vmul.f32 %v1006, %v1016
    %v1021 = vmul.f32 %v1007, %v1017
    %v1022 = vmul.f32 %v1008, %v1018
    %v1023 = vmul.f32 %v1009, %v1019
    %1024 = vadd.xlane.f32.xlu0 %v1020
    %v1025 = vpop.xlane.xlu0 %1024
    %1026 = vadd.xlane.f32.xlu0 %v1021
    %v1027 = vpop.xlane.xlu0 %1026
    %1028 = vadd.xlane.f32.xlu0 %v1022
    %v1029 = vpop.xlane.xlu0 %1028
    %1030 = vadd.xlane.f32.xlu0 %v1023
    %v1031 = vpop.xlane.xlu0 %1030
    %v1032 = vld [vmem:[#allocation4] sm:$0xff]
    %v1033 = vld [vmem:[#allocation4 + $0x8] sm:$0xff]
    %v1034 = vld [vmem:[#allocation4 + $0x10] sm:$0xff]
    %v1035 = vld [vmem:[#allocation4 + $0x18] sm:$0xff]
    %v1036 = vmul.f32 %v1032, %v1016
    %v1037 = vmul.f32 %v1033, %v1017
    %v1038 = vmul.f32 %v1034, %v1018
    %v1039 = vmul.f32 %v1035, %v1019
    %1040 = vadd.xlane.f32.xlu0 %v1036
    %v1041 = vpop.xlane.xlu0 %1040
    %1042 = vadd.xlane.f32.xlu0 %v1037
    %v1043 = vpop.xlane.xlu0 %1042
    %1044 = vadd.xlane.f32.xlu0 %v1038
    %v1045 = vpop.xlane.xlu0 %1044
    %1046 = vadd.xlane.f32.xlu0 %v1039
    %v1047 = vpop.xlane.xlu0 %1046
    %v1048 = vadd.f32 %v1041, %v1006
    %v1049 = vadd.f32 %v1043, %v1007
    %v1050 = vadd.f32 %v1045, %v1008
    %v1051 = vadd.f32 %v1047, %v1009
    %v1052 = vsub.f32 0.0, %v1048
    %v1053 = vsub.f32 0.0, %v1049
    %v1054 = vsub.f32 0.0, %v1050
    %v1055 = vsub.f32 0.0, %v1051
    %v1056 = vsub.f32 0.0, %v1052
    %v1057 = vsub.f32 0.0, %v1053
    %v1058 = vsub.f32 0.0, %v1054
    %v1059 = vsub.f32 0.0, %v1055
    %v1060 = vmax.f32 %v1056, 0.0
    %v1061 = vmax.f32 %v1057, 0.0
    %v1062 = vmax.f32 %v1058, 0.0
    %v1063 = vmax.f32 %v1059, 0.0
    %v1064 = vand.u32 2147483647, %v1052
    %v1065 = vand.u32 2147483647, %v1053
    %v1066 = vand.u32 2147483647, %v1054
    %v1067 = vand.u32 2147483647, %v1055
    %v1068 = vsub.f32 0.0, %v1064
    %v1069 = vsub.f32 0.0, %v1065
    %v1070 = vsub.f32 0.0, %v1066
    %v1071 = vsub.f32 0.0, %v1067
    %v1072 = vmul.f32 %v1068, 1.442695
    %v1073 = vpow.pop %v1072
    %v1074 = vmul.f32 %v1069, 1.442695
    %v1075 = vpow.pop %v1074
    %v1076 = vmul.f32 %v1070, 1.442695
    %v1077 = vpow.pop %v1076
    %v1078 = vmul.f32 %v1071, 1.442695
    %v1079 = vpow.pop %v1078
    %v1080 = vadd.f32 %v1073, 1.0
    %v1081 = vadd.f32 %v1075, 1.0
    %v1082 = vadd.f32 %v1077, 1.0
    %v1083 = vadd.f32 %v1079, 1.0
    %v1084 = vlog2.pop %v1080
    %v1085 = vmul.f32 %v1084, 0.6931472
    %v1086 = vlog2.pop %v1081
    %v1087 = vmul.f32 %v1086, 0.6931472
    %v1088 = vlog2.pop %v1082
    %v1089 = vmul.f32 %v1088, 0.6931472
    %v1090 = vlog2.pop %v1083
    %v1091 = vmul.f32 %v1090, 0.6931472
    %v1092 = vadd.f32 %v1060, %v1085
    %v1093 = vadd.f32 %v1061, %v1087
    %v1094 = vadd.f32 %v1062, %v1089
    %v1095 = vadd.f32 %v1063, %v1091
    %v1096 = vadd.f32 %v1092, 0.0
    %v1097 = vadd.f32 %v1093, 0.0
    %v1098 = vadd.f32 %v1094, 0.0
    %v1099 = vadd.f32 %v1095, 0.0
    %v1100 = vld [vmem:[%s88] sm:$0xff]
    %v1101 = vld [vmem:[%s88 + $0x8] sm:$0xff]
    %v1102 = vld [vmem:[%s88 + $0x10] sm:$0xff]
    %v1103 = vld [vmem:[%s88 + $0x18] sm:$0xff]
    %v1104 = vmul.f32 %v1100, %v1016
    %v1105 = vmul.f32 %v1101, %v1017
    %v1106 = vmul.f32 %v1102, %v1018
    %v1107 = vmul.f32 %v1103, %v1019
    %1108 = vadd.xlane.f32.xlu0 %v1104
    %v1109 = vpop.xlane.xlu0 %1108
    %1110 = vadd.xlane.f32.xlu0 %v1105
    %v1111 = vpop.xlane.xlu0 %1110
    %1112 = vadd.xlane.f32.xlu0 %v1106
    %v1113 = vpop.xlane.xlu0 %1112
    %1114 = vadd.xlane.f32.xlu0 %v1107
    %v1115 = vpop.xlane.xlu0 %1114
    %v1116 = vadd.f32 %v1109, %v1006
    %v1117 = vadd.f32 %v1111, %v1007
    %v1118 = vadd.f32 %v1113, %v1008
    %v1119 = vadd.f32 %v1115, %v1009
    %v1120 = vsub.f32 0.0, %v1116
    %v1121 = vsub.f32 0.0, %v1117
    %v1122 = vsub.f32 0.0, %v1118
    %v1123 = vsub.f32 0.0, %v1119
    %v1124 = vsub.f32 0.0, %v1120
    %v1125 = vsub.f32 0.0, %v1121
    %v1126 = vsub.f32 0.0, %v1122
    %v1127 = vsub.f32 0.0, %v1123
    %v1128 = vmax.f32 %v1124, 0.0
    %v1129 = vmax.f32 %v1125, 0.0
    %v1130 = vmax.f32 %v1126, 0.0
    %v1131 = vmax.f32 %v1127, 0.0
    %v1132 = vand.u32 2147483647, %v1120
    %v1133 = vand.u32 2147483647, %v1121
    %v1134 = vand.u32 2147483647, %v1122
    %v1135 = vand.u32 2147483647, %v1123
    %v1136 = vsub.f32 0.0, %v1132
    %v1137 = vsub.f32 0.0, %v1133
    %v1138 = vsub.f32 0.0, %v1134
    %v1139 = vsub.f32 0.0, %v1135
    %v1140 = vmul.f32 %v1136, 1.442695
    %v1141 = vpow.pop %v1140
    %v1142 = vmul.f32 %v1137, 1.442695
    %v1143 = vpow.pop %v1142
    %v1144 = vmul.f32 %v1138, 1.442695
    %v1145 = vpow.pop %v1144
    %v1146 = vmul.f32 %v1139, 1.442695
    %v1147 = vpow.pop %v1146
    %v1148 = vadd.f32 %v1141, 1.0
    %v1149 = vadd.f32 %v1143, 1.0
    %v1150 = vadd.f32 %v1145, 1.0
    %v1151 = vadd.f32 %v1147, 1.0
    %v1152 = vlog2.pop %v1148
    %v1153 = vmul.f32 %v1152, 0.6931472
    %v1154 = vlog2.pop %v1149
    %v1155 = vmul.f32 %v1154, 0.6931472
    %v1156 = vlog2.pop %v1150
    %v1157 = vmul.f32 %v1156, 0.6931472
    %v1158 = vlog2.pop %v1151
    %v1159 = vmul.f32 %v1158, 0.6931472
    %v1160 = vadd.f32 %v1128, %v1153
    %v1161 = vadd.f32 %v1129, %v1155
    %v1162 = vadd.f32 %v1130, %v1157
    %v1163 = vadd.f32 %v1131, %v1159
    %v1164 = vadd.f32 %v1096, %v1160
    %v1165 = vadd.f32 %v1097, %v1161
    %v1166 = vadd.f32 %v1098, %v1162
    %v1167 = vadd.f32 %v1099, %v1163
    %v1168 = vld [vmem:[%s94] sm:$0xff]
    %v1169 = vld [vmem:[%s94 + $0x8] sm:$0xff]
    %v1170 = vld [vmem:[%s94 + $0x10] sm:$0xff]
    %v1171 = vld [vmem:[%s94 + $0x18] sm:$0xff]
    %v1172 = vmul.f32 %v1168, %v1016
    %v1173 = vmul.f32 %v1169, %v1017
    %v1174 = vmul.f32 %v1170, %v1018
    %v1175 = vmul.f32 %v1171, %v1019
    %1176 = vadd.xlane.f32.xlu0 %v1172
    %v1177 = vpop.xlane.xlu0 %1176
    %1178 = vadd.xlane.f32.xlu0 %v1173
    %v1179 = vpop.xlane.xlu0 %1178
    %1180 = vadd.xlane.f32.xlu0 %v1174
    %v1181 = vpop.xlane.xlu0 %1180
    %1182 = vadd.xlane.f32.xlu0 %v1175
    %v1183 = vpop.xlane.xlu0 %1182
    %v1184 = vadd.f32 %v1177, %v1006
    %v1185 = vadd.f32 %v1179, %v1007
    %v1186 = vadd.f32 %v1181, %v1008
    %v1187 = vadd.f32 %v1183, %v1009
    %v1188 = vsub.f32 0.0, %v1184
    %v1189 = vsub.f32 0.0, %v1185
    %v1190 = vsub.f32 0.0, %v1186
    %v1191 = vsub.f32 0.0, %v1187
    %v1192 = vsub.f32 0.0, %v1188
    %v1193 = vsub.f32 0.0, %v1189
    %v1194 = vsub.f32 0.0, %v1190
    %v1195 = vsub.f32 0.0, %v1191
    %v1196 = vmax.f32 %v1192, 0.0
    %v1197 = vmax.f32 %v1193, 0.0
    %v1198 = vmax.f32 %v1194, 0.0
    %v1199 = vmax.f32 %v1195, 0.0
    %v1200 = vand.u32 2147483647, %v1188
    %v1201 = vand.u32 2147483647, %v1189
    %v1202 = vand.u32 2147483647, %v1190
    %v1203 = vand.u32 2147483647, %v1191
    %v1204 = vsub.f32 0.0, %v1200
    %v1205 = vsub.f32 0.0, %v1201
    %v1206 = vsub.f32 0.0, %v1202
    %v1207 = vsub.f32 0.0, %v1203
    %v1208 = vmul.f32 %v1204, 1.442695
    %v1209 = vpow.pop %v1208
    %v1210 = vmul.f32 %v1205, 1.442695
    %v1211 = vpow.pop %v1210
    %v1212 = vmul.f32 %v1206, 1.442695
    %v1213 = vpow.pop %v1212
    %v1214 = vmul.f32 %v1207, 1.442695
    %v1215 = vpow.pop %v1214
    %v1216 = vadd.f32 %v1209, 1.0
    %v1217 = vadd.f32 %v1211, 1.0
    %v1218 = vadd.f32 %v1213, 1.0
    %v1219 = vadd.f32 %v1215, 1.0
    %v1220 = vlog2.pop %v1216
    %v1221 = vmul.f32 %v1220, 0.6931472
    %v1222 = vlog2.pop %v1217
    %v1223 = vmul.f32 %v1222, 0.6931472
    %v1224 = vlog2.pop %v1218
    %v1225 = vmul.f32 %v1224, 0.6931472
    %v1226 = vlog2.pop %v1219
    %v1227 = vmul.f32 %v1226, 0.6931472
    %v1228 = vadd.f32 %v1196, %v1221
    %v1229 = vadd.f32 %v1197, %v1223
    %v1230 = vadd.f32 %v1198, %v1225
    %v1231 = vadd.f32 %v1199, %v1227
    %v1232 = vadd.f32 %v1164, %v1228
    %v1233 = vadd.f32 %v1165, %v1229
    %v1234 = vadd.f32 %v1166, %v1230
    %v1235 = vadd.f32 %v1167, %v1231
    %v1236 = vld [vmem:[%s100] sm:$0xff]
    %v1237 = vld [vmem:[%s100 + $0x8] sm:$0xff]
    %v1238 = vld [vmem:[%s100 + $0x10] sm:$0xff]
    %v1239 = vld [vmem:[%s100 + $0x18] sm:$0xff]
    %v1240 = vmul.f32 %v1236, %v1016
    %v1241 = vmul.f32 %v1237, %v1017
    %v1242 = vmul.f32 %v1238, %v1018
    %v1243 = vmul.f32 %v1239, %v1019
    %1244 = vadd.xlane.f32.xlu0 %v1240
    %v1245 = vpop.xlane.xlu0 %1244
    %1246 = vadd.xlane.f32.xlu0 %v1241
    %v1247 = vpop.xlane.xlu0 %1246
    %1248 = vadd.xlane.f32.xlu0 %v1242
    %v1249 = vpop.xlane.xlu0 %1248
    %1250 = vadd.xlane.f32.xlu0 %v1243
    %v1251 = vpop.xlane.xlu0 %1250
    %v1252 = vadd.f32 %v1245, %v1006
    %v1253 = vadd.f32 %v1247, %v1007
    %v1254 = vadd.f32 %v1249, %v1008
    %v1255 = vadd.f32 %v1251, %v1009
    %v1256 = vsub.f32 0.0, %v1252
    %v1257 = vsub.f32 0.0, %v1253
    %v1258 = vsub.f32 0.0, %v1254
    %v1259 = vsub.f32 0.0, %v1255
    %v1260 = vsub.f32 0.0, %v1256
    %v1261 = vsub.f32 0.0, %v1257
    %v1262 = vsub.f32 0.0, %v1258
    %v1263 = vsub.f32 0.0, %v1259
    %v1264 = vmax.f32 %v1260, 0.0
    %v1265 = vmax.f32 %v1261, 0.0
    %v1266 = vmax.f32 %v1262, 0.0
    %v1267 = vmax.f32 %v1263, 0.0
    %v1268 = vand.u32 2147483647, %v1256
    %v1269 = vand.u32 2147483647, %v1257
    %v1270 = vand.u32 2147483647, %v1258
    %v1271 = vand.u32 2147483647, %v1259
    %v1272 = vsub.f32 0.0, %v1268
    %v1273 = vsub.f32 0.0, %v1269
    %v1274 = vsub.f32 0.0, %v1270
    %v1275 = vsub.f32 0.0, %v1271
    %v1276 = vmul.f32 %v1272, 1.442695
    %v1277 = vpow.pop %v1276
    %v1278 = vmul.f32 %v1273, 1.442695
    %v1279 = vpow.pop %v1278
    %v1280 = vmul.f32 %v1274, 1.442695
    %v1281 = vpow.pop %v1280
    %v1282 = vmul.f32 %v1275, 1.442695
    %v1283 = vpow.pop %v1282
    %v1284 = vadd.f32 %v1277, 1.0
    %v1285 = vadd.f32 %v1279, 1.0
    %v1286 = vadd.f32 %v1281, 1.0
    %v1287 = vadd.f32 %v1283, 1.0
    %v1288 = vlog2.pop %v1284
    %v1289 = vmul.f32 %v1288, 0.6931472
    %v1290 = vlog2.pop %v1285
    %v1291 = vmul.f32 %v1290, 0.6931472
    %v1292 = vlog2.pop %v1286
    %v1293 = vmul.f32 %v1292, 0.6931472
    %v1294 = vlog2.pop %v1287
    %v1295 = vmul.f32 %v1294, 0.6931472
    %v1296 = vadd.f32 %v1264, %v1289
    %v1297 = vadd.f32 %v1265, %v1291
    %v1298 = vadd.f32 %v1266, %v1293
    %v1299 = vadd.f32 %v1267, %v1295
    %v1300 = vadd.f32 %v1232, %v1296
    %v1301 = vadd.f32 %v1233, %v1297
    %v1302 = vadd.f32 %v1234, %v1298
    %v1303 = vadd.f32 %v1235, %v1299
    %v1304 = vlaneseq
    %v1305 = vshrl.u32 %v1304, 7
    %v1306 = vadd.s32 %v1305, 8
    %v1307 = vadd.s32 %v1305, 16
    %v1308 = vadd.s32 %v1305, 24
    %v1309 = vstv %s62
    %v1310 = vadd.s32 %v1309, %v1305
    %v1311 = vadd.s32 %v1309, %v1306
    %v1312 = vadd.s32 %v1309, %v1307
    %v1313 = vadd.s32 %v1309, %v1308
    %v1314 = vstv %s61
    %vm1315 = vcmp.lt.s32.totalorder %v1310, %v1314
    %vm1316 = vcmp.lt.s32.totalorder %v1311, %v1314
    %vm1317 = vcmp.lt.s32.totalorder %v1312, %v1314
    %vm1318 = vcmp.lt.s32.totalorder %v1313, %v1314
    %v1319 = vsel %vm1315, %v1300, 0.0
    %v1320 = vsel %vm1316, %v1301, 0.0
    %v1321 = vsel %vm1317, %v1302, 0.0
    %v1322 = vsel %vm1318, %v1303, 0.0
    %1327 = vrot.lane.b32.xlu0 %v1319, 96
    %v1328 = vpop.permute.xlu0 %1327
    %1329 = vrot.lane.b32.xlu0 %v1320, 96
    %v1330 = vpop.permute.xlu0 %1329
    %1331 = vrot.lane.b32.xlu0 %v1321, 96
    %v1332 = vpop.permute.xlu0 %1331
    %1333 = vrot.lane.b32.xlu0 %v1322, 96
    %v1334 = vpop.permute.xlu0 %1333
    %vm1339 = vcmask 7168
    %v1340 = vsel %vm1339, %v1328, 0.0
    %v1341 = vsel %vm1339, %v1330, 0.0
    %v1342 = vadd.f32 %v1340, %v1341
    %v1343 = vsel %vm1339, %v1332, 0.0
    %v1344 = vadd.f32 %v1342, %v1343
    %v1345 = vsel %vm1339, %v1334, 0.0
    %v1346 = vadd.f32 %v1344, %v1345
    %1347 = vadd.xlane.f32.xlu0 %v1346
    %v1348 = vpop.xlane.xlu0 %1347
    %v1349 = vrot.slane %v1348, 4
    %v1350 = vadd.f32 %v1348, %v1349
    %v1351 = vrot.slane %v1350, 2
    %v1352 = vadd.f32 %v1350, %v1351
    %v1353 = vrot.slane %v1352, 1
    %v1354 = vadd.f32 %v1352, %v1353
    %s1355 = vtos %v1354
    %s1356 = scalar_lea.vmem [#allocation5], %s62
    %1357 = vst.msk [vmem:[%s1356] sm:$0xff] %vm1339, %v1025
    %1358 = vst.msk [vmem:[%s1356 + $0x8] sm:$0xff] %vm1339, %v1027
    %1359 = vst.msk [vmem:[%s1356 + $0x10] sm:$0xff] %vm1339, %v1029
    %1360 = vst.msk [vmem:[%s1356 + $0x18] sm:$0xff] %vm1339, %v1031
    %1365 = vrot.lane.b32.xlu0 %v1006, 96
    %v1366 = vpop.permute.xlu0 %1365
    %1367 = vrot.lane.b32.xlu0 %v1007, 96
    %v1368 = vpop.permute.xlu0 %1367
    %1369 = vrot.lane.b32.xlu0 %v1008, 96
    %v1370 = vpop.permute.xlu0 %1369
    %1371 = vrot.lane.b32.xlu0 %v1009, 96
    %v1372 = vpop.permute.xlu0 %1371
    %s1377 = scalar_lea.vmem [#allocation6], %s62
    %1378 = vst.msk [vmem:[%s1377] sm:$0xff] %vm1339, %v1366
    %1379 = vst.msk [vmem:[%s1377 + $0x8] sm:$0xff] %vm1339, %v1368
    %1380 = vst.msk [vmem:[%s1377 + $0x10] sm:$0xff] %vm1339, %v1370
    %1381 = vst.msk [vmem:[%s1377 + $0x18] sm:$0xff] %vm1339, %v1372
    %v1382 = vld [vmem:[#allocation7] sm:$0x1]
    %v1383 = vstv %s1355
    %v1384 = vadd.f32 %v1382, %v1383
    %vm1385 = vcmask 0
    %1386 = vst.msk [vmem:[#allocation7] sm:$0x1] %vm1385, %v1384
    %v1387 = vld [vmem:[#allocation8] sm:$0x1]
    %v1388 = vmul.f32 %v1002, %v1002
    %v1389 = vmul.f32 %v1003, %v1003
    %v1390 = vmul.f32 %v1004, %v1004
    %v1391 = vmul.f32 %v1005, %v1005
    %v1392 = vadd.f32 %v1388, %v1389
    %v1393 = vadd.f32 %v1392, %v1390
    %v1394 = vadd.f32 %v1393, %v1391
    %1395 = vadd.xlane.f32.xlu0 %v1394
    %v1396 = vpop.xlane.xlu0 %1395
    %v1397 = vrot.slane %v1396, 4
    %v1398 = vadd.f32 %v1396, %v1397
    %v1399 = vrot.slane %v1398, 2
    %v1400 = vadd.f32 %v1398, %v1399
    %v1401 = vrot.slane %v1400, 1
    %v1402 = vadd.f32 %v1400, %v1401
    %s1403 = vtos %v1402
    %v1404 = vstv %s1403
    %v1405 = vadd.f32 %v1387, %v1404
    %1406 = vst.msk [vmem:[#allocation8] sm:$0x1] %vm1385, %v1405
    %v1407 = vld [vmem:[#allocation9] sm:$0x1]
    %v1408 = vmul.f32 %v1006, %v1006
    %v1409 = vmul.f32 %v1007, %v1007
    %v1410 = vmul.f32 %v1008, %v1008
    %v1411 = vmul.f32 %v1009, %v1009
    %v1412 = vadd.f32 %v1408, %v1409
    %v1413 = vadd.f32 %v1412, %v1410
    %v1414 = vadd.f32 %v1413, %v1411
    %1415 = vadd.xlane.f32.xlu0 %v1414
    %v1416 = vpop.xlane.xlu0 %1415
    %v1417 = vrot.slane %v1416, 4
    %v1418 = vadd.f32 %v1416, %v1417
    %v1419 = vrot.slane %v1418, 2
    %v1420 = vadd.f32 %v1418, %v1419
    %v1421 = vrot.slane %v1420, 1
    %v1422 = vadd.f32 %v1420, %v1421
    %s1423 = vtos %v1422
    %1428 = vrot.lane.b32.xlu0 %v1408, 96
    %v1429 = vpop.permute.xlu0 %1428
    %1430 = vrot.lane.b32.xlu0 %v1409, 96
    %v1431 = vpop.permute.xlu0 %1430
    %1432 = vrot.lane.b32.xlu0 %v1410, 96
    %v1433 = vpop.permute.xlu0 %1432
    %1434 = vrot.lane.b32.xlu0 %v1411, 96
    %v1435 = vpop.permute.xlu0 %1434
    %v1440 = vsel %vm1339, %v1429, 0.0
    %v1441 = vsel %vm1339, %v1431, 0.0
    %v1442 = vadd.f32 %v1440, %v1441
    %v1443 = vsel %vm1339, %v1433, 0.0
    %v1444 = vadd.f32 %v1442, %v1443
    %v1445 = vsel %vm1339, %v1435, 0.0
    %v1446 = vadd.f32 %v1444, %v1445
    %1447 = vadd.xlane.f32.xlu0 %v1446
    %v1448 = vpop.xlane.xlu0 %1447
    %v1449 = vrot.slane %v1448, 4
    %v1450 = vadd.f32 %v1448, %v1449
    %v1451 = vrot.slane %v1450, 2
    %v1452 = vadd.f32 %v1450, %v1451
    %v1453 = vrot.slane %v1452, 1
    %v1454 = vadd.f32 %v1452, %v1453
    %s1455 = vtos %v1454
    %s1456 = ssub.f32 %s1423, %s1455
    %v1457 = vstv %s1456
    %v1458 = vadd.f32 %v1407, %v1457
    %1459 = vst.msk [vmem:[#allocation9] sm:$0x1] %vm1385, %v1458
    // Predicated region
    $region26: #{transe_neg_loss.1} parent=1 // pred_check
      %p1460 = pneg %p63
    $region27: #{transe_neg_loss.1} parent=1 // pred_check_branch
      %1462 = sbr.rel (%p1460) target = $region29
    $region28: #{transe_neg_loss.1} parent=1 // pred_region
      %s1463 = scvt.s32.f32 %s61
      %v1464 = vld [vmem:[#allocation6] sm:$0xff]
      %v1465 = vld [vmem:[#allocation6 + $0x8] sm:$0xff]
      %v1466 = vld [vmem:[#allocation6 + $0x10] sm:$0xff]
      %v1467 = vld [vmem:[#allocation6 + $0x18] sm:$0xff]
      %1468 = vxpose.xlu0.b32.start [1/16] %v1464, 128
      %1469 = vxpose.xlu0.b32.cont [2/16] %v1465, 128
      %1470 = vxpose.xlu0.b32.cont [3/16] %v1466, 128
      %1471 = vxpose.xlu0.b32.cont [4/16] %v1467, 128
      %1472 = vxpose.xlu0.b32.cont [5/16] 0.0, 128
      %1473 = vxpose.xlu0.b32.cont [6/16] 0.0, 128
      %1474 = vxpose.xlu0.b32.cont [7/16] 0.0, 128
      %1475 = vxpose.xlu0.b32.cont [8/16] 0.0, 128
      %1476 = vxpose.xlu0.b32.cont [9/16] 0.0, 128
      %1477 = vxpose.xlu0.b32.cont [10/16] 0.0, 128
      %1478 = vxpose.xlu0.b32.cont [11/16] 0.0, 128
      %1479 = vxpose.xlu0.b32.cont [12/16] 0.0, 128
      %1480 = vxpose.xlu0.b32.cont [13/16] 0.0, 128
      %1481 = vxpose.xlu0.b32.cont [14/16] 0.0, 128
      %1482 = vxpose.xlu0.b32.cont [15/16] 0.0, 128
      %1483 = vxpose.xlu0.b32.end [16/16] 0.0, 128
      %v1484 = vpop.trf.xlu0
      %v1485 = vpop.trf.xlu0
      %v1486 = vpop.trf.xlu0
      %v1487 = vpop.trf.xlu0
      %v1488 = vpop.trf.xlu0
      %v1489 = vpop.trf.xlu0
      %v1490 = vpop.trf.xlu0
      %v1491 = vpop.trf.xlu0
      %v1492 = vpop.trf.xlu0
      %v1493 = vpop.trf.xlu0
      %v1494 = vpop.trf.xlu0
      %v1495 = vpop.trf.xlu0
      %v1496 = vpop.trf.xlu0
      %v1497 = vpop.trf.xlu0
      %v1498 = vpop.trf.xlu0
      %v1499 = vpop.trf.xlu0
      %v1500 = vlaneseq
      %v1501 = vand.u32 %v1500, 127
      %vm1502 = vcmp.lt.s32.totalorder %v1501, %v1314
      %v1503 = vld [vmem:[#allocation5] sm:$0xff]
      %v1504 = vld [vmem:[#allocation5 + $0x8] sm:$0xff]
      %v1505 = vld [vmem:[#allocation5 + $0x10] sm:$0xff]
      %v1506 = vld [vmem:[#allocation5 + $0x18] sm:$0xff]
      %v1507 = vstv 0
      %v1508 = vadd.s32 %v1507, %v1305
      %v1509 = vadd.s32 %v1507, %v1306
      %v1510 = vadd.s32 %v1507, %v1307
      %v1511 = vadd.s32 %v1507, %v1308
      %vm1512 = vcmp.lt.s32.totalorder %v1508, %v1314
      %vm1513 = vcmp.lt.s32.totalorder %v1509, %v1314
      %vm1514 = vcmp.lt.s32.totalorder %v1510, %v1314
      %vm1515 = vcmp.lt.s32.totalorder %v1511, %v1314
      %1517 = vset.pattern.permute.xlu0 0
      %1518 = vperm.xlu0 %1517, %v1503
      %v1519 = vpop.permute.xlu0 %1518
      %1522 = vset.pattern.permute.xlu0 0
      %1523 = vperm.xlu0 %1522, %v1504
      %v1524 = vpop.permute.xlu0 %1523
      %1527 = vset.pattern.permute.xlu0 0
      %1528 = vperm.xlu0 %1527, %v1505
      %v1529 = vpop.permute.xlu0 %1528
      %1532 = vset.pattern.permute.xlu0 0
      %1533 = vperm.xlu0 %1532, %v1506
      %v1534 = vpop.permute.xlu0 %1533
      %v1536 = vlaneseq
      %v1537 = vshrl.u32 %v1536, 7
      %v1538 = vsub.s32 0, %v1537
      %v1539 = vrot.slane %v1484, %v1538
      %v1540 = vadd.f32 %v1519, %v1539
      %v1541 = vadd.f32 %v1524, %v1539
      %v1542 = vadd.f32 %v1529, %v1539
      %v1543 = vadd.f32 %v1534, %v1539
      %v1544 = vsel %vm1512, 1, 0
      %v1545 = vsel %vm1513, 1, 0
      %v1546 = vsel %vm1514, 1, 0
      %v1547 = vsel %vm1515, 1, 0
      %vm1548 = vcmp.eq.s32.totalorder %v1544, 1
      %vm1549 = vcmp.eq.s32.totalorder %v1545, 1
      %vm1550 = vcmp.eq.s32.totalorder %v1546, 1
      %vm1551 = vcmp.eq.s32.totalorder %v1547, 1
      %v1552 = vsel %vm1502, 1, 0
      %vm1553 = vcmp.eq.s32.totalorder %v1552, 1
      %vm1554 = vmand %vm1548, %vm1553
      %vm1555 = vmand %vm1549, %vm1553
      %vm1556 = vmand %vm1550, %vm1553
      %vm1557 = vmand %vm1551, %vm1553
      %v1558 = vsub.f32 0.0, %v1540
      %v1559 = vsub.f32 0.0, %v1541
      %v1560 = vsub.f32 0.0, %v1542
      %v1561 = vsub.f32 0.0, %v1543
      %v1562 = vmax.f32 %v1558, 0.0
      %v1563 = vmax.f32 %v1559, 0.0
      %v1564 = vmax.f32 %v1560, 0.0
      %v1565 = vmax.f32 %v1561, 0.0
      %v1566 = vand.u32 2147483647, %v1540
      %v1567 = vand.u32 2147483647, %v1541
      %v1568 = vand.u32 2147483647, %v1542
      %v1569 = vand.u32 2147483647, %v1543
      %v1570 = vsub.f32 0.0, %v1566
      %v1571 = vsub.f32 0.0, %v1567
      %v1572 = vsub.f32 0.0, %v1568
      %v1573 = vsub.f32 0.0, %v1569
      %v1574 = vmul.f32 %v1570, 1.442695
      %v1575 = vpow.pop %v1574
      %v1576 = vmul.f32 %v1571, 1.442695
      %v1577 = vpow.pop %v1576
      %v1578 = vmul.f32 %v1572, 1.442695
      %v1579 = vpow.pop %v1578
      %v1580 = vmul.f32 %v1573, 1.442695
      %v1581 = vpow.pop %v1580
      %v1582 = vadd.f32 %v1575, 1.0
      %v1583 = vadd.f32 %v1577, 1.0
      %v1584 = vadd.f32 %v1579, 1.0
      %v1585 = vadd.f32 %v1581, 1.0
      %v1586 = vlog2.pop %v1582
      %v1587 = vmul.f32 %v1586, 0.6931472
      %v1588 = vlog2.pop %v1583
      %v1589 = vmul.f32 %v1588, 0.6931472
      %v1590 = vlog2.pop %v1584
      %v1591 = vmul.f32 %v1590, 0.6931472
      %v1592 = vlog2.pop %v1585
      %v1593 = vmul.f32 %v1592, 0.6931472
      %v1594 = vadd.f32 %v1562, %v1587
      %v1595 = vadd.f32 %v1563, %v1589
      %v1596 = vadd.f32 %v1564, %v1591
      %v1597 = vadd.f32 %v1565, %v1593
      %v1598 = vsel %vm1554, %v1594, 0.0
      %v1599 = vsel %vm1555, %v1595, 0.0
      %v1600 = vsel %vm1556, %v1596, 0.0
      %v1601 = vsel %vm1557, %v1597, 0.0
      %vm1602 = vcmask 261120
      %v1603 = vsel %vm1602, %v1598, 0.0
      %v1604 = vsel %vm1602, %v1599, 0.0
      %v1605 = vadd.f32 %v1603, %v1604
      %v1606 = vsel %vm1602, %v1600, 0.0
      %v1607 = vadd.f32 %v1605, %v1606
      %v1608 = vsel %vm1602, %v1601, 0.0
      %v1609 = vadd.f32 %v1607, %v1608
      %1610 = vadd.xlane.f32.xlu0 %v1609
      %v1611 = vpop.xlane.xlu0 %1610
      %v1612 = vrot.slane %v1611, 4
      %v1613 = vadd.f32 %v1611, %v1612
      %v1614 = vrot.slane %v1613, 2
      %v1615 = vadd.f32 %v1613, %v1614
      %v1616 = vrot.slane %v1615, 1
      %v1617 = vadd.f32 %v1615, %v1616
      %s1618 = vtos %v1617
      %v1619 = vstv %s1618
      %v1620 = vadd.f32 %v1619, 0.0
      %v1621 = vld [vmem:[#allocation7] sm:$0x1]
      %v1622 = vstv %s1463
      %v1623 = vmul.f32 %v1622, %v1621
      %v1624 = vadd.f32 %v1620, %v1623
      %s1625 = smul.f32 %s1463, %s1463
      %v1626 = vstv %s1625
      %v1627 = vrcp.pop %v1626
      %v1628 = vmul.f32 %v1624, %v1627
      %v1629 = vld [vmem:[#allocation8] sm:$0x1]
      %v1630 = vrsqrt.pop %v1629
      %v1631 = vmul.f32 %v1629, %v1630
      %vm1632 = vcmp.eq.f32.partialorder %v1629, inf
      %v1633 = vsel %vm1632, %v1629, %v1631
      %vm1634 = vcmp.eq.f32.partialorder %v1629, 0.0
      %v1635 = vand.u32 %v1629, 2147483648
      %v1636 = vsel %vm1634, %v1635, %v1633
      %v1637 = vld [vmem:[#allocation9] sm:$0x1]
      %v1638 = vrsqrt.pop %v1637
      %v1639 = vmul.f32 %v1637, %v1638
      %vm1640 = vcmp.eq.f32.partialorder %v1637, inf
      %v1641 = vsel %vm1640, %v1637, %v1639
      %vm1642 = vcmp.eq.f32.partialorder %v1637, 0.0
      %v1643 = vand.u32 %v1637, 2147483648
      %v1644 = vsel %vm1642, %v1643, %v1641
      %v1645 = vadd.f32 %v1636, %v1644
      %v1646 = vmul.f32 %v1001, %v1001
      %vm1647 = vcmask 1040384
      %v1648 = vsel %vm1647, %v1646, 0.0
      %1649 = vadd.xlane.f32.xlu0 %v1648
      %v1650 = vpop.xlane.xlu0 %1649
      %v1651 = vrot.slane %v1650, 4
      %v1652 = vadd.f32 %v1650, %v1651
      %v1653 = vrot.slane %v1652, 2
      %v1654 = vadd.f32 %v1652, %v1653
      %v1655 = vrot.slane %v1654, 1
      %v1656 = vadd.f32 %v1654, %v1655
      %s1657 = vtos %v1656
      %v1658 = vstv %s1657
      %v1659 = vrsqrt.pop %v1658
      %v1660 = vmul.f32 %v1658, %v1659
      %vm1661 = vcmp.eq.f32.partialorder %v1658, inf
      %v1662 = vsel %vm1661, %v1658, %v1660
      %vm1663 = vcmp.eq.f32.partialorder %v1658, 0.0
      %v1664 = vand.u32 %v1658, 2147483648
      %v1665 = vsel %vm1663, %v1664, %v1662
      %s1666 = vtos %v1665
      %v1667 = vstv %s1666
      %v1668 = vadd.f32 %v1645, %v1667
      %vm1669 = vcmp.eq.s32.totalorder %v1501, 0
      %1671 = vset.pattern.permute.xlu0 0
      %1672 = vperm.xlu0 %1671, %v1628
      %v1673 = vpop.permute.xlu0 %1672
      %v1675 = vlaneseq
      %v1676 = vshrl.u32 %v1675, 7
      %v1677 = vsub.s32 0, %v1676
      %v1678 = vrot.slane %v1673, %v1677
      %v1679 = vsel %vm1669, %v1678, 0.0
      %vm1680 = vcmp.eq.s32.totalorder %v1501, 1
      %1682 = vset.pattern.permute.xlu0 0
      %1683 = vperm.xlu0 %1682, %v1668
      %v1684 = vpop.permute.xlu0 %1683
      %v1686 = vlaneseq
      %v1687 = vshrl.u32 %v1686, 7
      %v1688 = vsub.s32 0, %v1687
      %v1689 = vrot.slane %v1684, %v1688
      %v1690 = vsel %vm1680, %v1689, 0.0
      %v1691 = vadd.f32 %v1679, %v1690
      %1692 = vst [vmem:[%s7] sm:$0x1] %v1691
    $region29: #{transe_neg_loss.1} parent=1 // pred_fallthru
      _
    // Predicated region
    $region30: #{transe_neg_loss.1} parent=1 // pred_check
      _
    $region31: #{transe_neg_loss.1} parent=1 // pred_check_branch
      %1694 = sbr.rel (0) target = $region33
    $region32: #{transe_neg_loss.1} parent=1 // pred_region
      _
    $region33: #{transe_neg_loss.1} parent=1 // pred_fallthru
      _
    // Predicated region
    $region34: #{transe_neg_loss.1} parent=1 // pred_check
      _
    $region35: #{transe_neg_loss.1} parent=1 // pred_check_branch
      %1696 = sbr.rel (0) target = $region37
    $region36: #{transe_neg_loss.1} parent=1 // pred_region
      _
    $region37: #{transe_neg_loss.1} parent=1 // pred_fallthru
      _
    %1697 = vsyncpa [#allocation16], 1
    %1698 = vsyncpa [#allocation18], 1

</llo_original>
